<compile_context>
chip_gen: v7x
topology: tpu7x:2x2x1
jax: 0.10.0
libtpu: 0.0.40
codegen_flags: <defaults>
</compile_context>

<pallas_src>
import functools

import jax
import jax.numpy as jnp
from jax import lax
from jax.experimental import pallas as pl
from jax.experimental.pallas import tpu as pltpu

# ----------------------------- problem sizes ------------------------------
N, C_IN, H, W = 2, 256, 16, 16      # Block35 requires 256 input channels
HW = H * W
C_MID = 32                          # branch width
C_CAT = 96                          # 3 * 32
SCALE = 0.17                        # residual scale
BN_EPS = 1e-5
HIGH = lax.Precision.HIGHEST        # used only by the pure-JAX reference


# ------------------------------- the kernel -------------------------------
def block35_kernel(x_ref,
                   w1_ref, b1_ref,
                   w1b_ref, b1b_ref,
                   w2b_ref, b2b_ref,
                   w2c_ref, b2c_ref,
                   wc_ref, bc_ref,
                   out_ref,
                   pad_ref):
    # Zero the padded scratch ONCE per grid step.  Only the interior
    # [1:H+1, 1:W+1, :] is ever written afterwards, so the 1-pixel border
    # stays zero for all three 3x3 convolutions of this step.
    pad_ref[...] = jnp.zeros_like(pad_ref)

    xf = x_ref[0].reshape(HW, C_IN)                      # (256, 256) f32

    # --- fused branch-head 1x1 convs: ONE (HW,256)x(256,96) bf16 matmul ----
    h = jnp.dot(xf.astype(jnp.bfloat16), w1_ref[...],
                preferred_element_type=jnp.float32)
    h = jnp.maximum(h + b1_ref[...], 0.0)                # (256, 96) f32
    x0 = h[:, 0:C_MID]
    y1 = h[:, C_MID:2 * C_MID]
    y2 = h[:, 2 * C_MID:3 * C_MID]

    # --- 3x3 conv (SAME, pad=1) as a single im2col matmul, K = 9*32 = 288 --
    def conv3x3(t, w_ref, b_ref):
        pad_ref[1:H + 1, 1:W + 1, :] = t.reshape(H, W, C_MID)
        taps = []
        for k in range(9):
            dy, dx = k // 3, k % 3
            taps.append(pad_ref[dy:dy + H, dx:dx + W, :].reshape(HW, C_MID))
        col = jnp.concatenate(taps, axis=-1).astype(jnp.bfloat16)   # (256,288)
        y = jnp.dot(col, w_ref[...], preferred_element_type=jnp.float32)
        return jnp.maximum(y + b_ref[...], 0.0)

    x1 = conv3x3(y1, w1b_ref, b1b_ref)                             # branch1
    x2 = conv3x3(conv3x3(y2, w2b_ref, b2b_ref), w2c_ref, b2c_ref)  # branch2

    # --- concat + 1x1 projection as a single K=96 matmul -------------------
    cat = jnp.concatenate([x0, x1, x2], axis=-1).astype(jnp.bfloat16)
    out = jnp.dot(cat, wc_ref[...], preferred_element_type=jnp.float32)
    out = out + bc_ref[...]

    # --- residual scale-add + final ReLU (f32 elementwise) -----------------
    out = jnp.maximum(out * SCALE + xf, 0.0)
    out_ref[0] = out.reshape(H, W, C_IN)


def _full_spec(shape):
    nd = len(shape)
    return pl.BlockSpec(shape, lambda n, _nd=nd: (0,) * _nd)


def block35_pallas(x_nchw, params):
    """x_nchw: (N, 256, H, W) float32, PyTorch layout.  Returns NCHW."""
    x_nhwc = jnp.transpose(x_nchw, (0, 2, 3, 1))   # -> NHWC for the kernel
    bf16 = jnp.bfloat16

    # Fold the three branch-head 1x1 convs into one (256, 96) weight / bias.
    w1 = jnp.concatenate([params["w0"], params["w1a"], params["w2a"]],
                         axis=1).astype(bf16)                       # (256, 96)
    b1 = jnp.concatenate([params["b0"], params["b1a"], params["b2a"]],
                         axis=1)                                    # (1, 96)
    # im2col-flattened 3x3 weights: (9, 32, 32) -> (288, 32), tap-major.
    w1b = params["w1b"].reshape(9 * C_MID, C_MID).astype(bf16)
    w2b = params["w2b"].reshape(9 * C_MID, C_MID).astype(bf16)
    w2c = params["w2c"].reshape(9 * C_MID, C_MID).astype(bf16)
    wc = params["wc"].astype(bf16)                                  # (96, 256)

    weight_args = [
        w1, b1,
        w1b, params["b1b"],
        w2b, params["b2b"],
        w2c, params["b2c"],
        wc, params["bc"],
    ]

    in_specs = [pl.BlockSpec((1, H, W, C_IN), lambda n: (n, 0, 0, 0))]
    in_specs += [_full_spec(a.shape) for a in weight_args]

    out_nhwc = pl.pallas_call(
        block35_kernel,
        out_shape=jax.ShapeDtypeStruct((N, H, W, C_IN), jnp.float32),
        grid_spec=pltpu.PrefetchScalarGridSpec(
            num_scalar_prefetch=0,
            grid=(N,),
            in_specs=in_specs,
            out_specs=pl.BlockSpec((1, H, W, C_IN), lambda n: (n, 0, 0, 0)),
            scratch_shapes=[pltpu.VMEM((H + 2, W + 2, C_MID), jnp.float32)],
        ),
        compiler_params=pltpu.CompilerParams(
            dimension_semantics=("parallel",)),
    )(x_nhwc, *weight_args)

    return jnp.transpose(out_nhwc, (0, 3, 1, 2))   # back to NCHW


# -------------------- deterministic parameter construction ----------------
def _bn_fold(key, out_c, in_c, kh, kw):
    """Make conv weight + BN params, fold BN (eval-mode running stats)."""
    k = jax.random.split(key, 5)
    w = jax.random.normal(k[0], (out_c, in_c, kh, kw), jnp.float32) * 0.05
    gamma = jax.random.uniform(k[1], (out_c,), jnp.float32, 0.5, 1.5)
    beta = jax.random.normal(k[2], (out_c,), jnp.float32) * 0.1
    mean = jax.random.normal(k[3], (out_c,), jnp.float32) * 0.1
    var = jax.random.uniform(k[4], (out_c,), jnp.float32, 0.5, 1.5)
    s = gamma / jnp.sqrt(var + BN_EPS)
    w_eff = w * s[:, None, None, None]
    b_eff = beta - mean * s
    return w_eff, b_eff


def make_params(key):
    ks = jax.random.split(key, 8)
    p = {}

    def to_1x1(w):          # (O, I, 1, 1) -> (I, O)
        return jnp.transpose(w[:, :, 0, 0], (1, 0))

    def to_3x3(w):          # (O, I, 3, 3) -> (9, I, O) with k = ky*3 + kx
        return jnp.transpose(w, (2, 3, 1, 0)).reshape(9, w.shape[1], w.shape[0])

    # branch0: 1x1 256->32
    w, b = _bn_fold(ks[0], C_MID, C_IN, 1, 1)
    p["w0"], p["b0"] = to_1x1(w), b.reshape(1, C_MID)
    # branch1: 1x1 256->32, 3x3 32->32
    w, b = _bn_fold(ks[1], C_MID, C_IN, 1, 1)
    p["w1a"], p["b1a"] = to_1x1(w), b.reshape(1, C_MID)
    w, b = _bn_fold(ks[2], C_MID, C_MID, 3, 3)
    p["w1b"], p["b1b"] = to_3x3(w), b.reshape(1, C_MID)
    # branch2: 1x1 256->32, 3x3 32->32, 3x3 32->32
    w, b = _bn_fold(ks[3], C_MID, C_IN, 1, 1)
    p["w2a"], p["b2a"] = to_1x1(w), b.reshape(1, C_MID)
    w, b = _bn_fold(ks[4], C_MID, C_MID, 3, 3)
    p["w2b"], p["b2b"] = to_3x3(w), b.reshape(1, C_MID)
    w, b = _bn_fold(ks[5], C_MID, C_MID, 3, 3)
    p["w2c"], p["b2c"] = to_3x3(w), b.reshape(1, C_MID)
    # final plain conv2d 96->256, kernel 1, with bias (no BN / no ReLU inside)
    wc = jax.random.normal(ks[6], (C_IN, C_CAT, 1, 1), jnp.float32) * 0.05
    bc = jax.random.normal(ks[7], (C_IN,), jnp.float32) * 0.05
    p["wc"], p["bc"] = to_1x1(wc), bc.reshape(1, C_IN)
    return p


# --------------------------- pure-JAX reference ----------------------------
def block35_ref(x_nchw, p):
    x = jnp.transpose(x_nchw, (0, 2, 3, 1))   # NHWC
    dn = ("NHWC", "HWIO", "NHWC")

    def conv(inp, w_hwio, pad):
        return lax.conv_general_dilated(inp, w_hwio, (1, 1), pad,
                                        dimension_numbers=dn,
                                        precision=HIGH)

    def c1(inp, w, b):   # w: (I, O)
        return jax.nn.relu(conv(inp, w.reshape(1, 1, *w.shape), "VALID") + b[0])

    def c3(inp, w, b):   # w: (9, I, O)
        return jax.nn.relu(
            conv(inp, w.reshape(3, 3, w.shape[1], w.shape[2]), "SAME") + b[0])

    x0 = c1(x, p["w0"], p["b0"])
    x1 = c3(c1(x, p["w1a"], p["b1a"]), p["w1b"], p["b1b"])
    x2 = c3(c3(c1(x, p["w2a"], p["b2a"]), p["w2b"], p["b2b"]),
            p["w2c"], p["b2c"])
    cat = jnp.concatenate([x0, x1, x2], axis=-1)
    out = conv(cat, p["wc"].reshape(1, 1, C_CAT, C_IN), "VALID") + p["bc"][0]
    out = jax.nn.relu(out * SCALE + x)
    return jnp.transpose(out, (0, 3, 1, 2))   # NCHW


# ---------------------------------- main -----------------------------------
if __name__ == "__main__":
    key = jax.random.PRNGKey(0)
    kx, kp = jax.random.split(key)
    x = jax.random.normal(kx, (N, C_IN, H, W), jnp.float32)   # NCHW input
    params = make_params(kp)

    out = jax.jit(functools.partial(block35_pallas, params=params))(x)
    out = jax.block_until_ready(out)

    ref = jax.block_until_ready(block35_ref(x, params))
    max_err = float(jnp.max(jnp.abs(out - ref)))
    assert out.shape == (N, C_IN, H, W) and out.dtype == jnp.float32
    assert max_err < 2e-2, f"mismatch vs reference: {max_err}"

    print("KERNEL_OK")
</pallas_src>

<mosaic_0001>
module attributes {stable_mosaic.version = 11 : i64} {
  func.func @block35_kernel(%arg0: i32, %arg1: memref<1x16x16x256xf32, #tpu.memory_space<vmem>>, %arg2: memref<256x96xbf16, #tpu.memory_space<vmem>>, %arg3: memref<1x96xf32, #tpu.memory_space<vmem>>, %arg4: memref<288x32xbf16, #tpu.memory_space<vmem>>, %arg5: memref<1x32xf32, #tpu.memory_space<vmem>>, %arg6: memref<288x32xbf16, #tpu.memory_space<vmem>>, %arg7: memref<1x32xf32, #tpu.memory_space<vmem>>, %arg8: memref<288x32xbf16, #tpu.memory_space<vmem>>, %arg9: memref<1x32xf32, #tpu.memory_space<vmem>>, %arg10: memref<96x256xbf16, #tpu.memory_space<vmem>>, %arg11: memref<1x256xf32, #tpu.memory_space<vmem>>, %arg12: memref<1x16x16x256xf32, #tpu.memory_space<vmem>>, %arg13: memref<18x18x32xf32, #tpu.memory_space<vmem>>) attributes {dimension_semantics = [#tpu.dimension_semantics<parallel>], iteration_bounds = array<i64: 2>, scalar_prefetch = 0 : i64, scratch_operands = 1 : i64, tpu.core_type = #tpu.core_type<tc>, window_params = [{transform_indices = @transform_0, window_bounds = array<i64: 1, 16, 16, 256>}, {pipeline_mode = #tpu.pipeline_mode<synchronous>, transform_indices = @transform_1, window_bounds = array<i64: 256, 96>}, {pipeline_mode = #tpu.pipeline_mode<synchronous>, transform_indices = @transform_2, window_bounds = array<i64: 1, 96>}, {pipeline_mode = #tpu.pipeline_mode<synchronous>, transform_indices = @transform_3, window_bounds = array<i64: 288, 32>}, {pipeline_mode = #tpu.pipeline_mode<synchronous>, transform_indices = @transform_4, window_bounds = array<i64: 1, 32>}, {pipeline_mode = #tpu.pipeline_mode<synchronous>, transform_indices = @transform_5, window_bounds = array<i64: 288, 32>}, {pipeline_mode = #tpu.pipeline_mode<synchronous>, transform_indices = @transform_6, window_bounds = array<i64: 1, 32>}, {pipeline_mode = #tpu.pipeline_mode<synchronous>, transform_indices = @transform_7, window_bounds = array<i64: 288, 32>}, {pipeline_mode = #tpu.pipeline_mode<synchronous>, transform_indices = @transform_8, window_bounds = array<i64: 1, 32>}, {pipeline_mode = #tpu.pipeline_mode<synchronous>, transform_indices = @transform_9, window_bounds = array<i64: 96, 256>}, {pipeline_mode = #tpu.pipeline_mode<synchronous>, transform_indices = @transform_10, window_bounds = array<i64: 1, 256>}, {transform_indices = @transform_11, window_bounds = array<i64: 1, 16, 16, 256>}]} {
    %cst = arith.constant 0.000000e+00 : f32
    %0 = vector.broadcast %cst : f32 to vector<18x18x32xf32>
    %c0 = arith.constant 0 : index
    %c0_0 = arith.constant 0 : index
    %c0_1 = arith.constant 0 : index
    %1 = vector.load %arg13[%c0, %c0_0, %c0_1] : memref<18x18x32xf32, #tpu.memory_space<vmem>>, vector<18x18x32xf32>
    tpu.vector_store %arg13[%c0, %c0_0, %c0_1], %0 {strides = array<i32>} : memref<18x18x32xf32, #tpu.memory_space<vmem>>, vector<18x18x32xf32>,
    %c0_2 = arith.constant 0 : index
    %c0_3 = arith.constant 0 : index
    %c0_4 = arith.constant 0 : index
    %c0_5 = arith.constant 0 : index
    %2 = vector.load %arg1[%c0_2, %c0_3, %c0_4, %c0_5] : memref<1x16x16x256xf32, #tpu.memory_space<vmem>>, vector<1x16x16x256xf32>
    %3 = vector.shape_cast %2 : vector<1x16x16x256xf32> to vector<16x16x256xf32>
    %4 = vector.shape_cast %3 : vector<16x16x256xf32> to vector<256x256xf32>
    %5 = arith.truncf %4 : vector<256x256xf32> to vector<256x256xbf16>
    %c0_6 = arith.constant 0 : index
    %c0_7 = arith.constant 0 : index
    %6 = vector.load %arg2[%c0_6, %c0_7] : memref<256x96xbf16, #tpu.memory_space<vmem>>, vector<256x96xbf16>
    %cst_8 = arith.constant dense<0.000000e+00> : vector<256x96xf32>
    %7 = tpu.matmul %5, %6, %cst_8 {dimension_numbers = #tpu.dot_dimension_numbers<[1], [0], [0], [1], [0, 0, 1, 1], [], []>} : vector<256x256xbf16>, vector<256x96xbf16>, vector<256x96xf32> -> vector<256x96xf32>
    %c0_9 = arith.constant 0 : index
    %c0_10 = arith.constant 0 : index
    %8 = vector.load %arg3[%c0_9, %c0_10] : memref<1x96xf32, #tpu.memory_space<vmem>>, vector<1x96xf32>
    %9 = vector.broadcast %8 : vector<1x96xf32> to vector<256x96xf32>
    %10 = arith.addf %7, %9 : vector<256x96xf32>
    %cst_11 = arith.constant 0.000000e+00 : f32
    %11 = vector.broadcast %cst_11 : f32 to vector<256x96xf32>
    %12 = arith.maximumf %10, %11 : vector<256x96xf32>
    %13 = vector.extract_strided_slice %12 {offsets = [0, 0], sizes = [256, 32], strides = [1, 1]} : vector<256x96xf32> to vector<256x32xf32>
    %14 = vector.extract_strided_slice %12 {offsets = [0, 32], sizes = [256, 32], strides = [1, 1]} : vector<256x96xf32> to vector<256x32xf32>
    %15 = vector.extract_strided_slice %12 {offsets = [0, 64], sizes = [256, 32], strides = [1, 1]} : vector<256x96xf32> to vector<256x32xf32>
    %16 = vector.shape_cast %14 : vector<256x32xf32> to vector<16x16x32xf32>
    %c1 = arith.constant 1 : index
    %c1_12 = arith.constant 1 : index
    %c0_13 = arith.constant 0 : index
    %17 = vector.load %arg13[%c1, %c1_12, %c0_13] : memref<18x18x32xf32, #tpu.memory_space<vmem>>, vector<16x16x32xf32>
    tpu.vector_store %arg13[%c1, %c1_12, %c0_13], %16 {strides = array<i32>} : memref<18x18x32xf32, #tpu.memory_space<vmem>>, vector<16x16x32xf32>,
    %c0_14 = arith.constant 0 : index
    %c0_15 = arith.constant 0 : index
    %c0_16 = arith.constant 0 : index
    %18 = vector.load %arg13[%c0_14, %c0_15, %c0_16] : memref<18x18x32xf32, #tpu.memory_space<vmem>>, vector<16x16x32xf32>
    %19 = vector.shape_cast %18 : vector<16x16x32xf32> to vector<256x32xf32>
    %c0_17 = arith.constant 0 : index
    %c1_18 = arith.constant 1 : index
    %c0_19 = arith.constant 0 : index
    %20 = vector.load %arg13[%c0_17, %c1_18, %c0_19] : memref<18x18x32xf32, #tpu.memory_space<vmem>>, vector<16x16x32xf32>
    %21 = vector.shape_cast %20 : vector<16x16x32xf32> to vector<256x32xf32>
    %c0_20 = arith.constant 0 : index
    %c2 = arith.constant 2 : index
    %c0_21 = arith.constant 0 : index
    %22 = vector.load %arg13[%c0_20, %c2, %c0_21] : memref<18x18x32xf32, #tpu.memory_space<vmem>>, vector<16x16x32xf32>
    %23 = vector.shape_cast %22 : vector<16x16x32xf32> to vector<256x32xf32>
    %c1_22 = arith.constant 1 : index
    %c0_23 = arith.constant 0 : index
    %c0_24 = arith.constant 0 : index
    %24 = vector.load %arg13[%c1_22, %c0_23, %c0_24] : memref<18x18x32xf32, #tpu.memory_space<vmem>>, vector<16x16x32xf32>
    %25 = vector.shape_cast %24 : vector<16x16x32xf32> to vector<256x32xf32>
    %c1_25 = arith.constant 1 : index
    %c1_26 = arith.constant 1 : index
    %c0_27 = arith.constant 0 : index
    %26 = vector.load %arg13[%c1_25, %c1_26, %c0_27] : memref<18x18x32xf32, #tpu.memory_space<vmem>>, vector<16x16x32xf32>
    %27 = vector.shape_cast %26 : vector<16x16x32xf32> to vector<256x32xf32>
    %c1_28 = arith.constant 1 : index
    %c2_29 = arith.constant 2 : index
    %c0_30 = arith.constant 0 : index
    %28 = vector.load %arg13[%c1_28, %c2_29, %c0_30] : memref<18x18x32xf32, #tpu.memory_space<vmem>>, vector<16x16x32xf32>
    %29 = vector.shape_cast %28 : vector<16x16x32xf32> to vector<256x32xf32>
    %c2_31 = arith.constant 2 : index
    %c0_32 = arith.constant 0 : index
    %c0_33 = arith.constant 0 : index
    %30 = vector.load %arg13[%c2_31, %c0_32, %c0_33] : memref<18x18x32xf32, #tpu.memory_space<vmem>>, vector<16x16x32xf32>
    %31 = vector.shape_cast %30 : vector<16x16x32xf32> to vector<256x32xf32>
    %c2_34 = arith.constant 2 : index
    %c1_35 = arith.constant 1 : index
    %c0_36 = arith.constant 0 : index
    %32 = vector.load %arg13[%c2_34, %c1_35, %c0_36] : memref<18x18x32xf32, #tpu.memory_space<vmem>>, vector<16x16x32xf32>
    %33 = vector.shape_cast %32 : vector<16x16x32xf32> to vector<256x32xf32>
    %c2_37 = arith.constant 2 : index
    %c2_38 = arith.constant 2 : index
    %c0_39 = arith.constant 0 : index
    %34 = vector.load %arg13[%c2_37, %c2_38, %c0_39] : memref<18x18x32xf32, #tpu.memory_space<vmem>>, vector<16x16x32xf32>
    %35 = vector.shape_cast %34 : vector<16x16x32xf32> to vector<256x32xf32>
    %36 = tpu.concatenate %19, %21, %23, %25, %27, %29, %31, %33, %35 in 1 : vector<256x32xf32>, vector<256x32xf32>, vector<256x32xf32>, vector<256x32xf32>, vector<256x32xf32>, vector<256x32xf32>, vector<256x32xf32>, vector<256x32xf32>, vector<256x32xf32> -> vector<256x288xf32>
    %37 = arith.truncf %36 : vector<256x288xf32> to vector<256x288xbf16>
    %c0_40 = arith.constant 0 : index
    %c0_41 = arith.constant 0 : index
    %38 = vector.load %arg4[%c0_40, %c0_41] : memref<288x32xbf16, #tpu.memory_space<vmem>>, vector<288x32xbf16>
    %cst_42 = arith.constant dense<0.000000e+00> : vector<256x32xf32>
    %39 = tpu.matmul %37, %38, %cst_42 {dimension_numbers = #tpu.dot_dimension_numbers<[1], [0], [0], [1], [0, 0, 1, 1], [], []>} : vector<256x288xbf16>, vector<288x32xbf16>, vector<256x32xf32> -> vector<256x32xf32>
    %c0_43 = arith.constant 0 : index
    %c0_44 = arith.constant 0 : index
    %40 = vector.load %arg5[%c0_43, %c0_44] : memref<1x32xf32, #tpu.memory_space<vmem>>, vector<1x32xf32>
    %41 = vector.broadcast %40 : vector<1x32xf32> to vector<256x32xf32>
    %42 = arith.addf %39, %41 : vector<256x32xf32>
    %cst_45 = arith.constant 0.000000e+00 : f32
    %43 = vector.broadcast %cst_45 : f32 to vector<256x32xf32>
    %44 = arith.maximumf %42, %43 : vector<256x32xf32>
    %45 = vector.shape_cast %15 : vector<256x32xf32> to vector<16x16x32xf32>
    %c1_46 = arith.constant 1 : index
    %c1_47 = arith.constant 1 : index
    %c0_48 = arith.constant 0 : index
    %46 = vector.load %arg13[%c1_46, %c1_47, %c0_48] : memref<18x18x32xf32, #tpu.memory_space<vmem>>, vector<16x16x32xf32>
    tpu.vector_store %arg13[%c1_46, %c1_47, %c0_48], %45 {strides = array<i32>} : memref<18x18x32xf32, #tpu.memory_space<vmem>>, vector<16x16x32xf32>,
    %c0_49 = arith.constant 0 : index
    %c0_50 = arith.constant 0 : index
    %c0_51 = arith.constant 0 : index
    %47 = vector.load %arg13[%c0_49, %c0_50, %c0_51] : memref<18x18x32xf32, #tpu.memory_space<vmem>>, vector<16x16x32xf32>
    %48 = vector.shape_cast %47 : vector<16x16x32xf32> to vector<256x32xf32>
    %c0_52 = arith.constant 0 : index
    %c1_53 = arith.constant 1 : index
    %c0_54 = arith.constant 0 : index
    %49 = vector.load %arg13[%c0_52, %c1_53, %c0_54] : memref<18x18x32xf32, #tpu.memory_space<vmem>>, vector<16x16x32xf32>
    %50 = vector.shape_cast %49 : vector<16x16x32xf32> to vector<256x32xf32>
    %c0_55 = arith.constant 0 : index
    %c2_56 = arith.constant 2 : index
    %c0_57 = arith.constant 0 : index
    %51 = vector.load %arg13[%c0_55, %c2_56, %c0_57] : memref<18x18x32xf32, #tpu.memory_space<vmem>>, vector<16x16x32xf32>
    %52 = vector.shape_cast %51 : vector<16x16x32xf32> to vector<256x32xf32>
    %c1_58 = arith.constant 1 : index
    %c0_59 = arith.constant 0 : index
    %c0_60 = arith.constant 0 : index
    %53 = vector.load %arg13[%c1_58, %c0_59, %c0_60] : memref<18x18x32xf32, #tpu.memory_space<vmem>>, vector<16x16x32xf32>
    %54 = vector.shape_cast %53 : vector<16x16x32xf32> to vector<256x32xf32>
    %c1_61 = arith.constant 1 : index
    %c1_62 = arith.constant 1 : index
    %c0_63 = arith.constant 0 : index
    %55 = vector.load %arg13[%c1_61, %c1_62, %c0_63] : memref<18x18x32xf32, #tpu.memory_space<vmem>>, vector<16x16x32xf32>
    %56 = vector.shape_cast %55 : vector<16x16x32xf32> to vector<256x32xf32>
    %c1_64 = arith.constant 1 : index
    %c2_65 = arith.constant 2 : index
    %c0_66 = arith.constant 0 : index
    %57 = vector.load %arg13[%c1_64, %c2_65, %c0_66] : memref<18x18x32xf32, #tpu.memory_space<vmem>>, vector<16x16x32xf32>
    %58 = vector.shape_cast %57 : vector<16x16x32xf32> to vector<256x32xf32>
    %c2_67 = arith.constant 2 : index
    %c0_68 = arith.constant 0 : index
    %c0_69 = arith.constant 0 : index
    %59 = vector.load %arg13[%c2_67, %c0_68, %c0_69] : memref<18x18x32xf32, #tpu.memory_space<vmem>>, vector<16x16x32xf32>
    %60 = vector.shape_cast %59 : vector<16x16x32xf32> to vector<256x32xf32>
    %c2_70 = arith.constant 2 : index
    %c1_71 = arith.constant 1 : index
    %c0_72 = arith.constant 0 : index
    %61 = vector.load %arg13[%c2_70, %c1_71, %c0_72] : memref<18x18x32xf32, #tpu.memory_space<vmem>>, vector<16x16x32xf32>
    %62 = vector.shape_cast %61 : vector<16x16x32xf32> to vector<256x32xf32>
    %c2_73 = arith.constant 2 : index
    %c2_74 = arith.constant 2 : index
    %c0_75 = arith.constant 0 : index
    %63 = vector.load %arg13[%c2_73, %c2_74, %c0_75] : memref<18x18x32xf32, #tpu.memory_space<vmem>>, vector<16x16x32xf32>
    %64 = vector.shape_cast %63 : vector<16x16x32xf32> to vector<256x32xf32>
    %65 = tpu.concatenate %48, %50, %52, %54, %56, %58, %60, %62, %64 in 1 : vector<256x32xf32>, vector<256x32xf32>, vector<256x32xf32>, vector<256x32xf32>, vector<256x32xf32>, vector<256x32xf32>, vector<256x32xf32>, vector<256x32xf32>, vector<256x32xf32> -> vector<256x288xf32>
    %66 = arith.truncf %65 : vector<256x288xf32> to vector<256x288xbf16>
    %c0_76 = arith.constant 0 : index
    %c0_77 = arith.constant 0 : index
    %67 = vector.load %arg6[%c0_76, %c0_77] : memref<288x32xbf16, #tpu.memory_space<vmem>>, vector<288x32xbf16>
    %cst_78 = arith.constant dense<0.000000e+00> : vector<256x32xf32>
    %68 = tpu.matmul %66, %67, %cst_78 {dimension_numbers = #tpu.dot_dimension_numbers<[1], [0], [0], [1], [0, 0, 1, 1], [], []>} : vector<256x288xbf16>, vector<288x32xbf16>, vector<256x32xf32> -> vector<256x32xf32>
    %c0_79 = arith.constant 0 : index
    %c0_80 = arith.constant 0 : index
    %69 = vector.load %arg7[%c0_79, %c0_80] : memref<1x32xf32, #tpu.memory_space<vmem>>, vector<1x32xf32>
    %70 = vector.broadcast %69 : vector<1x32xf32> to vector<256x32xf32>
    %71 = arith.addf %68, %70 : vector<256x32xf32>
    %cst_81 = arith.constant 0.000000e+00 : f32
    %72 = vector.broadcast %cst_81 : f32 to vector<256x32xf32>
    %73 = arith.maximumf %71, %72 : vector<256x32xf32>
    %74 = vector.shape_cast %73 : vector<256x32xf32> to vector<16x16x32xf32>
    %c1_82 = arith.constant 1 : index
    %c1_83 = arith.constant 1 : index
    %c0_84 = arith.constant 0 : index
    %75 = vector.load %arg13[%c1_82, %c1_83, %c0_84] : memref<18x18x32xf32, #tpu.memory_space<vmem>>, vector<16x16x32xf32>
    tpu.vector_store %arg13[%c1_82, %c1_83, %c0_84], %74 {strides = array<i32>} : memref<18x18x32xf32, #tpu.memory_space<vmem>>, vector<16x16x32xf32>,
    %c0_85 = arith.constant 0 : index
    %c0_86 = arith.constant 0 : index
    %c0_87 = arith.constant 0 : index
    %76 = vector.load %arg13[%c0_85, %c0_86, %c0_87] : memref<18x18x32xf32, #tpu.memory_space<vmem>>, vector<16x16x32xf32>
    %77 = vector.shape_cast %76 : vector<16x16x32xf32> to vector<256x32xf32>
    %c0_88 = arith.constant 0 : index
    %c1_89 = arith.constant 1 : index
    %c0_90 = arith.constant 0 : index
    %78 = vector.load %arg13[%c0_88, %c1_89, %c0_90] : memref<18x18x32xf32, #tpu.memory_space<vmem>>, vector<16x16x32xf32>
    %79 = vector.shape_cast %78 : vector<16x16x32xf32> to vector<256x32xf32>
    %c0_91 = arith.constant 0 : index
    %c2_92 = arith.constant 2 : index
    %c0_93 = arith.constant 0 : index
    %80 = vector.load %arg13[%c0_91, %c2_92, %c0_93] : memref<18x18x32xf32, #tpu.memory_space<vmem>>, vector<16x16x32xf32>
    %81 = vector.shape_cast %80 : vector<16x16x32xf32> to vector<256x32xf32>
    %c1_94 = arith.constant 1 : index
    %c0_95 = arith.constant 0 : index
    %c0_96 = arith.constant 0 : index
    %82 = vector.load %arg13[%c1_94, %c0_95, %c0_96] : memref<18x18x32xf32, #tpu.memory_space<vmem>>, vector<16x16x32xf32>
    %83 = vector.shape_cast %82 : vector<16x16x32xf32> to vector<256x32xf32>
    %c1_97 = arith.constant 1 : index
    %c1_98 = arith.constant 1 : index
    %c0_99 = arith.constant 0 : index
    %84 = vector.load %arg13[%c1_97, %c1_98, %c0_99] : memref<18x18x32xf32, #tpu.memory_space<vmem>>, vector<16x16x32xf32>
    %85 = vector.shape_cast %84 : vector<16x16x32xf32> to vector<256x32xf32>
    %c1_100 = arith.constant 1 : index
    %c2_101 = arith.constant 2 : index
    %c0_102 = arith.constant 0 : index
    %86 = vector.load %arg13[%c1_100, %c2_101, %c0_102] : memref<18x18x32xf32, #tpu.memory_space<vmem>>, vector<16x16x32xf32>
    %87 = vector.shape_cast %86 : vector<16x16x32xf32> to vector<256x32xf32>
    %c2_103 = arith.constant 2 : index
    %c0_104 = arith.constant 0 : index
    %c0_105 = arith.constant 0 : index
    %88 = vector.load %arg13[%c2_103, %c0_104, %c0_105] : memref<18x18x32xf32, #tpu.memory_space<vmem>>, vector<16x16x32xf32>
    %89 = vector.shape_cast %88 : vector<16x16x32xf32> to vector<256x32xf32>
    %c2_106 = arith.constant 2 : index
    %c1_107 = arith.constant 1 : index
    %c0_108 = arith.constant 0 : index
    %90 = vector.load %arg13[%c2_106, %c1_107, %c0_108] : memref<18x18x32xf32, #tpu.memory_space<vmem>>, vector<16x16x32xf32>
    %91 = vector.shape_cast %90 : vector<16x16x32xf32> to vector<256x32xf32>
    %c2_109 = arith.constant 2 : index
    %c2_110 = arith.constant 2 : index
    %c0_111 = arith.constant 0 : index
    %92 = vector.load %arg13[%c2_109, %c2_110, %c0_111] : memref<18x18x32xf32, #tpu.memory_space<vmem>>, vector<16x16x32xf32>
    %93 = vector.shape_cast %92 : vector<16x16x32xf32> to vector<256x32xf32>
    %94 = tpu.concatenate %77, %79, %81, %83, %85, %87, %89, %91, %93 in 1 : vector<256x32xf32>, vector<256x32xf32>, vector<256x32xf32>, vector<256x32xf32>, vector<256x32xf32>, vector<256x32xf32>, vector<256x32xf32>, vector<256x32xf32>, vector<256x32xf32> -> vector<256x288xf32>
    %95 = arith.truncf %94 : vector<256x288xf32> to vector<256x288xbf16>
    %c0_112 = arith.constant 0 : index
    %c0_113 = arith.constant 0 : index
    %96 = vector.load %arg8[%c0_112, %c0_113] : memref<288x32xbf16, #tpu.memory_space<vmem>>, vector<288x32xbf16>
    %cst_114 = arith.constant dense<0.000000e+00> : vector<256x32xf32>
    %97 = tpu.matmul %95, %96, %cst_114 {dimension_numbers = #tpu.dot_dimension_numbers<[1], [0], [0], [1], [0, 0, 1, 1], [], []>} : vector<256x288xbf16>, vector<288x32xbf16>, vector<256x32xf32> -> vector<256x32xf32>
    %c0_115 = arith.constant 0 : index
    %c0_116 = arith.constant 0 : index
    %98 = vector.load %arg9[%c0_115, %c0_116] : memref<1x32xf32, #tpu.memory_space<vmem>>, vector<1x32xf32>
    %99 = vector.broadcast %98 : vector<1x32xf32> to vector<256x32xf32>
    %100 = arith.addf %97, %99 : vector<256x32xf32>
    %cst_117 = arith.constant 0.000000e+00 : f32
    %101 = vector.broadcast %cst_117 : f32 to vector<256x32xf32>
    %102 = arith.maximumf %100, %101 : vector<256x32xf32>
    %103 = tpu.concatenate %13, %44, %102 in 1 : vector<256x32xf32>, vector<256x32xf32>, vector<256x32xf32> -> vector<256x96xf32>
    %104 = arith.truncf %103 : vector<256x96xf32> to vector<256x96xbf16>
    %c0_118 = arith.constant 0 : index
    %c0_119 = arith.constant 0 : index
    %105 = vector.load %arg10[%c0_118, %c0_119] : memref<96x256xbf16, #tpu.memory_space<vmem>>, vector<96x256xbf16>
    %cst_120 = arith.constant dense<0.000000e+00> : vector<256x256xf32>
    %106 = tpu.matmul %104, %105, %cst_120 {dimension_numbers = #tpu.dot_dimension_numbers<[1], [0], [0], [1], [0, 0, 1, 1], [], []>} : vector<256x96xbf16>, vector<96x256xbf16>, vector<256x256xf32> -> vector<256x256xf32>
    %c0_121 = arith.constant 0 : index
    %c0_122 = arith.constant 0 : index
    %107 = vector.load %arg11[%c0_121, %c0_122] : memref<1x256xf32, #tpu.memory_space<vmem>>, vector<1x256xf32>
    %108 = vector.broadcast %107 : vector<1x256xf32> to vector<256x256xf32>
    %109 = arith.addf %106, %108 : vector<256x256xf32>
    %cst_123 = arith.constant 1.700000e-01 : f32
    %110 = vector.broadcast %cst_123 : f32 to vector<256x256xf32>
    %111 = arith.mulf %109, %110 : vector<256x256xf32>
    %112 = arith.addf %111, %4 : vector<256x256xf32>
    %cst_124 = arith.constant 0.000000e+00 : f32
    %113 = vector.broadcast %cst_124 : f32 to vector<256x256xf32>
    %114 = arith.maximumf %112, %113 : vector<256x256xf32>
    %115 = vector.shape_cast %114 : vector<256x256xf32> to vector<16x16x256xf32>
    %c0_125 = arith.constant 0 : index
    %c0_126 = arith.constant 0 : index
    %c0_127 = arith.constant 0 : index
    %c0_128 = arith.constant 0 : index
    %116 = vector.load %arg12[%c0_125, %c0_126, %c0_127, %c0_128] : memref<1x16x16x256xf32, #tpu.memory_space<vmem>>, vector<1x16x16x256xf32>
    %117 = vector.shape_cast %116 : vector<1x16x16x256xf32> to vector<16x16x256xf32>
    %118 = vector.shape_cast %115 : vector<16x16x256xf32> to vector<1x16x16x256xf32>
    tpu.vector_store %arg12[%c0_125, %c0_126, %c0_127, %c0_128], %118 {strides = array<i32>} : memref<1x16x16x256xf32, #tpu.memory_space<vmem>>, vector<1x16x16x256xf32>,
    return
  }
  func.func @transform_0(%arg0: i32) -> (i32, i32, i32, i32) {
    %c0_i32 = arith.constant 0 : i32
    %c0_i32_0 = arith.constant 0 : i32
    %c0_i32_1 = arith.constant 0 : i32
    %c0_i32_2 = arith.constant 0 : i32
    return %arg0, %c0_i32, %c0_i32_0, %c0_i32_1 : i32, i32, i32, i32
  }
  func.func @transform_1(%arg0: i32) -> (i32, i32) {
    %c0_i32 = arith.constant 0 : i32
    %c0_i32_0 = arith.constant 0 : i32
    %c0_i32_1 = arith.constant 0 : i32
    return %c0_i32, %c0_i32_0 : i32, i32
  }
  func.func @transform_2(%arg0: i32) -> (i32, i32) {
    %c0_i32 = arith.constant 0 : i32
    %c0_i32_0 = arith.constant 0 : i32
    %c0_i32_1 = arith.constant 0 : i32
    return %c0_i32, %c0_i32_0 : i32, i32
  }
  func.func @transform_3(%arg0: i32) -> (i32, i32) {
    %c0_i32 = arith.constant 0 : i32
    %c0_i32_0 = arith.constant 0 : i32
    %c0_i32_1 = arith.constant 0 : i32
    return %c0_i32, %c0_i32_0 : i32, i32
  }
  func.func @transform_4(%arg0: i32) -> (i32, i32) {
    %c0_i32 = arith.constant 0 : i32
    %c0_i32_0 = arith.constant 0 : i32
    %c0_i32_1 = arith.constant 0 : i32
    return %c0_i32, %c0_i32_0 : i32, i32
  }
  func.func @transform_5(%arg0: i32) -> (i32, i32) {
    %c0_i32 = arith.constant 0 : i32
    %c0_i32_0 = arith.constant 0 : i32
    %c0_i32_1 = arith.constant 0 : i32
    return %c0_i32, %c0_i32_0 : i32, i32
  }
  func.func @transform_6(%arg0: i32) -> (i32, i32) {
    %c0_i32 = arith.constant 0 : i32
    %c0_i32_0 = arith.constant 0 : i32
    %c0_i32_1 = arith.constant 0 : i32
    return %c0_i32, %c0_i32_0 : i32, i32
  }
  func.func @transform_7(%arg0: i32) -> (i32, i32) {
    %c0_i32 = arith.constant 0 : i32
    %c0_i32_0 = arith.constant 0 : i32
    %c0_i32_1 = arith.constant 0 : i32
    return %c0_i32, %c0_i32_0 : i32, i32
  }
  func.func @transform_8(%arg0: i32) -> (i32, i32) {
    %c0_i32 = arith.constant 0 : i32
    %c0_i32_0 = arith.constant 0 : i32
    %c0_i32_1 = arith.constant 0 : i32
    return %c0_i32, %c0_i32_0 : i32, i32
  }
  func.func @transform_9(%arg0: i32) -> (i32, i32) {
    %c0_i32 = arith.constant 0 : i32
    %c0_i32_0 = arith.constant 0 : i32
    %c0_i32_1 = arith.constant 0 : i32
    return %c0_i32, %c0_i32_0 : i32, i32
  }
  func.func @transform_10(%arg0: i32) -> (i32, i32) {
    %c0_i32 = arith.constant 0 : i32
    %c0_i32_0 = arith.constant 0 : i32
    %c0_i32_1 = arith.constant 0 : i32
    return %c0_i32, %c0_i32_0 : i32, i32
  }
  func.func @transform_11(%arg0: i32) -> (i32, i32, i32, i32) {
    %c0_i32 = arith.constant 0 : i32
    %c0_i32_0 = arith.constant 0 : i32
    %c0_i32_1 = arith.constant 0 : i32
    %c0_i32_2 = arith.constant 0 : i32
    return %arg0, %c0_i32, %c0_i32_0, %c0_i32_1 : i32, i32, i32, i32
  }
}

</mosaic_0001>

<llo_original>
// kernel: block35_pallas.1
$region0: #{block35_pallas.1}
  #allocation0 [shape = 'u32[]', space=smem, size = 0x4, offset = 0x4, fixed_abs, tag = 'smem constant byte address 0x4 - core index']
  #allocation1 [shape = 'u32[144,128]{1,0:T(1,128)}', space=vmem, size = 0x12000, scoped, tag = 'internal scratch']
  #allocation2 [shape = 'f32[18,18,32]{2,1,0:T(8,128)}', space=vmem, size = 0x36000, scoped, tag = 'scratch operand']
  %s0 = inlined_call_operand.hbm [shape: f32[2,16,16,256], index: 0, kind: input, shape index: {}]
  %s1 = inlined_call_operand.hbm [shape: bf16[256,96], index: 1, kind: input, shape index: {}]
  %s2 = inlined_call_operand.vmem [shape: f32[1,96], index: 2, kind: input, shape index: {}]
  %s3 = inlined_call_operand.vmem [shape: bf16[288,32], index: 3, kind: input, shape index: {}]
  %s4 = inlined_call_operand.vmem [shape: f32[1,32], index: 4, kind: input, shape index: {}]
  %s5 = inlined_call_operand.hbm [shape: bf16[288,32], index: 5, kind: input, shape index: {}]
  %s6 = inlined_call_operand.vmem [shape: f32[1,32], index: 6, kind: input, shape index: {}]
  %s7 = inlined_call_operand.hbm [shape: bf16[288,32], index: 7, kind: input, shape index: {}]
  %s8 = inlined_call_operand.vmem [shape: f32[1,32], index: 8, kind: input, shape index: {}]
  %s9 = inlined_call_operand.vmem [shape: bf16[96,256], index: 9, kind: input, shape index: {}]
  %s10 = inlined_call_operand.vmem [shape: f32[1,256], index: 10, kind: input, shape index: {}]
  %s11 = inlined_call_operand.hbm [shape: f32[2,16,16,256], index: 11, kind: output, shape index: {}]
  %s12 = sld [smem:[#allocation0]]
  $region93: #{block35_pallas.1} parent=0
    _
  %s14 = ssub.s32 1, %s12
  %s15 = scalar_select 0, %s14, %s12
  $region1: #{block35_pallas.1} parent=0
    #allocation3 [shape = 'u8[524288]{0}', space=vmem, size = 0x80000, scoped, tag = 'input window, operand 0']
    #allocation4 [shape = 's32[2]{0}', space=sflag, size = 0x8, scoped, tag = 'scoped memory for block35_pallas.1']
    #allocation5 [shape = 's32[2]{0}', space=sflag, size = 0x8, scoped, tag = 'scoped memory for block35_pallas.1']
    #allocation6 [shape = 'u8[65536]{0}', space=vmem, size = 0x10000, scoped, tag = 'input window, operand 1, single buffered']
    #allocation7 [shape = 's32[1]{0}', space=sflag, size = 0x4, scoped, tag = 'scoped memory for block35_pallas.1']
    #allocation8 [shape = 'u8[73728]{0}', space=vmem, size = 0x12000, scoped, tag = 'input window, operand 5, single buffered']
    #allocation9 [shape = 'u8[73728]{0}', space=vmem, size = 0x12000, scoped, tag = 'input window, operand 7, single buffered']
    #allocation10 [shape = 's32[1]{0}', space=sflag, size = 0x4, scoped, tag = 'scoped memory for block35_pallas.1']
    #allocation11 [shape = 'u8[524288]{0}', space=vmem, size = 0x80000, scoped, tag = 'output window, operand 0']
    %16 = vsyncpa [#allocation4], 0
    %s17 = scalar_lea.sflag [#allocation4], 1
    %18 = vsyncpa %s17, 0
    %19 = vsyncpa [#allocation7], 0
    %20 = vsyncpa [#allocation10], 0
    %21 = vsyncpa [#allocation5], 0
    %s22 = scalar_lea.sflag [#allocation5], 1
    %23 = vsyncpa %s22, 0
    loop: start=0, step=1, limit=4
    $region2: #{block35_pallas.1} parent=1 // loop_pre_header
      _
    $region3: #{block35_pallas.1} parent=1 // loop_header
      %s25 = sphi 0, %s29
      %p26 = scmp.ge.s32.totalorder %s25, 4
      %s35 = sphi 0, %s37
      %s38 = sphi 0, %s35
      %s39 = sphi 0, %s38
      %s55 = sphi 0, %s39
      %s59 = sphi 0, %s59
      %s61 = sphi 0, %s59
      %s62 = sphi 0, %s61
      %s76 = sphi 0, %s62
      %s80 = sphi 0, %s80
      %s82 = sphi 0, %s80
      %s83 = sphi 0, %s82
      %s97 = sphi 0, %s83
      %s101 = sphi 0, %s101
      %s103 = sphi 0, %s101
      %s104 = sphi 0, %s103
      %s118 = sphi 0, %s104
      %s122 = sphi 0, %s122
      %s124 = sphi 0, %s122
      %s125 = sphi 0, %s124
      %s139 = sphi 0, %s125
      %s143 = sphi 0, %s143
      %s145 = sphi 0, %s143
      %s146 = sphi 0, %s145
      %s160 = sphi 0, %s146
      %s164 = sphi 0, %s164
      %s166 = sphi 0, %s164
      %s167 = sphi 0, %s166
      %s181 = sphi 0, %s167
      %s185 = sphi 0, %s185
      %s187 = sphi 0, %s185
      %s188 = sphi 0, %s187
      %s202 = sphi 0, %s188
      %s206 = sphi 0, %s206
      %s208 = sphi 0, %s206
      %s209 = sphi 0, %s208
      %s223 = sphi 0, %s209
      %s227 = sphi 0, %s227
      %s229 = sphi 0, %s227
      %s230 = sphi 0, %s229
      %s244 = sphi 0, %s230
      %s248 = sphi 0, %s248
      %s250 = sphi 0, %s248
      %s251 = sphi 0, %s250
      %s265 = sphi 0, %s251
      %s271 = sphi 0, %s273
      %s274 = sphi 0, %s271
      %s275 = sphi 0, %s274
      %s291 = sphi 0, %s275
    $region4: #{block35_pallas.1} parent=1 // loop_header_branch
      %28 = sbr.rel (%p26) target = $region8
    $region5: #{block35_pallas.1} parent=1 // loop_body
      %s30 = ssub.s32 %s25, 1
      %s31 = ssub.s32 %s25, 2
      %s32 = sadd.s32 %s25, 1
      %s33 = ssub.s32 %s25, %s32
      %p34 = scmp.eq.s32.totalorder %s33, 0
      %s36 = sadd.s32 %s35, 1
      %s37 = scalar_select %p34, %s35, %s36
      %p40 = pneg %p34
      %p41 = scmp.eq.s32.totalorder %s25, 1
      %p42 = por %p40, %p41
      %p43 = scmp.ne.s32.totalorder %s35, %s38
      %p44 = scmp.eq.s32.totalorder %s25, 0
      %p45 = por %p43, %p44
      %p46 = scmp.ne.s32.totalorder %s35, %s38
      %p47 = scmp.eq.s32.totalorder %s30, 1
      %p48 = por %p46, %p47
      %p49 = scmp.ne.s32.totalorder %s38, %s39
      %p50 = scmp.eq.s32.totalorder %s30, 0
      %p51 = por %p49, %p50
      %p52 = scmp.ne.s32.totalorder %s38, %s39
      %p53 = scmp.eq.s32.totalorder %s31, 1
      %p54 = por %p52, %p53
      %p56 = scmp.ne.s32.totalorder %s39, %s55
      %p57 = scmp.eq.s32.totalorder %s31, 0
      %p58 = por %p56, %p57
      %s60 = sadd.s32 %s59, 1
      %p63 = scmp.eq.s32.totalorder %s25, 1
      %p64 = scmp.ne.s32.totalorder %s59, %s61
      %p65 = scmp.eq.s32.totalorder %s25, 0
      %p66 = por %p64, %p65
      %p67 = scmp.ne.s32.totalorder %s59, %s61
      %p68 = scmp.eq.s32.totalorder %s30, 1
      %p69 = por %p67, %p68
      %p70 = scmp.ne.s32.totalorder %s61, %s62
      %p71 = scmp.eq.s32.totalorder %s30, 0
      %p72 = por %p70, %p71
      %p73 = scmp.ne.s32.totalorder %s61, %s62
      %p74 = scmp.eq.s32.totalorder %s31, 1
      %p75 = por %p73, %p74
      %p77 = scmp.ne.s32.totalorder %s62, %s76
      %p78 = scmp.eq.s32.totalorder %s31, 0
      %p79 = por %p77, %p78
      %s81 = sadd.s32 %s80, 1
      %p84 = scmp.eq.s32.totalorder %s25, 1
      %p85 = scmp.ne.s32.totalorder %s80, %s82
      %p86 = scmp.eq.s32.totalorder %s25, 0
      %p87 = por %p85, %p86
      %p88 = scmp.ne.s32.totalorder %s80, %s82
      %p89 = scmp.eq.s32.totalorder %s30, 1
      %p90 = por %p88, %p89
      %p91 = scmp.ne.s32.totalorder %s82, %s83
      %p92 = scmp.eq.s32.totalorder %s30, 0
      %p93 = por %p91, %p92
      %p94 = scmp.ne.s32.totalorder %s82, %s83
      %p95 = scmp.eq.s32.totalorder %s31, 1
      %p96 = por %p94, %p95
      %p98 = scmp.ne.s32.totalorder %s83, %s97
      %p99 = scmp.eq.s32.totalorder %s31, 0
      %p100 = por %p98, %p99
      %s102 = sadd.s32 %s101, 1
      %p105 = scmp.eq.s32.totalorder %s25, 1
      %p106 = scmp.ne.s32.totalorder %s101, %s103
      %p107 = scmp.eq.s32.totalorder %s25, 0
      %p108 = por %p106, %p107
      %p109 = scmp.ne.s32.totalorder %s101, %s103
      %p110 = scmp.eq.s32.totalorder %s30, 1
      %p111 = por %p109, %p110
      %p112 = scmp.ne.s32.totalorder %s103, %s104
      %p113 = scmp.eq.s32.totalorder %s30, 0
      %p114 = por %p112, %p113
      %p115 = scmp.ne.s32.totalorder %s103, %s104
      %p116 = scmp.eq.s32.totalorder %s31, 1
      %p117 = por %p115, %p116
      %p119 = scmp.ne.s32.totalorder %s104, %s118
      %p120 = scmp.eq.s32.totalorder %s31, 0
      %p121 = por %p119, %p120
      %s123 = sadd.s32 %s122, 1
      %p126 = scmp.eq.s32.totalorder %s25, 1
      %p127 = scmp.ne.s32.totalorder %s122, %s124
      %p128 = scmp.eq.s32.totalorder %s25, 0
      %p129 = por %p127, %p128
      %p130 = scmp.ne.s32.totalorder %s122, %s124
      %p131 = scmp.eq.s32.totalorder %s30, 1
      %p132 = por %p130, %p131
      %p133 = scmp.ne.s32.totalorder %s124, %s125
      %p134 = scmp.eq.s32.totalorder %s30, 0
      %p135 = por %p133, %p134
      %p136 = scmp.ne.s32.totalorder %s124, %s125
      %p137 = scmp.eq.s32.totalorder %s31, 1
      %p138 = por %p136, %p137
      %p140 = scmp.ne.s32.totalorder %s125, %s139
      %p141 = scmp.eq.s32.totalorder %s31, 0
      %p142 = por %p140, %p141
      %s144 = sadd.s32 %s143, 1
      %p147 = scmp.eq.s32.totalorder %s25, 1
      %p148 = scmp.ne.s32.totalorder %s143, %s145
      %p149 = scmp.eq.s32.totalorder %s25, 0
      %p150 = por %p148, %p149
      %p151 = scmp.ne.s32.totalorder %s143, %s145
      %p152 = scmp.eq.s32.totalorder %s30, 1
      %p153 = por %p151, %p152
      %p154 = scmp.ne.s32.totalorder %s145, %s146
      %p155 = scmp.eq.s32.totalorder %s30, 0
      %p156 = por %p154, %p155
      %p157 = scmp.ne.s32.totalorder %s145, %s146
      %p158 = scmp.eq.s32.totalorder %s31, 1
      %p159 = por %p157, %p158
      %p161 = scmp.ne.s32.totalorder %s146, %s160
      %p162 = scmp.eq.s32.totalorder %s31, 0
      %p163 = por %p161, %p162
      %s165 = sadd.s32 %s164, 1
      %p168 = scmp.eq.s32.totalorder %s25, 1
      %p169 = scmp.ne.s32.totalorder %s164, %s166
      %p170 = scmp.eq.s32.totalorder %s25, 0
      %p171 = por %p169, %p170
      %p172 = scmp.ne.s32.totalorder %s164, %s166
      %p173 = scmp.eq.s32.totalorder %s30, 1
      %p174 = por %p172, %p173
      %p175 = scmp.ne.s32.totalorder %s166, %s167
      %p176 = scmp.eq.s32.totalorder %s30, 0
      %p177 = por %p175, %p176
      %p178 = scmp.ne.s32.totalorder %s166, %s167
      %p179 = scmp.eq.s32.totalorder %s31, 1
      %p180 = por %p178, %p179
      %p182 = scmp.ne.s32.totalorder %s167, %s181
      %p183 = scmp.eq.s32.totalorder %s31, 0
      %p184 = por %p182, %p183
      %s186 = sadd.s32 %s185, 1
      %p189 = scmp.eq.s32.totalorder %s25, 1
      %p190 = scmp.ne.s32.totalorder %s185, %s187
      %p191 = scmp.eq.s32.totalorder %s25, 0
      %p192 = por %p190, %p191
      %p193 = scmp.ne.s32.totalorder %s185, %s187
      %p194 = scmp.eq.s32.totalorder %s30, 1
      %p195 = por %p193, %p194
      %p196 = scmp.ne.s32.totalorder %s187, %s188
      %p197 = scmp.eq.s32.totalorder %s30, 0
      %p198 = por %p196, %p197
      %p199 = scmp.ne.s32.totalorder %s187, %s188
      %p200 = scmp.eq.s32.totalorder %s31, 1
      %p201 = por %p199, %p200
      %p203 = scmp.ne.s32.totalorder %s188, %s202
      %p204 = scmp.eq.s32.totalorder %s31, 0
      %p205 = por %p203, %p204
      %s207 = sadd.s32 %s206, 1
      %p210 = scmp.eq.s32.totalorder %s25, 1
      %p211 = scmp.ne.s32.totalorder %s206, %s208
      %p212 = scmp.eq.s32.totalorder %s25, 0
      %p213 = por %p211, %p212
      %p214 = scmp.ne.s32.totalorder %s206, %s208
      %p215 = scmp.eq.s32.totalorder %s30, 1
      %p216 = por %p214, %p215
      %p217 = scmp.ne.s32.totalorder %s208, %s209
      %p218 = scmp.eq.s32.totalorder %s30, 0
      %p219 = por %p217, %p218
      %p220 = scmp.ne.s32.totalorder %s208, %s209
      %p221 = scmp.eq.s32.totalorder %s31, 1
      %p222 = por %p220, %p221
      %p224 = scmp.ne.s32.totalorder %s209, %s223
      %p225 = scmp.eq.s32.totalorder %s31, 0
      %p226 = por %p224, %p225
      %s228 = sadd.s32 %s227, 1
      %p231 = scmp.eq.s32.totalorder %s25, 1
      %p232 = scmp.ne.s32.totalorder %s227, %s229
      %p233 = scmp.eq.s32.totalorder %s25, 0
      %p234 = por %p232, %p233
      %p235 = scmp.ne.s32.totalorder %s227, %s229
      %p236 = scmp.eq.s32.totalorder %s30, 1
      %p237 = por %p235, %p236
      %p238 = scmp.ne.s32.totalorder %s229, %s230
      %p239 = scmp.eq.s32.totalorder %s30, 0
      %p240 = por %p238, %p239
      %p241 = scmp.ne.s32.totalorder %s229, %s230
      %p242 = scmp.eq.s32.totalorder %s31, 1
      %p243 = por %p241, %p242
      %p245 = scmp.ne.s32.totalorder %s230, %s244
      %p246 = scmp.eq.s32.totalorder %s31, 0
      %p247 = por %p245, %p246
      %s249 = sadd.s32 %s248, 1
      %p252 = scmp.eq.s32.totalorder %s25, 1
      %p253 = scmp.ne.s32.totalorder %s248, %s250
      %p254 = scmp.eq.s32.totalorder %s25, 0
      %p255 = por %p253, %p254
      %p256 = scmp.ne.s32.totalorder %s248, %s250
      %p257 = scmp.eq.s32.totalorder %s30, 1
      %p258 = por %p256, %p257
      %p259 = scmp.ne.s32.totalorder %s250, %s251
      %p260 = scmp.eq.s32.totalorder %s30, 0
      %p261 = por %p259, %p260
      %p262 = scmp.ne.s32.totalorder %s250, %s251
      %p263 = scmp.eq.s32.totalorder %s31, 1
      %p264 = por %p262, %p263
      %p266 = scmp.ne.s32.totalorder %s251, %s265
      %p267 = scmp.eq.s32.totalorder %s31, 0
      %p268 = por %p266, %p267
      %s269 = ssub.s32 %s25, %s32
      %p270 = scmp.eq.s32.totalorder %s269, 0
      %s272 = sadd.s32 %s271, 1
      %s273 = scalar_select %p270, %s271, %s272
      %p276 = pneg %p270
      %p277 = scmp.eq.s32.totalorder %s25, 1
      %p278 = por %p276, %p277
      %p279 = scmp.ne.s32.totalorder %s271, %s274
      %p280 = scmp.eq.s32.totalorder %s25, 0
      %p281 = por %p279, %p280
      %p282 = scmp.ne.s32.totalorder %s271, %s274
      %p283 = scmp.eq.s32.totalorder %s30, 1
      %p284 = por %p282, %p283
      %p285 = scmp.ne.s32.totalorder %s274, %s275
      %p286 = scmp.eq.s32.totalorder %s30, 0
      %p287 = por %p285, %p286
      %p288 = scmp.ne.s32.totalorder %s274, %s275
      %p289 = scmp.eq.s32.totalorder %s31, 1
      %p290 = por %p288, %p289
      %p292 = scmp.ne.s32.totalorder %s275, %s291
      %p293 = scmp.eq.s32.totalorder %s31, 0
      %p294 = por %p292, %p293
      %p295 = scmp.le.s32.totalorder 1, %s25
      %p296 = scmp.lt.s32.totalorder %s25, 3
      %p297 = pnand %p295, %p296
      %p298 = pneg %p297
      // Predicated region
      $region9: #{block35_pallas.1} parent=5 // pred_check
        _
      $region10: #{block35_pallas.1} parent=5 // pred_check_branch
        %300 = sbr.rel (%p297) target = $region12
      $region11: #{block35_pallas.1} parent=5 // pred_region
        %s301 = ssub.s32 %s25, 1
        // Predicated region
        $region13: #{block35_pallas.1} parent=11 // pred_check
          %p302 = pneg %p72
        $region14: #{block35_pallas.1} parent=11 // pred_check_branch
          %304 = sbr.rel (%p302) target = $region16
        $region15: #{block35_pallas.1} parent=11 // pred_region
          %s306 = ssub.s32 2048, 2048
          %307 = vsyncadd [#allocation7], %s306
          %s308 = sshll.u32 [#allocation6], 4
          %s309 = int_to_ptr.vmem [resolvable:$true] %s308
          %314 = dma.hbm_to_vmem [thread:$0]  %s1, 2048, %s309, [#allocation7], 64, 64, 4
        $region16: #{block35_pallas.1} parent=11 // pred_fallthru
          _
        // Predicated region
        $region17: #{block35_pallas.1} parent=11 // pred_check
          %p315 = pneg %p93
        $region18: #{block35_pallas.1} parent=11 // pred_check_branch
          %317 = sbr.rel (%p315) target = $region20
        $region19: #{block35_pallas.1} parent=11 // pred_region
          _
        $region20: #{block35_pallas.1} parent=11 // pred_fallthru
          _
        // Predicated region
        $region21: #{block35_pallas.1} parent=11 // pred_check
          %p318 = pneg %p114
        $region22: #{block35_pallas.1} parent=11 // pred_check_branch
          %320 = sbr.rel (%p318) target = $region24
        $region23: #{block35_pallas.1} parent=11 // pred_region
          _
        $region24: #{block35_pallas.1} parent=11 // pred_fallthru
          _
        // Predicated region
        $region25: #{block35_pallas.1} parent=11 // pred_check
          %p321 = pneg %p135
        $region26: #{block35_pallas.1} parent=11 // pred_check_branch
          %323 = sbr.rel (%p321) target = $region28
        $region27: #{block35_pallas.1} parent=11 // pred_region
          _
        $region28: #{block35_pallas.1} parent=11 // pred_fallthru
          _
        // Predicated region
        $region29: #{block35_pallas.1} parent=11 // pred_check
          %p324 = pneg %p156
        $region30: #{block35_pallas.1} parent=11 // pred_check_branch
          %326 = sbr.rel (%p324) target = $region32
        $region31: #{block35_pallas.1} parent=11 // pred_region
          %s328 = ssub.s32 2304, 2304
          %329 = vsyncadd [#allocation7], %s328
          %s330 = sshll.u32 [#allocation8], 4
          %s331 = int_to_ptr.vmem [resolvable:$true] %s330
          %336 = dma.hbm_to_vmem [thread:$0]  %s5, 2304, %s331, [#allocation7], 64, 64, 4
        $region32: #{block35_pallas.1} parent=11 // pred_fallthru
          _
        // Predicated region
        $region33: #{block35_pallas.1} parent=11 // pred_check
          %p337 = pneg %p177
        $region34: #{block35_pallas.1} parent=11 // pred_check_branch
          %339 = sbr.rel (%p337) target = $region36
        $region35: #{block35_pallas.1} parent=11 // pred_region
          _
        $region36: #{block35_pallas.1} parent=11 // pred_fallthru
          _
        // Predicated region
        $region37: #{block35_pallas.1} parent=11 // pred_check
          %p340 = pneg %p198
        $region38: #{block35_pallas.1} parent=11 // pred_check_branch
          %342 = sbr.rel (%p340) target = $region40
        $region39: #{block35_pallas.1} parent=11 // pred_region
          %s344 = ssub.s32 2304, 2304
          %345 = vsyncadd [#allocation10], %s344
          %s346 = sshll.u32 [#allocation9], 4
          %s347 = int_to_ptr.vmem [resolvable:$true] %s346
          %352 = dma.hbm_to_vmem [thread:$0]  %s7, 2304, %s347, [#allocation10], 64, 64, 4
        $region40: #{block35_pallas.1} parent=11 // pred_fallthru
          _
        // Predicated region
        $region41: #{block35_pallas.1} parent=11 // pred_check
          %p353 = pneg %p219
        $region42: #{block35_pallas.1} parent=11 // pred_check_branch
          %355 = sbr.rel (%p353) target = $region44
        $region43: #{block35_pallas.1} parent=11 // pred_region
          _
        $region44: #{block35_pallas.1} parent=11 // pred_fallthru
          _
        // Predicated region
        $region45: #{block35_pallas.1} parent=11 // pred_check
          %p356 = pneg %p240
        $region46: #{block35_pallas.1} parent=11 // pred_check_branch
          %358 = sbr.rel (%p356) target = $region48
        $region47: #{block35_pallas.1} parent=11 // pred_region
          _
        $region48: #{block35_pallas.1} parent=11 // pred_fallthru
          _
        // Predicated region
        $region49: #{block35_pallas.1} parent=11 // pred_check
          %p359 = pneg %p261
        $region50: #{block35_pallas.1} parent=11 // pred_check_branch
          %361 = sbr.rel (%p359) target = $region52
        $region51: #{block35_pallas.1} parent=11 // pred_region
          _
        $region52: #{block35_pallas.1} parent=11 // pred_fallthru
          _
      $region12: #{block35_pallas.1} parent=5 // pred_fallthru
        _
      %p362 = scmp.lt.s32.totalorder %s25, 2
      // Predicated region
      $region53: #{block35_pallas.1} parent=5 // pred_check
        %p363 = pneg %p362
      $region54: #{block35_pallas.1} parent=5 // pred_check_branch
        %365 = sbr.rel (%p363) target = $region56
      $region55: #{block35_pallas.1} parent=5 // pred_region
        // Predicated region
        $region57: #{block35_pallas.1} parent=55 // pred_check
          %p366 = pneg %p45
        $region58: #{block35_pallas.1} parent=55 // pred_check_branch
          %368 = sbr.rel (%p366) target = $region60
        $region59: #{block35_pallas.1} parent=55 // pred_region
          %s369 = sand.u32 %s35, 1
          %s370 = scalar_lea.sflag [#allocation4], %s369
          %s371 = sand.u32 %s35, 1
          %s372 = smul.addr %s371, 512
          %s373 = scalar_lea.vmem [#allocation3], %s372
          %s375 = ssub.s32 8192, 8192
          %376 = vsyncadd %s370, %s375
          %s377 = smul.addr %s25, 64
          %s378 = smul.addr %s377, 128
          %s379 = scalar_lea.hbm %s0, %s378
          %s380 = sshll.u32 %s373, 4
          %s381 = int_to_ptr.vmem [resolvable:$true] %s380
          %386 = dma.hbm_to_vmem [thread:$0]  %s379, 8192, %s381, %s370, 256, 256, 16
        $region60: #{block35_pallas.1} parent=55 // pred_fallthru
          _
      $region56: #{block35_pallas.1} parent=5 // pred_fallthru
        _
      %p387 = scmp.le.s32.totalorder 1, %s25
      %p388 = scmp.lt.s32.totalorder %s25, 3
      %p389 = pnand %p387, %p388
      %p390 = pneg %p389
      // Predicated region
      $region61: #{block35_pallas.1} parent=5 // pred_check
        _
      $region62: #{block35_pallas.1} parent=5 // pred_check_branch
        %392 = sbr.rel (%p389) target = $region64
      $region63: #{block35_pallas.1} parent=5 // pred_region
        %s393 = ssub.s32 %s25, 1
        %s394 = sand.u32 %s38, 1
        %s395 = scalar_lea.sflag [#allocation4], %s394
        %s396 = sand.u32 %s38, 1
        %s397 = smul.addr %s396, 512
        %s398 = scalar_lea.vmem [#allocation3], %s397
        // Predicated region
        $region65: #{block35_pallas.1} parent=63 // pred_check
          %p399 = pneg %p51
        $region66: #{block35_pallas.1} parent=63 // pred_check_branch
          %401 = sbr.rel (%p399) target = $region68
        $region67: #{block35_pallas.1} parent=63 // pred_region
          %402 = dma.done %s395, 8192
        $region68: #{block35_pallas.1} parent=63 // pred_fallthru
          _
        // Predicated region
        $region69: #{block35_pallas.1} parent=63 // pred_check
          %p403 = pneg %p72
        $region70: #{block35_pallas.1} parent=63 // pred_check_branch
          %405 = sbr.rel (%p403) target = $region72
        $region71: #{block35_pallas.1} parent=63 // pred_region
          %406 = dma.done [#allocation7], 2048
        $region72: #{block35_pallas.1} parent=63 // pred_fallthru
          _
        // Predicated region
        $region73: #{block35_pallas.1} parent=63 // pred_check
          %p407 = pneg %p156
        $region74: #{block35_pallas.1} parent=63 // pred_check_branch
          %409 = sbr.rel (%p407) target = $region76
        $region75: #{block35_pallas.1} parent=63 // pred_region
          %410 = dma.done [#allocation7], 2304
        $region76: #{block35_pallas.1} parent=63 // pred_fallthru
          _
        // Predicated region
        $region77: #{block35_pallas.1} parent=63 // pred_check
          %p411 = pneg %p198
        $region78: #{block35_pallas.1} parent=63 // pred_check_branch
          %413 = sbr.rel (%p411) target = $region80
        $region79: #{block35_pallas.1} parent=63 // pred_region
          %414 = dma.done [#allocation10], 2304
        $region80: #{block35_pallas.1} parent=63 // pred_fallthru
          _
        %s415 = sand.u32 %s38, 1
        %s416 = scalar_lea.sflag [#allocation4], %s415
        %s417 = sand.u32 %s38, 1
        %s418 = smul.addr %s417, 512
        %s419 = scalar_lea.vmem [#allocation3], %s418
        %p420 = pneg %p51
        %p421 = pneg %p48
        %p422 = pneg %p72
        %p423 = pneg %p69
        %p424 = pneg %p93
        %p425 = pneg %p90
        %p426 = pneg %p114
        %p427 = pneg %p111
        %p428 = pneg %p135
        %p429 = pneg %p132
        %p430 = pneg %p156
        %p431 = pneg %p153
        %p432 = pneg %p177
        %p433 = pneg %p174
        %p434 = pneg %p198
        %p435 = pneg %p195
        %p436 = pneg %p219
        %p437 = pneg %p216
        %p438 = pneg %p240
        %p439 = pneg %p237
        %p440 = pneg %p261
        %p441 = pneg %p258
        %p442 = pneg %p287
        %p443 = pneg %p284
        %s444 = sand.u32 %s274, 1
        %s445 = scalar_lea.sflag [#allocation5], %s444
        %s446 = sand.u32 %s274, 1
        %s447 = smul.addr %s446, 512
        %s448 = scalar_lea.vmem [#allocation11], %s447
        %vm450 = vcmask 261120
        %451 = vst.msk [vmem:[#allocation2] sm:$0xff] %vm450, 0.0
        %452 = vst.msk [vmem:[#allocation2 + $0x8] sm:$0xff] %vm450, 0.0
        %vm453 = vcmask 254976
        %454 = vst.msk [vmem:[#allocation2 + $0x10] sm:$0x3] %vm453, 0.0
        %455 = vst.msk [vmem:[#allocation2 + $0x18] sm:$0xff] %vm450, 0.0
        %456 = vst.msk [vmem:[#allocation2 + $0x20] sm:$0xff] %vm450, 0.0
        %457 = vst.msk [vmem:[#allocation2 + $0x28] sm:$0x3] %vm453, 0.0
        %458 = vst.msk [vmem:[#allocation2 + $0x30] sm:$0xff] %vm450, 0.0
        %459 = vst.msk [vmem:[#allocation2 + $0x38] sm:$0xff] %vm450, 0.0
        %460 = vst.msk [vmem:[#allocation2 + $0x40] sm:$0x3] %vm453, 0.0
        %461 = vst.msk [vmem:[#allocation2 + $0x48] sm:$0xff] %vm450, 0.0
        %462 = vst.msk [vmem:[#allocation2 + $0x50] sm:$0xff] %vm450, 0.0
        %463 = vst.msk [vmem:[#allocation2 + $0x58] sm:$0x3] %vm453, 0.0
        %464 = vst.msk [vmem:[#allocation2 + $0x60] sm:$0xff] %vm450, 0.0
        %465 = vst.msk [vmem:[#allocation2 + $0x68] sm:$0xff] %vm450, 0.0
        %466 = vst.msk [vmem:[#allocation2 + $0x70] sm:$0x3] %vm453, 0.0
        %467 = vst.msk [vmem:[#allocation2 + $0x78] sm:$0xff] %vm450, 0.0
        %468 = vst.msk [vmem:[#allocation2 + $0x80] sm:$0xff] %vm450, 0.0
        %469 = vst.msk [vmem:[#allocation2 + $0x88] sm:$0x3] %vm453, 0.0
        %470 = vst.msk [vmem:[#allocation2 + $0x90] sm:$0xff] %vm450, 0.0
        %471 = vst.msk [vmem:[#allocation2 + $0x98] sm:$0xff] %vm450, 0.0
        %472 = vst.msk [vmem:[#allocation2 + $0xa0] sm:$0x3] %vm453, 0.0
        %473 = vst.msk [vmem:[#allocation2 + $0xa8] sm:$0xff] %vm450, 0.0
        %474 = vst.msk [vmem:[#allocation2 + $0xb0] sm:$0xff] %vm450, 0.0
        %475 = vst.msk [vmem:[#allocation2 + $0xb8] sm:$0x3] %vm453, 0.0
        %476 = vst.msk [vmem:[#allocation2 + $0xc0] sm:$0xff] %vm450, 0.0
        %477 = vst.msk [vmem:[#allocation2 + $0xc8] sm:$0xff] %vm450, 0.0
        %478 = vst.msk [vmem:[#allocation2 + $0xd0] sm:$0x3] %vm453, 0.0
        %479 = vst.msk [vmem:[#allocation2 + $0xd8] sm:$0xff] %vm450, 0.0
        %480 = vst.msk [vmem:[#allocation2 + $0xe0] sm:$0xff] %vm450, 0.0
        %481 = vst.msk [vmem:[#allocation2 + $0xe8] sm:$0x3] %vm453, 0.0
        %482 = vst.msk [vmem:[#allocation2 + $0xf0] sm:$0xff] %vm450, 0.0
        %483 = vst.msk [vmem:[#allocation2 + $0xf8] sm:$0xff] %vm450, 0.0
        %484 = vst.msk [vmem:[#allocation2 + $0x100] sm:$0x3] %vm453, 0.0
        %485 = vst.msk [vmem:[#allocation2 + $0x108] sm:$0xff] %vm450, 0.0
        %486 = vst.msk [vmem:[#allocation2 + $0x110] sm:$0xff] %vm450, 0.0
        %487 = vst.msk [vmem:[#allocation2 + $0x118] sm:$0x3] %vm453, 0.0
        %488 = vst.msk [vmem:[#allocation2 + $0x120] sm:$0xff] %vm450, 0.0
        %489 = vst.msk [vmem:[#allocation2 + $0x128] sm:$0xff] %vm450, 0.0
        %490 = vst.msk [vmem:[#allocation2 + $0x130] sm:$0x3] %vm453, 0.0
        %491 = vst.msk [vmem:[#allocation2 + $0x138] sm:$0xff] %vm450, 0.0
        %492 = vst.msk [vmem:[#allocation2 + $0x140] sm:$0xff] %vm450, 0.0
        %493 = vst.msk [vmem:[#allocation2 + $0x148] sm:$0x3] %vm453, 0.0
        %494 = vst.msk [vmem:[#allocation2 + $0x150] sm:$0xff] %vm450, 0.0
        %495 = vst.msk [vmem:[#allocation2 + $0x158] sm:$0xff] %vm450, 0.0
        %496 = vst.msk [vmem:[#allocation2 + $0x160] sm:$0x3] %vm453, 0.0
        %497 = vst.msk [vmem:[#allocation2 + $0x168] sm:$0xff] %vm450, 0.0
        %498 = vst.msk [vmem:[#allocation2 + $0x170] sm:$0xff] %vm450, 0.0
        %499 = vst.msk [vmem:[#allocation2 + $0x178] sm:$0x3] %vm453, 0.0
        %500 = vst.msk [vmem:[#allocation2 + $0x180] sm:$0xff] %vm450, 0.0
        %501 = vst.msk [vmem:[#allocation2 + $0x188] sm:$0xff] %vm450, 0.0
        %502 = vst.msk [vmem:[#allocation2 + $0x190] sm:$0x3] %vm453, 0.0
        %503 = vst.msk [vmem:[#allocation2 + $0x198] sm:$0xff] %vm450, 0.0
        %504 = vst.msk [vmem:[#allocation2 + $0x1a0] sm:$0xff] %vm450, 0.0
        %505 = vst.msk [vmem:[#allocation2 + $0x1a8] sm:$0x3] %vm453, 0.0
        %v506 = vld [vmem:[%s398] sm:$0xff]
        %v507 = vld [vmem:[%s398 + $0x8] sm:$0xff]
        %v508 = vld [vmem:[%s398 + $0x10] sm:$0xff]
        %v509 = vld [vmem:[%s398 + $0x18] sm:$0xff]
        %v510 = vld [vmem:[%s398 + $0x20] sm:$0xff]
        %v511 = vld [vmem:[%s398 + $0x28] sm:$0xff]
        %v512 = vld [vmem:[%s398 + $0x30] sm:$0xff]
        %v513 = vld [vmem:[%s398 + $0x38] sm:$0xff]
        %v514 = vld [vmem:[%s398 + $0x40] sm:$0xff]
        %v515 = vld [vmem:[%s398 + $0x48] sm:$0xff]
        %v516 = vld [vmem:[%s398 + $0x50] sm:$0xff]
        %v517 = vld [vmem:[%s398 + $0x58] sm:$0xff]
        %v518 = vld [vmem:[%s398 + $0x60] sm:$0xff]
        %v519 = vld [vmem:[%s398 + $0x68] sm:$0xff]
        %v520 = vld [vmem:[%s398 + $0x70] sm:$0xff]
        %v521 = vld [vmem:[%s398 + $0x78] sm:$0xff]
        %v522 = vld [vmem:[%s398 + $0x80] sm:$0xff]
        %v523 = vld [vmem:[%s398 + $0x88] sm:$0xff]
        %v524 = vld [vmem:[%s398 + $0x90] sm:$0xff]
        %v525 = vld [vmem:[%s398 + $0x98] sm:$0xff]
        %v526 = vld [vmem:[%s398 + $0xa0] sm:$0xff]
        %v527 = vld [vmem:[%s398 + $0xa8] sm:$0xff]
        %v528 = vld [vmem:[%s398 + $0xb0] sm:$0xff]
        %v529 = vld [vmem:[%s398 + $0xb8] sm:$0xff]
        %v530 = vld [vmem:[%s398 + $0xc0] sm:$0xff]
        %v531 = vld [vmem:[%s398 + $0xc8] sm:$0xff]
        %v532 = vld [vmem:[%s398 + $0xd0] sm:$0xff]
        %v533 = vld [vmem:[%s398 + $0xd8] sm:$0xff]
        %v534 = vld [vmem:[%s398 + $0xe0] sm:$0xff]
        %v535 = vld [vmem:[%s398 + $0xe8] sm:$0xff]
        %v536 = vld [vmem:[%s398 + $0xf0] sm:$0xff]
        %v537 = vld [vmem:[%s398 + $0xf8] sm:$0xff]
        %v538 = vld [vmem:[%s398 + $0x100] sm:$0xff]
        %v539 = vld [vmem:[%s398 + $0x108] sm:$0xff]
        %v540 = vld [vmem:[%s398 + $0x110] sm:$0xff]
        %v541 = vld [vmem:[%s398 + $0x118] sm:$0xff]
        %v542 = vld [vmem:[%s398 + $0x120] sm:$0xff]
        %v543 = vld [vmem:[%s398 + $0x128] sm:$0xff]
        %v544 = vld [vmem:[%s398 + $0x130] sm:$0xff]
        %v545 = vld [vmem:[%s398 + $0x138] sm:$0xff]
        %v546 = vld [vmem:[%s398 + $0x140] sm:$0xff]
        %v547 = vld [vmem:[%s398 + $0x148] sm:$0xff]
        %v548 = vld [vmem:[%s398 + $0x150] sm:$0xff]
        %v549 = vld [vmem:[%s398 + $0x158] sm:$0xff]
        %v550 = vld [vmem:[%s398 + $0x160] sm:$0xff]
        %v551 = vld [vmem:[%s398 + $0x168] sm:$0xff]
        %v552 = vld [vmem:[%s398 + $0x170] sm:$0xff]
        %v553 = vld [vmem:[%s398 + $0x178] sm:$0xff]
        %v554 = vld [vmem:[%s398 + $0x180] sm:$0xff]
        %v555 = vld [vmem:[%s398 + $0x188] sm:$0xff]
        %v556 = vld [vmem:[%s398 + $0x190] sm:$0xff]
        %v557 = vld [vmem:[%s398 + $0x198] sm:$0xff]
        %v558 = vld [vmem:[%s398 + $0x1a0] sm:$0xff]
        %v559 = vld [vmem:[%s398 + $0x1a8] sm:$0xff]
        %v560 = vld [vmem:[%s398 + $0x1b0] sm:$0xff]
        %v561 = vld [vmem:[%s398 + $0x1b8] sm:$0xff]
        %v562 = vld [vmem:[%s398 + $0x1c0] sm:$0xff]
        %v563 = vld [vmem:[%s398 + $0x1c8] sm:$0xff]
        %v564 = vld [vmem:[%s398 + $0x1d0] sm:$0xff]
        %v565 = vld [vmem:[%s398 + $0x1d8] sm:$0xff]
        %v566 = vld [vmem:[%s398 + $0x1e0] sm:$0xff]
        %v567 = vld [vmem:[%s398 + $0x1e8] sm:$0xff]
        %v568 = vld [vmem:[%s398 + $0x1f0] sm:$0xff]
        %v569 = vld [vmem:[%s398 + $0x1f8] sm:$0xff]
        %v570 = vpack.c.bf16 %v508, %v506
        %v571 = vpack.c.bf16 %v509, %v507
        %v572 = vpack.c.bf16 %v512, %v510
        %v573 = vpack.c.bf16 %v513, %v511
        %v574 = vpack.c.bf16 %v516, %v514
        %v575 = vpack.c.bf16 %v517, %v515
        %v576 = vpack.c.bf16 %v520, %v518
        %v577 = vpack.c.bf16 %v521, %v519
        %v578 = vpack.c.bf16 %v524, %v522
        %v579 = vpack.c.bf16 %v525, %v523
        %v580 = vpack.c.bf16 %v528, %v526
        %v581 = vpack.c.bf16 %v529, %v527
        %v582 = vpack.c.bf16 %v532, %v530
        %v583 = vpack.c.bf16 %v533, %v531
        %v584 = vpack.c.bf16 %v536, %v534
        %v585 = vpack.c.bf16 %v537, %v535
        %v586 = vpack.c.bf16 %v540, %v538
        %v587 = vpack.c.bf16 %v541, %v539
        %v588 = vpack.c.bf16 %v544, %v542
        %v589 = vpack.c.bf16 %v545, %v543
        %v590 = vpack.c.bf16 %v548, %v546
        %v591 = vpack.c.bf16 %v549, %v547
        %v592 = vpack.c.bf16 %v552, %v550
        %v593 = vpack.c.bf16 %v553, %v551
        %v594 = vpack.c.bf16 %v556, %v554
        %v595 = vpack.c.bf16 %v557, %v555
        %v596 = vpack.c.bf16 %v560, %v558
        %v597 = vpack.c.bf16 %v561, %v559
        %v598 = vpack.c.bf16 %v564, %v562
        %v599 = vpack.c.bf16 %v565, %v563
        %v600 = vpack.c.bf16 %v568, %v566
        %v601 = vpack.c.bf16 %v569, %v567
        %v602 = vld [vmem:[#allocation6] sm:$0xf]
        %v603 = vld [vmem:[#allocation6 + $0x4] sm:$0xf]
        %v604 = vld [vmem:[#allocation6 + $0x8] sm:$0xf]
        %v605 = vld [vmem:[#allocation6 + $0xc] sm:$0xf]
        %v606 = vld [vmem:[#allocation6 + $0x10] sm:$0xf]
        %v607 = vld [vmem:[#allocation6 + $0x14] sm:$0xf]
        %v608 = vld [vmem:[#allocation6 + $0x18] sm:$0xf]
        %v609 = vld [vmem:[#allocation6 + $0x1c] sm:$0xf]
        %v610 = vld [vmem:[#allocation6 + $0x20] sm:$0xf]
        %v611 = vld [vmem:[#allocation6 + $0x24] sm:$0xf]
        %v612 = vld [vmem:[#allocation6 + $0x28] sm:$0xf]
        %v613 = vld [vmem:[#allocation6 + $0x2c] sm:$0xf]
        %v614 = vld [vmem:[#allocation6 + $0x30] sm:$0xf]
        %v615 = vld [vmem:[#allocation6 + $0x34] sm:$0xf]
        %v616 = vld [vmem:[#allocation6 + $0x38] sm:$0xf]
        %v617 = vld [vmem:[#allocation6 + $0x3c] sm:$0xf]
        %v618 = vld [vmem:[#allocation6 + $0x40] sm:$0xf]
        %v619 = vld [vmem:[#allocation6 + $0x44] sm:$0xf]
        %v620 = vld [vmem:[#allocation6 + $0x48] sm:$0xf]
        %v621 = vld [vmem:[#allocation6 + $0x4c] sm:$0xf]
        %v622 = vld [vmem:[#allocation6 + $0x50] sm:$0xf]
        %v623 = vld [vmem:[#allocation6 + $0x54] sm:$0xf]
        %v624 = vld [vmem:[#allocation6 + $0x58] sm:$0xf]
        %v625 = vld [vmem:[#allocation6 + $0x5c] sm:$0xf]
        %v626 = vld [vmem:[#allocation6 + $0x60] sm:$0xf]
        %v627 = vld [vmem:[#allocation6 + $0x64] sm:$0xf]
        %v628 = vld [vmem:[#allocation6 + $0x68] sm:$0xf]
        %v629 = vld [vmem:[#allocation6 + $0x6c] sm:$0xf]
        %v630 = vld [vmem:[#allocation6 + $0x70] sm:$0xf]
        %v631 = vld [vmem:[#allocation6 + $0x74] sm:$0xf]
        %v632 = vld [vmem:[#allocation6 + $0x78] sm:$0xf]
        %v633 = vld [vmem:[#allocation6 + $0x7c] sm:$0xf]
        %v634 = vld [vmem:[%s2] sm:$0x1]
        %v636 = vlaneseq
        %v637 = vshrl.u32 %v636, 7
        %v638 = vsub.s32 0, %v637
        %v639 = vrot.slane %v634, %v638
        %v673 = vunpack.c.l.b16 %v602
        %v674 = vunpack.c.l.b16 %v603
        %v675 = vunpack.c.l.b16 %v604
        %v676 = vunpack.c.l.b16 %v605
        %v677 = vunpack.c.l.b16 %v606
        %v678 = vunpack.c.l.b16 %v607
        %v679 = vunpack.c.l.b16 %v608
        %v680 = vunpack.c.l.b16 %v609
        %v681 = vunpack.c.l.b16 %v610
        %v682 = vunpack.c.l.b16 %v611
        %v683 = vunpack.c.l.b16 %v612
        %v684 = vunpack.c.l.b16 %v613
        %v685 = vunpack.c.l.b16 %v614
        %v686 = vunpack.c.l.b16 %v615
        %v687 = vunpack.c.l.b16 %v616
        %v688 = vunpack.c.l.b16 %v617
        %v689 = vunpack.c.l.b16 %v618
        %v690 = vunpack.c.l.b16 %v619
        %v691 = vunpack.c.l.b16 %v620
        %v692 = vunpack.c.l.b16 %v621
        %v693 = vunpack.c.l.b16 %v622
        %v694 = vunpack.c.l.b16 %v623
        %v695 = vunpack.c.l.b16 %v624
        %v696 = vunpack.c.l.b16 %v625
        %v697 = vunpack.c.l.b16 %v626
        %v698 = vunpack.c.l.b16 %v627
        %v699 = vunpack.c.l.b16 %v628
        %v700 = vunpack.c.l.b16 %v629
        %v701 = vunpack.c.l.b16 %v630
        %v702 = vunpack.c.l.b16 %v631
        %v703 = vunpack.c.l.b16 %v632
        %v704 = vunpack.c.l.b16 %v633
        %v705 = vpack.c.b16 %v674, %v673
        %v706 = vpack.c.b16 %v676, %v675
        %v707 = vpack.c.b16 %v678, %v677
        %v708 = vpack.c.b16 %v680, %v679
        %v709 = vpack.c.b16 %v682, %v681
        %v710 = vpack.c.b16 %v684, %v683
        %v711 = vpack.c.b16 %v686, %v685
        %v712 = vpack.c.b16 %v688, %v687
        %v713 = vpack.c.b16 %v690, %v689
        %v714 = vpack.c.b16 %v692, %v691
        %v715 = vpack.c.b16 %v694, %v693
        %v716 = vpack.c.b16 %v696, %v695
        %v717 = vpack.c.b16 %v698, %v697
        %v718 = vpack.c.b16 %v700, %v699
        %v719 = vpack.c.b16 %v702, %v701
        %v720 = vpack.c.b16 %v704, %v703
        %737 = vmatprep.subr.bf16.mxu0 0
        %738 = vmatpush1.bf16.msra.mxu0 %v705
        %739 = vmatprep.subr.bf16.mxu0 0
        %740 = vmatpush1.bf16.msra.mxu0 %v706
        %741 = vmatprep.subr.bf16.mxu0 0
        %742 = vmatpush1.bf16.msra.mxu0 %v707
        %743 = vmatprep.subr.bf16.mxu0 0
        %744 = vmatpush1.bf16.msra.mxu0 %v708
        %745 = vmatprep.subr.bf16.mxu0 0
        %746 = vmatpush1.bf16.msra.mxu0 %v709
        %747 = vmatprep.subr.bf16.mxu0 0
        %748 = vmatpush1.bf16.msra.mxu0 %v710
        %749 = vmatprep.subr.bf16.mxu0 0
        %750 = vmatpush1.bf16.msra.mxu0 %v711
        %751 = vmatprep.subr.bf16.mxu0 0
        %752 = vmatpush1.bf16.msra.mxu0 %v712
        %753 = vmatprep.subr.bf16.mxu0 0
        %754 = vmatpush1.bf16.msra.mxu0 %v713
        %755 = vmatprep.subr.bf16.mxu0 0
        %756 = vmatpush1.bf16.msra.mxu0 %v714
        %757 = vmatprep.subr.bf16.mxu0 0
        %758 = vmatpush1.bf16.msra.mxu0 %v715
        %759 = vmatprep.subr.bf16.mxu0 0
        %760 = vmatpush1.bf16.msra.mxu0 %v716
        %761 = vmatprep.subr.bf16.mxu0 0
        %762 = vmatpush1.bf16.msra.mxu0 %v717
        %763 = vmatprep.subr.bf16.mxu0 0
        %764 = vmatpush1.bf16.msra.mxu0 %v718
        %765 = vmatprep.subr.bf16.mxu0 0
        %766 = vmatpush1.bf16.msra.mxu0 %v719
        %767 = vmatprep.subr.bf16.mxu0 0
        %768 = vmatpush1.bf16.msra.mxu0 %v720
        %769 = vmatprep.mubr.bf16.mxu0 %v571
        %770 = vmatmul.mubr.bf16.gmra.mrb[0].mxu0 %v570
        %v771 = vpop.f32.mrb[0].mxu0
        %v772 = vadd.f32 %v639, %v771
        %v773 = vpop.f32.mrb[0].mxu0
        %v774 = vpop.f32.mrb[0].mxu0
        %v775 = vadd.f32 %v639, %v774
        %v776 = vpop.f32.mrb[0].mxu0
        %777 = vmatprep.mubr.bf16.mxu0 %v573
        %778 = vmatmul.mubr.bf16.gmra.mrb[0].mxu0 %v572
        %v779 = vpop.f32.mrb[0].mxu0
        %v780 = vadd.f32 %v639, %v779
        %v781 = vpop.f32.mrb[0].mxu0
        %v782 = vpop.f32.mrb[0].mxu0
        %v783 = vadd.f32 %v639, %v782
        %v784 = vpop.f32.mrb[0].mxu0
        %785 = vmatprep.mubr.bf16.mxu0 %v575
        %786 = vmatmul.mubr.bf16.gmra.mrb[0].mxu0 %v574
        %v787 = vpop.f32.mrb[0].mxu0
        %v788 = vadd.f32 %v639, %v787
        %v789 = vpop.f32.mrb[0].mxu0
        %v790 = vpop.f32.mrb[0].mxu0
        %v791 = vadd.f32 %v639, %v790
        %v792 = vpop.f32.mrb[0].mxu0
        %793 = vmatprep.mubr.bf16.mxu0 %v577
        %794 = vmatmul.mubr.bf16.gmra.mrb[0].mxu0 %v576
        %v795 = vpop.f32.mrb[0].mxu0
        %v796 = vadd.f32 %v639, %v795
        %v797 = vpop.f32.mrb[0].mxu0
        %v798 = vpop.f32.mrb[0].mxu0
        %v799 = vadd.f32 %v639, %v798
        %v800 = vpop.f32.mrb[0].mxu0
        %801 = vmatprep.mubr.bf16.mxu0 %v579
        %802 = vmatmul.mubr.bf16.gmra.mrb[0].mxu0 %v578
        %v803 = vpop.f32.mrb[0].mxu0
        %v804 = vadd.f32 %v639, %v803
        %v805 = vpop.f32.mrb[0].mxu0
        %v806 = vpop.f32.mrb[0].mxu0
        %v807 = vadd.f32 %v639, %v806
        %v808 = vpop.f32.mrb[0].mxu0
        %809 = vmatprep.mubr.bf16.mxu0 %v581
        %810 = vmatmul.mubr.bf16.gmra.mrb[0].mxu0 %v580
        %v811 = vpop.f32.mrb[0].mxu0
        %v812 = vadd.f32 %v639, %v811
        %v813 = vpop.f32.mrb[0].mxu0
        %v814 = vpop.f32.mrb[0].mxu0
        %v815 = vadd.f32 %v639, %v814
        %v816 = vpop.f32.mrb[0].mxu0
        %817 = vmatprep.mubr.bf16.mxu0 %v583
        %818 = vmatmul.mubr.bf16.gmra.mrb[0].mxu0 %v582
        %v819 = vpop.f32.mrb[0].mxu0
        %v820 = vadd.f32 %v639, %v819
        %v821 = vpop.f32.mrb[0].mxu0
        %v822 = vpop.f32.mrb[0].mxu0
        %v823 = vadd.f32 %v639, %v822
        %v824 = vpop.f32.mrb[0].mxu0
        %825 = vmatprep.mubr.bf16.mxu0 %v585
        %826 = vmatmul.mubr.bf16.gmra.mrb[0].mxu0 %v584
        %v827 = vpop.f32.mrb[0].mxu0
        %v828 = vadd.f32 %v639, %v827
        %v829 = vpop.f32.mrb[0].mxu0
        %v830 = vpop.f32.mrb[0].mxu0
        %v831 = vadd.f32 %v639, %v830
        %v832 = vpop.f32.mrb[0].mxu0
        %833 = vmatprep.mubr.bf16.mxu0 %v587
        %834 = vmatmul.mubr.bf16.gmra.mrb[0].mxu0 %v586
        %v835 = vpop.f32.mrb[0].mxu0
        %v836 = vadd.f32 %v639, %v835
        %v837 = vpop.f32.mrb[0].mxu0
        %v838 = vpop.f32.mrb[0].mxu0
        %v839 = vadd.f32 %v639, %v838
        %v840 = vpop.f32.mrb[0].mxu0
        %841 = vmatprep.mubr.bf16.mxu0 %v589
        %842 = vmatmul.mubr.bf16.gmra.mrb[0].mxu0 %v588
        %v843 = vpop.f32.mrb[0].mxu0
        %v844 = vadd.f32 %v639, %v843
        %v845 = vpop.f32.mrb[0].mxu0
        %v846 = vpop.f32.mrb[0].mxu0
        %v847 = vadd.f32 %v639, %v846
        %v848 = vpop.f32.mrb[0].mxu0
        %849 = vmatprep.mubr.bf16.mxu0 %v591
        %850 = vmatmul.mubr.bf16.gmra.mrb[0].mxu0 %v590
        %v851 = vpop.f32.mrb[0].mxu0
        %v852 = vadd.f32 %v639, %v851
        %v853 = vpop.f32.mrb[0].mxu0
        %v854 = vpop.f32.mrb[0].mxu0
        %v855 = vadd.f32 %v639, %v854
        %v856 = vpop.f32.mrb[0].mxu0
        %857 = vmatprep.mubr.bf16.mxu0 %v593
        %858 = vmatmul.mubr.bf16.gmra.mrb[0].mxu0 %v592
        %v859 = vpop.f32.mrb[0].mxu0
        %v860 = vadd.f32 %v639, %v859
        %v861 = vpop.f32.mrb[0].mxu0
        %v862 = vpop.f32.mrb[0].mxu0
        %v863 = vadd.f32 %v639, %v862
        %v864 = vpop.f32.mrb[0].mxu0
        %865 = vmatprep.mubr.bf16.mxu0 %v595
        %866 = vmatmul.mubr.bf16.gmra.mrb[0].mxu0 %v594
        %v867 = vpop.f32.mrb[0].mxu0
        %v868 = vadd.f32 %v639, %v867
        %v869 = vpop.f32.mrb[0].mxu0
        %v870 = vpop.f32.mrb[0].mxu0
        %v871 = vadd.f32 %v639, %v870
        %v872 = vpop.f32.mrb[0].mxu0
        %873 = vmatprep.mubr.bf16.mxu0 %v597
        %874 = vmatmul.mubr.bf16.gmra.mrb[0].mxu0 %v596
        %v875 = vpop.f32.mrb[0].mxu0
        %v876 = vadd.f32 %v639, %v875
        %v877 = vpop.f32.mrb[0].mxu0
        %v878 = vpop.f32.mrb[0].mxu0
        %v879 = vadd.f32 %v639, %v878
        %v880 = vpop.f32.mrb[0].mxu0
        %881 = vmatprep.mubr.bf16.mxu0 %v599
        %882 = vmatmul.mubr.bf16.gmra.mrb[0].mxu0 %v598
        %v883 = vpop.f32.mrb[0].mxu0
        %v884 = vadd.f32 %v639, %v883
        %v885 = vpop.f32.mrb[0].mxu0
        %v886 = vpop.f32.mrb[0].mxu0
        %v887 = vadd.f32 %v639, %v886
        %v888 = vpop.f32.mrb[0].mxu0
        %889 = vmatprep.mubr.bf16.mxu0 %v601
        %890 = vmatmul.mubr.bf16.gmra.mrb[0].mxu0 %v600
        %v891 = vpop.f32.mrb[0].mxu0
        %v892 = vadd.f32 %v639, %v891
        %v893 = vpop.f32.mrb[0].mxu0
        %v894 = vpop.f32.mrb[0].mxu0
        %v895 = vadd.f32 %v639, %v894
        %v896 = vpop.f32.mrb[0].mxu0
        %897 = vdwg.mxu0
        %v898 = vmax.f32 %v772, 0.0
        %v899 = vmax.f32 %v775, 0.0
        %v900 = vmax.f32 %v780, 0.0
        %v901 = vmax.f32 %v783, 0.0
        %v902 = vmax.f32 %v788, 0.0
        %v903 = vmax.f32 %v791, 0.0
        %v904 = vmax.f32 %v796, 0.0
        %v905 = vmax.f32 %v799, 0.0
        %v906 = vmax.f32 %v804, 0.0
        %v907 = vmax.f32 %v807, 0.0
        %v908 = vmax.f32 %v812, 0.0
        %v909 = vmax.f32 %v815, 0.0
        %v910 = vmax.f32 %v820, 0.0
        %v911 = vmax.f32 %v823, 0.0
        %v912 = vmax.f32 %v828, 0.0
        %v913 = vmax.f32 %v831, 0.0
        %v914 = vmax.f32 %v836, 0.0
        %v915 = vmax.f32 %v839, 0.0
        %v916 = vmax.f32 %v844, 0.0
        %v917 = vmax.f32 %v847, 0.0
        %v918 = vmax.f32 %v852, 0.0
        %v919 = vmax.f32 %v855, 0.0
        %v920 = vmax.f32 %v860, 0.0
        %v921 = vmax.f32 %v863, 0.0
        %v922 = vmax.f32 %v868, 0.0
        %v923 = vmax.f32 %v871, 0.0
        %v924 = vmax.f32 %v876, 0.0
        %v925 = vmax.f32 %v879, 0.0
        %v926 = vmax.f32 %v884, 0.0
        %v927 = vmax.f32 %v887, 0.0
        %v928 = vmax.f32 %v892, 0.0
        %v929 = vmax.f32 %v895, 0.0
        %962 = vrot.lane.b32.xlu0 %v898, 96
        %v963 = vpop.permute.xlu0 %962
        %964 = vrot.lane.b32.xlu0 %v899, 96
        %v965 = vpop.permute.xlu0 %964
        %966 = vrot.lane.b32.xlu0 %v900, 96
        %v967 = vpop.permute.xlu0 %966
        %968 = vrot.lane.b32.xlu0 %v901, 96
        %v969 = vpop.permute.xlu0 %968
        %970 = vrot.lane.b32.xlu0 %v902, 96
        %v971 = vpop.permute.xlu0 %970
        %972 = vrot.lane.b32.xlu0 %v903, 96
        %v973 = vpop.permute.xlu0 %972
        %974 = vrot.lane.b32.xlu0 %v904, 96
        %v975 = vpop.permute.xlu0 %974
        %976 = vrot.lane.b32.xlu0 %v905, 96
        %v977 = vpop.permute.xlu0 %976
        %978 = vrot.lane.b32.xlu0 %v906, 96
        %v979 = vpop.permute.xlu0 %978
        %980 = vrot.lane.b32.xlu0 %v907, 96
        %v981 = vpop.permute.xlu0 %980
        %982 = vrot.lane.b32.xlu0 %v908, 96
        %v983 = vpop.permute.xlu0 %982
        %984 = vrot.lane.b32.xlu0 %v909, 96
        %v985 = vpop.permute.xlu0 %984
        %986 = vrot.lane.b32.xlu0 %v910, 96
        %v987 = vpop.permute.xlu0 %986
        %988 = vrot.lane.b32.xlu0 %v911, 96
        %v989 = vpop.permute.xlu0 %988
        %990 = vrot.lane.b32.xlu0 %v912, 96
        %v991 = vpop.permute.xlu0 %990
        %992 = vrot.lane.b32.xlu0 %v913, 96
        %v993 = vpop.permute.xlu0 %992
        %994 = vrot.lane.b32.xlu0 %v914, 96
        %v995 = vpop.permute.xlu0 %994
        %996 = vrot.lane.b32.xlu0 %v915, 96
        %v997 = vpop.permute.xlu0 %996
        %998 = vrot.lane.b32.xlu0 %v916, 96
        %v999 = vpop.permute.xlu0 %998
        %1000 = vrot.lane.b32.xlu0 %v917, 96
        %v1001 = vpop.permute.xlu0 %1000
        %1002 = vrot.lane.b32.xlu0 %v918, 96
        %v1003 = vpop.permute.xlu0 %1002
        %1004 = vrot.lane.b32.xlu0 %v919, 96
        %v1005 = vpop.permute.xlu0 %1004
        %1006 = vrot.lane.b32.xlu0 %v920, 96
        %v1007 = vpop.permute.xlu0 %1006
        %1008 = vrot.lane.b32.xlu0 %v921, 96
        %v1009 = vpop.permute.xlu0 %1008
        %1010 = vrot.lane.b32.xlu0 %v922, 96
        %v1011 = vpop.permute.xlu0 %1010
        %1012 = vrot.lane.b32.xlu0 %v923, 96
        %v1013 = vpop.permute.xlu0 %1012
        %1014 = vrot.lane.b32.xlu0 %v924, 96
        %v1015 = vpop.permute.xlu0 %1014
        %1016 = vrot.lane.b32.xlu0 %v925, 96
        %v1017 = vpop.permute.xlu0 %1016
        %1018 = vrot.lane.b32.xlu0 %v926, 96
        %v1019 = vpop.permute.xlu0 %1018
        %1020 = vrot.lane.b32.xlu0 %v927, 96
        %v1021 = vpop.permute.xlu0 %1020
        %1022 = vrot.lane.b32.xlu0 %v928, 96
        %v1023 = vpop.permute.xlu0 %1022
        %1024 = vrot.lane.b32.xlu0 %v929, 96
        %v1025 = vpop.permute.xlu0 %1024
        %s1058 = scalar_lea.vmem [#allocation2], 24
        %1059 = vst.msk [vmem:[%s1058 + $0x1] sm:$0xff] %vm450, %v963
        %1060 = vst.msk [vmem:[%s1058 + $0x9] sm:$0xff] %vm450, %v965
        %1061 = vst.msk [vmem:[%s1058 + $0x19] sm:$0xff] %vm450, %v967
        %1062 = vst.msk [vmem:[%s1058 + $0x21] sm:$0xff] %vm450, %v969
        %1063 = vst.msk [vmem:[%s1058 + $0x31] sm:$0xff] %vm450, %v971
        %1064 = vst.msk [vmem:[%s1058 + $0x39] sm:$0xff] %vm450, %v973
        %1065 = vst.msk [vmem:[%s1058 + $0x49] sm:$0xff] %vm450, %v975
        %1066 = vst.msk [vmem:[%s1058 + $0x51] sm:$0xff] %vm450, %v977
        %1067 = vst.msk [vmem:[%s1058 + $0x61] sm:$0xff] %vm450, %v979
        %1068 = vst.msk [vmem:[%s1058 + $0x69] sm:$0xff] %vm450, %v981
        %1069 = vst.msk [vmem:[%s1058 + $0x79] sm:$0xff] %vm450, %v983
        %1070 = vst.msk [vmem:[%s1058 + $0x81] sm:$0xff] %vm450, %v985
        %1071 = vst.msk [vmem:[%s1058 + $0x91] sm:$0xff] %vm450, %v987
        %1072 = vst.msk [vmem:[%s1058 + $0x99] sm:$0xff] %vm450, %v989
        %1073 = vst.msk [vmem:[%s1058 + $0xa9] sm:$0xff] %vm450, %v991
        %1074 = vst.msk [vmem:[%s1058 + $0xb1] sm:$0xff] %vm450, %v993
        %1075 = vst.msk [vmem:[%s1058 + $0xc1] sm:$0xff] %vm450, %v995
        %1076 = vst.msk [vmem:[%s1058 + $0xc9] sm:$0xff] %vm450, %v997
        %1077 = vst.msk [vmem:[%s1058 + $0xd9] sm:$0xff] %vm450, %v999
        %1078 = vst.msk [vmem:[%s1058 + $0xe1] sm:$0xff] %vm450, %v1001
        %1079 = vst.msk [vmem:[%s1058 + $0xf1] sm:$0xff] %vm450, %v1003
        %1080 = vst.msk [vmem:[%s1058 + $0xf9] sm:$0xff] %vm450, %v1005
        %1081 = vst.msk [vmem:[%s1058 + $0x109] sm:$0xff] %vm450, %v1007
        %1082 = vst.msk [vmem:[%s1058 + $0x111] sm:$0xff] %vm450, %v1009
        %1083 = vst.msk [vmem:[%s1058 + $0x121] sm:$0xff] %vm450, %v1011
        %1084 = vst.msk [vmem:[%s1058 + $0x129] sm:$0xff] %vm450, %v1013
        %1085 = vst.msk [vmem:[%s1058 + $0x139] sm:$0xff] %vm450, %v1015
        %1086 = vst.msk [vmem:[%s1058 + $0x141] sm:$0xff] %vm450, %v1017
        %1087 = vst.msk [vmem:[%s1058 + $0x151] sm:$0xff] %vm450, %v1019
        %1088 = vst.msk [vmem:[%s1058 + $0x159] sm:$0xff] %vm450, %v1021
        %1089 = vst.msk [vmem:[%s1058 + $0x169] sm:$0xff] %vm450, %v1023
        %1090 = vst.msk [vmem:[%s1058 + $0x171] sm:$0xff] %vm450, %v1025
        %v1091 = vld [vmem:[#allocation2] sm:$0xff]
        %v1092 = vld [vmem:[#allocation2 + $0x8] sm:$0xff]
        %v1093 = vld [vmem:[#allocation2 + $0x18] sm:$0xff]
        %v1094 = vld [vmem:[#allocation2 + $0x20] sm:$0xff]
        %v1095 = vld [vmem:[#allocation2 + $0x30] sm:$0xff]
        %v1096 = vld [vmem:[#allocation2 + $0x38] sm:$0xff]
        %v1097 = vld [vmem:[#allocation2 + $0x48] sm:$0xff]
        %v1098 = vld [vmem:[#allocation2 + $0x50] sm:$0xff]
        %v1099 = vld [vmem:[#allocation2 + $0x60] sm:$0xff]
        %v1100 = vld [vmem:[#allocation2 + $0x68] sm:$0xff]
        %v1101 = vld [vmem:[#allocation2 + $0x78] sm:$0xff]
        %v1102 = vld [vmem:[#allocation2 + $0x80] sm:$0xff]
        %v1103 = vld [vmem:[#allocation2 + $0x90] sm:$0xff]
        %v1104 = vld [vmem:[#allocation2 + $0x98] sm:$0xff]
        %v1105 = vld [vmem:[#allocation2 + $0xa8] sm:$0xff]
        %v1106 = vld [vmem:[#allocation2 + $0xb0] sm:$0xff]
        %v1107 = vld [vmem:[#allocation2 + $0xc0] sm:$0xff]
        %v1108 = vld [vmem:[#allocation2 + $0xc8] sm:$0xff]
        %v1109 = vld [vmem:[#allocation2 + $0xd8] sm:$0xff]
        %v1110 = vld [vmem:[#allocation2 + $0xe0] sm:$0xff]
        %v1111 = vld [vmem:[#allocation2 + $0xf0] sm:$0xff]
        %v1112 = vld [vmem:[#allocation2 + $0xf8] sm:$0xff]
        %v1113 = vld [vmem:[#allocation2 + $0x108] sm:$0xff]
        %v1114 = vld [vmem:[#allocation2 + $0x110] sm:$0xff]
        %v1115 = vld [vmem:[#allocation2 + $0x120] sm:$0xff]
        %v1116 = vld [vmem:[#allocation2 + $0x128] sm:$0xff]
        %v1117 = vld [vmem:[#allocation2 + $0x138] sm:$0xff]
        %v1118 = vld [vmem:[#allocation2 + $0x140] sm:$0xff]
        %v1119 = vld [vmem:[#allocation2 + $0x150] sm:$0xff]
        %v1120 = vld [vmem:[#allocation2 + $0x158] sm:$0xff]
        %v1121 = vld [vmem:[#allocation2 + $0x168] sm:$0xff]
        %v1122 = vld [vmem:[#allocation2 + $0x170] sm:$0xff]
        %v1123 = vld [vmem:[#allocation2 + $0x1] sm:$0xff]
        %v1124 = vld [vmem:[#allocation2 + $0x9] sm:$0xff]
        %v1125 = vld [vmem:[#allocation2 + $0x19] sm:$0xff]
        %v1126 = vld [vmem:[#allocation2 + $0x21] sm:$0xff]
        %v1127 = vld [vmem:[#allocation2 + $0x31] sm:$0xff]
        %v1128 = vld [vmem:[#allocation2 + $0x39] sm:$0xff]
        %v1129 = vld [vmem:[#allocation2 + $0x49] sm:$0xff]
        %v1130 = vld [vmem:[#allocation2 + $0x51] sm:$0xff]
        %v1131 = vld [vmem:[#allocation2 + $0x61] sm:$0xff]
        %v1132 = vld [vmem:[#allocation2 + $0x69] sm:$0xff]
        %v1133 = vld [vmem:[#allocation2 + $0x79] sm:$0xff]
        %v1134 = vld [vmem:[#allocation2 + $0x81] sm:$0xff]
        %v1135 = vld [vmem:[#allocation2 + $0x91] sm:$0xff]
        %v1136 = vld [vmem:[#allocation2 + $0x99] sm:$0xff]
        %v1137 = vld [vmem:[#allocation2 + $0xa9] sm:$0xff]
        %v1138 = vld [vmem:[#allocation2 + $0xb1] sm:$0xff]
        %v1139 = vld [vmem:[#allocation2 + $0xc1] sm:$0xff]
        %v1140 = vld [vmem:[#allocation2 + $0xc9] sm:$0xff]
        %v1141 = vld [vmem:[#allocation2 + $0xd9] sm:$0xff]
        %v1142 = vld [vmem:[#allocation2 + $0xe1] sm:$0xff]
        %v1143 = vld [vmem:[#allocation2 + $0xf1] sm:$0xff]
        %v1144 = vld [vmem:[#allocation2 + $0xf9] sm:$0xff]
        %v1145 = vld [vmem:[#allocation2 + $0x109] sm:$0xff]
        %v1146 = vld [vmem:[#allocation2 + $0x111] sm:$0xff]
        %v1147 = vld [vmem:[#allocation2 + $0x121] sm:$0xff]
        %v1148 = vld [vmem:[#allocation2 + $0x129] sm:$0xff]
        %v1149 = vld [vmem:[#allocation2 + $0x139] sm:$0xff]
        %v1150 = vld [vmem:[#allocation2 + $0x141] sm:$0xff]
        %v1151 = vld [vmem:[#allocation2 + $0x151] sm:$0xff]
        %v1152 = vld [vmem:[#allocation2 + $0x159] sm:$0xff]
        %v1153 = vld [vmem:[#allocation2 + $0x169] sm:$0xff]
        %v1154 = vld [vmem:[#allocation2 + $0x171] sm:$0xff]
        %v1155 = vld [vmem:[#allocation2 + $0x2] sm:$0xff]
        %v1156 = vld [vmem:[#allocation2 + $0xa] sm:$0xff]
        %v1157 = vld [vmem:[#allocation2 + $0x1a] sm:$0xff]
        %v1158 = vld [vmem:[#allocation2 + $0x22] sm:$0xff]
        %v1159 = vld [vmem:[#allocation2 + $0x32] sm:$0xff]
        %v1160 = vld [vmem:[#allocation2 + $0x3a] sm:$0xff]
        %v1161 = vld [vmem:[#allocation2 + $0x4a] sm:$0xff]
        %v1162 = vld [vmem:[#allocation2 + $0x52] sm:$0xff]
        %v1163 = vld [vmem:[#allocation2 + $0x62] sm:$0xff]
        %v1164 = vld [vmem:[#allocation2 + $0x6a] sm:$0xff]
        %v1165 = vld [vmem:[#allocation2 + $0x7a] sm:$0xff]
        %v1166 = vld [vmem:[#allocation2 + $0x82] sm:$0xff]
        %v1167 = vld [vmem:[#allocation2 + $0x92] sm:$0xff]
        %v1168 = vld [vmem:[#allocation2 + $0x9a] sm:$0xff]
        %v1169 = vld [vmem:[#allocation2 + $0xaa] sm:$0xff]
        %v1170 = vld [vmem:[#allocation2 + $0xb2] sm:$0xff]
        %v1171 = vld [vmem:[#allocation2 + $0xc2] sm:$0xff]
        %v1172 = vld [vmem:[#allocation2 + $0xca] sm:$0xff]
        %v1173 = vld [vmem:[#allocation2 + $0xda] sm:$0xff]
        %v1174 = vld [vmem:[#allocation2 + $0xe2] sm:$0xff]
        %v1175 = vld [vmem:[#allocation2 + $0xf2] sm:$0xff]
        %v1176 = vld [vmem:[#allocation2 + $0xfa] sm:$0xff]
        %v1177 = vld [vmem:[#allocation2 + $0x10a] sm:$0xff]
        %v1178 = vld [vmem:[#allocation2 + $0x112] sm:$0xff]
        %v1179 = vld [vmem:[#allocation2 + $0x122] sm:$0xff]
        %v1180 = vld [vmem:[#allocation2 + $0x12a] sm:$0xff]
        %v1181 = vld [vmem:[#allocation2 + $0x13a] sm:$0xff]
        %v1182 = vld [vmem:[#allocation2 + $0x142] sm:$0xff]
        %v1183 = vld [vmem:[#allocation2 + $0x152] sm:$0xff]
        %v1184 = vld [vmem:[#allocation2 + $0x15a] sm:$0xff]
        %v1185 = vld [vmem:[#allocation2 + $0x16a] sm:$0xff]
        %v1186 = vld [vmem:[#allocation2 + $0x172] sm:$0xff]
        %v1187 = vld [vmem:[%s1058] sm:$0xff]
        %v1188 = vld [vmem:[%s1058 + $0x8] sm:$0xff]
        %v1189 = vld [vmem:[%s1058 + $0x18] sm:$0xff]
        %v1190 = vld [vmem:[%s1058 + $0x20] sm:$0xff]
        %v1191 = vld [vmem:[%s1058 + $0x30] sm:$0xff]
        %v1192 = vld [vmem:[%s1058 + $0x38] sm:$0xff]
        %v1193 = vld [vmem:[%s1058 + $0x48] sm:$0xff]
        %v1194 = vld [vmem:[%s1058 + $0x50] sm:$0xff]
        %v1195 = vld [vmem:[%s1058 + $0x60] sm:$0xff]
        %v1196 = vld [vmem:[%s1058 + $0x68] sm:$0xff]
        %v1197 = vld [vmem:[%s1058 + $0x78] sm:$0xff]
        %v1198 = vld [vmem:[%s1058 + $0x80] sm:$0xff]
        %v1199 = vld [vmem:[%s1058 + $0x90] sm:$0xff]
        %v1200 = vld [vmem:[%s1058 + $0x98] sm:$0xff]
        %v1201 = vld [vmem:[%s1058 + $0xa8] sm:$0xff]
        %v1202 = vld [vmem:[%s1058 + $0xb0] sm:$0xff]
        %v1203 = vld [vmem:[%s1058 + $0xc0] sm:$0xff]
        %v1204 = vld [vmem:[%s1058 + $0xc8] sm:$0xff]
        %v1205 = vld [vmem:[%s1058 + $0xd8] sm:$0xff]
        %v1206 = vld [vmem:[%s1058 + $0xe0] sm:$0xff]
        %v1207 = vld [vmem:[%s1058 + $0xf0] sm:$0xff]
        %v1208 = vld [vmem:[%s1058 + $0xf8] sm:$0xff]
        %v1209 = vld [vmem:[%s1058 + $0x108] sm:$0xff]
        %v1210 = vld [vmem:[%s1058 + $0x110] sm:$0xff]
        %v1211 = vld [vmem:[%s1058 + $0x120] sm:$0xff]
        %v1212 = vld [vmem:[%s1058 + $0x128] sm:$0xff]
        %v1213 = vld [vmem:[%s1058 + $0x138] sm:$0xff]
        %v1214 = vld [vmem:[%s1058 + $0x140] sm:$0xff]
        %v1215 = vld [vmem:[%s1058 + $0x150] sm:$0xff]
        %v1216 = vld [vmem:[%s1058 + $0x158] sm:$0xff]
        %v1217 = vld [vmem:[%s1058 + $0x168] sm:$0xff]
        %v1218 = vld [vmem:[%s1058 + $0x170] sm:$0xff]
        %v1219 = vld [vmem:[%s1058 + $0x1] sm:$0xff]
        %v1220 = vld [vmem:[%s1058 + $0x9] sm:$0xff]
        %v1221 = vld [vmem:[%s1058 + $0x19] sm:$0xff]
        %v1222 = vld [vmem:[%s1058 + $0x21] sm:$0xff]
        %v1223 = vld [vmem:[%s1058 + $0x31] sm:$0xff]
        %v1224 = vld [vmem:[%s1058 + $0x39] sm:$0xff]
        %v1225 = vld [vmem:[%s1058 + $0x49] sm:$0xff]
        %v1226 = vld [vmem:[%s1058 + $0x51] sm:$0xff]
        %v1227 = vld [vmem:[%s1058 + $0x61] sm:$0xff]
        %v1228 = vld [vmem:[%s1058 + $0x69] sm:$0xff]
        %v1229 = vld [vmem:[%s1058 + $0x79] sm:$0xff]
        %v1230 = vld [vmem:[%s1058 + $0x81] sm:$0xff]
        %v1231 = vld [vmem:[%s1058 + $0x91] sm:$0xff]
        %v1232 = vld [vmem:[%s1058 + $0x99] sm:$0xff]
        %v1233 = vld [vmem:[%s1058 + $0xa9] sm:$0xff]
        %v1234 = vld [vmem:[%s1058 + $0xb1] sm:$0xff]
        %v1235 = vld [vmem:[%s1058 + $0xc1] sm:$0xff]
        %v1236 = vld [vmem:[%s1058 + $0xc9] sm:$0xff]
        %v1237 = vld [vmem:[%s1058 + $0xd9] sm:$0xff]
        %v1238 = vld [vmem:[%s1058 + $0xe1] sm:$0xff]
        %v1239 = vld [vmem:[%s1058 + $0xf1] sm:$0xff]
        %v1240 = vld [vmem:[%s1058 + $0xf9] sm:$0xff]
        %v1241 = vld [vmem:[%s1058 + $0x109] sm:$0xff]
        %v1242 = vld [vmem:[%s1058 + $0x111] sm:$0xff]
        %v1243 = vld [vmem:[%s1058 + $0x121] sm:$0xff]
        %v1244 = vld [vmem:[%s1058 + $0x129] sm:$0xff]
        %v1245 = vld [vmem:[%s1058 + $0x139] sm:$0xff]
        %v1246 = vld [vmem:[%s1058 + $0x141] sm:$0xff]
        %v1247 = vld [vmem:[%s1058 + $0x151] sm:$0xff]
        %v1248 = vld [vmem:[%s1058 + $0x159] sm:$0xff]
        %v1249 = vld [vmem:[%s1058 + $0x169] sm:$0xff]
        %v1250 = vld [vmem:[%s1058 + $0x171] sm:$0xff]
        %v1251 = vld [vmem:[%s1058 + $0x2] sm:$0xff]
        %v1252 = vld [vmem:[%s1058 + $0xa] sm:$0xff]
        %v1253 = vld [vmem:[%s1058 + $0x1a] sm:$0xff]
        %v1254 = vld [vmem:[%s1058 + $0x22] sm:$0xff]
        %v1255 = vld [vmem:[%s1058 + $0x32] sm:$0xff]
        %v1256 = vld [vmem:[%s1058 + $0x3a] sm:$0xff]
        %v1257 = vld [vmem:[%s1058 + $0x4a] sm:$0xff]
        %v1258 = vld [vmem:[%s1058 + $0x52] sm:$0xff]
        %v1259 = vld [vmem:[%s1058 + $0x62] sm:$0xff]
        %v1260 = vld [vmem:[%s1058 + $0x6a] sm:$0xff]
        %v1261 = vld [vmem:[%s1058 + $0x7a] sm:$0xff]
        %v1262 = vld [vmem:[%s1058 + $0x82] sm:$0xff]
        %v1263 = vld [vmem:[%s1058 + $0x92] sm:$0xff]
        %v1264 = vld [vmem:[%s1058 + $0x9a] sm:$0xff]
        %v1265 = vld [vmem:[%s1058 + $0xaa] sm:$0xff]
        %v1266 = vld [vmem:[%s1058 + $0xb2] sm:$0xff]
        %v1267 = vld [vmem:[%s1058 + $0xc2] sm:$0xff]
        %v1268 = vld [vmem:[%s1058 + $0xca] sm:$0xff]
        %v1269 = vld [vmem:[%s1058 + $0xda] sm:$0xff]
        %v1270 = vld [vmem:[%s1058 + $0xe2] sm:$0xff]
        %v1271 = vld [vmem:[%s1058 + $0xf2] sm:$0xff]
        %v1272 = vld [vmem:[%s1058 + $0xfa] sm:$0xff]
        %v1273 = vld [vmem:[%s1058 + $0x10a] sm:$0xff]
        %v1274 = vld [vmem:[%s1058 + $0x112] sm:$0xff]
        %v1275 = vld [vmem:[%s1058 + $0x122] sm:$0xff]
        %v1276 = vld [vmem:[%s1058 + $0x12a] sm:$0xff]
        %v1277 = vld [vmem:[%s1058 + $0x13a] sm:$0xff]
        %v1278 = vld [vmem:[%s1058 + $0x142] sm:$0xff]
        %v1279 = vld [vmem:[%s1058 + $0x152] sm:$0xff]
        %v1280 = vld [vmem:[%s1058 + $0x15a] sm:$0xff]
        %v1281 = vld [vmem:[%s1058 + $0x16a] sm:$0xff]
        %v1282 = vld [vmem:[%s1058 + $0x172] sm:$0xff]
        %s1283 = scalar_lea.vmem [#allocation2], 48
        %v1284 = vld [vmem:[%s1283] sm:$0xff]
        %v1285 = vld [vmem:[%s1283 + $0x8] sm:$0xff]
        %v1286 = vld [vmem:[%s1283 + $0x18] sm:$0xff]
        %v1287 = vld [vmem:[%s1283 + $0x20] sm:$0xff]
        %v1288 = vld [vmem:[%s1283 + $0x30] sm:$0xff]
        %v1289 = vld [vmem:[%s1283 + $0x38] sm:$0xff]
        %v1290 = vld [vmem:[%s1283 + $0x48] sm:$0xff]
        %v1291 = vld [vmem:[%s1283 + $0x50] sm:$0xff]
        %v1292 = vld [vmem:[%s1283 + $0x60] sm:$0xff]
        %v1293 = vld [vmem:[%s1283 + $0x68] sm:$0xff]
        %v1294 = vld [vmem:[%s1283 + $0x78] sm:$0xff]
        %v1295 = vld [vmem:[%s1283 + $0x80] sm:$0xff]
        %v1296 = vld [vmem:[%s1283 + $0x90] sm:$0xff]
        %v1297 = vld [vmem:[%s1283 + $0x98] sm:$0xff]
        %v1298 = vld [vmem:[%s1283 + $0xa8] sm:$0xff]
        %v1299 = vld [vmem:[%s1283 + $0xb0] sm:$0xff]
        %v1300 = vld [vmem:[%s1283 + $0xc0] sm:$0xff]
        %v1301 = vld [vmem:[%s1283 + $0xc8] sm:$0xff]
        %v1302 = vld [vmem:[%s1283 + $0xd8] sm:$0xff]
        %v1303 = vld [vmem:[%s1283 + $0xe0] sm:$0xff]
        %v1304 = vld [vmem:[%s1283 + $0xf0] sm:$0xff]
        %v1305 = vld [vmem:[%s1283 + $0xf8] sm:$0xff]
        %v1306 = vld [vmem:[%s1283 + $0x108] sm:$0xff]
        %v1307 = vld [vmem:[%s1283 + $0x110] sm:$0xff]
        %v1308 = vld [vmem:[%s1283 + $0x120] sm:$0xff]
        %v1309 = vld [vmem:[%s1283 + $0x128] sm:$0xff]
        %v1310 = vld [vmem:[%s1283 + $0x138] sm:$0xff]
        %v1311 = vld [vmem:[%s1283 + $0x140] sm:$0xff]
        %v1312 = vld [vmem:[%s1283 + $0x150] sm:$0xff]
        %v1313 = vld [vmem:[%s1283 + $0x158] sm:$0xff]
        %v1314 = vld [vmem:[%s1283 + $0x168] sm:$0xff]
        %v1315 = vld [vmem:[%s1283 + $0x170] sm:$0xff]
        %v1316 = vld [vmem:[%s1283 + $0x1] sm:$0xff]
        %v1317 = vld [vmem:[%s1283 + $0x9] sm:$0xff]
        %v1318 = vld [vmem:[%s1283 + $0x19] sm:$0xff]
        %v1319 = vld [vmem:[%s1283 + $0x21] sm:$0xff]
        %v1320 = vld [vmem:[%s1283 + $0x31] sm:$0xff]
        %v1321 = vld [vmem:[%s1283 + $0x39] sm:$0xff]
        %v1322 = vld [vmem:[%s1283 + $0x49] sm:$0xff]
        %v1323 = vld [vmem:[%s1283 + $0x51] sm:$0xff]
        %v1324 = vld [vmem:[%s1283 + $0x61] sm:$0xff]
        %v1325 = vld [vmem:[%s1283 + $0x69] sm:$0xff]
        %v1326 = vld [vmem:[%s1283 + $0x79] sm:$0xff]
        %v1327 = vld [vmem:[%s1283 + $0x81] sm:$0xff]
        %v1328 = vld [vmem:[%s1283 + $0x91] sm:$0xff]
        %v1329 = vld [vmem:[%s1283 + $0x99] sm:$0xff]
        %v1330 = vld [vmem:[%s1283 + $0xa9] sm:$0xff]
        %v1331 = vld [vmem:[%s1283 + $0xb1] sm:$0xff]
        %v1332 = vld [vmem:[%s1283 + $0xc1] sm:$0xff]
        %v1333 = vld [vmem:[%s1283 + $0xc9] sm:$0xff]
        %v1334 = vld [vmem:[%s1283 + $0xd9] sm:$0xff]
        %v1335 = vld [vmem:[%s1283 + $0xe1] sm:$0xff]
        %v1336 = vld [vmem:[%s1283 + $0xf1] sm:$0xff]
        %v1337 = vld [vmem:[%s1283 + $0xf9] sm:$0xff]
        %v1338 = vld [vmem:[%s1283 + $0x109] sm:$0xff]
        %v1339 = vld [vmem:[%s1283 + $0x111] sm:$0xff]
        %v1340 = vld [vmem:[%s1283 + $0x121] sm:$0xff]
        %v1341 = vld [vmem:[%s1283 + $0x129] sm:$0xff]
        %v1342 = vld [vmem:[%s1283 + $0x139] sm:$0xff]
        %v1343 = vld [vmem:[%s1283 + $0x141] sm:$0xff]
        %v1344 = vld [vmem:[%s1283 + $0x151] sm:$0xff]
        %v1345 = vld [vmem:[%s1283 + $0x159] sm:$0xff]
        %v1346 = vld [vmem:[%s1283 + $0x169] sm:$0xff]
        %v1347 = vld [vmem:[%s1283 + $0x171] sm:$0xff]
        %v1348 = vld [vmem:[%s1283 + $0x2] sm:$0xff]
        %v1349 = vld [vmem:[%s1283 + $0xa] sm:$0xff]
        %v1350 = vld [vmem:[%s1283 + $0x1a] sm:$0xff]
        %v1351 = vld [vmem:[%s1283 + $0x22] sm:$0xff]
        %v1352 = vld [vmem:[%s1283 + $0x32] sm:$0xff]
        %v1353 = vld [vmem:[%s1283 + $0x3a] sm:$0xff]
        %v1354 = vld [vmem:[%s1283 + $0x4a] sm:$0xff]
        %v1355 = vld [vmem:[%s1283 + $0x52] sm:$0xff]
        %v1356 = vld [vmem:[%s1283 + $0x62] sm:$0xff]
        %v1357 = vld [vmem:[%s1283 + $0x6a] sm:$0xff]
        %v1358 = vld [vmem:[%s1283 + $0x7a] sm:$0xff]
        %v1359 = vld [vmem:[%s1283 + $0x82] sm:$0xff]
        %v1360 = vld [vmem:[%s1283 + $0x92] sm:$0xff]
        %v1361 = vld [vmem:[%s1283 + $0x9a] sm:$0xff]
        %v1362 = vld [vmem:[%s1283 + $0xaa] sm:$0xff]
        %v1363 = vld [vmem:[%s1283 + $0xb2] sm:$0xff]
        %v1364 = vld [vmem:[%s1283 + $0xc2] sm:$0xff]
        %v1365 = vld [vmem:[%s1283 + $0xca] sm:$0xff]
        %v1366 = vld [vmem:[%s1283 + $0xda] sm:$0xff]
        %v1367 = vld [vmem:[%s1283 + $0xe2] sm:$0xff]
        %v1368 = vld [vmem:[%s1283 + $0xf2] sm:$0xff]
        %v1369 = vld [vmem:[%s1283 + $0xfa] sm:$0xff]
        %v1370 = vld [vmem:[%s1283 + $0x10a] sm:$0xff]
        %v1371 = vld [vmem:[%s1283 + $0x112] sm:$0xff]
        %v1372 = vld [vmem:[%s1283 + $0x122] sm:$0xff]
        %v1373 = vld [vmem:[%s1283 + $0x12a] sm:$0xff]
        %v1374 = vld [vmem:[%s1283 + $0x13a] sm:$0xff]
        %v1375 = vld [vmem:[%s1283 + $0x142] sm:$0xff]
        %v1376 = vld [vmem:[%s1283 + $0x152] sm:$0xff]
        %v1377 = vld [vmem:[%s1283 + $0x15a] sm:$0xff]
        %v1378 = vld [vmem:[%s1283 + $0x16a] sm:$0xff]
        %v1379 = vld [vmem:[%s1283 + $0x172] sm:$0xff]
        %1412 = vrot.lane.b32.xlu0 %v1123, 32
        %v1413 = vpop.permute.xlu0 %1412
        %1414 = vrot.lane.b32.xlu0 %v1124, 32
        %v1415 = vpop.permute.xlu0 %1414
        %1416 = vrot.lane.b32.xlu0 %v1125, 32
        %v1417 = vpop.permute.xlu0 %1416
        %1418 = vrot.lane.b32.xlu0 %v1126, 32
        %v1419 = vpop.permute.xlu0 %1418
        %1420 = vrot.lane.b32.xlu0 %v1127, 32
        %v1421 = vpop.permute.xlu0 %1420
        %1422 = vrot.lane.b32.xlu0 %v1128, 32
        %v1423 = vpop.permute.xlu0 %1422
        %1424 = vrot.lane.b32.xlu0 %v1129, 32
        %v1425 = vpop.permute.xlu0 %1424
        %1426 = vrot.lane.b32.xlu0 %v1130, 32
        %v1427 = vpop.permute.xlu0 %1426
        %1428 = vrot.lane.b32.xlu0 %v1131, 32
        %v1429 = vpop.permute.xlu0 %1428
        %1430 = vrot.lane.b32.xlu0 %v1132, 32
        %v1431 = vpop.permute.xlu0 %1430
        %1432 = vrot.lane.b32.xlu0 %v1133, 32
        %v1433 = vpop.permute.xlu0 %1432
        %1434 = vrot.lane.b32.xlu0 %v1134, 32
        %v1435 = vpop.permute.xlu0 %1434
        %1436 = vrot.lane.b32.xlu0 %v1135, 32
        %v1437 = vpop.permute.xlu0 %1436
        %1438 = vrot.lane.b32.xlu0 %v1136, 32
        %v1439 = vpop.permute.xlu0 %1438
        %1440 = vrot.lane.b32.xlu0 %v1137, 32
        %v1441 = vpop.permute.xlu0 %1440
        %1442 = vrot.lane.b32.xlu0 %v1138, 32
        %v1443 = vpop.permute.xlu0 %1442
        %1444 = vrot.lane.b32.xlu0 %v1139, 32
        %v1445 = vpop.permute.xlu0 %1444
        %1446 = vrot.lane.b32.xlu0 %v1140, 32
        %v1447 = vpop.permute.xlu0 %1446
        %1448 = vrot.lane.b32.xlu0 %v1141, 32
        %v1449 = vpop.permute.xlu0 %1448
        %1450 = vrot.lane.b32.xlu0 %v1142, 32
        %v1451 = vpop.permute.xlu0 %1450
        %1452 = vrot.lane.b32.xlu0 %v1143, 32
        %v1453 = vpop.permute.xlu0 %1452
        %1454 = vrot.lane.b32.xlu0 %v1144, 32
        %v1455 = vpop.permute.xlu0 %1454
        %1456 = vrot.lane.b32.xlu0 %v1145, 32
        %v1457 = vpop.permute.xlu0 %1456
        %1458 = vrot.lane.b32.xlu0 %v1146, 32
        %v1459 = vpop.permute.xlu0 %1458
        %1460 = vrot.lane.b32.xlu0 %v1147, 32
        %v1461 = vpop.permute.xlu0 %1460
        %1462 = vrot.lane.b32.xlu0 %v1148, 32
        %v1463 = vpop.permute.xlu0 %1462
        %1464 = vrot.lane.b32.xlu0 %v1149, 32
        %v1465 = vpop.permute.xlu0 %1464
        %1466 = vrot.lane.b32.xlu0 %v1150, 32
        %v1467 = vpop.permute.xlu0 %1466
        %1468 = vrot.lane.b32.xlu0 %v1151, 32
        %v1469 = vpop.permute.xlu0 %1468
        %1470 = vrot.lane.b32.xlu0 %v1152, 32
        %v1471 = vpop.permute.xlu0 %1470
        %1472 = vrot.lane.b32.xlu0 %v1153, 32
        %v1473 = vpop.permute.xlu0 %1472
        %1474 = vrot.lane.b32.xlu0 %v1154, 32
        %v1475 = vpop.permute.xlu0 %1474
        %1540 = vrot.lane.b32.xlu0 %v1155, 64
        %v1541 = vpop.permute.xlu0 %1540
        %1542 = vrot.lane.b32.xlu0 %v1156, 64
        %v1543 = vpop.permute.xlu0 %1542
        %1544 = vrot.lane.b32.xlu0 %v1157, 64
        %v1545 = vpop.permute.xlu0 %1544
        %1546 = vrot.lane.b32.xlu0 %v1158, 64
        %v1547 = vpop.permute.xlu0 %1546
        %1548 = vrot.lane.b32.xlu0 %v1159, 64
        %v1549 = vpop.permute.xlu0 %1548
        %1550 = vrot.lane.b32.xlu0 %v1160, 64
        %v1551 = vpop.permute.xlu0 %1550
        %1552 = vrot.lane.b32.xlu0 %v1161, 64
        %v1553 = vpop.permute.xlu0 %1552
        %1554 = vrot.lane.b32.xlu0 %v1162, 64
        %v1555 = vpop.permute.xlu0 %1554
        %1556 = vrot.lane.b32.xlu0 %v1163, 64
        %v1557 = vpop.permute.xlu0 %1556
        %1558 = vrot.lane.b32.xlu0 %v1164, 64
        %v1559 = vpop.permute.xlu0 %1558
        %1560 = vrot.lane.b32.xlu0 %v1165, 64
        %v1561 = vpop.permute.xlu0 %1560
        %1562 = vrot.lane.b32.xlu0 %v1166, 64
        %v1563 = vpop.permute.xlu0 %1562
        %1564 = vrot.lane.b32.xlu0 %v1167, 64
        %v1565 = vpop.permute.xlu0 %1564
        %1566 = vrot.lane.b32.xlu0 %v1168, 64
        %v1567 = vpop.permute.xlu0 %1566
        %1568 = vrot.lane.b32.xlu0 %v1169, 64
        %v1569 = vpop.permute.xlu0 %1568
        %1570 = vrot.lane.b32.xlu0 %v1170, 64
        %v1571 = vpop.permute.xlu0 %1570
        %1572 = vrot.lane.b32.xlu0 %v1171, 64
        %v1573 = vpop.permute.xlu0 %1572
        %1574 = vrot.lane.b32.xlu0 %v1172, 64
        %v1575 = vpop.permute.xlu0 %1574
        %1576 = vrot.lane.b32.xlu0 %v1173, 64
        %v1577 = vpop.permute.xlu0 %1576
        %1578 = vrot.lane.b32.xlu0 %v1174, 64
        %v1579 = vpop.permute.xlu0 %1578
        %1580 = vrot.lane.b32.xlu0 %v1175, 64
        %v1581 = vpop.permute.xlu0 %1580
        %1582 = vrot.lane.b32.xlu0 %v1176, 64
        %v1583 = vpop.permute.xlu0 %1582
        %1584 = vrot.lane.b32.xlu0 %v1177, 64
        %v1585 = vpop.permute.xlu0 %1584
        %1586 = vrot.lane.b32.xlu0 %v1178, 64
        %v1587 = vpop.permute.xlu0 %1586
        %1588 = vrot.lane.b32.xlu0 %v1179, 64
        %v1589 = vpop.permute.xlu0 %1588
        %1590 = vrot.lane.b32.xlu0 %v1180, 64
        %v1591 = vpop.permute.xlu0 %1590
        %1592 = vrot.lane.b32.xlu0 %v1181, 64
        %v1593 = vpop.permute.xlu0 %1592
        %1594 = vrot.lane.b32.xlu0 %v1182, 64
        %v1595 = vpop.permute.xlu0 %1594
        %1596 = vrot.lane.b32.xlu0 %v1183, 64
        %v1597 = vpop.permute.xlu0 %1596
        %1598 = vrot.lane.b32.xlu0 %v1184, 64
        %v1599 = vpop.permute.xlu0 %1598
        %1600 = vrot.lane.b32.xlu0 %v1185, 64
        %v1601 = vpop.permute.xlu0 %1600
        %1602 = vrot.lane.b32.xlu0 %v1186, 64
        %v1603 = vpop.permute.xlu0 %1602
        %1668 = vrot.lane.b32.xlu0 %v1187, 96
        %v1669 = vpop.permute.xlu0 %1668
        %1670 = vrot.lane.b32.xlu0 %v1188, 96
        %v1671 = vpop.permute.xlu0 %1670
        %1672 = vrot.lane.b32.xlu0 %v1189, 96
        %v1673 = vpop.permute.xlu0 %1672
        %1674 = vrot.lane.b32.xlu0 %v1190, 96
        %v1675 = vpop.permute.xlu0 %1674
        %1676 = vrot.lane.b32.xlu0 %v1191, 96
        %v1677 = vpop.permute.xlu0 %1676
        %1678 = vrot.lane.b32.xlu0 %v1192, 96
        %v1679 = vpop.permute.xlu0 %1678
        %1680 = vrot.lane.b32.xlu0 %v1193, 96
        %v1681 = vpop.permute.xlu0 %1680
        %1682 = vrot.lane.b32.xlu0 %v1194, 96
        %v1683 = vpop.permute.xlu0 %1682
        %1684 = vrot.lane.b32.xlu0 %v1195, 96
        %v1685 = vpop.permute.xlu0 %1684
        %1686 = vrot.lane.b32.xlu0 %v1196, 96
        %v1687 = vpop.permute.xlu0 %1686
        %1688 = vrot.lane.b32.xlu0 %v1197, 96
        %v1689 = vpop.permute.xlu0 %1688
        %1690 = vrot.lane.b32.xlu0 %v1198, 96
        %v1691 = vpop.permute.xlu0 %1690
        %1692 = vrot.lane.b32.xlu0 %v1199, 96
        %v1693 = vpop.permute.xlu0 %1692
        %1694 = vrot.lane.b32.xlu0 %v1200, 96
        %v1695 = vpop.permute.xlu0 %1694
        %1696 = vrot.lane.b32.xlu0 %v1201, 96
        %v1697 = vpop.permute.xlu0 %1696
        %1698 = vrot.lane.b32.xlu0 %v1202, 96
        %v1699 = vpop.permute.xlu0 %1698
        %1700 = vrot.lane.b32.xlu0 %v1203, 96
        %v1701 = vpop.permute.xlu0 %1700
        %1702 = vrot.lane.b32.xlu0 %v1204, 96
        %v1703 = vpop.permute.xlu0 %1702
        %1704 = vrot.lane.b32.xlu0 %v1205, 96
        %v1705 = vpop.permute.xlu0 %1704
        %1706 = vrot.lane.b32.xlu0 %v1206, 96
        %v1707 = vpop.permute.xlu0 %1706
        %1708 = vrot.lane.b32.xlu0 %v1207, 96
        %v1709 = vpop.permute.xlu0 %1708
        %1710 = vrot.lane.b32.xlu0 %v1208, 96
        %v1711 = vpop.permute.xlu0 %1710
        %1712 = vrot.lane.b32.xlu0 %v1209, 96
        %v1713 = vpop.permute.xlu0 %1712
        %1714 = vrot.lane.b32.xlu0 %v1210, 96
        %v1715 = vpop.permute.xlu0 %1714
        %1716 = vrot.lane.b32.xlu0 %v1211, 96
        %v1717 = vpop.permute.xlu0 %1716
        %1718 = vrot.lane.b32.xlu0 %v1212, 96
        %v1719 = vpop.permute.xlu0 %1718
        %1720 = vrot.lane.b32.xlu0 %v1213, 96
        %v1721 = vpop.permute.xlu0 %1720
        %1722 = vrot.lane.b32.xlu0 %v1214, 96
        %v1723 = vpop.permute.xlu0 %1722
        %1724 = vrot.lane.b32.xlu0 %v1215, 96
        %v1725 = vpop.permute.xlu0 %1724
        %1726 = vrot.lane.b32.xlu0 %v1216, 96
        %v1727 = vpop.permute.xlu0 %1726
        %1728 = vrot.lane.b32.xlu0 %v1217, 96
        %v1729 = vpop.permute.xlu0 %1728
        %1730 = vrot.lane.b32.xlu0 %v1218, 96
        %v1731 = vpop.permute.xlu0 %1730
        %1796 = vrot.lane.b32.xlu0 %v1251, 32
        %v1797 = vpop.permute.xlu0 %1796
        %1798 = vrot.lane.b32.xlu0 %v1252, 32
        %v1799 = vpop.permute.xlu0 %1798
        %1800 = vrot.lane.b32.xlu0 %v1253, 32
        %v1801 = vpop.permute.xlu0 %1800
        %1802 = vrot.lane.b32.xlu0 %v1254, 32
        %v1803 = vpop.permute.xlu0 %1802
        %1804 = vrot.lane.b32.xlu0 %v1255, 32
        %v1805 = vpop.permute.xlu0 %1804
        %1806 = vrot.lane.b32.xlu0 %v1256, 32
        %v1807 = vpop.permute.xlu0 %1806
        %1808 = vrot.lane.b32.xlu0 %v1257, 32
        %v1809 = vpop.permute.xlu0 %1808
        %1810 = vrot.lane.b32.xlu0 %v1258, 32
        %v1811 = vpop.permute.xlu0 %1810
        %1812 = vrot.lane.b32.xlu0 %v1259, 32
        %v1813 = vpop.permute.xlu0 %1812
        %1814 = vrot.lane.b32.xlu0 %v1260, 32
        %v1815 = vpop.permute.xlu0 %1814
        %1816 = vrot.lane.b32.xlu0 %v1261, 32
        %v1817 = vpop.permute.xlu0 %1816
        %1818 = vrot.lane.b32.xlu0 %v1262, 32
        %v1819 = vpop.permute.xlu0 %1818
        %1820 = vrot.lane.b32.xlu0 %v1263, 32
        %v1821 = vpop.permute.xlu0 %1820
        %1822 = vrot.lane.b32.xlu0 %v1264, 32
        %v1823 = vpop.permute.xlu0 %1822
        %1824 = vrot.lane.b32.xlu0 %v1265, 32
        %v1825 = vpop.permute.xlu0 %1824
        %1826 = vrot.lane.b32.xlu0 %v1266, 32
        %v1827 = vpop.permute.xlu0 %1826
        %1828 = vrot.lane.b32.xlu0 %v1267, 32
        %v1829 = vpop.permute.xlu0 %1828
        %1830 = vrot.lane.b32.xlu0 %v1268, 32
        %v1831 = vpop.permute.xlu0 %1830
        %1832 = vrot.lane.b32.xlu0 %v1269, 32
        %v1833 = vpop.permute.xlu0 %1832
        %1834 = vrot.lane.b32.xlu0 %v1270, 32
        %v1835 = vpop.permute.xlu0 %1834
        %1836 = vrot.lane.b32.xlu0 %v1271, 32
        %v1837 = vpop.permute.xlu0 %1836
        %1838 = vrot.lane.b32.xlu0 %v1272, 32
        %v1839 = vpop.permute.xlu0 %1838
        %1840 = vrot.lane.b32.xlu0 %v1273, 32
        %v1841 = vpop.permute.xlu0 %1840
        %1842 = vrot.lane.b32.xlu0 %v1274, 32
        %v1843 = vpop.permute.xlu0 %1842
        %1844 = vrot.lane.b32.xlu0 %v1275, 32
        %v1845 = vpop.permute.xlu0 %1844
        %1846 = vrot.lane.b32.xlu0 %v1276, 32
        %v1847 = vpop.permute.xlu0 %1846
        %1848 = vrot.lane.b32.xlu0 %v1277, 32
        %v1849 = vpop.permute.xlu0 %1848
        %1850 = vrot.lane.b32.xlu0 %v1278, 32
        %v1851 = vpop.permute.xlu0 %1850
        %1852 = vrot.lane.b32.xlu0 %v1279, 32
        %v1853 = vpop.permute.xlu0 %1852
        %1854 = vrot.lane.b32.xlu0 %v1280, 32
        %v1855 = vpop.permute.xlu0 %1854
        %1856 = vrot.lane.b32.xlu0 %v1281, 32
        %v1857 = vpop.permute.xlu0 %1856
        %1858 = vrot.lane.b32.xlu0 %v1282, 32
        %v1859 = vpop.permute.xlu0 %1858
        %1924 = vrot.lane.b32.xlu0 %v1284, 64
        %v1925 = vpop.permute.xlu0 %1924
        %1926 = vrot.lane.b32.xlu0 %v1285, 64
        %v1927 = vpop.permute.xlu0 %1926
        %1928 = vrot.lane.b32.xlu0 %v1286, 64
        %v1929 = vpop.permute.xlu0 %1928
        %1930 = vrot.lane.b32.xlu0 %v1287, 64
        %v1931 = vpop.permute.xlu0 %1930
        %1932 = vrot.lane.b32.xlu0 %v1288, 64
        %v1933 = vpop.permute.xlu0 %1932
        %1934 = vrot.lane.b32.xlu0 %v1289, 64
        %v1935 = vpop.permute.xlu0 %1934
        %1936 = vrot.lane.b32.xlu0 %v1290, 64
        %v1937 = vpop.permute.xlu0 %1936
        %1938 = vrot.lane.b32.xlu0 %v1291, 64
        %v1939 = vpop.permute.xlu0 %1938
        %1940 = vrot.lane.b32.xlu0 %v1292, 64
        %v1941 = vpop.permute.xlu0 %1940
        %1942 = vrot.lane.b32.xlu0 %v1293, 64
        %v1943 = vpop.permute.xlu0 %1942
        %1944 = vrot.lane.b32.xlu0 %v1294, 64
        %v1945 = vpop.permute.xlu0 %1944
        %1946 = vrot.lane.b32.xlu0 %v1295, 64
        %v1947 = vpop.permute.xlu0 %1946
        %1948 = vrot.lane.b32.xlu0 %v1296, 64
        %v1949 = vpop.permute.xlu0 %1948
        %1950 = vrot.lane.b32.xlu0 %v1297, 64
        %v1951 = vpop.permute.xlu0 %1950
        %1952 = vrot.lane.b32.xlu0 %v1298, 64
        %v1953 = vpop.permute.xlu0 %1952
        %1954 = vrot.lane.b32.xlu0 %v1299, 64
        %v1955 = vpop.permute.xlu0 %1954
        %1956 = vrot.lane.b32.xlu0 %v1300, 64
        %v1957 = vpop.permute.xlu0 %1956
        %1958 = vrot.lane.b32.xlu0 %v1301, 64
        %v1959 = vpop.permute.xlu0 %1958
        %1960 = vrot.lane.b32.xlu0 %v1302, 64
        %v1961 = vpop.permute.xlu0 %1960
        %1962 = vrot.lane.b32.xlu0 %v1303, 64
        %v1963 = vpop.permute.xlu0 %1962
        %1964 = vrot.lane.b32.xlu0 %v1304, 64
        %v1965 = vpop.permute.xlu0 %1964
        %1966 = vrot.lane.b32.xlu0 %v1305, 64
        %v1967 = vpop.permute.xlu0 %1966
        %1968 = vrot.lane.b32.xlu0 %v1306, 64
        %v1969 = vpop.permute.xlu0 %1968
        %1970 = vrot.lane.b32.xlu0 %v1307, 64
        %v1971 = vpop.permute.xlu0 %1970
        %1972 = vrot.lane.b32.xlu0 %v1308, 64
        %v1973 = vpop.permute.xlu0 %1972
        %1974 = vrot.lane.b32.xlu0 %v1309, 64
        %v1975 = vpop.permute.xlu0 %1974
        %1976 = vrot.lane.b32.xlu0 %v1310, 64
        %v1977 = vpop.permute.xlu0 %1976
        %1978 = vrot.lane.b32.xlu0 %v1311, 64
        %v1979 = vpop.permute.xlu0 %1978
        %1980 = vrot.lane.b32.xlu0 %v1312, 64
        %v1981 = vpop.permute.xlu0 %1980
        %1982 = vrot.lane.b32.xlu0 %v1313, 64
        %v1983 = vpop.permute.xlu0 %1982
        %1984 = vrot.lane.b32.xlu0 %v1314, 64
        %v1985 = vpop.permute.xlu0 %1984
        %1986 = vrot.lane.b32.xlu0 %v1315, 64
        %v1987 = vpop.permute.xlu0 %1986
        %2052 = vrot.lane.b32.xlu0 %v1316, 96
        %v2053 = vpop.permute.xlu0 %2052
        %2054 = vrot.lane.b32.xlu0 %v1317, 96
        %v2055 = vpop.permute.xlu0 %2054
        %2056 = vrot.lane.b32.xlu0 %v1318, 96
        %v2057 = vpop.permute.xlu0 %2056
        %2058 = vrot.lane.b32.xlu0 %v1319, 96
        %v2059 = vpop.permute.xlu0 %2058
        %2060 = vrot.lane.b32.xlu0 %v1320, 96
        %v2061 = vpop.permute.xlu0 %2060
        %2062 = vrot.lane.b32.xlu0 %v1321, 96
        %v2063 = vpop.permute.xlu0 %2062
        %2064 = vrot.lane.b32.xlu0 %v1322, 96
        %v2065 = vpop.permute.xlu0 %2064
        %2066 = vrot.lane.b32.xlu0 %v1323, 96
        %v2067 = vpop.permute.xlu0 %2066
        %2068 = vrot.lane.b32.xlu0 %v1324, 96
        %v2069 = vpop.permute.xlu0 %2068
        %2070 = vrot.lane.b32.xlu0 %v1325, 96
        %v2071 = vpop.permute.xlu0 %2070
        %2072 = vrot.lane.b32.xlu0 %v1326, 96
        %v2073 = vpop.permute.xlu0 %2072
        %2074 = vrot.lane.b32.xlu0 %v1327, 96
        %v2075 = vpop.permute.xlu0 %2074
        %2076 = vrot.lane.b32.xlu0 %v1328, 96
        %v2077 = vpop.permute.xlu0 %2076
        %2078 = vrot.lane.b32.xlu0 %v1329, 96
        %v2079 = vpop.permute.xlu0 %2078
        %2080 = vrot.lane.b32.xlu0 %v1330, 96
        %v2081 = vpop.permute.xlu0 %2080
        %2082 = vrot.lane.b32.xlu0 %v1331, 96
        %v2083 = vpop.permute.xlu0 %2082
        %2084 = vrot.lane.b32.xlu0 %v1332, 96
        %v2085 = vpop.permute.xlu0 %2084
        %2086 = vrot.lane.b32.xlu0 %v1333, 96
        %v2087 = vpop.permute.xlu0 %2086
        %2088 = vrot.lane.b32.xlu0 %v1334, 96
        %v2089 = vpop.permute.xlu0 %2088
        %2090 = vrot.lane.b32.xlu0 %v1335, 96
        %v2091 = vpop.permute.xlu0 %2090
        %2092 = vrot.lane.b32.xlu0 %v1336, 96
        %v2093 = vpop.permute.xlu0 %2092
        %2094 = vrot.lane.b32.xlu0 %v1337, 96
        %v2095 = vpop.permute.xlu0 %2094
        %2096 = vrot.lane.b32.xlu0 %v1338, 96
        %v2097 = vpop.permute.xlu0 %2096
        %2098 = vrot.lane.b32.xlu0 %v1339, 96
        %v2099 = vpop.permute.xlu0 %2098
        %2100 = vrot.lane.b32.xlu0 %v1340, 96
        %v2101 = vpop.permute.xlu0 %2100
        %2102 = vrot.lane.b32.xlu0 %v1341, 96
        %v2103 = vpop.permute.xlu0 %2102
        %2104 = vrot.lane.b32.xlu0 %v1342, 96
        %v2105 = vpop.permute.xlu0 %2104
        %2106 = vrot.lane.b32.xlu0 %v1343, 96
        %v2107 = vpop.permute.xlu0 %2106
        %2108 = vrot.lane.b32.xlu0 %v1344, 96
        %v2109 = vpop.permute.xlu0 %2108
        %2110 = vrot.lane.b32.xlu0 %v1345, 96
        %v2111 = vpop.permute.xlu0 %2110
        %2112 = vrot.lane.b32.xlu0 %v1346, 96
        %v2113 = vpop.permute.xlu0 %2112
        %2114 = vrot.lane.b32.xlu0 %v1347, 96
        %v2115 = vpop.permute.xlu0 %2114
        %v2148 = vsel %vm450, %v1091, %v1413
        %v2149 = vsel %vm450, %v1092, %v1415
        %v2150 = vsel %vm450, %v1093, %v1417
        %v2151 = vsel %vm450, %v1094, %v1419
        %v2152 = vsel %vm450, %v1095, %v1421
        %v2153 = vsel %vm450, %v1096, %v1423
        %v2154 = vsel %vm450, %v1097, %v1425
        %v2155 = vsel %vm450, %v1098, %v1427
        %v2156 = vsel %vm450, %v1099, %v1429
        %v2157 = vsel %vm450, %v1100, %v1431
        %v2158 = vsel %vm450, %v1101, %v1433
        %v2159 = vsel %vm450, %v1102, %v1435
        %v2160 = vsel %vm450, %v1103, %v1437
        %v2161 = vsel %vm450, %v1104, %v1439
        %v2162 = vsel %vm450, %v1105, %v1441
        %v2163 = vsel %vm450, %v1106, %v1443
        %v2164 = vsel %vm450, %v1107, %v1445
        %v2165 = vsel %vm450, %v1108, %v1447
        %v2166 = vsel %vm450, %v1109, %v1449
        %v2167 = vsel %vm450, %v1110, %v1451
        %v2168 = vsel %vm450, %v1111, %v1453
        %v2169 = vsel %vm450, %v1112, %v1455
        %v2170 = vsel %vm450, %v1113, %v1457
        %v2171 = vsel %vm450, %v1114, %v1459
        %v2172 = vsel %vm450, %v1115, %v1461
        %v2173 = vsel %vm450, %v1116, %v1463
        %v2174 = vsel %vm450, %v1117, %v1465
        %v2175 = vsel %vm450, %v1118, %v1467
        %v2176 = vsel %vm450, %v1119, %v1469
        %v2177 = vsel %vm450, %v1120, %v1471
        %v2178 = vsel %vm450, %v1121, %v1473
        %v2179 = vsel %vm450, %v1122, %v1475
        %vm2180 = vcmask 523264
        %v2181 = vsel %vm2180, %v2148, %v1541
        %v2182 = vsel %vm2180, %v2149, %v1543
        %v2183 = vsel %vm2180, %v2150, %v1545
        %v2184 = vsel %vm2180, %v2151, %v1547
        %v2185 = vsel %vm2180, %v2152, %v1549
        %v2186 = vsel %vm2180, %v2153, %v1551
        %v2187 = vsel %vm2180, %v2154, %v1553
        %v2188 = vsel %vm2180, %v2155, %v1555
        %v2189 = vsel %vm2180, %v2156, %v1557
        %v2190 = vsel %vm2180, %v2157, %v1559
        %v2191 = vsel %vm2180, %v2158, %v1561
        %v2192 = vsel %vm2180, %v2159, %v1563
        %v2193 = vsel %vm2180, %v2160, %v1565
        %v2194 = vsel %vm2180, %v2161, %v1567
        %v2195 = vsel %vm2180, %v2162, %v1569
        %v2196 = vsel %vm2180, %v2163, %v1571
        %v2197 = vsel %vm2180, %v2164, %v1573
        %v2198 = vsel %vm2180, %v2165, %v1575
        %v2199 = vsel %vm2180, %v2166, %v1577
        %v2200 = vsel %vm2180, %v2167, %v1579
        %v2201 = vsel %vm2180, %v2168, %v1581
        %v2202 = vsel %vm2180, %v2169, %v1583
        %v2203 = vsel %vm2180, %v2170, %v1585
        %v2204 = vsel %vm2180, %v2171, %v1587
        %v2205 = vsel %vm2180, %v2172, %v1589
        %v2206 = vsel %vm2180, %v2173, %v1591
        %v2207 = vsel %vm2180, %v2174, %v1593
        %v2208 = vsel %vm2180, %v2175, %v1595
        %v2209 = vsel %vm2180, %v2176, %v1597
        %v2210 = vsel %vm2180, %v2177, %v1599
        %v2211 = vsel %vm2180, %v2178, %v1601
        %v2212 = vsel %vm2180, %v2179, %v1603
        %vm2213 = vcmask 785408
        %v2214 = vsel %vm2213, %v2181, %v1669
        %v2215 = vsel %vm2213, %v2182, %v1671
        %v2216 = vsel %vm2213, %v2183, %v1673
        %v2217 = vsel %vm2213, %v2184, %v1675
        %v2218 = vsel %vm2213, %v2185, %v1677
        %v2219 = vsel %vm2213, %v2186, %v1679
        %v2220 = vsel %vm2213, %v2187, %v1681
        %v2221 = vsel %vm2213, %v2188, %v1683
        %v2222 = vsel %vm2213, %v2189, %v1685
        %v2223 = vsel %vm2213, %v2190, %v1687
        %v2224 = vsel %vm2213, %v2191, %v1689
        %v2225 = vsel %vm2213, %v2192, %v1691
        %v2226 = vsel %vm2213, %v2193, %v1693
        %v2227 = vsel %vm2213, %v2194, %v1695
        %v2228 = vsel %vm2213, %v2195, %v1697
        %v2229 = vsel %vm2213, %v2196, %v1699
        %v2230 = vsel %vm2213, %v2197, %v1701
        %v2231 = vsel %vm2213, %v2198, %v1703
        %v2232 = vsel %vm2213, %v2199, %v1705
        %v2233 = vsel %vm2213, %v2200, %v1707
        %v2234 = vsel %vm2213, %v2201, %v1709
        %v2235 = vsel %vm2213, %v2202, %v1711
        %v2236 = vsel %vm2213, %v2203, %v1713
        %v2237 = vsel %vm2213, %v2204, %v1715
        %v2238 = vsel %vm2213, %v2205, %v1717
        %v2239 = vsel %vm2213, %v2206, %v1719
        %v2240 = vsel %vm2213, %v2207, %v1721
        %v2241 = vsel %vm2213, %v2208, %v1723
        %v2242 = vsel %vm2213, %v2209, %v1725
        %v2243 = vsel %vm2213, %v2210, %v1727
        %v2244 = vsel %vm2213, %v2211, %v1729
        %v2245 = vsel %vm2213, %v2212, %v1731
        %v2246 = vsel %vm450, %v1219, %v1797
        %v2247 = vsel %vm450, %v1220, %v1799
        %v2248 = vsel %vm450, %v1221, %v1801
        %v2249 = vsel %vm450, %v1222, %v1803
        %v2250 = vsel %vm450, %v1223, %v1805
        %v2251 = vsel %vm450, %v1224, %v1807
        %v2252 = vsel %vm450, %v1225, %v1809
        %v2253 = vsel %vm450, %v1226, %v1811
        %v2254 = vsel %vm450, %v1227, %v1813
        %v2255 = vsel %vm450, %v1228, %v1815
        %v2256 = vsel %vm450, %v1229, %v1817
        %v2257 = vsel %vm450, %v1230, %v1819
        %v2258 = vsel %vm450, %v1231, %v1821
        %v2259 = vsel %vm450, %v1232, %v1823
        %v2260 = vsel %vm450, %v1233, %v1825
        %v2261 = vsel %vm450, %v1234, %v1827
        %v2262 = vsel %vm450, %v1235, %v1829
        %v2263 = vsel %vm450, %v1236, %v1831
        %v2264 = vsel %vm450, %v1237, %v1833
        %v2265 = vsel %vm450, %v1238, %v1835
        %v2266 = vsel %vm450, %v1239, %v1837
        %v2267 = vsel %vm450, %v1240, %v1839
        %v2268 = vsel %vm450, %v1241, %v1841
        %v2269 = vsel %vm450, %v1242, %v1843
        %v2270 = vsel %vm450, %v1243, %v1845
        %v2271 = vsel %vm450, %v1244, %v1847
        %v2272 = vsel %vm450, %v1245, %v1849
        %v2273 = vsel %vm450, %v1246, %v1851
        %v2274 = vsel %vm450, %v1247, %v1853
        %v2275 = vsel %vm450, %v1248, %v1855
        %v2276 = vsel %vm450, %v1249, %v1857
        %v2277 = vsel %vm450, %v1250, %v1859
        %v2278 = vsel %vm2180, %v2246, %v1925
        %v2279 = vsel %vm2180, %v2247, %v1927
        %v2280 = vsel %vm2180, %v2248, %v1929
        %v2281 = vsel %vm2180, %v2249, %v1931
        %v2282 = vsel %vm2180, %v2250, %v1933
        %v2283 = vsel %vm2180, %v2251, %v1935
        %v2284 = vsel %vm2180, %v2252, %v1937
        %v2285 = vsel %vm2180, %v2253, %v1939
        %v2286 = vsel %vm2180, %v2254, %v1941
        %v2287 = vsel %vm2180, %v2255, %v1943
        %v2288 = vsel %vm2180, %v2256, %v1945
        %v2289 = vsel %vm2180, %v2257, %v1947
        %v2290 = vsel %vm2180, %v2258, %v1949
        %v2291 = vsel %vm2180, %v2259, %v1951
        %v2292 = vsel %vm2180, %v2260, %v1953
        %v2293 = vsel %vm2180, %v2261, %v1955
        %v2294 = vsel %vm2180, %v2262, %v1957
        %v2295 = vsel %vm2180, %v2263, %v1959
        %v2296 = vsel %vm2180, %v2264, %v1961
        %v2297 = vsel %vm2180, %v2265, %v1963
        %v2298 = vsel %vm2180, %v2266, %v1965
        %v2299 = vsel %vm2180, %v2267, %v1967
        %v2300 = vsel %vm2180, %v2268, %v1969
        %v2301 = vsel %vm2180, %v2269, %v1971
        %v2302 = vsel %vm2180, %v2270, %v1973
        %v2303 = vsel %vm2180, %v2271, %v1975
        %v2304 = vsel %vm2180, %v2272, %v1977
        %v2305 = vsel %vm2180, %v2273, %v1979
        %v2306 = vsel %vm2180, %v2274, %v1981
        %v2307 = vsel %vm2180, %v2275, %v1983
        %v2308 = vsel %vm2180, %v2276, %v1985
        %v2309 = vsel %vm2180, %v2277, %v1987
        %v2310 = vsel %vm2213, %v2278, %v2053
        %v2311 = vsel %vm2213, %v2279, %v2055
        %v2312 = vsel %vm2213, %v2280, %v2057
        %v2313 = vsel %vm2213, %v2281, %v2059
        %v2314 = vsel %vm2213, %v2282, %v2061
        %v2315 = vsel %vm2213, %v2283, %v2063
        %v2316 = vsel %vm2213, %v2284, %v2065
        %v2317 = vsel %vm2213, %v2285, %v2067
        %v2318 = vsel %vm2213, %v2286, %v2069
        %v2319 = vsel %vm2213, %v2287, %v2071
        %v2320 = vsel %vm2213, %v2288, %v2073
        %v2321 = vsel %vm2213, %v2289, %v2075
        %v2322 = vsel %vm2213, %v2290, %v2077
        %v2323 = vsel %vm2213, %v2291, %v2079
        %v2324 = vsel %vm2213, %v2292, %v2081
        %v2325 = vsel %vm2213, %v2293, %v2083
        %v2326 = vsel %vm2213, %v2294, %v2085
        %v2327 = vsel %vm2213, %v2295, %v2087
        %v2328 = vsel %vm2213, %v2296, %v2089
        %v2329 = vsel %vm2213, %v2297, %v2091
        %v2330 = vsel %vm2213, %v2298, %v2093
        %v2331 = vsel %vm2213, %v2299, %v2095
        %v2332 = vsel %vm2213, %v2300, %v2097
        %v2333 = vsel %vm2213, %v2301, %v2099
        %v2334 = vsel %vm2213, %v2302, %v2101
        %v2335 = vsel %vm2213, %v2303, %v2103
        %v2336 = vsel %vm2213, %v2304, %v2105
        %v2337 = vsel %vm2213, %v2305, %v2107
        %v2338 = vsel %vm2213, %v2306, %v2109
        %v2339 = vsel %vm2213, %v2307, %v2111
        %v2340 = vsel %vm2213, %v2308, %v2113
        %v2341 = vsel %vm2213, %v2309, %v2115
        %v2342 = vpack.c.bf16 %v2215, %v2214
        %v2343 = vpack.c.bf16 %v2311, %v2310
        %v2344 = vpack.c.bf16 %v1349, %v1348
        %v2345 = vpack.c.bf16 %v2217, %v2216
        %v2346 = vpack.c.bf16 %v2313, %v2312
        %v2347 = vpack.c.bf16 %v1351, %v1350
        %v2348 = vpack.c.bf16 %v2219, %v2218
        %v2349 = vpack.c.bf16 %v2315, %v2314
        %v2350 = vpack.c.bf16 %v1353, %v1352
        %v2351 = vpack.c.bf16 %v2221, %v2220
        %v2352 = vpack.c.bf16 %v2317, %v2316
        %v2353 = vpack.c.bf16 %v1355, %v1354
        %v2354 = vpack.c.bf16 %v2223, %v2222
        %v2355 = vpack.c.bf16 %v2319, %v2318
        %v2356 = vpack.c.bf16 %v1357, %v1356
        %v2357 = vpack.c.bf16 %v2225, %v2224
        %v2358 = vpack.c.bf16 %v2321, %v2320
        %v2359 = vpack.c.bf16 %v1359, %v1358
        %v2360 = vpack.c.bf16 %v2227, %v2226
        %v2361 = vpack.c.bf16 %v2323, %v2322
        %v2362 = vpack.c.bf16 %v1361, %v1360
        %v2363 = vpack.c.bf16 %v2229, %v2228
        %v2364 = vpack.c.bf16 %v2325, %v2324
        %v2365 = vpack.c.bf16 %v1363, %v1362
        %v2366 = vpack.c.bf16 %v2231, %v2230
        %v2367 = vpack.c.bf16 %v2327, %v2326
        %v2368 = vpack.c.bf16 %v1365, %v1364
        %v2369 = vpack.c.bf16 %v2233, %v2232
        %v2370 = vpack.c.bf16 %v2329, %v2328
        %v2371 = vpack.c.bf16 %v1367, %v1366
        %v2372 = vpack.c.bf16 %v2235, %v2234
        %v2373 = vpack.c.bf16 %v2331, %v2330
        %v2374 = vpack.c.bf16 %v1369, %v1368
        %v2375 = vpack.c.bf16 %v2237, %v2236
        %v2376 = vpack.c.bf16 %v2333, %v2332
        %v2377 = vpack.c.bf16 %v1371, %v1370
        %v2378 = vpack.c.bf16 %v2239, %v2238
        %v2379 = vpack.c.bf16 %v2335, %v2334
        %v2380 = vpack.c.bf16 %v1373, %v1372
        %v2381 = vpack.c.bf16 %v2241, %v2240
        %v2382 = vpack.c.bf16 %v2337, %v2336
        %v2383 = vpack.c.bf16 %v1375, %v1374
        %v2384 = vpack.c.bf16 %v2243, %v2242
        %v2385 = vpack.c.bf16 %v2339, %v2338
        %v2386 = vpack.c.bf16 %v1377, %v1376
        %v2387 = vpack.c.bf16 %v2245, %v2244
        %v2388 = vpack.c.bf16 %v2341, %v2340
        %v2389 = vpack.c.bf16 %v1379, %v1378
        %v2390 = vld [vmem:[%s3] sm:$0xf]
        %v2391 = vld [vmem:[%s3 + $0x4] sm:$0xf]
        %v2392 = vld [vmem:[%s3 + $0x8] sm:$0xf]
        %v2393 = vld [vmem:[%s3 + $0xc] sm:$0xf]
        %v2394 = vld [vmem:[%s3 + $0x10] sm:$0xf]
        %v2395 = vld [vmem:[%s3 + $0x14] sm:$0xf]
        %v2396 = vld [vmem:[%s3 + $0x18] sm:$0xf]
        %v2397 = vld [vmem:[%s3 + $0x1c] sm:$0xf]
        %v2398 = vld [vmem:[%s3 + $0x20] sm:$0xf]
        %v2399 = vld [vmem:[%s3 + $0x24] sm:$0xf]
        %v2400 = vld [vmem:[%s3 + $0x28] sm:$0xf]
        %v2401 = vld [vmem:[%s3 + $0x2c] sm:$0xf]
        %v2402 = vld [vmem:[%s3 + $0x30] sm:$0xf]
        %v2403 = vld [vmem:[%s3 + $0x34] sm:$0xf]
        %v2404 = vld [vmem:[%s3 + $0x38] sm:$0xf]
        %v2405 = vld [vmem:[%s3 + $0x3c] sm:$0xf]
        %v2406 = vld [vmem:[%s3 + $0x40] sm:$0xf]
        %v2407 = vld [vmem:[%s3 + $0x44] sm:$0xf]
        %v2408 = vld [vmem:[%s3 + $0x48] sm:$0xf]
        %v2409 = vld [vmem:[%s3 + $0x4c] sm:$0xf]
        %v2410 = vld [vmem:[%s3 + $0x50] sm:$0xf]
        %v2411 = vld [vmem:[%s3 + $0x54] sm:$0xf]
        %v2412 = vld [vmem:[%s3 + $0x58] sm:$0xf]
        %v2413 = vld [vmem:[%s3 + $0x5c] sm:$0xf]
        %v2414 = vld [vmem:[%s3 + $0x60] sm:$0xf]
        %v2415 = vld [vmem:[%s3 + $0x64] sm:$0xf]
        %v2416 = vld [vmem:[%s3 + $0x68] sm:$0xf]
        %v2417 = vld [vmem:[%s3 + $0x6c] sm:$0xf]
        %v2418 = vld [vmem:[%s3 + $0x70] sm:$0xf]
        %v2419 = vld [vmem:[%s3 + $0x74] sm:$0xf]
        %v2420 = vld [vmem:[%s3 + $0x78] sm:$0xf]
        %v2421 = vld [vmem:[%s3 + $0x7c] sm:$0xf]
        %v2422 = vld [vmem:[%s3 + $0x80] sm:$0xf]
        %v2423 = vld [vmem:[%s3 + $0x84] sm:$0xf]
        %v2424 = vld [vmem:[%s3 + $0x88] sm:$0xf]
        %v2425 = vld [vmem:[%s3 + $0x8c] sm:$0xf]
        %v2426 = vld [vmem:[%s4] sm:$0x1]
        %v2428 = vlaneseq
        %v2429 = vshrl.u32 %v2428, 7
        %v2430 = vsub.s32 0, %v2429
        %v2431 = vrot.slane %v2426, %v2430
        %v2469 = vunpack.c.l.b16 %v2390
        %v2470 = vunpack.c.l.b16 %v2391
        %v2471 = vunpack.c.l.b16 %v2392
        %v2472 = vunpack.c.l.b16 %v2393
        %v2473 = vunpack.c.l.b16 %v2394
        %v2474 = vunpack.c.l.b16 %v2395
        %v2475 = vunpack.c.l.b16 %v2396
        %v2476 = vunpack.c.l.b16 %v2397
        %v2477 = vunpack.c.l.b16 %v2398
        %v2478 = vunpack.c.l.b16 %v2399
        %v2479 = vunpack.c.l.b16 %v2400
        %v2480 = vunpack.c.l.b16 %v2401
        %v2481 = vunpack.c.l.b16 %v2402
        %v2482 = vunpack.c.l.b16 %v2403
        %v2483 = vunpack.c.l.b16 %v2404
        %v2484 = vunpack.c.l.b16 %v2405
        %v2485 = vunpack.c.l.b16 %v2406
        %v2486 = vunpack.c.l.b16 %v2407
        %v2487 = vunpack.c.l.b16 %v2408
        %v2488 = vunpack.c.l.b16 %v2409
        %v2489 = vunpack.c.l.b16 %v2410
        %v2490 = vunpack.c.l.b16 %v2411
        %v2491 = vunpack.c.l.b16 %v2412
        %v2492 = vunpack.c.l.b16 %v2413
        %v2493 = vunpack.c.l.b16 %v2414
        %v2494 = vunpack.c.l.b16 %v2415
        %v2495 = vunpack.c.l.b16 %v2416
        %v2496 = vunpack.c.l.b16 %v2417
        %v2497 = vunpack.c.l.b16 %v2418
        %v2498 = vunpack.c.l.b16 %v2419
        %v2499 = vunpack.c.l.b16 %v2420
        %v2500 = vunpack.c.l.b16 %v2421
        %v2501 = vunpack.c.l.b16 %v2422
        %v2502 = vunpack.c.l.b16 %v2423
        %v2503 = vunpack.c.l.b16 %v2424
        %v2504 = vunpack.c.l.b16 %v2425
        %v2505 = vpack.c.b16 %v2470, %v2469
        %v2506 = vpack.c.b16 %v2472, %v2471
        %v2507 = vpack.c.b16 %v2474, %v2473
        %v2508 = vpack.c.b16 %v2476, %v2475
        %v2509 = vpack.c.b16 %v2478, %v2477
        %v2510 = vpack.c.b16 %v2480, %v2479
        %v2511 = vpack.c.b16 %v2482, %v2481
        %v2512 = vpack.c.b16 %v2484, %v2483
        %v2513 = vpack.c.b16 %v2486, %v2485
        %v2514 = vpack.c.b16 %v2488, %v2487
        %v2515 = vpack.c.b16 %v2490, %v2489
        %v2516 = vpack.c.b16 %v2492, %v2491
        %v2517 = vpack.c.b16 %v2494, %v2493
        %v2518 = vpack.c.b16 %v2496, %v2495
        %v2519 = vpack.c.b16 %v2498, %v2497
        %v2520 = vpack.c.b16 %v2500, %v2499
        %v2521 = vpack.c.b16 %v2502, %v2501
        %v2522 = vpack.c.b16 %v2504, %v2503
        %v2542 = vsel %vm450, %v2344, 0
        %v2545 = vsel %vm450, %v2347, 0
        %v2548 = vsel %vm450, %v2350, 0
        %v2551 = vsel %vm450, %v2353, 0
        %v2554 = vsel %vm450, %v2356, 0
        %v2557 = vsel %vm450, %v2359, 0
        %v2560 = vsel %vm450, %v2362, 0
        %v2563 = vsel %vm450, %v2365, 0
        %v2566 = vsel %vm450, %v2368, 0
        %v2569 = vsel %vm450, %v2371, 0
        %v2572 = vsel %vm450, %v2374, 0
        %v2575 = vsel %vm450, %v2377, 0
        %v2578 = vsel %vm450, %v2380, 0
        %v2581 = vsel %vm450, %v2383, 0
        %v2584 = vsel %vm450, %v2386, 0
        %v2587 = vsel %vm450, %v2389, 0
        %2589 = vmatprep.subr.bf16.mxu0 0
        %2590 = vmatpush1.bf16.msra.mxu0 %v2505
        %2591 = vmatprep.subr.bf16.mxu0 0
        %2592 = vmatpush1.bf16.msra.mxu0 %v2506
        %2593 = vmatprep.subr.bf16.mxu0 0
        %2594 = vmatpush1.bf16.msra.mxu0 %v2507
        %2595 = vmatprep.subr.bf16.mxu0 0
        %2596 = vmatpush1.bf16.msra.mxu0 %v2508
        %2597 = vmatprep.subr.bf16.mxu0 0
        %2598 = vmatpush1.bf16.msra.mxu0 %v2509
        %2599 = vmatprep.subr.bf16.mxu0 0
        %2600 = vmatpush1.bf16.msra.mxu0 %v2510
        %2601 = vmatprep.subr.bf16.mxu0 0
        %2602 = vmatpush1.bf16.msra.mxu0 %v2511
        %2603 = vmatprep.subr.bf16.mxu0 0
        %2604 = vmatpush1.bf16.msra.mxu0 %v2512
        %2605 = vmatprep.subr.bf16.mxu0 0
        %2606 = vmatpush1.bf16.msra.mxu0 %v2513
        %2607 = vmatprep.subr.bf16.mxu0 0
        %2608 = vmatpush1.bf16.msra.mxu0 %v2514
        %2609 = vmatprep.subr.bf16.mxu0 0
        %2610 = vmatpush1.bf16.msra.mxu0 %v2515
        %2611 = vmatprep.subr.bf16.mxu0 0
        %2612 = vmatpush1.bf16.msra.mxu0 %v2516
        %2613 = vmatprep.subr.bf16.mxu0 0
        %2614 = vmatpush1.bf16.msra.mxu0 %v2517
        %2615 = vmatprep.subr.bf16.mxu0 0
        %2616 = vmatpush1.bf16.msra.mxu0 %v2518
        %2617 = vmatprep.subr.bf16.mxu0 0
        %2618 = vmatpush1.bf16.msra.mxu0 %v2519
        %2619 = vmatprep.subr.bf16.mxu0 0
        %2620 = vmatpush1.bf16.msra.mxu0 %v2520
        %2621 = vmatprep.mubr.bf16.mxu0 %v2343
        %2622 = vmatmul.mubr.bf16.gmra.mrb[0].mxu0 %v2342
        %v2623 = vpop.f32.mrb[0].mxu0
        %v2624 = vadd.f32 %v2431, %v2623
        %v2625 = vpop.f32.mrb[0].mxu0
        %v2626 = vpop.f32.mrb[0].mxu0
        %v2627 = vadd.f32 %v2431, %v2626
        %v2628 = vpop.f32.mrb[0].mxu0
        %2629 = vmatprep.mubr.bf16.mxu0 %v2346
        %2630 = vmatmul.mubr.bf16.gmra.mrb[0].mxu0 %v2345
        %v2631 = vpop.f32.mrb[0].mxu0
        %v2632 = vadd.f32 %v2431, %v2631
        %v2633 = vpop.f32.mrb[0].mxu0
        %v2634 = vpop.f32.mrb[0].mxu0
        %v2635 = vadd.f32 %v2431, %v2634
        %v2636 = vpop.f32.mrb[0].mxu0
        %2637 = vmatprep.mubr.bf16.mxu0 %v2349
        %2638 = vmatmul.mubr.bf16.gmra.mrb[0].mxu0 %v2348
        %v2639 = vpop.f32.mrb[0].mxu0
        %v2640 = vadd.f32 %v2431, %v2639
        %v2641 = vpop.f32.mrb[0].mxu0
        %v2642 = vpop.f32.mrb[0].mxu0
        %v2643 = vadd.f32 %v2431, %v2642
        %v2644 = vpop.f32.mrb[0].mxu0
        %2645 = vmatprep.mubr.bf16.mxu0 %v2352
        %2646 = vmatmul.mubr.bf16.gmra.mrb[0].mxu0 %v2351
        %v2647 = vpop.f32.mrb[0].mxu0
        %v2648 = vadd.f32 %v2431, %v2647
        %v2649 = vpop.f32.mrb[0].mxu0
        %v2650 = vpop.f32.mrb[0].mxu0
        %v2651 = vadd.f32 %v2431, %v2650
        %v2652 = vpop.f32.mrb[0].mxu0
        %2653 = vmatprep.mubr.bf16.mxu0 %v2355
        %2654 = vmatmul.mubr.bf16.gmra.mrb[0].mxu0 %v2354
        %v2655 = vpop.f32.mrb[0].mxu0
        %v2656 = vadd.f32 %v2431, %v2655
        %v2657 = vpop.f32.mrb[0].mxu0
        %v2658 = vpop.f32.mrb[0].mxu0
        %v2659 = vadd.f32 %v2431, %v2658
        %v2660 = vpop.f32.mrb[0].mxu0
        %2661 = vmatprep.mubr.bf16.mxu0 %v2358
        %2662 = vmatmul.mubr.bf16.gmra.mrb[0].mxu0 %v2357
        %v2663 = vpop.f32.mrb[0].mxu0
        %v2664 = vadd.f32 %v2431, %v2663
        %v2665 = vpop.f32.mrb[0].mxu0
        %v2666 = vpop.f32.mrb[0].mxu0
        %v2667 = vadd.f32 %v2431, %v2666
        %v2668 = vpop.f32.mrb[0].mxu0
        %2669 = vmatprep.mubr.bf16.mxu0 %v2361
        %2670 = vmatmul.mubr.bf16.gmra.mrb[0].mxu0 %v2360
        %v2671 = vpop.f32.mrb[0].mxu0
        %v2672 = vadd.f32 %v2431, %v2671
        %v2673 = vpop.f32.mrb[0].mxu0
        %v2674 = vpop.f32.mrb[0].mxu0
        %v2675 = vadd.f32 %v2431, %v2674
        %v2676 = vpop.f32.mrb[0].mxu0
        %2677 = vmatprep.mubr.bf16.mxu0 %v2364
        %2678 = vmatmul.mubr.bf16.gmra.mrb[0].mxu0 %v2363
        %v2679 = vpop.f32.mrb[0].mxu0
        %v2680 = vadd.f32 %v2431, %v2679
        %v2681 = vpop.f32.mrb[0].mxu0
        %v2682 = vpop.f32.mrb[0].mxu0
        %v2683 = vadd.f32 %v2431, %v2682
        %v2684 = vpop.f32.mrb[0].mxu0
        %2685 = vmatprep.mubr.bf16.mxu0 %v2367
        %2686 = vmatmul.mubr.bf16.gmra.mrb[0].mxu0 %v2366
        %v2687 = vpop.f32.mrb[0].mxu0
        %v2688 = vadd.f32 %v2431, %v2687
        %v2689 = vpop.f32.mrb[0].mxu0
        %v2690 = vpop.f32.mrb[0].mxu0
        %v2691 = vadd.f32 %v2431, %v2690
        %v2692 = vpop.f32.mrb[0].mxu0
        %2693 = vmatprep.mubr.bf16.mxu0 %v2370
        %2694 = vmatmul.mubr.bf16.gmra.mrb[0].mxu0 %v2369
        %v2695 = vpop.f32.mrb[0].mxu0
        %v2696 = vadd.f32 %v2431, %v2695
        %v2697 = vpop.f32.mrb[0].mxu0
        %v2698 = vpop.f32.mrb[0].mxu0
        %v2699 = vadd.f32 %v2431, %v2698
        %v2700 = vpop.f32.mrb[0].mxu0
        %2701 = vmatprep.mubr.bf16.mxu0 %v2373
        %2702 = vmatmul.mubr.bf16.gmra.mrb[0].mxu0 %v2372
        %v2703 = vpop.f32.mrb[0].mxu0
        %v2704 = vadd.f32 %v2431, %v2703
        %v2705 = vpop.f32.mrb[0].mxu0
        %v2706 = vpop.f32.mrb[0].mxu0
        %v2707 = vadd.f32 %v2431, %v2706
        %v2708 = vpop.f32.mrb[0].mxu0
        %2709 = vmatprep.mubr.bf16.mxu0 %v2376
        %2710 = vmatmul.mubr.bf16.gmra.mrb[0].mxu0 %v2375
        %v2711 = vpop.f32.mrb[0].mxu0
        %v2712 = vadd.f32 %v2431, %v2711
        %v2713 = vpop.f32.mrb[0].mxu0
        %v2714 = vpop.f32.mrb[0].mxu0
        %v2715 = vadd.f32 %v2431, %v2714
        %v2716 = vpop.f32.mrb[0].mxu0
        %2717 = vmatprep.mubr.bf16.mxu0 %v2379
        %2718 = vmatmul.mubr.bf16.gmra.mrb[0].mxu0 %v2378
        %v2719 = vpop.f32.mrb[0].mxu0
        %v2720 = vadd.f32 %v2431, %v2719
        %v2721 = vpop.f32.mrb[0].mxu0
        %v2722 = vpop.f32.mrb[0].mxu0
        %v2723 = vadd.f32 %v2431, %v2722
        %v2724 = vpop.f32.mrb[0].mxu0
        %2725 = vmatprep.mubr.bf16.mxu0 %v2382
        %2726 = vmatmul.mubr.bf16.gmra.mrb[0].mxu0 %v2381
        %v2727 = vpop.f32.mrb[0].mxu0
        %v2728 = vadd.f32 %v2431, %v2727
        %v2729 = vpop.f32.mrb[0].mxu0
        %v2730 = vpop.f32.mrb[0].mxu0
        %v2731 = vadd.f32 %v2431, %v2730
        %v2732 = vpop.f32.mrb[0].mxu0
        %2733 = vmatprep.mubr.bf16.mxu0 %v2385
        %2734 = vmatmul.mubr.bf16.gmra.mrb[0].mxu0 %v2384
        %v2735 = vpop.f32.mrb[0].mxu0
        %v2736 = vadd.f32 %v2431, %v2735
        %v2737 = vpop.f32.mrb[0].mxu0
        %v2738 = vpop.f32.mrb[0].mxu0
        %v2739 = vadd.f32 %v2431, %v2738
        %v2740 = vpop.f32.mrb[0].mxu0
        %2741 = vmatprep.mubr.bf16.mxu0 %v2388
        %2742 = vmatmul.mubr.bf16.gmra.mrb[0].mxu0 %v2387
        %v2743 = vpop.f32.mrb[0].mxu0
        %v2744 = vadd.f32 %v2431, %v2743
        %v2745 = vpop.f32.mrb[0].mxu0
        %v2746 = vpop.f32.mrb[0].mxu0
        %v2747 = vadd.f32 %v2431, %v2746
        %v2748 = vpop.f32.mrb[0].mxu0
        %2749 = vdwg.mxu0
        %2750 = vmatprep.subr.bf16.mxu0 0
        %2751 = vmatpush1.bf16.msra.mxu0 %v2521
        %2752 = vmatprep.subr.bf16.mxu0 0
        %2753 = vmatpush1.bf16.msra.mxu0 %v2522
        %2754 = vmatprep.subr.bf16.mxu0 0
        %2755 = vmatpush1.bf16.msra.mxu0 0
        %2756 = vmatprep.subr.bf16.mxu0 0
        %2757 = vmatpush1.bf16.msra.mxu0 0
        %2758 = vmatprep.subr.bf16.mxu0 0
        %2759 = vmatpush1.bf16.msra.mxu0 0
        %2760 = vmatprep.subr.bf16.mxu0 0
        %2761 = vmatpush1.bf16.msra.mxu0 0
        %2762 = vmatprep.subr.bf16.mxu0 0
        %2763 = vmatpush1.bf16.msra.mxu0 0
        %2764 = vmatprep.subr.bf16.mxu0 0
        %2765 = vmatpush1.bf16.msra.mxu0 0
        %2766 = vmatprep.subr.bf16.mxu0 0
        %2767 = vmatpush1.bf16.msra.mxu0 0
        %2768 = vmatprep.subr.bf16.mxu0 0
        %2769 = vmatpush1.bf16.msra.mxu0 0
        %2770 = vmatprep.subr.bf16.mxu0 0
        %2771 = vmatpush1.bf16.msra.mxu0 0
        %2772 = vmatprep.subr.bf16.mxu0 0
        %2773 = vmatpush1.bf16.msra.mxu0 0
        %2774 = vmatprep.subr.bf16.mxu0 0
        %2775 = vmatpush1.bf16.msra.mxu0 0
        %2776 = vmatprep.subr.bf16.mxu0 0
        %2777 = vmatpush1.bf16.msra.mxu0 0
        %2778 = vmatprep.subr.bf16.mxu0 0
        %2779 = vmatpush1.bf16.msra.mxu0 0
        %2780 = vmatprep.subr.bf16.mxu0 0
        %2781 = vmatpush1.bf16.msra.mxu0 0
        %2782 = vmatprep.mubr.bf16.mxu0 0
        %2783 = vmatmul.mubr.bf16.gmra.mrb[0].mxu0 %v2542
        %v2784 = vpop.f32.mrb[0].mxu0
        %v2785 = vadd.f32 %v2624, %v2784
        %v2786 = vpop.f32.mrb[0].mxu0
        %v2787 = vpop.f32.mrb[0].mxu0
        %v2788 = vadd.f32 %v2627, %v2787
        %v2789 = vpop.f32.mrb[0].mxu0
        %2790 = vmatprep.mubr.bf16.mxu0 0
        %2791 = vmatmul.mubr.bf16.gmra.mrb[0].mxu0 %v2545
        %v2792 = vpop.f32.mrb[0].mxu0
        %v2793 = vadd.f32 %v2632, %v2792
        %v2794 = vpop.f32.mrb[0].mxu0
        %v2795 = vpop.f32.mrb[0].mxu0
        %v2796 = vadd.f32 %v2635, %v2795
        %v2797 = vpop.f32.mrb[0].mxu0
        %2798 = vmatprep.mubr.bf16.mxu0 0
        %2799 = vmatmul.mubr.bf16.gmra.mrb[0].mxu0 %v2548
        %v2800 = vpop.f32.mrb[0].mxu0
        %v2801 = vadd.f32 %v2640, %v2800
        %v2802 = vpop.f32.mrb[0].mxu0
        %v2803 = vpop.f32.mrb[0].mxu0
        %v2804 = vadd.f32 %v2643, %v2803
        %v2805 = vpop.f32.mrb[0].mxu0
        %2806 = vmatprep.mubr.bf16.mxu0 0
        %2807 = vmatmul.mubr.bf16.gmra.mrb[0].mxu0 %v2551
        %v2808 = vpop.f32.mrb[0].mxu0
        %v2809 = vadd.f32 %v2648, %v2808
        %v2810 = vpop.f32.mrb[0].mxu0
        %v2811 = vpop.f32.mrb[0].mxu0
        %v2812 = vadd.f32 %v2651, %v2811
        %v2813 = vpop.f32.mrb[0].mxu0
        %2814 = vmatprep.mubr.bf16.mxu0 0
        %2815 = vmatmul.mubr.bf16.gmra.mrb[0].mxu0 %v2554
        %v2816 = vpop.f32.mrb[0].mxu0
        %v2817 = vadd.f32 %v2656, %v2816
        %v2818 = vpop.f32.mrb[0].mxu0
        %v2819 = vpop.f32.mrb[0].mxu0
        %v2820 = vadd.f32 %v2659, %v2819
        %v2821 = vpop.f32.mrb[0].mxu0
        %2822 = vmatprep.mubr.bf16.mxu0 0
        %2823 = vmatmul.mubr.bf16.gmra.mrb[0].mxu0 %v2557
        %v2824 = vpop.f32.mrb[0].mxu0
        %v2825 = vadd.f32 %v2664, %v2824
        %v2826 = vpop.f32.mrb[0].mxu0
        %v2827 = vpop.f32.mrb[0].mxu0
        %v2828 = vadd.f32 %v2667, %v2827
        %v2829 = vpop.f32.mrb[0].mxu0
        %2830 = vmatprep.mubr.bf16.mxu0 0
        %2831 = vmatmul.mubr.bf16.gmra.mrb[0].mxu0 %v2560
        %v2832 = vpop.f32.mrb[0].mxu0
        %v2833 = vadd.f32 %v2672, %v2832
        %v2834 = vpop.f32.mrb[0].mxu0
        %v2835 = vpop.f32.mrb[0].mxu0
        %v2836 = vadd.f32 %v2675, %v2835
        %v2837 = vpop.f32.mrb[0].mxu0
        %2838 = vmatprep.mubr.bf16.mxu0 0
        %2839 = vmatmul.mubr.bf16.gmra.mrb[0].mxu0 %v2563
        %v2840 = vpop.f32.mrb[0].mxu0
        %v2841 = vadd.f32 %v2680, %v2840
        %v2842 = vpop.f32.mrb[0].mxu0
        %v2843 = vpop.f32.mrb[0].mxu0
        %v2844 = vadd.f32 %v2683, %v2843
        %v2845 = vpop.f32.mrb[0].mxu0
        %2846 = vmatprep.mubr.bf16.mxu0 0
        %2847 = vmatmul.mubr.bf16.gmra.mrb[0].mxu0 %v2566
        %v2848 = vpop.f32.mrb[0].mxu0
        %v2849 = vadd.f32 %v2688, %v2848
        %v2850 = vpop.f32.mrb[0].mxu0
        %v2851 = vpop.f32.mrb[0].mxu0
        %v2852 = vadd.f32 %v2691, %v2851
        %v2853 = vpop.f32.mrb[0].mxu0
        %2854 = vmatprep.mubr.bf16.mxu0 0
        %2855 = vmatmul.mubr.bf16.gmra.mrb[0].mxu0 %v2569
        %v2856 = vpop.f32.mrb[0].mxu0
        %v2857 = vadd.f32 %v2696, %v2856
        %v2858 = vpop.f32.mrb[0].mxu0
        %v2859 = vpop.f32.mrb[0].mxu0
        %v2860 = vadd.f32 %v2699, %v2859
        %v2861 = vpop.f32.mrb[0].mxu0
        %2862 = vmatprep.mubr.bf16.mxu0 0
        %2863 = vmatmul.mubr.bf16.gmra.mrb[0].mxu0 %v2572
        %v2864 = vpop.f32.mrb[0].mxu0
        %v2865 = vadd.f32 %v2704, %v2864
        %v2866 = vpop.f32.mrb[0].mxu0
        %v2867 = vpop.f32.mrb[0].mxu0
        %v2868 = vadd.f32 %v2707, %v2867
        %v2869 = vpop.f32.mrb[0].mxu0
        %2870 = vmatprep.mubr.bf16.mxu0 0
        %2871 = vmatmul.mubr.bf16.gmra.mrb[0].mxu0 %v2575
        %v2872 = vpop.f32.mrb[0].mxu0
        %v2873 = vadd.f32 %v2712, %v2872
        %v2874 = vpop.f32.mrb[0].mxu0
        %v2875 = vpop.f32.mrb[0].mxu0
        %v2876 = vadd.f32 %v2715, %v2875
        %v2877 = vpop.f32.mrb[0].mxu0
        %2878 = vmatprep.mubr.bf16.mxu0 0
        %2879 = vmatmul.mubr.bf16.gmra.mrb[0].mxu0 %v2578
        %v2880 = vpop.f32.mrb[0].mxu0
        %v2881 = vadd.f32 %v2720, %v2880
        %v2882 = vpop.f32.mrb[0].mxu0
        %v2883 = vpop.f32.mrb[0].mxu0
        %v2884 = vadd.f32 %v2723, %v2883
        %v2885 = vpop.f32.mrb[0].mxu0
        %2886 = vmatprep.mubr.bf16.mxu0 0
        %2887 = vmatmul.mubr.bf16.gmra.mrb[0].mxu0 %v2581
        %v2888 = vpop.f32.mrb[0].mxu0
        %v2889 = vadd.f32 %v2728, %v2888
        %v2890 = vpop.f32.mrb[0].mxu0
        %v2891 = vpop.f32.mrb[0].mxu0
        %v2892 = vadd.f32 %v2731, %v2891
        %v2893 = vpop.f32.mrb[0].mxu0
        %2894 = vmatprep.mubr.bf16.mxu0 0
        %2895 = vmatmul.mubr.bf16.gmra.mrb[0].mxu0 %v2584
        %v2896 = vpop.f32.mrb[0].mxu0
        %v2897 = vadd.f32 %v2736, %v2896
        %v2898 = vpop.f32.mrb[0].mxu0
        %v2899 = vpop.f32.mrb[0].mxu0
        %v2900 = vadd.f32 %v2739, %v2899
        %v2901 = vpop.f32.mrb[0].mxu0
        %2902 = vmatprep.mubr.bf16.mxu0 0
        %2903 = vmatmul.mubr.bf16.gmra.mrb[0].mxu0 %v2587
        %v2904 = vpop.f32.mrb[0].mxu0
        %v2905 = vadd.f32 %v2744, %v2904
        %v2906 = vpop.f32.mrb[0].mxu0
        %v2907 = vpop.f32.mrb[0].mxu0
        %v2908 = vadd.f32 %v2747, %v2907
        %v2909 = vpop.f32.mrb[0].mxu0
        %2910 = vdwg.mxu0
        %v2911 = vmax.f32 %v2785, 0.0
        %v2912 = vmax.f32 %v2788, 0.0
        %v2913 = vmax.f32 %v2793, 0.0
        %v2914 = vmax.f32 %v2796, 0.0
        %v2915 = vmax.f32 %v2801, 0.0
        %v2916 = vmax.f32 %v2804, 0.0
        %v2917 = vmax.f32 %v2809, 0.0
        %v2918 = vmax.f32 %v2812, 0.0
        %v2919 = vmax.f32 %v2817, 0.0
        %v2920 = vmax.f32 %v2820, 0.0
        %v2921 = vmax.f32 %v2825, 0.0
        %v2922 = vmax.f32 %v2828, 0.0
        %v2923 = vmax.f32 %v2833, 0.0
        %v2924 = vmax.f32 %v2836, 0.0
        %v2925 = vmax.f32 %v2841, 0.0
        %v2926 = vmax.f32 %v2844, 0.0
        %v2927 = vmax.f32 %v2849, 0.0
        %v2928 = vmax.f32 %v2852, 0.0
        %v2929 = vmax.f32 %v2857, 0.0
        %v2930 = vmax.f32 %v2860, 0.0
        %v2931 = vmax.f32 %v2865, 0.0
        %v2932 = vmax.f32 %v2868, 0.0
        %v2933 = vmax.f32 %v2873, 0.0
        %v2934 = vmax.f32 %v2876, 0.0
        %v2935 = vmax.f32 %v2881, 0.0
        %v2936 = vmax.f32 %v2884, 0.0
        %v2937 = vmax.f32 %v2889, 0.0
        %v2938 = vmax.f32 %v2892, 0.0
        %v2939 = vmax.f32 %v2897, 0.0
        %v2940 = vmax.f32 %v2900, 0.0
        %v2941 = vmax.f32 %v2905, 0.0
        %v2942 = vmax.f32 %v2908, 0.0
        %2943 = vrot.lane.b32.xlu0 %v898, 64
        %v2944 = vpop.permute.xlu0 %2943
        %2945 = vrot.lane.b32.xlu0 %v899, 64
        %v2946 = vpop.permute.xlu0 %2945
        %2947 = vrot.lane.b32.xlu0 %v900, 64
        %v2948 = vpop.permute.xlu0 %2947
        %2949 = vrot.lane.b32.xlu0 %v901, 64
        %v2950 = vpop.permute.xlu0 %2949
        %2951 = vrot.lane.b32.xlu0 %v902, 64
        %v2952 = vpop.permute.xlu0 %2951
        %2953 = vrot.lane.b32.xlu0 %v903, 64
        %v2954 = vpop.permute.xlu0 %2953
        %2955 = vrot.lane.b32.xlu0 %v904, 64
        %v2956 = vpop.permute.xlu0 %2955
        %2957 = vrot.lane.b32.xlu0 %v905, 64
        %v2958 = vpop.permute.xlu0 %2957
        %2959 = vrot.lane.b32.xlu0 %v906, 64
        %v2960 = vpop.permute.xlu0 %2959
        %2961 = vrot.lane.b32.xlu0 %v907, 64
        %v2962 = vpop.permute.xlu0 %2961
        %2963 = vrot.lane.b32.xlu0 %v908, 64
        %v2964 = vpop.permute.xlu0 %2963
        %2965 = vrot.lane.b32.xlu0 %v909, 64
        %v2966 = vpop.permute.xlu0 %2965
        %2967 = vrot.lane.b32.xlu0 %v910, 64
        %v2968 = vpop.permute.xlu0 %2967
        %2969 = vrot.lane.b32.xlu0 %v911, 64
        %v2970 = vpop.permute.xlu0 %2969
        %2971 = vrot.lane.b32.xlu0 %v912, 64
        %v2972 = vpop.permute.xlu0 %2971
        %2973 = vrot.lane.b32.xlu0 %v913, 64
        %v2974 = vpop.permute.xlu0 %2973
        %2975 = vrot.lane.b32.xlu0 %v914, 64
        %v2976 = vpop.permute.xlu0 %2975
        %2977 = vrot.lane.b32.xlu0 %v915, 64
        %v2978 = vpop.permute.xlu0 %2977
        %2979 = vrot.lane.b32.xlu0 %v916, 64
        %v2980 = vpop.permute.xlu0 %2979
        %2981 = vrot.lane.b32.xlu0 %v917, 64
        %v2982 = vpop.permute.xlu0 %2981
        %2983 = vrot.lane.b32.xlu0 %v918, 64
        %v2984 = vpop.permute.xlu0 %2983
        %2985 = vrot.lane.b32.xlu0 %v919, 64
        %v2986 = vpop.permute.xlu0 %2985
        %2987 = vrot.lane.b32.xlu0 %v920, 64
        %v2988 = vpop.permute.xlu0 %2987
        %2989 = vrot.lane.b32.xlu0 %v921, 64
        %v2990 = vpop.permute.xlu0 %2989
        %2991 = vrot.lane.b32.xlu0 %v922, 64
        %v2992 = vpop.permute.xlu0 %2991
        %2993 = vrot.lane.b32.xlu0 %v923, 64
        %v2994 = vpop.permute.xlu0 %2993
        %2995 = vrot.lane.b32.xlu0 %v924, 64
        %v2996 = vpop.permute.xlu0 %2995
        %2997 = vrot.lane.b32.xlu0 %v925, 64
        %v2998 = vpop.permute.xlu0 %2997
        %2999 = vrot.lane.b32.xlu0 %v926, 64
        %v3000 = vpop.permute.xlu0 %2999
        %3001 = vrot.lane.b32.xlu0 %v927, 64
        %v3002 = vpop.permute.xlu0 %3001
        %3003 = vrot.lane.b32.xlu0 %v928, 64
        %v3004 = vpop.permute.xlu0 %3003
        %3005 = vrot.lane.b32.xlu0 %v929, 64
        %v3006 = vpop.permute.xlu0 %3005
        %3039 = vst.msk [vmem:[%s1058 + $0x1] sm:$0xff] %vm450, %v2944
        %3040 = vst.msk [vmem:[%s1058 + $0x9] sm:$0xff] %vm450, %v2946
        %3041 = vst.msk [vmem:[%s1058 + $0x19] sm:$0xff] %vm450, %v2948
        %3042 = vst.msk [vmem:[%s1058 + $0x21] sm:$0xff] %vm450, %v2950
        %3043 = vst.msk [vmem:[%s1058 + $0x31] sm:$0xff] %vm450, %v2952
        %3044 = vst.msk [vmem:[%s1058 + $0x39] sm:$0xff] %vm450, %v2954
        %3045 = vst.msk [vmem:[%s1058 + $0x49] sm:$0xff] %vm450, %v2956
        %3046 = vst.msk [vmem:[%s1058 + $0x51] sm:$0xff] %vm450, %v2958
        %3047 = vst.msk [vmem:[%s1058 + $0x61] sm:$0xff] %vm450, %v2960
        %3048 = vst.msk [vmem:[%s1058 + $0x69] sm:$0xff] %vm450, %v2962
        %3049 = vst.msk [vmem:[%s1058 + $0x79] sm:$0xff] %vm450, %v2964
        %3050 = vst.msk [vmem:[%s1058 + $0x81] sm:$0xff] %vm450, %v2966
        %3051 = vst.msk [vmem:[%s1058 + $0x91] sm:$0xff] %vm450, %v2968
        %3052 = vst.msk [vmem:[%s1058 + $0x99] sm:$0xff] %vm450, %v2970
        %3053 = vst.msk [vmem:[%s1058 + $0xa9] sm:$0xff] %vm450, %v2972
        %3054 = vst.msk [vmem:[%s1058 + $0xb1] sm:$0xff] %vm450, %v2974
        %3055 = vst.msk [vmem:[%s1058 + $0xc1] sm:$0xff] %vm450, %v2976
        %3056 = vst.msk [vmem:[%s1058 + $0xc9] sm:$0xff] %vm450, %v2978
        %3057 = vst.msk [vmem:[%s1058 + $0xd9] sm:$0xff] %vm450, %v2980
        %3058 = vst.msk [vmem:[%s1058 + $0xe1] sm:$0xff] %vm450, %v2982
        %3059 = vst.msk [vmem:[%s1058 + $0xf1] sm:$0xff] %vm450, %v2984
        %3060 = vst.msk [vmem:[%s1058 + $0xf9] sm:$0xff] %vm450, %v2986
        %3061 = vst.msk [vmem:[%s1058 + $0x109] sm:$0xff] %vm450, %v2988
        %3062 = vst.msk [vmem:[%s1058 + $0x111] sm:$0xff] %vm450, %v2990
        %3063 = vst.msk [vmem:[%s1058 + $0x121] sm:$0xff] %vm450, %v2992
        %3064 = vst.msk [vmem:[%s1058 + $0x129] sm:$0xff] %vm450, %v2994
        %3065 = vst.msk [vmem:[%s1058 + $0x139] sm:$0xff] %vm450, %v2996
        %3066 = vst.msk [vmem:[%s1058 + $0x141] sm:$0xff] %vm450, %v2998
        %3067 = vst.msk [vmem:[%s1058 + $0x151] sm:$0xff] %vm450, %v3000
        %3068 = vst.msk [vmem:[%s1058 + $0x159] sm:$0xff] %vm450, %v3002
        %3069 = vst.msk [vmem:[%s1058 + $0x169] sm:$0xff] %vm450, %v3004
        %3070 = vst.msk [vmem:[%s1058 + $0x171] sm:$0xff] %vm450, %v3006
        %v3071 = vld [vmem:[#allocation2] sm:$0xff]
        %v3072 = vld [vmem:[#allocation2 + $0x8] sm:$0xff]
        %v3073 = vld [vmem:[#allocation2 + $0x18] sm:$0xff]
        %v3074 = vld [vmem:[#allocation2 + $0x20] sm:$0xff]
        %v3075 = vld [vmem:[#allocation2 + $0x30] sm:$0xff]
        %v3076 = vld [vmem:[#allocation2 + $0x38] sm:$0xff]
        %v3077 = vld [vmem:[#allocation2 + $0x48] sm:$0xff]
        %v3078 = vld [vmem:[#allocation2 + $0x50] sm:$0xff]
        %v3079 = vld [vmem:[#allocation2 + $0x60] sm:$0xff]
        %v3080 = vld [vmem:[#allocation2 + $0x68] sm:$0xff]
        %v3081 = vld [vmem:[#allocation2 + $0x78] sm:$0xff]
        %v3082 = vld [vmem:[#allocation2 + $0x80] sm:$0xff]
        %v3083 = vld [vmem:[#allocation2 + $0x90] sm:$0xff]
        %v3084 = vld [vmem:[#allocation2 + $0x98] sm:$0xff]
        %v3085 = vld [vmem:[#allocation2 + $0xa8] sm:$0xff]
        %v3086 = vld [vmem:[#allocation2 + $0xb0] sm:$0xff]
        %v3087 = vld [vmem:[#allocation2 + $0xc0] sm:$0xff]
        %v3088 = vld [vmem:[#allocation2 + $0xc8] sm:$0xff]
        %v3089 = vld [vmem:[#allocation2 + $0xd8] sm:$0xff]
        %v3090 = vld [vmem:[#allocation2 + $0xe0] sm:$0xff]
        %v3091 = vld [vmem:[#allocation2 + $0xf0] sm:$0xff]
        %v3092 = vld [vmem:[#allocation2 + $0xf8] sm:$0xff]
        %v3093 = vld [vmem:[#allocation2 + $0x108] sm:$0xff]
        %v3094 = vld [vmem:[#allocation2 + $0x110] sm:$0xff]
        %v3095 = vld [vmem:[#allocation2 + $0x120] sm:$0xff]
        %v3096 = vld [vmem:[#allocation2 + $0x128] sm:$0xff]
        %v3097 = vld [vmem:[#allocation2 + $0x138] sm:$0xff]
        %v3098 = vld [vmem:[#allocation2 + $0x140] sm:$0xff]
        %v3099 = vld [vmem:[#allocation2 + $0x150] sm:$0xff]
        %v3100 = vld [vmem:[#allocation2 + $0x158] sm:$0xff]
        %v3101 = vld [vmem:[#allocation2 + $0x168] sm:$0xff]
        %v3102 = vld [vmem:[#allocation2 + $0x170] sm:$0xff]
        %v3103 = vld [vmem:[#allocation2 + $0x1] sm:$0xff]
        %v3104 = vld [vmem:[#allocation2 + $0x9] sm:$0xff]
        %v3105 = vld [vmem:[#allocation2 + $0x19] sm:$0xff]
        %v3106 = vld [vmem:[#allocation2 + $0x21] sm:$0xff]
        %v3107 = vld [vmem:[#allocation2 + $0x31] sm:$0xff]
        %v3108 = vld [vmem:[#allocation2 + $0x39] sm:$0xff]
        %v3109 = vld [vmem:[#allocation2 + $0x49] sm:$0xff]
        %v3110 = vld [vmem:[#allocation2 + $0x51] sm:$0xff]
        %v3111 = vld [vmem:[#allocation2 + $0x61] sm:$0xff]
        %v3112 = vld [vmem:[#allocation2 + $0x69] sm:$0xff]
        %v3113 = vld [vmem:[#allocation2 + $0x79] sm:$0xff]
        %v3114 = vld [vmem:[#allocation2 + $0x81] sm:$0xff]
        %v3115 = vld [vmem:[#allocation2 + $0x91] sm:$0xff]
        %v3116 = vld [vmem:[#allocation2 + $0x99] sm:$0xff]
        %v3117 = vld [vmem:[#allocation2 + $0xa9] sm:$0xff]
        %v3118 = vld [vmem:[#allocation2 + $0xb1] sm:$0xff]
        %v3119 = vld [vmem:[#allocation2 + $0xc1] sm:$0xff]
        %v3120 = vld [vmem:[#allocation2 + $0xc9] sm:$0xff]
        %v3121 = vld [vmem:[#allocation2 + $0xd9] sm:$0xff]
        %v3122 = vld [vmem:[#allocation2 + $0xe1] sm:$0xff]
        %v3123 = vld [vmem:[#allocation2 + $0xf1] sm:$0xff]
        %v3124 = vld [vmem:[#allocation2 + $0xf9] sm:$0xff]
        %v3125 = vld [vmem:[#allocation2 + $0x109] sm:$0xff]
        %v3126 = vld [vmem:[#allocation2 + $0x111] sm:$0xff]
        %v3127 = vld [vmem:[#allocation2 + $0x121] sm:$0xff]
        %v3128 = vld [vmem:[#allocation2 + $0x129] sm:$0xff]
        %v3129 = vld [vmem:[#allocation2 + $0x139] sm:$0xff]
        %v3130 = vld [vmem:[#allocation2 + $0x141] sm:$0xff]
        %v3131 = vld [vmem:[#allocation2 + $0x151] sm:$0xff]
        %v3132 = vld [vmem:[#allocation2 + $0x159] sm:$0xff]
        %v3133 = vld [vmem:[#allocation2 + $0x169] sm:$0xff]
        %v3134 = vld [vmem:[#allocation2 + $0x171] sm:$0xff]
        %v3135 = vld [vmem:[#allocation2 + $0x2] sm:$0xff]
        %v3136 = vld [vmem:[#allocation2 + $0xa] sm:$0xff]
        %v3137 = vld [vmem:[#allocation2 + $0x1a] sm:$0xff]
        %v3138 = vld [vmem:[#allocation2 + $0x22] sm:$0xff]
        %v3139 = vld [vmem:[#allocation2 + $0x32] sm:$0xff]
        %v3140 = vld [vmem:[#allocation2 + $0x3a] sm:$0xff]
        %v3141 = vld [vmem:[#allocation2 + $0x4a] sm:$0xff]
        %v3142 = vld [vmem:[#allocation2 + $0x52] sm:$0xff]
        %v3143 = vld [vmem:[#allocation2 + $0x62] sm:$0xff]
        %v3144 = vld [vmem:[#allocation2 + $0x6a] sm:$0xff]
        %v3145 = vld [vmem:[#allocation2 + $0x7a] sm:$0xff]
        %v3146 = vld [vmem:[#allocation2 + $0x82] sm:$0xff]
        %v3147 = vld [vmem:[#allocation2 + $0x92] sm:$0xff]
        %v3148 = vld [vmem:[#allocation2 + $0x9a] sm:$0xff]
        %v3149 = vld [vmem:[#allocation2 + $0xaa] sm:$0xff]
        %v3150 = vld [vmem:[#allocation2 + $0xb2] sm:$0xff]
        %v3151 = vld [vmem:[#allocation2 + $0xc2] sm:$0xff]
        %v3152 = vld [vmem:[#allocation2 + $0xca] sm:$0xff]
        %v3153 = vld [vmem:[#allocation2 + $0xda] sm:$0xff]
        %v3154 = vld [vmem:[#allocation2 + $0xe2] sm:$0xff]
        %v3155 = vld [vmem:[#allocation2 + $0xf2] sm:$0xff]
        %v3156 = vld [vmem:[#allocation2 + $0xfa] sm:$0xff]
        %v3157 = vld [vmem:[#allocation2 + $0x10a] sm:$0xff]
        %v3158 = vld [vmem:[#allocation2 + $0x112] sm:$0xff]
        %v3159 = vld [vmem:[#allocation2 + $0x122] sm:$0xff]
        %v3160 = vld [vmem:[#allocation2 + $0x12a] sm:$0xff]
        %v3161 = vld [vmem:[#allocation2 + $0x13a] sm:$0xff]
        %v3162 = vld [vmem:[#allocation2 + $0x142] sm:$0xff]
        %v3163 = vld [vmem:[#allocation2 + $0x152] sm:$0xff]
        %v3164 = vld [vmem:[#allocation2 + $0x15a] sm:$0xff]
        %v3165 = vld [vmem:[#allocation2 + $0x16a] sm:$0xff]
        %v3166 = vld [vmem:[#allocation2 + $0x172] sm:$0xff]
        %v3167 = vld [vmem:[%s1058] sm:$0xff]
        %v3168 = vld [vmem:[%s1058 + $0x8] sm:$0xff]
        %v3169 = vld [vmem:[%s1058 + $0x18] sm:$0xff]
        %v3170 = vld [vmem:[%s1058 + $0x20] sm:$0xff]
        %v3171 = vld [vmem:[%s1058 + $0x30] sm:$0xff]
        %v3172 = vld [vmem:[%s1058 + $0x38] sm:$0xff]
        %v3173 = vld [vmem:[%s1058 + $0x48] sm:$0xff]
        %v3174 = vld [vmem:[%s1058 + $0x50] sm:$0xff]
        %v3175 = vld [vmem:[%s1058 + $0x60] sm:$0xff]
        %v3176 = vld [vmem:[%s1058 + $0x68] sm:$0xff]
        %v3177 = vld [vmem:[%s1058 + $0x78] sm:$0xff]
        %v3178 = vld [vmem:[%s1058 + $0x80] sm:$0xff]
        %v3179 = vld [vmem:[%s1058 + $0x90] sm:$0xff]
        %v3180 = vld [vmem:[%s1058 + $0x98] sm:$0xff]
        %v3181 = vld [vmem:[%s1058 + $0xa8] sm:$0xff]
        %v3182 = vld [vmem:[%s1058 + $0xb0] sm:$0xff]
        %v3183 = vld [vmem:[%s1058 + $0xc0] sm:$0xff]
        %v3184 = vld [vmem:[%s1058 + $0xc8] sm:$0xff]
        %v3185 = vld [vmem:[%s1058 + $0xd8] sm:$0xff]
        %v3186 = vld [vmem:[%s1058 + $0xe0] sm:$0xff]
        %v3187 = vld [vmem:[%s1058 + $0xf0] sm:$0xff]
        %v3188 = vld [vmem:[%s1058 + $0xf8] sm:$0xff]
        %v3189 = vld [vmem:[%s1058 + $0x108] sm:$0xff]
        %v3190 = vld [vmem:[%s1058 + $0x110] sm:$0xff]
        %v3191 = vld [vmem:[%s1058 + $0x120] sm:$0xff]
        %v3192 = vld [vmem:[%s1058 + $0x128] sm:$0xff]
        %v3193 = vld [vmem:[%s1058 + $0x138] sm:$0xff]
        %v3194 = vld [vmem:[%s1058 + $0x140] sm:$0xff]
        %v3195 = vld [vmem:[%s1058 + $0x150] sm:$0xff]
        %v3196 = vld [vmem:[%s1058 + $0x158] sm:$0xff]
        %v3197 = vld [vmem:[%s1058 + $0x168] sm:$0xff]
        %v3198 = vld [vmem:[%s1058 + $0x170] sm:$0xff]
        %v3199 = vld [vmem:[%s1058 + $0x1] sm:$0xff]
        %v3200 = vld [vmem:[%s1058 + $0x9] sm:$0xff]
        %v3201 = vld [vmem:[%s1058 + $0x19] sm:$0xff]
        %v3202 = vld [vmem:[%s1058 + $0x21] sm:$0xff]
        %v3203 = vld [vmem:[%s1058 + $0x31] sm:$0xff]
        %v3204 = vld [vmem:[%s1058 + $0x39] sm:$0xff]
        %v3205 = vld [vmem:[%s1058 + $0x49] sm:$0xff]
        %v3206 = vld [vmem:[%s1058 + $0x51] sm:$0xff]
        %v3207 = vld [vmem:[%s1058 + $0x61] sm:$0xff]
        %v3208 = vld [vmem:[%s1058 + $0x69] sm:$0xff]
        %v3209 = vld [vmem:[%s1058 + $0x79] sm:$0xff]
        %v3210 = vld [vmem:[%s1058 + $0x81] sm:$0xff]
        %v3211 = vld [vmem:[%s1058 + $0x91] sm:$0xff]
        %v3212 = vld [vmem:[%s1058 + $0x99] sm:$0xff]
        %v3213 = vld [vmem:[%s1058 + $0xa9] sm:$0xff]
        %v3214 = vld [vmem:[%s1058 + $0xb1] sm:$0xff]
        %v3215 = vld [vmem:[%s1058 + $0xc1] sm:$0xff]
        %v3216 = vld [vmem:[%s1058 + $0xc9] sm:$0xff]
        %v3217 = vld [vmem:[%s1058 + $0xd9] sm:$0xff]
        %v3218 = vld [vmem:[%s1058 + $0xe1] sm:$0xff]
        %v3219 = vld [vmem:[%s1058 + $0xf1] sm:$0xff]
        %v3220 = vld [vmem:[%s1058 + $0xf9] sm:$0xff]
        %v3221 = vld [vmem:[%s1058 + $0x109] sm:$0xff]
        %v3222 = vld [vmem:[%s1058 + $0x111] sm:$0xff]
        %v3223 = vld [vmem:[%s1058 + $0x121] sm:$0xff]
        %v3224 = vld [vmem:[%s1058 + $0x129] sm:$0xff]
        %v3225 = vld [vmem:[%s1058 + $0x139] sm:$0xff]
        %v3226 = vld [vmem:[%s1058 + $0x141] sm:$0xff]
        %v3227 = vld [vmem:[%s1058 + $0x151] sm:$0xff]
        %v3228 = vld [vmem:[%s1058 + $0x159] sm:$0xff]
        %v3229 = vld [vmem:[%s1058 + $0x169] sm:$0xff]
        %v3230 = vld [vmem:[%s1058 + $0x171] sm:$0xff]
        %v3231 = vld [vmem:[%s1058 + $0x2] sm:$0xff]
        %v3232 = vld [vmem:[%s1058 + $0xa] sm:$0xff]
        %v3233 = vld [vmem:[%s1058 + $0x1a] sm:$0xff]
        %v3234 = vld [vmem:[%s1058 + $0x22] sm:$0xff]
        %v3235 = vld [vmem:[%s1058 + $0x32] sm:$0xff]
        %v3236 = vld [vmem:[%s1058 + $0x3a] sm:$0xff]
        %v3237 = vld [vmem:[%s1058 + $0x4a] sm:$0xff]
        %v3238 = vld [vmem:[%s1058 + $0x52] sm:$0xff]
        %v3239 = vld [vmem:[%s1058 + $0x62] sm:$0xff]
        %v3240 = vld [vmem:[%s1058 + $0x6a] sm:$0xff]
        %v3241 = vld [vmem:[%s1058 + $0x7a] sm:$0xff]
        %v3242 = vld [vmem:[%s1058 + $0x82] sm:$0xff]
        %v3243 = vld [vmem:[%s1058 + $0x92] sm:$0xff]
        %v3244 = vld [vmem:[%s1058 + $0x9a] sm:$0xff]
        %v3245 = vld [vmem:[%s1058 + $0xaa] sm:$0xff]
        %v3246 = vld [vmem:[%s1058 + $0xb2] sm:$0xff]
        %v3247 = vld [vmem:[%s1058 + $0xc2] sm:$0xff]
        %v3248 = vld [vmem:[%s1058 + $0xca] sm:$0xff]
        %v3249 = vld [vmem:[%s1058 + $0xda] sm:$0xff]
        %v3250 = vld [vmem:[%s1058 + $0xe2] sm:$0xff]
        %v3251 = vld [vmem:[%s1058 + $0xf2] sm:$0xff]
        %v3252 = vld [vmem:[%s1058 + $0xfa] sm:$0xff]
        %v3253 = vld [vmem:[%s1058 + $0x10a] sm:$0xff]
        %v3254 = vld [vmem:[%s1058 + $0x112] sm:$0xff]
        %v3255 = vld [vmem:[%s1058 + $0x122] sm:$0xff]
        %v3256 = vld [vmem:[%s1058 + $0x12a] sm:$0xff]
        %v3257 = vld [vmem:[%s1058 + $0x13a] sm:$0xff]
        %v3258 = vld [vmem:[%s1058 + $0x142] sm:$0xff]
        %v3259 = vld [vmem:[%s1058 + $0x152] sm:$0xff]
        %v3260 = vld [vmem:[%s1058 + $0x15a] sm:$0xff]
        %v3261 = vld [vmem:[%s1058 + $0x16a] sm:$0xff]
        %v3262 = vld [vmem:[%s1058 + $0x172] sm:$0xff]
        %v3263 = vld [vmem:[%s1283] sm:$0xff]
        %v3264 = vld [vmem:[%s1283 + $0x8] sm:$0xff]
        %v3265 = vld [vmem:[%s1283 + $0x18] sm:$0xff]
        %v3266 = vld [vmem:[%s1283 + $0x20] sm:$0xff]
        %v3267 = vld [vmem:[%s1283 + $0x30] sm:$0xff]
        %v3268 = vld [vmem:[%s1283 + $0x38] sm:$0xff]
        %v3269 = vld [vmem:[%s1283 + $0x48] sm:$0xff]
        %v3270 = vld [vmem:[%s1283 + $0x50] sm:$0xff]
        %v3271 = vld [vmem:[%s1283 + $0x60] sm:$0xff]
        %v3272 = vld [vmem:[%s1283 + $0x68] sm:$0xff]
        %v3273 = vld [vmem:[%s1283 + $0x78] sm:$0xff]
        %v3274 = vld [vmem:[%s1283 + $0x80] sm:$0xff]
        %v3275 = vld [vmem:[%s1283 + $0x90] sm:$0xff]
        %v3276 = vld [vmem:[%s1283 + $0x98] sm:$0xff]
        %v3277 = vld [vmem:[%s1283 + $0xa8] sm:$0xff]
        %v3278 = vld [vmem:[%s1283 + $0xb0] sm:$0xff]
        %v3279 = vld [vmem:[%s1283 + $0xc0] sm:$0xff]
        %v3280 = vld [vmem:[%s1283 + $0xc8] sm:$0xff]
        %v3281 = vld [vmem:[%s1283 + $0xd8] sm:$0xff]
        %v3282 = vld [vmem:[%s1283 + $0xe0] sm:$0xff]
        %v3283 = vld [vmem:[%s1283 + $0xf0] sm:$0xff]
        %v3284 = vld [vmem:[%s1283 + $0xf8] sm:$0xff]
        %v3285 = vld [vmem:[%s1283 + $0x108] sm:$0xff]
        %v3286 = vld [vmem:[%s1283 + $0x110] sm:$0xff]
        %v3287 = vld [vmem:[%s1283 + $0x120] sm:$0xff]
        %v3288 = vld [vmem:[%s1283 + $0x128] sm:$0xff]
        %v3289 = vld [vmem:[%s1283 + $0x138] sm:$0xff]
        %v3290 = vld [vmem:[%s1283 + $0x140] sm:$0xff]
        %v3291 = vld [vmem:[%s1283 + $0x150] sm:$0xff]
        %v3292 = vld [vmem:[%s1283 + $0x158] sm:$0xff]
        %v3293 = vld [vmem:[%s1283 + $0x168] sm:$0xff]
        %v3294 = vld [vmem:[%s1283 + $0x170] sm:$0xff]
        %v3295 = vld [vmem:[%s1283 + $0x1] sm:$0xff]
        %v3296 = vld [vmem:[%s1283 + $0x9] sm:$0xff]
        %v3297 = vld [vmem:[%s1283 + $0x19] sm:$0xff]
        %v3298 = vld [vmem:[%s1283 + $0x21] sm:$0xff]
        %v3299 = vld [vmem:[%s1283 + $0x31] sm:$0xff]
        %v3300 = vld [vmem:[%s1283 + $0x39] sm:$0xff]
        %v3301 = vld [vmem:[%s1283 + $0x49] sm:$0xff]
        %v3302 = vld [vmem:[%s1283 + $0x51] sm:$0xff]
        %v3303 = vld [vmem:[%s1283 + $0x61] sm:$0xff]
        %v3304 = vld [vmem:[%s1283 + $0x69] sm:$0xff]
        %v3305 = vld [vmem:[%s1283 + $0x79] sm:$0xff]
        %v3306 = vld [vmem:[%s1283 + $0x81] sm:$0xff]
        %v3307 = vld [vmem:[%s1283 + $0x91] sm:$0xff]
        %v3308 = vld [vmem:[%s1283 + $0x99] sm:$0xff]
        %v3309 = vld [vmem:[%s1283 + $0xa9] sm:$0xff]
        %v3310 = vld [vmem:[%s1283 + $0xb1] sm:$0xff]
        %v3311 = vld [vmem:[%s1283 + $0xc1] sm:$0xff]
        %v3312 = vld [vmem:[%s1283 + $0xc9] sm:$0xff]
        %v3313 = vld [vmem:[%s1283 + $0xd9] sm:$0xff]
        %v3314 = vld [vmem:[%s1283 + $0xe1] sm:$0xff]
        %v3315 = vld [vmem:[%s1283 + $0xf1] sm:$0xff]
        %v3316 = vld [vmem:[%s1283 + $0xf9] sm:$0xff]
        %v3317 = vld [vmem:[%s1283 + $0x109] sm:$0xff]
        %v3318 = vld [vmem:[%s1283 + $0x111] sm:$0xff]
        %v3319 = vld [vmem:[%s1283 + $0x121] sm:$0xff]
        %v3320 = vld [vmem:[%s1283 + $0x129] sm:$0xff]
        %v3321 = vld [vmem:[%s1283 + $0x139] sm:$0xff]
        %v3322 = vld [vmem:[%s1283 + $0x141] sm:$0xff]
        %v3323 = vld [vmem:[%s1283 + $0x151] sm:$0xff]
        %v3324 = vld [vmem:[%s1283 + $0x159] sm:$0xff]
        %v3325 = vld [vmem:[%s1283 + $0x169] sm:$0xff]
        %v3326 = vld [vmem:[%s1283 + $0x171] sm:$0xff]
        %v3327 = vld [vmem:[%s1283 + $0x2] sm:$0xff]
        %v3328 = vld [vmem:[%s1283 + $0xa] sm:$0xff]
        %v3329 = vld [vmem:[%s1283 + $0x1a] sm:$0xff]
        %v3330 = vld [vmem:[%s1283 + $0x22] sm:$0xff]
        %v3331 = vld [vmem:[%s1283 + $0x32] sm:$0xff]
        %v3332 = vld [vmem:[%s1283 + $0x3a] sm:$0xff]
        %v3333 = vld [vmem:[%s1283 + $0x4a] sm:$0xff]
        %v3334 = vld [vmem:[%s1283 + $0x52] sm:$0xff]
        %v3335 = vld [vmem:[%s1283 + $0x62] sm:$0xff]
        %v3336 = vld [vmem:[%s1283 + $0x6a] sm:$0xff]
        %v3337 = vld [vmem:[%s1283 + $0x7a] sm:$0xff]
        %v3338 = vld [vmem:[%s1283 + $0x82] sm:$0xff]
        %v3339 = vld [vmem:[%s1283 + $0x92] sm:$0xff]
        %v3340 = vld [vmem:[%s1283 + $0x9a] sm:$0xff]
        %v3341 = vld [vmem:[%s1283 + $0xaa] sm:$0xff]
        %v3342 = vld [vmem:[%s1283 + $0xb2] sm:$0xff]
        %v3343 = vld [vmem:[%s1283 + $0xc2] sm:$0xff]
        %v3344 = vld [vmem:[%s1283 + $0xca] sm:$0xff]
        %v3345 = vld [vmem:[%s1283 + $0xda] sm:$0xff]
        %v3346 = vld [vmem:[%s1283 + $0xe2] sm:$0xff]
        %v3347 = vld [vmem:[%s1283 + $0xf2] sm:$0xff]
        %v3348 = vld [vmem:[%s1283 + $0xfa] sm:$0xff]
        %v3349 = vld [vmem:[%s1283 + $0x10a] sm:$0xff]
        %v3350 = vld [vmem:[%s1283 + $0x112] sm:$0xff]
        %v3351 = vld [vmem:[%s1283 + $0x122] sm:$0xff]
        %v3352 = vld [vmem:[%s1283 + $0x12a] sm:$0xff]
        %v3353 = vld [vmem:[%s1283 + $0x13a] sm:$0xff]
        %v3354 = vld [vmem:[%s1283 + $0x142] sm:$0xff]
        %v3355 = vld [vmem:[%s1283 + $0x152] sm:$0xff]
        %v3356 = vld [vmem:[%s1283 + $0x15a] sm:$0xff]
        %v3357 = vld [vmem:[%s1283 + $0x16a] sm:$0xff]
        %v3358 = vld [vmem:[%s1283 + $0x172] sm:$0xff]
        %3391 = vrot.lane.b32.xlu0 %v3103, 32
        %v3392 = vpop.permute.xlu0 %3391
        %3393 = vrot.lane.b32.xlu0 %v3104, 32
        %v3394 = vpop.permute.xlu0 %3393
        %3395 = vrot.lane.b32.xlu0 %v3105, 32
        %v3396 = vpop.permute.xlu0 %3395
        %3397 = vrot.lane.b32.xlu0 %v3106, 32
        %v3398 = vpop.permute.xlu0 %3397
        %3399 = vrot.lane.b32.xlu0 %v3107, 32
        %v3400 = vpop.permute.xlu0 %3399
        %3401 = vrot.lane.b32.xlu0 %v3108, 32
        %v3402 = vpop.permute.xlu0 %3401
        %3403 = vrot.lane.b32.xlu0 %v3109, 32
        %v3404 = vpop.permute.xlu0 %3403
        %3405 = vrot.lane.b32.xlu0 %v3110, 32
        %v3406 = vpop.permute.xlu0 %3405
        %3407 = vrot.lane.b32.xlu0 %v3111, 32
        %v3408 = vpop.permute.xlu0 %3407
        %3409 = vrot.lane.b32.xlu0 %v3112, 32
        %v3410 = vpop.permute.xlu0 %3409
        %3411 = vrot.lane.b32.xlu0 %v3113, 32
        %v3412 = vpop.permute.xlu0 %3411
        %3413 = vrot.lane.b32.xlu0 %v3114, 32
        %v3414 = vpop.permute.xlu0 %3413
        %3415 = vrot.lane.b32.xlu0 %v3115, 32
        %v3416 = vpop.permute.xlu0 %3415
        %3417 = vrot.lane.b32.xlu0 %v3116, 32
        %v3418 = vpop.permute.xlu0 %3417
        %3419 = vrot.lane.b32.xlu0 %v3117, 32
        %v3420 = vpop.permute.xlu0 %3419
        %3421 = vrot.lane.b32.xlu0 %v3118, 32
        %v3422 = vpop.permute.xlu0 %3421
        %3423 = vrot.lane.b32.xlu0 %v3119, 32
        %v3424 = vpop.permute.xlu0 %3423
        %3425 = vrot.lane.b32.xlu0 %v3120, 32
        %v3426 = vpop.permute.xlu0 %3425
        %3427 = vrot.lane.b32.xlu0 %v3121, 32
        %v3428 = vpop.permute.xlu0 %3427
        %3429 = vrot.lane.b32.xlu0 %v3122, 32
        %v3430 = vpop.permute.xlu0 %3429
        %3431 = vrot.lane.b32.xlu0 %v3123, 32
        %v3432 = vpop.permute.xlu0 %3431
        %3433 = vrot.lane.b32.xlu0 %v3124, 32
        %v3434 = vpop.permute.xlu0 %3433
        %3435 = vrot.lane.b32.xlu0 %v3125, 32
        %v3436 = vpop.permute.xlu0 %3435
        %3437 = vrot.lane.b32.xlu0 %v3126, 32
        %v3438 = vpop.permute.xlu0 %3437
        %3439 = vrot.lane.b32.xlu0 %v3127, 32
        %v3440 = vpop.permute.xlu0 %3439
        %3441 = vrot.lane.b32.xlu0 %v3128, 32
        %v3442 = vpop.permute.xlu0 %3441
        %3443 = vrot.lane.b32.xlu0 %v3129, 32
        %v3444 = vpop.permute.xlu0 %3443
        %3445 = vrot.lane.b32.xlu0 %v3130, 32
        %v3446 = vpop.permute.xlu0 %3445
        %3447 = vrot.lane.b32.xlu0 %v3131, 32
        %v3448 = vpop.permute.xlu0 %3447
        %3449 = vrot.lane.b32.xlu0 %v3132, 32
        %v3450 = vpop.permute.xlu0 %3449
        %3451 = vrot.lane.b32.xlu0 %v3133, 32
        %v3452 = vpop.permute.xlu0 %3451
        %3453 = vrot.lane.b32.xlu0 %v3134, 32
        %v3454 = vpop.permute.xlu0 %3453
        %3519 = vrot.lane.b32.xlu0 %v3135, 64
        %v3520 = vpop.permute.xlu0 %3519
        %3521 = vrot.lane.b32.xlu0 %v3136, 64
        %v3522 = vpop.permute.xlu0 %3521
        %3523 = vrot.lane.b32.xlu0 %v3137, 64
        %v3524 = vpop.permute.xlu0 %3523
        %3525 = vrot.lane.b32.xlu0 %v3138, 64
        %v3526 = vpop.permute.xlu0 %3525
        %3527 = vrot.lane.b32.xlu0 %v3139, 64
        %v3528 = vpop.permute.xlu0 %3527
        %3529 = vrot.lane.b32.xlu0 %v3140, 64
        %v3530 = vpop.permute.xlu0 %3529
        %3531 = vrot.lane.b32.xlu0 %v3141, 64
        %v3532 = vpop.permute.xlu0 %3531
        %3533 = vrot.lane.b32.xlu0 %v3142, 64
        %v3534 = vpop.permute.xlu0 %3533
        %3535 = vrot.lane.b32.xlu0 %v3143, 64
        %v3536 = vpop.permute.xlu0 %3535
        %3537 = vrot.lane.b32.xlu0 %v3144, 64
        %v3538 = vpop.permute.xlu0 %3537
        %3539 = vrot.lane.b32.xlu0 %v3145, 64
        %v3540 = vpop.permute.xlu0 %3539
        %3541 = vrot.lane.b32.xlu0 %v3146, 64
        %v3542 = vpop.permute.xlu0 %3541
        %3543 = vrot.lane.b32.xlu0 %v3147, 64
        %v3544 = vpop.permute.xlu0 %3543
        %3545 = vrot.lane.b32.xlu0 %v3148, 64
        %v3546 = vpop.permute.xlu0 %3545
        %3547 = vrot.lane.b32.xlu0 %v3149, 64
        %v3548 = vpop.permute.xlu0 %3547
        %3549 = vrot.lane.b32.xlu0 %v3150, 64
        %v3550 = vpop.permute.xlu0 %3549
        %3551 = vrot.lane.b32.xlu0 %v3151, 64
        %v3552 = vpop.permute.xlu0 %3551
        %3553 = vrot.lane.b32.xlu0 %v3152, 64
        %v3554 = vpop.permute.xlu0 %3553
        %3555 = vrot.lane.b32.xlu0 %v3153, 64
        %v3556 = vpop.permute.xlu0 %3555
        %3557 = vrot.lane.b32.xlu0 %v3154, 64
        %v3558 = vpop.permute.xlu0 %3557
        %3559 = vrot.lane.b32.xlu0 %v3155, 64
        %v3560 = vpop.permute.xlu0 %3559
        %3561 = vrot.lane.b32.xlu0 %v3156, 64
        %v3562 = vpop.permute.xlu0 %3561
        %3563 = vrot.lane.b32.xlu0 %v3157, 64
        %v3564 = vpop.permute.xlu0 %3563
        %3565 = vrot.lane.b32.xlu0 %v3158, 64
        %v3566 = vpop.permute.xlu0 %3565
        %3567 = vrot.lane.b32.xlu0 %v3159, 64
        %v3568 = vpop.permute.xlu0 %3567
        %3569 = vrot.lane.b32.xlu0 %v3160, 64
        %v3570 = vpop.permute.xlu0 %3569
        %3571 = vrot.lane.b32.xlu0 %v3161, 64
        %v3572 = vpop.permute.xlu0 %3571
        %3573 = vrot.lane.b32.xlu0 %v3162, 64
        %v3574 = vpop.permute.xlu0 %3573
        %3575 = vrot.lane.b32.xlu0 %v3163, 64
        %v3576 = vpop.permute.xlu0 %3575
        %3577 = vrot.lane.b32.xlu0 %v3164, 64
        %v3578 = vpop.permute.xlu0 %3577
        %3579 = vrot.lane.b32.xlu0 %v3165, 64
        %v3580 = vpop.permute.xlu0 %3579
        %3581 = vrot.lane.b32.xlu0 %v3166, 64
        %v3582 = vpop.permute.xlu0 %3581
        %3647 = vrot.lane.b32.xlu0 %v3167, 96
        %v3648 = vpop.permute.xlu0 %3647
        %3649 = vrot.lane.b32.xlu0 %v3168, 96
        %v3650 = vpop.permute.xlu0 %3649
        %3651 = vrot.lane.b32.xlu0 %v3169, 96
        %v3652 = vpop.permute.xlu0 %3651
        %3653 = vrot.lane.b32.xlu0 %v3170, 96
        %v3654 = vpop.permute.xlu0 %3653
        %3655 = vrot.lane.b32.xlu0 %v3171, 96
        %v3656 = vpop.permute.xlu0 %3655
        %3657 = vrot.lane.b32.xlu0 %v3172, 96
        %v3658 = vpop.permute.xlu0 %3657
        %3659 = vrot.lane.b32.xlu0 %v3173, 96
        %v3660 = vpop.permute.xlu0 %3659
        %3661 = vrot.lane.b32.xlu0 %v3174, 96
        %v3662 = vpop.permute.xlu0 %3661
        %3663 = vrot.lane.b32.xlu0 %v3175, 96
        %v3664 = vpop.permute.xlu0 %3663
        %3665 = vrot.lane.b32.xlu0 %v3176, 96
        %v3666 = vpop.permute.xlu0 %3665
        %3667 = vrot.lane.b32.xlu0 %v3177, 96
        %v3668 = vpop.permute.xlu0 %3667
        %3669 = vrot.lane.b32.xlu0 %v3178, 96
        %v3670 = vpop.permute.xlu0 %3669
        %3671 = vrot.lane.b32.xlu0 %v3179, 96
        %v3672 = vpop.permute.xlu0 %3671
        %3673 = vrot.lane.b32.xlu0 %v3180, 96
        %v3674 = vpop.permute.xlu0 %3673
        %3675 = vrot.lane.b32.xlu0 %v3181, 96
        %v3676 = vpop.permute.xlu0 %3675
        %3677 = vrot.lane.b32.xlu0 %v3182, 96
        %v3678 = vpop.permute.xlu0 %3677
        %3679 = vrot.lane.b32.xlu0 %v3183, 96
        %v3680 = vpop.permute.xlu0 %3679
        %3681 = vrot.lane.b32.xlu0 %v3184, 96
        %v3682 = vpop.permute.xlu0 %3681
        %3683 = vrot.lane.b32.xlu0 %v3185, 96
        %v3684 = vpop.permute.xlu0 %3683
        %3685 = vrot.lane.b32.xlu0 %v3186, 96
        %v3686 = vpop.permute.xlu0 %3685
        %3687 = vrot.lane.b32.xlu0 %v3187, 96
        %v3688 = vpop.permute.xlu0 %3687
        %3689 = vrot.lane.b32.xlu0 %v3188, 96
        %v3690 = vpop.permute.xlu0 %3689
        %3691 = vrot.lane.b32.xlu0 %v3189, 96
        %v3692 = vpop.permute.xlu0 %3691
        %3693 = vrot.lane.b32.xlu0 %v3190, 96
        %v3694 = vpop.permute.xlu0 %3693
        %3695 = vrot.lane.b32.xlu0 %v3191, 96
        %v3696 = vpop.permute.xlu0 %3695
        %3697 = vrot.lane.b32.xlu0 %v3192, 96
        %v3698 = vpop.permute.xlu0 %3697
        %3699 = vrot.lane.b32.xlu0 %v3193, 96
        %v3700 = vpop.permute.xlu0 %3699
        %3701 = vrot.lane.b32.xlu0 %v3194, 96
        %v3702 = vpop.permute.xlu0 %3701
        %3703 = vrot.lane.b32.xlu0 %v3195, 96
        %v3704 = vpop.permute.xlu0 %3703
        %3705 = vrot.lane.b32.xlu0 %v3196, 96
        %v3706 = vpop.permute.xlu0 %3705
        %3707 = vrot.lane.b32.xlu0 %v3197, 96
        %v3708 = vpop.permute.xlu0 %3707
        %3709 = vrot.lane.b32.xlu0 %v3198, 96
        %v3710 = vpop.permute.xlu0 %3709
        %3775 = vrot.lane.b32.xlu0 %v3231, 32
        %v3776 = vpop.permute.xlu0 %3775
        %3777 = vrot.lane.b32.xlu0 %v3232, 32
        %v3778 = vpop.permute.xlu0 %3777
        %3779 = vrot.lane.b32.xlu0 %v3233, 32
        %v3780 = vpop.permute.xlu0 %3779
        %3781 = vrot.lane.b32.xlu0 %v3234, 32
        %v3782 = vpop.permute.xlu0 %3781
        %3783 = vrot.lane.b32.xlu0 %v3235, 32
        %v3784 = vpop.permute.xlu0 %3783
        %3785 = vrot.lane.b32.xlu0 %v3236, 32
        %v3786 = vpop.permute.xlu0 %3785
        %3787 = vrot.lane.b32.xlu0 %v3237, 32
        %v3788 = vpop.permute.xlu0 %3787
        %3789 = vrot.lane.b32.xlu0 %v3238, 32
        %v3790 = vpop.permute.xlu0 %3789
        %3791 = vrot.lane.b32.xlu0 %v3239, 32
        %v3792 = vpop.permute.xlu0 %3791
        %3793 = vrot.lane.b32.xlu0 %v3240, 32
        %v3794 = vpop.permute.xlu0 %3793
        %3795 = vrot.lane.b32.xlu0 %v3241, 32
        %v3796 = vpop.permute.xlu0 %3795
        %3797 = vrot.lane.b32.xlu0 %v3242, 32
        %v3798 = vpop.permute.xlu0 %3797
        %3799 = vrot.lane.b32.xlu0 %v3243, 32
        %v3800 = vpop.permute.xlu0 %3799
        %3801 = vrot.lane.b32.xlu0 %v3244, 32
        %v3802 = vpop.permute.xlu0 %3801
        %3803 = vrot.lane.b32.xlu0 %v3245, 32
        %v3804 = vpop.permute.xlu0 %3803
        %3805 = vrot.lane.b32.xlu0 %v3246, 32
        %v3806 = vpop.permute.xlu0 %3805
        %3807 = vrot.lane.b32.xlu0 %v3247, 32
        %v3808 = vpop.permute.xlu0 %3807
        %3809 = vrot.lane.b32.xlu0 %v3248, 32
        %v3810 = vpop.permute.xlu0 %3809
        %3811 = vrot.lane.b32.xlu0 %v3249, 32
        %v3812 = vpop.permute.xlu0 %3811
        %3813 = vrot.lane.b32.xlu0 %v3250, 32
        %v3814 = vpop.permute.xlu0 %3813
        %3815 = vrot.lane.b32.xlu0 %v3251, 32
        %v3816 = vpop.permute.xlu0 %3815
        %3817 = vrot.lane.b32.xlu0 %v3252, 32
        %v3818 = vpop.permute.xlu0 %3817
        %3819 = vrot.lane.b32.xlu0 %v3253, 32
        %v3820 = vpop.permute.xlu0 %3819
        %3821 = vrot.lane.b32.xlu0 %v3254, 32
        %v3822 = vpop.permute.xlu0 %3821
        %3823 = vrot.lane.b32.xlu0 %v3255, 32
        %v3824 = vpop.permute.xlu0 %3823
        %3825 = vrot.lane.b32.xlu0 %v3256, 32
        %v3826 = vpop.permute.xlu0 %3825
        %3827 = vrot.lane.b32.xlu0 %v3257, 32
        %v3828 = vpop.permute.xlu0 %3827
        %3829 = vrot.lane.b32.xlu0 %v3258, 32
        %v3830 = vpop.permute.xlu0 %3829
        %3831 = vrot.lane.b32.xlu0 %v3259, 32
        %v3832 = vpop.permute.xlu0 %3831
        %3833 = vrot.lane.b32.xlu0 %v3260, 32
        %v3834 = vpop.permute.xlu0 %3833
        %3835 = vrot.lane.b32.xlu0 %v3261, 32
        %v3836 = vpop.permute.xlu0 %3835
        %3837 = vrot.lane.b32.xlu0 %v3262, 32
        %v3838 = vpop.permute.xlu0 %3837
        %3903 = vrot.lane.b32.xlu0 %v3263, 64
        %v3904 = vpop.permute.xlu0 %3903
        %3905 = vrot.lane.b32.xlu0 %v3264, 64
        %v3906 = vpop.permute.xlu0 %3905
        %3907 = vrot.lane.b32.xlu0 %v3265, 64
        %v3908 = vpop.permute.xlu0 %3907
        %3909 = vrot.lane.b32.xlu0 %v3266, 64
        %v3910 = vpop.permute.xlu0 %3909
        %3911 = vrot.lane.b32.xlu0 %v3267, 64
        %v3912 = vpop.permute.xlu0 %3911
        %3913 = vrot.lane.b32.xlu0 %v3268, 64
        %v3914 = vpop.permute.xlu0 %3913
        %3915 = vrot.lane.b32.xlu0 %v3269, 64
        %v3916 = vpop.permute.xlu0 %3915
        %3917 = vrot.lane.b32.xlu0 %v3270, 64
        %v3918 = vpop.permute.xlu0 %3917
        %3919 = vrot.lane.b32.xlu0 %v3271, 64
        %v3920 = vpop.permute.xlu0 %3919
        %3921 = vrot.lane.b32.xlu0 %v3272, 64
        %v3922 = vpop.permute.xlu0 %3921
        %3923 = vrot.lane.b32.xlu0 %v3273, 64
        %v3924 = vpop.permute.xlu0 %3923
        %3925 = vrot.lane.b32.xlu0 %v3274, 64
        %v3926 = vpop.permute.xlu0 %3925
        %3927 = vrot.lane.b32.xlu0 %v3275, 64
        %v3928 = vpop.permute.xlu0 %3927
        %3929 = vrot.lane.b32.xlu0 %v3276, 64
        %v3930 = vpop.permute.xlu0 %3929
        %3931 = vrot.lane.b32.xlu0 %v3277, 64
        %v3932 = vpop.permute.xlu0 %3931
        %3933 = vrot.lane.b32.xlu0 %v3278, 64
        %v3934 = vpop.permute.xlu0 %3933
        %3935 = vrot.lane.b32.xlu0 %v3279, 64
        %v3936 = vpop.permute.xlu0 %3935
        %3937 = vrot.lane.b32.xlu0 %v3280, 64
        %v3938 = vpop.permute.xlu0 %3937
        %3939 = vrot.lane.b32.xlu0 %v3281, 64
        %v3940 = vpop.permute.xlu0 %3939
        %3941 = vrot.lane.b32.xlu0 %v3282, 64
        %v3942 = vpop.permute.xlu0 %3941
        %3943 = vrot.lane.b32.xlu0 %v3283, 64
        %v3944 = vpop.permute.xlu0 %3943
        %3945 = vrot.lane.b32.xlu0 %v3284, 64
        %v3946 = vpop.permute.xlu0 %3945
        %3947 = vrot.lane.b32.xlu0 %v3285, 64
        %v3948 = vpop.permute.xlu0 %3947
        %3949 = vrot.lane.b32.xlu0 %v3286, 64
        %v3950 = vpop.permute.xlu0 %3949
        %3951 = vrot.lane.b32.xlu0 %v3287, 64
        %v3952 = vpop.permute.xlu0 %3951
        %3953 = vrot.lane.b32.xlu0 %v3288, 64
        %v3954 = vpop.permute.xlu0 %3953
        %3955 = vrot.lane.b32.xlu0 %v3289, 64
        %v3956 = vpop.permute.xlu0 %3955
        %3957 = vrot.lane.b32.xlu0 %v3290, 64
        %v3958 = vpop.permute.xlu0 %3957
        %3959 = vrot.lane.b32.xlu0 %v3291, 64
        %v3960 = vpop.permute.xlu0 %3959
        %3961 = vrot.lane.b32.xlu0 %v3292, 64
        %v3962 = vpop.permute.xlu0 %3961
        %3963 = vrot.lane.b32.xlu0 %v3293, 64
        %v3964 = vpop.permute.xlu0 %3963
        %3965 = vrot.lane.b32.xlu0 %v3294, 64
        %v3966 = vpop.permute.xlu0 %3965
        %4031 = vrot.lane.b32.xlu0 %v3295, 96
        %v4032 = vpop.permute.xlu0 %4031
        %4033 = vrot.lane.b32.xlu0 %v3296, 96
        %v4034 = vpop.permute.xlu0 %4033
        %4035 = vrot.lane.b32.xlu0 %v3297, 96
        %v4036 = vpop.permute.xlu0 %4035
        %4037 = vrot.lane.b32.xlu0 %v3298, 96
        %v4038 = vpop.permute.xlu0 %4037
        %4039 = vrot.lane.b32.xlu0 %v3299, 96
        %v4040 = vpop.permute.xlu0 %4039
        %4041 = vrot.lane.b32.xlu0 %v3300, 96
        %v4042 = vpop.permute.xlu0 %4041
        %4043 = vrot.lane.b32.xlu0 %v3301, 96
        %v4044 = vpop.permute.xlu0 %4043
        %4045 = vrot.lane.b32.xlu0 %v3302, 96
        %v4046 = vpop.permute.xlu0 %4045
        %4047 = vrot.lane.b32.xlu0 %v3303, 96
        %v4048 = vpop.permute.xlu0 %4047
        %4049 = vrot.lane.b32.xlu0 %v3304, 96
        %v4050 = vpop.permute.xlu0 %4049
        %4051 = vrot.lane.b32.xlu0 %v3305, 96
        %v4052 = vpop.permute.xlu0 %4051
        %4053 = vrot.lane.b32.xlu0 %v3306, 96
        %v4054 = vpop.permute.xlu0 %4053
        %4055 = vrot.lane.b32.xlu0 %v3307, 96
        %v4056 = vpop.permute.xlu0 %4055
        %4057 = vrot.lane.b32.xlu0 %v3308, 96
        %v4058 = vpop.permute.xlu0 %4057
        %4059 = vrot.lane.b32.xlu0 %v3309, 96
        %v4060 = vpop.permute.xlu0 %4059
        %4061 = vrot.lane.b32.xlu0 %v3310, 96
        %v4062 = vpop.permute.xlu0 %4061
        %4063 = vrot.lane.b32.xlu0 %v3311, 96
        %v4064 = vpop.permute.xlu0 %4063
        %4065 = vrot.lane.b32.xlu0 %v3312, 96
        %v4066 = vpop.permute.xlu0 %4065
        %4067 = vrot.lane.b32.xlu0 %v3313, 96
        %v4068 = vpop.permute.xlu0 %4067
        %4069 = vrot.lane.b32.xlu0 %v3314, 96
        %v4070 = vpop.permute.xlu0 %4069
        %4071 = vrot.lane.b32.xlu0 %v3315, 96
        %v4072 = vpop.permute.xlu0 %4071
        %4073 = vrot.lane.b32.xlu0 %v3316, 96
        %v4074 = vpop.permute.xlu0 %4073
        %4075 = vrot.lane.b32.xlu0 %v3317, 96
        %v4076 = vpop.permute.xlu0 %4075
        %4077 = vrot.lane.b32.xlu0 %v3318, 96
        %v4078 = vpop.permute.xlu0 %4077
        %4079 = vrot.lane.b32.xlu0 %v3319, 96
        %v4080 = vpop.permute.xlu0 %4079
        %4081 = vrot.lane.b32.xlu0 %v3320, 96
        %v4082 = vpop.permute.xlu0 %4081
        %4083 = vrot.lane.b32.xlu0 %v3321, 96
        %v4084 = vpop.permute.xlu0 %4083
        %4085 = vrot.lane.b32.xlu0 %v3322, 96
        %v4086 = vpop.permute.xlu0 %4085
        %4087 = vrot.lane.b32.xlu0 %v3323, 96
        %v4088 = vpop.permute.xlu0 %4087
        %4089 = vrot.lane.b32.xlu0 %v3324, 96
        %v4090 = vpop.permute.xlu0 %4089
        %4091 = vrot.lane.b32.xlu0 %v3325, 96
        %v4092 = vpop.permute.xlu0 %4091
        %4093 = vrot.lane.b32.xlu0 %v3326, 96
        %v4094 = vpop.permute.xlu0 %4093
        %v4127 = vsel %vm450, %v3071, %v3392
        %v4128 = vsel %vm450, %v3072, %v3394
        %v4129 = vsel %vm450, %v3073, %v3396
        %v4130 = vsel %vm450, %v3074, %v3398
        %v4131 = vsel %vm450, %v3075, %v3400
        %v4132 = vsel %vm450, %v3076, %v3402
        %v4133 = vsel %vm450, %v3077, %v3404
        %v4134 = vsel %vm450, %v3078, %v3406
        %v4135 = vsel %vm450, %v3079, %v3408
        %v4136 = vsel %vm450, %v3080, %v3410
        %v4137 = vsel %vm450, %v3081, %v3412
        %v4138 = vsel %vm450, %v3082, %v3414
        %v4139 = vsel %vm450, %v3083, %v3416
        %v4140 = vsel %vm450, %v3084, %v3418
        %v4141 = vsel %vm450, %v3085, %v3420
        %v4142 = vsel %vm450, %v3086, %v3422
        %v4143 = vsel %vm450, %v3087, %v3424
        %v4144 = vsel %vm450, %v3088, %v3426
        %v4145 = vsel %vm450, %v3089, %v3428
        %v4146 = vsel %vm450, %v3090, %v3430
        %v4147 = vsel %vm450, %v3091, %v3432
        %v4148 = vsel %vm450, %v3092, %v3434
        %v4149 = vsel %vm450, %v3093, %v3436
        %v4150 = vsel %vm450, %v3094, %v3438
        %v4151 = vsel %vm450, %v3095, %v3440
        %v4152 = vsel %vm450, %v3096, %v3442
        %v4153 = vsel %vm450, %v3097, %v3444
        %v4154 = vsel %vm450, %v3098, %v3446
        %v4155 = vsel %vm450, %v3099, %v3448
        %v4156 = vsel %vm450, %v3100, %v3450
        %v4157 = vsel %vm450, %v3101, %v3452
        %v4158 = vsel %vm450, %v3102, %v3454
        %v4159 = vsel %vm2180, %v4127, %v3520
        %v4160 = vsel %vm2180, %v4128, %v3522
        %v4161 = vsel %vm2180, %v4129, %v3524
        %v4162 = vsel %vm2180, %v4130, %v3526
        %v4163 = vsel %vm2180, %v4131, %v3528
        %v4164 = vsel %vm2180, %v4132, %v3530
        %v4165 = vsel %vm2180, %v4133, %v3532
        %v4166 = vsel %vm2180, %v4134, %v3534
        %v4167 = vsel %vm2180, %v4135, %v3536
        %v4168 = vsel %vm2180, %v4136, %v3538
        %v4169 = vsel %vm2180, %v4137, %v3540
        %v4170 = vsel %vm2180, %v4138, %v3542
        %v4171 = vsel %vm2180, %v4139, %v3544
        %v4172 = vsel %vm2180, %v4140, %v3546
        %v4173 = vsel %vm2180, %v4141, %v3548
        %v4174 = vsel %vm2180, %v4142, %v3550
        %v4175 = vsel %vm2180, %v4143, %v3552
        %v4176 = vsel %vm2180, %v4144, %v3554
        %v4177 = vsel %vm2180, %v4145, %v3556
        %v4178 = vsel %vm2180, %v4146, %v3558
        %v4179 = vsel %vm2180, %v4147, %v3560
        %v4180 = vsel %vm2180, %v4148, %v3562
        %v4181 = vsel %vm2180, %v4149, %v3564
        %v4182 = vsel %vm2180, %v4150, %v3566
        %v4183 = vsel %vm2180, %v4151, %v3568
        %v4184 = vsel %vm2180, %v4152, %v3570
        %v4185 = vsel %vm2180, %v4153, %v3572
        %v4186 = vsel %vm2180, %v4154, %v3574
        %v4187 = vsel %vm2180, %v4155, %v3576
        %v4188 = vsel %vm2180, %v4156, %v3578
        %v4189 = vsel %vm2180, %v4157, %v3580
        %v4190 = vsel %vm2180, %v4158, %v3582
        %v4191 = vsel %vm2213, %v4159, %v3648
        %v4192 = vsel %vm2213, %v4160, %v3650
        %v4193 = vsel %vm2213, %v4161, %v3652
        %v4194 = vsel %vm2213, %v4162, %v3654
        %v4195 = vsel %vm2213, %v4163, %v3656
        %v4196 = vsel %vm2213, %v4164, %v3658
        %v4197 = vsel %vm2213, %v4165, %v3660
        %v4198 = vsel %vm2213, %v4166, %v3662
        %v4199 = vsel %vm2213, %v4167, %v3664
        %v4200 = vsel %vm2213, %v4168, %v3666
        %v4201 = vsel %vm2213, %v4169, %v3668
        %v4202 = vsel %vm2213, %v4170, %v3670
        %v4203 = vsel %vm2213, %v4171, %v3672
        %v4204 = vsel %vm2213, %v4172, %v3674
        %v4205 = vsel %vm2213, %v4173, %v3676
        %v4206 = vsel %vm2213, %v4174, %v3678
        %v4207 = vsel %vm2213, %v4175, %v3680
        %v4208 = vsel %vm2213, %v4176, %v3682
        %v4209 = vsel %vm2213, %v4177, %v3684
        %v4210 = vsel %vm2213, %v4178, %v3686
        %v4211 = vsel %vm2213, %v4179, %v3688
        %v4212 = vsel %vm2213, %v4180, %v3690
        %v4213 = vsel %vm2213, %v4181, %v3692
        %v4214 = vsel %vm2213, %v4182, %v3694
        %v4215 = vsel %vm2213, %v4183, %v3696
        %v4216 = vsel %vm2213, %v4184, %v3698
        %v4217 = vsel %vm2213, %v4185, %v3700
        %v4218 = vsel %vm2213, %v4186, %v3702
        %v4219 = vsel %vm2213, %v4187, %v3704
        %v4220 = vsel %vm2213, %v4188, %v3706
        %v4221 = vsel %vm2213, %v4189, %v3708
        %v4222 = vsel %vm2213, %v4190, %v3710
        %v4223 = vsel %vm450, %v3199, %v3776
        %v4224 = vsel %vm450, %v3200, %v3778
        %v4225 = vsel %vm450, %v3201, %v3780
        %v4226 = vsel %vm450, %v3202, %v3782
        %v4227 = vsel %vm450, %v3203, %v3784
        %v4228 = vsel %vm450, %v3204, %v3786
        %v4229 = vsel %vm450, %v3205, %v3788
        %v4230 = vsel %vm450, %v3206, %v3790
        %v4231 = vsel %vm450, %v3207, %v3792
        %v4232 = vsel %vm450, %v3208, %v3794
        %v4233 = vsel %vm450, %v3209, %v3796
        %v4234 = vsel %vm450, %v3210, %v3798
        %v4235 = vsel %vm450, %v3211, %v3800
        %v4236 = vsel %vm450, %v3212, %v3802
        %v4237 = vsel %vm450, %v3213, %v3804
        %v4238 = vsel %vm450, %v3214, %v3806
        %v4239 = vsel %vm450, %v3215, %v3808
        %v4240 = vsel %vm450, %v3216, %v3810
        %v4241 = vsel %vm450, %v3217, %v3812
        %v4242 = vsel %vm450, %v3218, %v3814
        %v4243 = vsel %vm450, %v3219, %v3816
        %v4244 = vsel %vm450, %v3220, %v3818
        %v4245 = vsel %vm450, %v3221, %v3820
        %v4246 = vsel %vm450, %v3222, %v3822
        %v4247 = vsel %vm450, %v3223, %v3824
        %v4248 = vsel %vm450, %v3224, %v3826
        %v4249 = vsel %vm450, %v3225, %v3828
        %v4250 = vsel %vm450, %v3226, %v3830
        %v4251 = vsel %vm450, %v3227, %v3832
        %v4252 = vsel %vm450, %v3228, %v3834
        %v4253 = vsel %vm450, %v3229, %v3836
        %v4254 = vsel %vm450, %v3230, %v3838
        %v4255 = vsel %vm2180, %v4223, %v3904
        %v4256 = vsel %vm2180, %v4224, %v3906
        %v4257 = vsel %vm2180, %v4225, %v3908
        %v4258 = vsel %vm2180, %v4226, %v3910
        %v4259 = vsel %vm2180, %v4227, %v3912
        %v4260 = vsel %vm2180, %v4228, %v3914
        %v4261 = vsel %vm2180, %v4229, %v3916
        %v4262 = vsel %vm2180, %v4230, %v3918
        %v4263 = vsel %vm2180, %v4231, %v3920
        %v4264 = vsel %vm2180, %v4232, %v3922
        %v4265 = vsel %vm2180, %v4233, %v3924
        %v4266 = vsel %vm2180, %v4234, %v3926
        %v4267 = vsel %vm2180, %v4235, %v3928
        %v4268 = vsel %vm2180, %v4236, %v3930
        %v4269 = vsel %vm2180, %v4237, %v3932
        %v4270 = vsel %vm2180, %v4238, %v3934
        %v4271 = vsel %vm2180, %v4239, %v3936
        %v4272 = vsel %vm2180, %v4240, %v3938
        %v4273 = vsel %vm2180, %v4241, %v3940
        %v4274 = vsel %vm2180, %v4242, %v3942
        %v4275 = vsel %vm2180, %v4243, %v3944
        %v4276 = vsel %vm2180, %v4244, %v3946
        %v4277 = vsel %vm2180, %v4245, %v3948
        %v4278 = vsel %vm2180, %v4246, %v3950
        %v4279 = vsel %vm2180, %v4247, %v3952
        %v4280 = vsel %vm2180, %v4248, %v3954
        %v4281 = vsel %vm2180, %v4249, %v3956
        %v4282 = vsel %vm2180, %v4250, %v3958
        %v4283 = vsel %vm2180, %v4251, %v3960
        %v4284 = vsel %vm2180, %v4252, %v3962
        %v4285 = vsel %vm2180, %v4253, %v3964
        %v4286 = vsel %vm2180, %v4254, %v3966
        %v4287 = vsel %vm2213, %v4255, %v4032
        %v4288 = vsel %vm2213, %v4256, %v4034
        %v4289 = vsel %vm2213, %v4257, %v4036
        %v4290 = vsel %vm2213, %v4258, %v4038
        %v4291 = vsel %vm2213, %v4259, %v4040
        %v4292 = vsel %vm2213, %v4260, %v4042
        %v4293 = vsel %vm2213, %v4261, %v4044
        %v4294 = vsel %vm2213, %v4262, %v4046
        %v4295 = vsel %vm2213, %v4263, %v4048
        %v4296 = vsel %vm2213, %v4264, %v4050
        %v4297 = vsel %vm2213, %v4265, %v4052
        %v4298 = vsel %vm2213, %v4266, %v4054
        %v4299 = vsel %vm2213, %v4267, %v4056
        %v4300 = vsel %vm2213, %v4268, %v4058
        %v4301 = vsel %vm2213, %v4269, %v4060
        %v4302 = vsel %vm2213, %v4270, %v4062
        %v4303 = vsel %vm2213, %v4271, %v4064
        %v4304 = vsel %vm2213, %v4272, %v4066
        %v4305 = vsel %vm2213, %v4273, %v4068
        %v4306 = vsel %vm2213, %v4274, %v4070
        %v4307 = vsel %vm2213, %v4275, %v4072
        %v4308 = vsel %vm2213, %v4276, %v4074
        %v4309 = vsel %vm2213, %v4277, %v4076
        %v4310 = vsel %vm2213, %v4278, %v4078
        %v4311 = vsel %vm2213, %v4279, %v4080
        %v4312 = vsel %vm2213, %v4280, %v4082
        %v4313 = vsel %vm2213, %v4281, %v4084
        %v4314 = vsel %vm2213, %v4282, %v4086
        %v4315 = vsel %vm2213, %v4283, %v4088
        %v4316 = vsel %vm2213, %v4284, %v4090
        %v4317 = vsel %vm2213, %v4285, %v4092
        %v4318 = vsel %vm2213, %v4286, %v4094
        %v4319 = vpack.c.bf16 %v4192, %v4191
        %v4320 = vpack.c.bf16 %v4288, %v4287
        %v4321 = vpack.c.bf16 %v3328, %v3327
        %v4322 = vpack.c.bf16 %v4194, %v4193
        %v4323 = vpack.c.bf16 %v4290, %v4289
        %v4324 = vpack.c.bf16 %v3330, %v3329
        %v4325 = vpack.c.bf16 %v4196, %v4195
        %v4326 = vpack.c.bf16 %v4292, %v4291
        %v4327 = vpack.c.bf16 %v3332, %v3331
        %v4328 = vpack.c.bf16 %v4198, %v4197
        %v4329 = vpack.c.bf16 %v4294, %v4293
        %v4330 = vpack.c.bf16 %v3334, %v3333
        %v4331 = vpack.c.bf16 %v4200, %v4199
        %v4332 = vpack.c.bf16 %v4296, %v4295
        %v4333 = vpack.c.bf16 %v3336, %v3335
        %v4334 = vpack.c.bf16 %v4202, %v4201
        %v4335 = vpack.c.bf16 %v4298, %v4297
        %v4336 = vpack.c.bf16 %v3338, %v3337
        %v4337 = vpack.c.bf16 %v4204, %v4203
        %v4338 = vpack.c.bf16 %v4300, %v4299
        %v4339 = vpack.c.bf16 %v3340, %v3339
        %v4340 = vpack.c.bf16 %v4206, %v4205
        %v4341 = vpack.c.bf16 %v4302, %v4301
        %v4342 = vpack.c.bf16 %v3342, %v3341
        %v4343 = vpack.c.bf16 %v4208, %v4207
        %v4344 = vpack.c.bf16 %v4304, %v4303
        %v4345 = vpack.c.bf16 %v3344, %v3343
        %v4346 = vpack.c.bf16 %v4210, %v4209
        %v4347 = vpack.c.bf16 %v4306, %v4305
        %v4348 = vpack.c.bf16 %v3346, %v3345
        %v4349 = vpack.c.bf16 %v4212, %v4211
        %v4350 = vpack.c.bf16 %v4308, %v4307
        %v4351 = vpack.c.bf16 %v3348, %v3347
        %v4352 = vpack.c.bf16 %v4214, %v4213
        %v4353 = vpack.c.bf16 %v4310, %v4309
        %v4354 = vpack.c.bf16 %v3350, %v3349
        %v4355 = vpack.c.bf16 %v4216, %v4215
        %v4356 = vpack.c.bf16 %v4312, %v4311
        %v4357 = vpack.c.bf16 %v3352, %v3351
        %v4358 = vpack.c.bf16 %v4218, %v4217
        %v4359 = vpack.c.bf16 %v4314, %v4313
        %v4360 = vpack.c.bf16 %v3354, %v3353
        %v4361 = vpack.c.bf16 %v4220, %v4219
        %v4362 = vpack.c.bf16 %v4316, %v4315
        %v4363 = vpack.c.bf16 %v3356, %v3355
        %v4364 = vpack.c.bf16 %v4222, %v4221
        %v4365 = vpack.c.bf16 %v4318, %v4317
        %v4366 = vpack.c.bf16 %v3358, %v3357
        %v4367 = vld [vmem:[#allocation8] sm:$0xf]
        %v4368 = vld [vmem:[#allocation8 + $0x4] sm:$0xf]
        %v4369 = vld [vmem:[#allocation8 + $0x8] sm:$0xf]
        %v4370 = vld [vmem:[#allocation8 + $0xc] sm:$0xf]
        %v4371 = vld [vmem:[#allocation8 + $0x10] sm:$0xf]
        %v4372 = vld [vmem:[#allocation8 + $0x14] sm:$0xf]
        %v4373 = vld [vmem:[#allocation8 + $0x18] sm:$0xf]
        %v4374 = vld [vmem:[#allocation8 + $0x1c] sm:$0xf]
        %v4375 = vld [vmem:[#allocation8 + $0x20] sm:$0xf]
        %v4376 = vld [vmem:[#allocation8 + $0x24] sm:$0xf]
        %v4377 = vld [vmem:[#allocation8 + $0x28] sm:$0xf]
        %v4378 = vld [vmem:[#allocation8 + $0x2c] sm:$0xf]
        %v4379 = vld [vmem:[#allocation8 + $0x30] sm:$0xf]
        %v4380 = vld [vmem:[#allocation8 + $0x34] sm:$0xf]
        %v4381 = vld [vmem:[#allocation8 + $0x38] sm:$0xf]
        %v4382 = vld [vmem:[#allocation8 + $0x3c] sm:$0xf]
        %v4383 = vld [vmem:[#allocation8 + $0x40] sm:$0xf]
        %v4384 = vld [vmem:[#allocation8 + $0x44] sm:$0xf]
        %v4385 = vld [vmem:[#allocation8 + $0x48] sm:$0xf]
        %v4386 = vld [vmem:[#allocation8 + $0x4c] sm:$0xf]
        %v4387 = vld [vmem:[#allocation8 + $0x50] sm:$0xf]
        %v4388 = vld [vmem:[#allocation8 + $0x54] sm:$0xf]
        %v4389 = vld [vmem:[#allocation8 + $0x58] sm:$0xf]
        %v4390 = vld [vmem:[#allocation8 + $0x5c] sm:$0xf]
        %v4391 = vld [vmem:[#allocation8 + $0x60] sm:$0xf]
        %v4392 = vld [vmem:[#allocation8 + $0x64] sm:$0xf]
        %v4393 = vld [vmem:[#allocation8 + $0x68] sm:$0xf]
        %v4394 = vld [vmem:[#allocation8 + $0x6c] sm:$0xf]
        %v4395 = vld [vmem:[#allocation8 + $0x70] sm:$0xf]
        %v4396 = vld [vmem:[#allocation8 + $0x74] sm:$0xf]
        %v4397 = vld [vmem:[#allocation8 + $0x78] sm:$0xf]
        %v4398 = vld [vmem:[#allocation8 + $0x7c] sm:$0xf]
        %v4399 = vld [vmem:[#allocation8 + $0x80] sm:$0xf]
        %v4400 = vld [vmem:[#allocation8 + $0x84] sm:$0xf]
        %v4401 = vld [vmem:[#allocation8 + $0x88] sm:$0xf]
        %v4402 = vld [vmem:[#allocation8 + $0x8c] sm:$0xf]
        %v4403 = vld [vmem:[%s6] sm:$0x1]
        %v4405 = vlaneseq
        %v4406 = vshrl.u32 %v4405, 7
        %v4407 = vsub.s32 0, %v4406
        %v4408 = vrot.slane %v4403, %v4407
        %v4446 = vunpack.c.l.b16 %v4367
        %v4447 = vunpack.c.l.b16 %v4368
        %v4448 = vunpack.c.l.b16 %v4369
        %v4449 = vunpack.c.l.b16 %v4370
        %v4450 = vunpack.c.l.b16 %v4371
        %v4451 = vunpack.c.l.b16 %v4372
        %v4452 = vunpack.c.l.b16 %v4373
        %v4453 = vunpack.c.l.b16 %v4374
        %v4454 = vunpack.c.l.b16 %v4375
        %v4455 = vunpack.c.l.b16 %v4376
        %v4456 = vunpack.c.l.b16 %v4377
        %v4457 = vunpack.c.l.b16 %v4378
        %v4458 = vunpack.c.l.b16 %v4379
        %v4459 = vunpack.c.l.b16 %v4380
        %v4460 = vunpack.c.l.b16 %v4381
        %v4461 = vunpack.c.l.b16 %v4382
        %v4462 = vunpack.c.l.b16 %v4383
        %v4463 = vunpack.c.l.b16 %v4384
        %v4464 = vunpack.c.l.b16 %v4385
        %v4465 = vunpack.c.l.b16 %v4386
        %v4466 = vunpack.c.l.b16 %v4387
        %v4467 = vunpack.c.l.b16 %v4388
        %v4468 = vunpack.c.l.b16 %v4389
        %v4469 = vunpack.c.l.b16 %v4390
        %v4470 = vunpack.c.l.b16 %v4391
        %v4471 = vunpack.c.l.b16 %v4392
        %v4472 = vunpack.c.l.b16 %v4393
        %v4473 = vunpack.c.l.b16 %v4394
        %v4474 = vunpack.c.l.b16 %v4395
        %v4475 = vunpack.c.l.b16 %v4396
        %v4476 = vunpack.c.l.b16 %v4397
        %v4477 = vunpack.c.l.b16 %v4398
        %v4478 = vunpack.c.l.b16 %v4399
        %v4479 = vunpack.c.l.b16 %v4400
        %v4480 = vunpack.c.l.b16 %v4401
        %v4481 = vunpack.c.l.b16 %v4402
        %v4482 = vpack.c.b16 %v4447, %v4446
        %v4483 = vpack.c.b16 %v4449, %v4448
        %v4484 = vpack.c.b16 %v4451, %v4450
        %v4485 = vpack.c.b16 %v4453, %v4452
        %v4486 = vpack.c.b16 %v4455, %v4454
        %v4487 = vpack.c.b16 %v4457, %v4456
        %v4488 = vpack.c.b16 %v4459, %v4458
        %v4489 = vpack.c.b16 %v4461, %v4460
        %v4490 = vpack.c.b16 %v4463, %v4462
        %v4491 = vpack.c.b16 %v4465, %v4464
        %v4492 = vpack.c.b16 %v4467, %v4466
        %v4493 = vpack.c.b16 %v4469, %v4468
        %v4494 = vpack.c.b16 %v4471, %v4470
        %v4495 = vpack.c.b16 %v4473, %v4472
        %v4496 = vpack.c.b16 %v4475, %v4474
        %v4497 = vpack.c.b16 %v4477, %v4476
        %v4498 = vpack.c.b16 %v4479, %v4478
        %v4499 = vpack.c.b16 %v4481, %v4480
        %v4519 = vsel %vm450, %v4321, 0
        %v4522 = vsel %vm450, %v4324, 0
        %v4525 = vsel %vm450, %v4327, 0
        %v4528 = vsel %vm450, %v4330, 0
        %v4531 = vsel %vm450, %v4333, 0
        %v4534 = vsel %vm450, %v4336, 0
        %v4537 = vsel %vm450, %v4339, 0
        %v4540 = vsel %vm450, %v4342, 0
        %v4543 = vsel %vm450, %v4345, 0
        %v4546 = vsel %vm450, %v4348, 0
        %v4549 = vsel %vm450, %v4351, 0
        %v4552 = vsel %vm450, %v4354, 0
        %v4555 = vsel %vm450, %v4357, 0
        %v4558 = vsel %vm450, %v4360, 0
        %v4561 = vsel %vm450, %v4363, 0
        %v4564 = vsel %vm450, %v4366, 0
        %4566 = vmatprep.subr.bf16.mxu0 0
        %4567 = vmatpush1.bf16.msra.mxu0 %v4482
        %4568 = vmatprep.subr.bf16.mxu0 0
        %4569 = vmatpush1.bf16.msra.mxu0 %v4483
        %4570 = vmatprep.subr.bf16.mxu0 0
        %4571 = vmatpush1.bf16.msra.mxu0 %v4484
        %4572 = vmatprep.subr.bf16.mxu0 0
        %4573 = vmatpush1.bf16.msra.mxu0 %v4485
        %4574 = vmatprep.subr.bf16.mxu0 0
        %4575 = vmatpush1.bf16.msra.mxu0 %v4486
        %4576 = vmatprep.subr.bf16.mxu0 0
        %4577 = vmatpush1.bf16.msra.mxu0 %v4487
        %4578 = vmatprep.subr.bf16.mxu0 0
        %4579 = vmatpush1.bf16.msra.mxu0 %v4488
        %4580 = vmatprep.subr.bf16.mxu0 0
        %4581 = vmatpush1.bf16.msra.mxu0 %v4489
        %4582 = vmatprep.subr.bf16.mxu0 0
        %4583 = vmatpush1.bf16.msra.mxu0 %v4490
        %4584 = vmatprep.subr.bf16.mxu0 0
        %4585 = vmatpush1.bf16.msra.mxu0 %v4491
        %4586 = vmatprep.subr.bf16.mxu0 0
        %4587 = vmatpush1.bf16.msra.mxu0 %v4492
        %4588 = vmatprep.subr.bf16.mxu0 0
        %4589 = vmatpush1.bf16.msra.mxu0 %v4493
        %4590 = vmatprep.subr.bf16.mxu0 0
        %4591 = vmatpush1.bf16.msra.mxu0 %v4494
        %4592 = vmatprep.subr.bf16.mxu0 0
        %4593 = vmatpush1.bf16.msra.mxu0 %v4495
        %4594 = vmatprep.subr.bf16.mxu0 0
        %4595 = vmatpush1.bf16.msra.mxu0 %v4496
        %4596 = vmatprep.subr.bf16.mxu0 0
        %4597 = vmatpush1.bf16.msra.mxu0 %v4497
        %4598 = vmatprep.mubr.bf16.mxu0 %v4320
        %4599 = vmatmul.mubr.bf16.gmra.mrb[0].mxu0 %v4319
        %v4600 = vpop.f32.mrb[0].mxu0
        %v4601 = vadd.f32 %v4408, %v4600
        %v4602 = vpop.f32.mrb[0].mxu0
        %v4603 = vpop.f32.mrb[0].mxu0
        %v4604 = vadd.f32 %v4408, %v4603
        %v4605 = vpop.f32.mrb[0].mxu0
        %4606 = vmatprep.mubr.bf16.mxu0 %v4323
        %4607 = vmatmul.mubr.bf16.gmra.mrb[0].mxu0 %v4322
        %v4608 = vpop.f32.mrb[0].mxu0
        %v4609 = vadd.f32 %v4408, %v4608
        %v4610 = vpop.f32.mrb[0].mxu0
        %v4611 = vpop.f32.mrb[0].mxu0
        %v4612 = vadd.f32 %v4408, %v4611
        %v4613 = vpop.f32.mrb[0].mxu0
        %4614 = vmatprep.mubr.bf16.mxu0 %v4326
        %4615 = vmatmul.mubr.bf16.gmra.mrb[0].mxu0 %v4325
        %v4616 = vpop.f32.mrb[0].mxu0
        %v4617 = vadd.f32 %v4408, %v4616
        %v4618 = vpop.f32.mrb[0].mxu0
        %v4619 = vpop.f32.mrb[0].mxu0
        %v4620 = vadd.f32 %v4408, %v4619
        %v4621 = vpop.f32.mrb[0].mxu0
        %4622 = vmatprep.mubr.bf16.mxu0 %v4329
        %4623 = vmatmul.mubr.bf16.gmra.mrb[0].mxu0 %v4328
        %v4624 = vpop.f32.mrb[0].mxu0
        %v4625 = vadd.f32 %v4408, %v4624
        %v4626 = vpop.f32.mrb[0].mxu0
        %v4627 = vpop.f32.mrb[0].mxu0
        %v4628 = vadd.f32 %v4408, %v4627
        %v4629 = vpop.f32.mrb[0].mxu0
        %4630 = vmatprep.mubr.bf16.mxu0 %v4332
        %4631 = vmatmul.mubr.bf16.gmra.mrb[0].mxu0 %v4331
        %v4632 = vpop.f32.mrb[0].mxu0
        %v4633 = vadd.f32 %v4408, %v4632
        %v4634 = vpop.f32.mrb[0].mxu0
        %v4635 = vpop.f32.mrb[0].mxu0
        %v4636 = vadd.f32 %v4408, %v4635
        %v4637 = vpop.f32.mrb[0].mxu0
        %4638 = vmatprep.mubr.bf16.mxu0 %v4335
        %4639 = vmatmul.mubr.bf16.gmra.mrb[0].mxu0 %v4334
        %v4640 = vpop.f32.mrb[0].mxu0
        %v4641 = vadd.f32 %v4408, %v4640
        %v4642 = vpop.f32.mrb[0].mxu0
        %v4643 = vpop.f32.mrb[0].mxu0
        %v4644 = vadd.f32 %v4408, %v4643
        %v4645 = vpop.f32.mrb[0].mxu0
        %4646 = vmatprep.mubr.bf16.mxu0 %v4338
        %4647 = vmatmul.mubr.bf16.gmra.mrb[0].mxu0 %v4337
        %v4648 = vpop.f32.mrb[0].mxu0
        %v4649 = vadd.f32 %v4408, %v4648
        %v4650 = vpop.f32.mrb[0].mxu0
        %v4651 = vpop.f32.mrb[0].mxu0
        %v4652 = vadd.f32 %v4408, %v4651
        %v4653 = vpop.f32.mrb[0].mxu0
        %4654 = vmatprep.mubr.bf16.mxu0 %v4341
        %4655 = vmatmul.mubr.bf16.gmra.mrb[0].mxu0 %v4340
        %v4656 = vpop.f32.mrb[0].mxu0
        %v4657 = vadd.f32 %v4408, %v4656
        %v4658 = vpop.f32.mrb[0].mxu0
        %v4659 = vpop.f32.mrb[0].mxu0
        %v4660 = vadd.f32 %v4408, %v4659
        %v4661 = vpop.f32.mrb[0].mxu0
        %4662 = vmatprep.mubr.bf16.mxu0 %v4344
        %4663 = vmatmul.mubr.bf16.gmra.mrb[0].mxu0 %v4343
        %v4664 = vpop.f32.mrb[0].mxu0
        %v4665 = vadd.f32 %v4408, %v4664
        %v4666 = vpop.f32.mrb[0].mxu0
        %v4667 = vpop.f32.mrb[0].mxu0
        %v4668 = vadd.f32 %v4408, %v4667
        %v4669 = vpop.f32.mrb[0].mxu0
        %4670 = vmatprep.mubr.bf16.mxu0 %v4347
        %4671 = vmatmul.mubr.bf16.gmra.mrb[0].mxu0 %v4346
        %v4672 = vpop.f32.mrb[0].mxu0
        %v4673 = vadd.f32 %v4408, %v4672
        %v4674 = vpop.f32.mrb[0].mxu0
        %v4675 = vpop.f32.mrb[0].mxu0
        %v4676 = vadd.f32 %v4408, %v4675
        %v4677 = vpop.f32.mrb[0].mxu0
        %4678 = vmatprep.mubr.bf16.mxu0 %v4350
        %4679 = vmatmul.mubr.bf16.gmra.mrb[0].mxu0 %v4349
        %v4680 = vpop.f32.mrb[0].mxu0
        %v4681 = vadd.f32 %v4408, %v4680
        %v4682 = vpop.f32.mrb[0].mxu0
        %v4683 = vpop.f32.mrb[0].mxu0
        %v4684 = vadd.f32 %v4408, %v4683
        %v4685 = vpop.f32.mrb[0].mxu0
        %4686 = vmatprep.mubr.bf16.mxu0 %v4353
        %4687 = vmatmul.mubr.bf16.gmra.mrb[0].mxu0 %v4352
        %v4688 = vpop.f32.mrb[0].mxu0
        %v4689 = vadd.f32 %v4408, %v4688
        %v4690 = vpop.f32.mrb[0].mxu0
        %v4691 = vpop.f32.mrb[0].mxu0
        %v4692 = vadd.f32 %v4408, %v4691
        %v4693 = vpop.f32.mrb[0].mxu0
        %4694 = vmatprep.mubr.bf16.mxu0 %v4356
        %4695 = vmatmul.mubr.bf16.gmra.mrb[0].mxu0 %v4355
        %v4696 = vpop.f32.mrb[0].mxu0
        %v4697 = vadd.f32 %v4408, %v4696
        %v4698 = vpop.f32.mrb[0].mxu0
        %v4699 = vpop.f32.mrb[0].mxu0
        %v4700 = vadd.f32 %v4408, %v4699
        %v4701 = vpop.f32.mrb[0].mxu0
        %4702 = vmatprep.mubr.bf16.mxu0 %v4359
        %4703 = vmatmul.mubr.bf16.gmra.mrb[0].mxu0 %v4358
        %v4704 = vpop.f32.mrb[0].mxu0
        %v4705 = vadd.f32 %v4408, %v4704
        %v4706 = vpop.f32.mrb[0].mxu0
        %v4707 = vpop.f32.mrb[0].mxu0
        %v4708 = vadd.f32 %v4408, %v4707
        %v4709 = vpop.f32.mrb[0].mxu0
        %4710 = vmatprep.mubr.bf16.mxu0 %v4362
        %4711 = vmatmul.mubr.bf16.gmra.mrb[0].mxu0 %v4361
        %v4712 = vpop.f32.mrb[0].mxu0
        %v4713 = vadd.f32 %v4408, %v4712
        %v4714 = vpop.f32.mrb[0].mxu0
        %v4715 = vpop.f32.mrb[0].mxu0
        %v4716 = vadd.f32 %v4408, %v4715
        %v4717 = vpop.f32.mrb[0].mxu0
        %4718 = vmatprep.mubr.bf16.mxu0 %v4365
        %4719 = vmatmul.mubr.bf16.gmra.mrb[0].mxu0 %v4364
        %v4720 = vpop.f32.mrb[0].mxu0
        %v4721 = vadd.f32 %v4408, %v4720
        %v4722 = vpop.f32.mrb[0].mxu0
        %v4723 = vpop.f32.mrb[0].mxu0
        %v4724 = vadd.f32 %v4408, %v4723
        %v4725 = vpop.f32.mrb[0].mxu0
        %4726 = vdwg.mxu0
        %4727 = vmatprep.subr.bf16.mxu0 0
        %4728 = vmatpush1.bf16.msra.mxu0 %v4498
        %4729 = vmatprep.subr.bf16.mxu0 0
        %4730 = vmatpush1.bf16.msra.mxu0 %v4499
        %4731 = vmatprep.subr.bf16.mxu0 0
        %4732 = vmatpush1.bf16.msra.mxu0 0
        %4733 = vmatprep.subr.bf16.mxu0 0
        %4734 = vmatpush1.bf16.msra.mxu0 0
        %4735 = vmatprep.subr.bf16.mxu0 0
        %4736 = vmatpush1.bf16.msra.mxu0 0
        %4737 = vmatprep.subr.bf16.mxu0 0
        %4738 = vmatpush1.bf16.msra.mxu0 0
        %4739 = vmatprep.subr.bf16.mxu0 0
        %4740 = vmatpush1.bf16.msra.mxu0 0
        %4741 = vmatprep.subr.bf16.mxu0 0
        %4742 = vmatpush1.bf16.msra.mxu0 0
        %4743 = vmatprep.subr.bf16.mxu0 0
        %4744 = vmatpush1.bf16.msra.mxu0 0
        %4745 = vmatprep.subr.bf16.mxu0 0
        %4746 = vmatpush1.bf16.msra.mxu0 0
        %4747 = vmatprep.subr.bf16.mxu0 0
        %4748 = vmatpush1.bf16.msra.mxu0 0
        %4749 = vmatprep.subr.bf16.mxu0 0
        %4750 = vmatpush1.bf16.msra.mxu0 0
        %4751 = vmatprep.subr.bf16.mxu0 0
        %4752 = vmatpush1.bf16.msra.mxu0 0
        %4753 = vmatprep.subr.bf16.mxu0 0
        %4754 = vmatpush1.bf16.msra.mxu0 0
        %4755 = vmatprep.subr.bf16.mxu0 0
        %4756 = vmatpush1.bf16.msra.mxu0 0
        %4757 = vmatprep.subr.bf16.mxu0 0
        %4758 = vmatpush1.bf16.msra.mxu0 0
        %4759 = vmatprep.mubr.bf16.mxu0 0
        %4760 = vmatmul.mubr.bf16.gmra.mrb[0].mxu0 %v4519
        %v4761 = vpop.f32.mrb[0].mxu0
        %v4762 = vadd.f32 %v4601, %v4761
        %v4763 = vpop.f32.mrb[0].mxu0
        %v4764 = vpop.f32.mrb[0].mxu0
        %v4765 = vadd.f32 %v4604, %v4764
        %v4766 = vpop.f32.mrb[0].mxu0
        %4767 = vmatprep.mubr.bf16.mxu0 0
        %4768 = vmatmul.mubr.bf16.gmra.mrb[0].mxu0 %v4522
        %v4769 = vpop.f32.mrb[0].mxu0
        %v4770 = vadd.f32 %v4609, %v4769
        %v4771 = vpop.f32.mrb[0].mxu0
        %v4772 = vpop.f32.mrb[0].mxu0
        %v4773 = vadd.f32 %v4612, %v4772
        %v4774 = vpop.f32.mrb[0].mxu0
        %4775 = vmatprep.mubr.bf16.mxu0 0
        %4776 = vmatmul.mubr.bf16.gmra.mrb[0].mxu0 %v4525
        %v4777 = vpop.f32.mrb[0].mxu0
        %v4778 = vadd.f32 %v4617, %v4777
        %v4779 = vpop.f32.mrb[0].mxu0
        %v4780 = vpop.f32.mrb[0].mxu0
        %v4781 = vadd.f32 %v4620, %v4780
        %v4782 = vpop.f32.mrb[0].mxu0
        %4783 = vmatprep.mubr.bf16.mxu0 0
        %4784 = vmatmul.mubr.bf16.gmra.mrb[0].mxu0 %v4528
        %v4785 = vpop.f32.mrb[0].mxu0
        %v4786 = vadd.f32 %v4625, %v4785
        %v4787 = vpop.f32.mrb[0].mxu0
        %v4788 = vpop.f32.mrb[0].mxu0
        %v4789 = vadd.f32 %v4628, %v4788
        %v4790 = vpop.f32.mrb[0].mxu0
        %4791 = vmatprep.mubr.bf16.mxu0 0
        %4792 = vmatmul.mubr.bf16.gmra.mrb[0].mxu0 %v4531
        %v4793 = vpop.f32.mrb[0].mxu0
        %v4794 = vadd.f32 %v4633, %v4793
        %v4795 = vpop.f32.mrb[0].mxu0
        %v4796 = vpop.f32.mrb[0].mxu0
        %v4797 = vadd.f32 %v4636, %v4796
        %v4798 = vpop.f32.mrb[0].mxu0
        %4799 = vmatprep.mubr.bf16.mxu0 0
        %4800 = vmatmul.mubr.bf16.gmra.mrb[0].mxu0 %v4534
        %v4801 = vpop.f32.mrb[0].mxu0
        %v4802 = vadd.f32 %v4641, %v4801
        %v4803 = vpop.f32.mrb[0].mxu0
        %v4804 = vpop.f32.mrb[0].mxu0
        %v4805 = vadd.f32 %v4644, %v4804
        %v4806 = vpop.f32.mrb[0].mxu0
        %4807 = vmatprep.mubr.bf16.mxu0 0
        %4808 = vmatmul.mubr.bf16.gmra.mrb[0].mxu0 %v4537
        %v4809 = vpop.f32.mrb[0].mxu0
        %v4810 = vadd.f32 %v4649, %v4809
        %v4811 = vpop.f32.mrb[0].mxu0
        %v4812 = vpop.f32.mrb[0].mxu0
        %v4813 = vadd.f32 %v4652, %v4812
        %v4814 = vpop.f32.mrb[0].mxu0
        %4815 = vmatprep.mubr.bf16.mxu0 0
        %4816 = vmatmul.mubr.bf16.gmra.mrb[0].mxu0 %v4540
        %v4817 = vpop.f32.mrb[0].mxu0
        %v4818 = vadd.f32 %v4657, %v4817
        %v4819 = vpop.f32.mrb[0].mxu0
        %v4820 = vpop.f32.mrb[0].mxu0
        %v4821 = vadd.f32 %v4660, %v4820
        %v4822 = vpop.f32.mrb[0].mxu0
        %4823 = vmatprep.mubr.bf16.mxu0 0
        %4824 = vmatmul.mubr.bf16.gmra.mrb[0].mxu0 %v4543
        %v4825 = vpop.f32.mrb[0].mxu0
        %v4826 = vadd.f32 %v4665, %v4825
        %v4827 = vpop.f32.mrb[0].mxu0
        %v4828 = vpop.f32.mrb[0].mxu0
        %v4829 = vadd.f32 %v4668, %v4828
        %v4830 = vpop.f32.mrb[0].mxu0
        %4831 = vmatprep.mubr.bf16.mxu0 0
        %4832 = vmatmul.mubr.bf16.gmra.mrb[0].mxu0 %v4546
        %v4833 = vpop.f32.mrb[0].mxu0
        %v4834 = vadd.f32 %v4673, %v4833
        %v4835 = vpop.f32.mrb[0].mxu0
        %v4836 = vpop.f32.mrb[0].mxu0
        %v4837 = vadd.f32 %v4676, %v4836
        %v4838 = vpop.f32.mrb[0].mxu0
        %4839 = vmatprep.mubr.bf16.mxu0 0
        %4840 = vmatmul.mubr.bf16.gmra.mrb[0].mxu0 %v4549
        %v4841 = vpop.f32.mrb[0].mxu0
        %v4842 = vadd.f32 %v4681, %v4841
        %v4843 = vpop.f32.mrb[0].mxu0
        %v4844 = vpop.f32.mrb[0].mxu0
        %v4845 = vadd.f32 %v4684, %v4844
        %v4846 = vpop.f32.mrb[0].mxu0
        %4847 = vmatprep.mubr.bf16.mxu0 0
        %4848 = vmatmul.mubr.bf16.gmra.mrb[0].mxu0 %v4552
        %v4849 = vpop.f32.mrb[0].mxu0
        %v4850 = vadd.f32 %v4689, %v4849
        %v4851 = vpop.f32.mrb[0].mxu0
        %v4852 = vpop.f32.mrb[0].mxu0
        %v4853 = vadd.f32 %v4692, %v4852
        %v4854 = vpop.f32.mrb[0].mxu0
        %4855 = vmatprep.mubr.bf16.mxu0 0
        %4856 = vmatmul.mubr.bf16.gmra.mrb[0].mxu0 %v4555
        %v4857 = vpop.f32.mrb[0].mxu0
        %v4858 = vadd.f32 %v4697, %v4857
        %v4859 = vpop.f32.mrb[0].mxu0
        %v4860 = vpop.f32.mrb[0].mxu0
        %v4861 = vadd.f32 %v4700, %v4860
        %v4862 = vpop.f32.mrb[0].mxu0
        %4863 = vmatprep.mubr.bf16.mxu0 0
        %4864 = vmatmul.mubr.bf16.gmra.mrb[0].mxu0 %v4558
        %v4865 = vpop.f32.mrb[0].mxu0
        %v4866 = vadd.f32 %v4705, %v4865
        %v4867 = vpop.f32.mrb[0].mxu0
        %v4868 = vpop.f32.mrb[0].mxu0
        %v4869 = vadd.f32 %v4708, %v4868
        %v4870 = vpop.f32.mrb[0].mxu0
        %4871 = vmatprep.mubr.bf16.mxu0 0
        %4872 = vmatmul.mubr.bf16.gmra.mrb[0].mxu0 %v4561
        %v4873 = vpop.f32.mrb[0].mxu0
        %v4874 = vadd.f32 %v4713, %v4873
        %v4875 = vpop.f32.mrb[0].mxu0
        %v4876 = vpop.f32.mrb[0].mxu0
        %v4877 = vadd.f32 %v4716, %v4876
        %v4878 = vpop.f32.mrb[0].mxu0
        %4879 = vmatprep.mubr.bf16.mxu0 0
        %4880 = vmatmul.mubr.bf16.gmra.mrb[0].mxu0 %v4564
        %v4881 = vpop.f32.mrb[0].mxu0
        %v4882 = vadd.f32 %v4721, %v4881
        %v4883 = vpop.f32.mrb[0].mxu0
        %v4884 = vpop.f32.mrb[0].mxu0
        %v4885 = vadd.f32 %v4724, %v4884
        %v4886 = vpop.f32.mrb[0].mxu0
        %4887 = vdwg.mxu0
        %v4888 = vmax.f32 %v4762, 0.0
        %v4889 = vmax.f32 %v4765, 0.0
        %v4890 = vmax.f32 %v4770, 0.0
        %v4891 = vmax.f32 %v4773, 0.0
        %v4892 = vmax.f32 %v4778, 0.0
        %v4893 = vmax.f32 %v4781, 0.0
        %v4894 = vmax.f32 %v4786, 0.0
        %v4895 = vmax.f32 %v4789, 0.0
        %v4896 = vmax.f32 %v4794, 0.0
        %v4897 = vmax.f32 %v4797, 0.0
        %v4898 = vmax.f32 %v4802, 0.0
        %v4899 = vmax.f32 %v4805, 0.0
        %v4900 = vmax.f32 %v4810, 0.0
        %v4901 = vmax.f32 %v4813, 0.0
        %v4902 = vmax.f32 %v4818, 0.0
        %v4903 = vmax.f32 %v4821, 0.0
        %v4904 = vmax.f32 %v4826, 0.0
        %v4905 = vmax.f32 %v4829, 0.0
        %v4906 = vmax.f32 %v4834, 0.0
        %v4907 = vmax.f32 %v4837, 0.0
        %v4908 = vmax.f32 %v4842, 0.0
        %v4909 = vmax.f32 %v4845, 0.0
        %v4910 = vmax.f32 %v4850, 0.0
        %v4911 = vmax.f32 %v4853, 0.0
        %v4912 = vmax.f32 %v4858, 0.0
        %v4913 = vmax.f32 %v4861, 0.0
        %v4914 = vmax.f32 %v4866, 0.0
        %v4915 = vmax.f32 %v4869, 0.0
        %v4916 = vmax.f32 %v4874, 0.0
        %v4917 = vmax.f32 %v4877, 0.0
        %v4918 = vmax.f32 %v4882, 0.0
        %v4919 = vmax.f32 %v4885, 0.0
        %4920 = vst.msk [vmem:[%s1058 + $0x1] sm:$0xff] %vm450, %v4888
        %4921 = vst.msk [vmem:[%s1058 + $0x9] sm:$0xff] %vm450, %v4889
        %4922 = vst.msk [vmem:[%s1058 + $0x19] sm:$0xff] %vm450, %v4890
        %4923 = vst.msk [vmem:[%s1058 + $0x21] sm:$0xff] %vm450, %v4891
        %4924 = vst.msk [vmem:[%s1058 + $0x31] sm:$0xff] %vm450, %v4892
        %4925 = vst.msk [vmem:[%s1058 + $0x39] sm:$0xff] %vm450, %v4893
        %4926 = vst.msk [vmem:[%s1058 + $0x49] sm:$0xff] %vm450, %v4894
        %4927 = vst.msk [vmem:[%s1058 + $0x51] sm:$0xff] %vm450, %v4895
        %4928 = vst.msk [vmem:[%s1058 + $0x61] sm:$0xff] %vm450, %v4896
        %4929 = vst.msk [vmem:[%s1058 + $0x69] sm:$0xff] %vm450, %v4897
        %4930 = vst.msk [vmem:[%s1058 + $0x79] sm:$0xff] %vm450, %v4898
        %4931 = vst.msk [vmem:[%s1058 + $0x81] sm:$0xff] %vm450, %v4899
        %4932 = vst.msk [vmem:[%s1058 + $0x91] sm:$0xff] %vm450, %v4900
        %4933 = vst.msk [vmem:[%s1058 + $0x99] sm:$0xff] %vm450, %v4901
        %4934 = vst.msk [vmem:[%s1058 + $0xa9] sm:$0xff] %vm450, %v4902
        %4935 = vst.msk [vmem:[%s1058 + $0xb1] sm:$0xff] %vm450, %v4903
        %4936 = vst.msk [vmem:[%s1058 + $0xc1] sm:$0xff] %vm450, %v4904
        %4937 = vst.msk [vmem:[%s1058 + $0xc9] sm:$0xff] %vm450, %v4905
        %4938 = vst.msk [vmem:[%s1058 + $0xd9] sm:$0xff] %vm450, %v4906
        %4939 = vst.msk [vmem:[%s1058 + $0xe1] sm:$0xff] %vm450, %v4907
        %4940 = vst.msk [vmem:[%s1058 + $0xf1] sm:$0xff] %vm450, %v4908
        %4941 = vst.msk [vmem:[%s1058 + $0xf9] sm:$0xff] %vm450, %v4909
        %4942 = vst.msk [vmem:[%s1058 + $0x109] sm:$0xff] %vm450, %v4910
        %4943 = vst.msk [vmem:[%s1058 + $0x111] sm:$0xff] %vm450, %v4911
        %4944 = vst.msk [vmem:[%s1058 + $0x121] sm:$0xff] %vm450, %v4912
        %4945 = vst.msk [vmem:[%s1058 + $0x129] sm:$0xff] %vm450, %v4913
        %4946 = vst.msk [vmem:[%s1058 + $0x139] sm:$0xff] %vm450, %v4914
        %4947 = vst.msk [vmem:[%s1058 + $0x141] sm:$0xff] %vm450, %v4915
        %4948 = vst.msk [vmem:[%s1058 + $0x151] sm:$0xff] %vm450, %v4916
        %4949 = vst.msk [vmem:[%s1058 + $0x159] sm:$0xff] %vm450, %v4917
        %4950 = vst.msk [vmem:[%s1058 + $0x169] sm:$0xff] %vm450, %v4918
        %4951 = vst.msk [vmem:[%s1058 + $0x171] sm:$0xff] %vm450, %v4919
        %v4952 = vld [vmem:[#allocation2] sm:$0xff]
        %v4953 = vld [vmem:[#allocation2 + $0x8] sm:$0xff]
        %v4954 = vld [vmem:[#allocation2 + $0x18] sm:$0xff]
        %v4955 = vld [vmem:[#allocation2 + $0x20] sm:$0xff]
        %v4956 = vld [vmem:[#allocation2 + $0x30] sm:$0xff]
        %v4957 = vld [vmem:[#allocation2 + $0x38] sm:$0xff]
        %v4958 = vld [vmem:[#allocation2 + $0x48] sm:$0xff]
        %v4959 = vld [vmem:[#allocation2 + $0x50] sm:$0xff]
        %v4960 = vld [vmem:[#allocation2 + $0x60] sm:$0xff]
        %v4961 = vld [vmem:[#allocation2 + $0x68] sm:$0xff]
        %v4962 = vld [vmem:[#allocation2 + $0x78] sm:$0xff]
        %v4963 = vld [vmem:[#allocation2 + $0x80] sm:$0xff]
        %v4964 = vld [vmem:[#allocation2 + $0x90] sm:$0xff]
        %v4965 = vld [vmem:[#allocation2 + $0x98] sm:$0xff]
        %v4966 = vld [vmem:[#allocation2 + $0xa8] sm:$0xff]
        %v4967 = vld [vmem:[#allocation2 + $0xb0] sm:$0xff]
        %v4968 = vld [vmem:[#allocation2 + $0xc0] sm:$0xff]
        %v4969 = vld [vmem:[#allocation2 + $0xc8] sm:$0xff]
        %v4970 = vld [vmem:[#allocation2 + $0xd8] sm:$0xff]
        %v4971 = vld [vmem:[#allocation2 + $0xe0] sm:$0xff]
        %v4972 = vld [vmem:[#allocation2 + $0xf0] sm:$0xff]
        %v4973 = vld [vmem:[#allocation2 + $0xf8] sm:$0xff]
        %v4974 = vld [vmem:[#allocation2 + $0x108] sm:$0xff]
        %v4975 = vld [vmem:[#allocation2 + $0x110] sm:$0xff]
        %v4976 = vld [vmem:[#allocation2 + $0x120] sm:$0xff]
        %v4977 = vld [vmem:[#allocation2 + $0x128] sm:$0xff]
        %v4978 = vld [vmem:[#allocation2 + $0x138] sm:$0xff]
        %v4979 = vld [vmem:[#allocation2 + $0x140] sm:$0xff]
        %v4980 = vld [vmem:[#allocation2 + $0x150] sm:$0xff]
        %v4981 = vld [vmem:[#allocation2 + $0x158] sm:$0xff]
        %v4982 = vld [vmem:[#allocation2 + $0x168] sm:$0xff]
        %v4983 = vld [vmem:[#allocation2 + $0x170] sm:$0xff]
        %v4984 = vld [vmem:[#allocation2 + $0x1] sm:$0xff]
        %v4985 = vld [vmem:[#allocation2 + $0x9] sm:$0xff]
        %v4986 = vld [vmem:[#allocation2 + $0x19] sm:$0xff]
        %v4987 = vld [vmem:[#allocation2 + $0x21] sm:$0xff]
        %v4988 = vld [vmem:[#allocation2 + $0x31] sm:$0xff]
        %v4989 = vld [vmem:[#allocation2 + $0x39] sm:$0xff]
        %v4990 = vld [vmem:[#allocation2 + $0x49] sm:$0xff]
        %v4991 = vld [vmem:[#allocation2 + $0x51] sm:$0xff]
        %v4992 = vld [vmem:[#allocation2 + $0x61] sm:$0xff]
        %v4993 = vld [vmem:[#allocation2 + $0x69] sm:$0xff]
        %v4994 = vld [vmem:[#allocation2 + $0x79] sm:$0xff]
        %v4995 = vld [vmem:[#allocation2 + $0x81] sm:$0xff]
        %v4996 = vld [vmem:[#allocation2 + $0x91] sm:$0xff]
        %v4997 = vld [vmem:[#allocation2 + $0x99] sm:$0xff]
        %v4998 = vld [vmem:[#allocation2 + $0xa9] sm:$0xff]
        %v4999 = vld [vmem:[#allocation2 + $0xb1] sm:$0xff]
        %v5000 = vld [vmem:[#allocation2 + $0xc1] sm:$0xff]
        %v5001 = vld [vmem:[#allocation2 + $0xc9] sm:$0xff]
        %v5002 = vld [vmem:[#allocation2 + $0xd9] sm:$0xff]
        %v5003 = vld [vmem:[#allocation2 + $0xe1] sm:$0xff]
        %v5004 = vld [vmem:[#allocation2 + $0xf1] sm:$0xff]
        %v5005 = vld [vmem:[#allocation2 + $0xf9] sm:$0xff]
        %v5006 = vld [vmem:[#allocation2 + $0x109] sm:$0xff]
        %v5007 = vld [vmem:[#allocation2 + $0x111] sm:$0xff]
        %v5008 = vld [vmem:[#allocation2 + $0x121] sm:$0xff]
        %v5009 = vld [vmem:[#allocation2 + $0x129] sm:$0xff]
        %v5010 = vld [vmem:[#allocation2 + $0x139] sm:$0xff]
        %v5011 = vld [vmem:[#allocation2 + $0x141] sm:$0xff]
        %v5012 = vld [vmem:[#allocation2 + $0x151] sm:$0xff]
        %v5013 = vld [vmem:[#allocation2 + $0x159] sm:$0xff]
        %v5014 = vld [vmem:[#allocation2 + $0x169] sm:$0xff]
        %v5015 = vld [vmem:[#allocation2 + $0x171] sm:$0xff]
        %v5016 = vld [vmem:[#allocation2 + $0x2] sm:$0xff]
        %v5017 = vld [vmem:[#allocation2 + $0xa] sm:$0xff]
        %v5018 = vld [vmem:[#allocation2 + $0x1a] sm:$0xff]
        %v5019 = vld [vmem:[#allocation2 + $0x22] sm:$0xff]
        %v5020 = vld [vmem:[#allocation2 + $0x32] sm:$0xff]
        %v5021 = vld [vmem:[#allocation2 + $0x3a] sm:$0xff]
        %v5022 = vld [vmem:[#allocation2 + $0x4a] sm:$0xff]
        %v5023 = vld [vmem:[#allocation2 + $0x52] sm:$0xff]
        %v5024 = vld [vmem:[#allocation2 + $0x62] sm:$0xff]
        %v5025 = vld [vmem:[#allocation2 + $0x6a] sm:$0xff]
        %v5026 = vld [vmem:[#allocation2 + $0x7a] sm:$0xff]
        %v5027 = vld [vmem:[#allocation2 + $0x82] sm:$0xff]
        %v5028 = vld [vmem:[#allocation2 + $0x92] sm:$0xff]
        %v5029 = vld [vmem:[#allocation2 + $0x9a] sm:$0xff]
        %v5030 = vld [vmem:[#allocation2 + $0xaa] sm:$0xff]
        %v5031 = vld [vmem:[#allocation2 + $0xb2] sm:$0xff]
        %v5032 = vld [vmem:[#allocation2 + $0xc2] sm:$0xff]
        %v5033 = vld [vmem:[#allocation2 + $0xca] sm:$0xff]
        %v5034 = vld [vmem:[#allocation2 + $0xda] sm:$0xff]
        %v5035 = vld [vmem:[#allocation2 + $0xe2] sm:$0xff]
        %v5036 = vld [vmem:[#allocation2 + $0xf2] sm:$0xff]
        %v5037 = vld [vmem:[#allocation2 + $0xfa] sm:$0xff]
        %v5038 = vld [vmem:[#allocation2 + $0x10a] sm:$0xff]
        %v5039 = vld [vmem:[#allocation2 + $0x112] sm:$0xff]
        %v5040 = vld [vmem:[#allocation2 + $0x122] sm:$0xff]
        %v5041 = vld [vmem:[#allocation2 + $0x12a] sm:$0xff]
        %v5042 = vld [vmem:[#allocation2 + $0x13a] sm:$0xff]
        %v5043 = vld [vmem:[#allocation2 + $0x142] sm:$0xff]
        %v5044 = vld [vmem:[#allocation2 + $0x152] sm:$0xff]
        %v5045 = vld [vmem:[#allocation2 + $0x15a] sm:$0xff]
        %v5046 = vld [vmem:[#allocation2 + $0x16a] sm:$0xff]
        %v5047 = vld [vmem:[#allocation2 + $0x172] sm:$0xff]
        %v5048 = vld [vmem:[%s1058] sm:$0xff]
        %v5049 = vld [vmem:[%s1058 + $0x8] sm:$0xff]
        %v5050 = vld [vmem:[%s1058 + $0x18] sm:$0xff]
        %v5051 = vld [vmem:[%s1058 + $0x20] sm:$0xff]
        %v5052 = vld [vmem:[%s1058 + $0x30] sm:$0xff]
        %v5053 = vld [vmem:[%s1058 + $0x38] sm:$0xff]
        %v5054 = vld [vmem:[%s1058 + $0x48] sm:$0xff]
        %v5055 = vld [vmem:[%s1058 + $0x50] sm:$0xff]
        %v5056 = vld [vmem:[%s1058 + $0x60] sm:$0xff]
        %v5057 = vld [vmem:[%s1058 + $0x68] sm:$0xff]
        %v5058 = vld [vmem:[%s1058 + $0x78] sm:$0xff]
        %v5059 = vld [vmem:[%s1058 + $0x80] sm:$0xff]
        %v5060 = vld [vmem:[%s1058 + $0x90] sm:$0xff]
        %v5061 = vld [vmem:[%s1058 + $0x98] sm:$0xff]
        %v5062 = vld [vmem:[%s1058 + $0xa8] sm:$0xff]
        %v5063 = vld [vmem:[%s1058 + $0xb0] sm:$0xff]
        %v5064 = vld [vmem:[%s1058 + $0xc0] sm:$0xff]
        %v5065 = vld [vmem:[%s1058 + $0xc8] sm:$0xff]
        %v5066 = vld [vmem:[%s1058 + $0xd8] sm:$0xff]
        %v5067 = vld [vmem:[%s1058 + $0xe0] sm:$0xff]
        %v5068 = vld [vmem:[%s1058 + $0xf0] sm:$0xff]
        %v5069 = vld [vmem:[%s1058 + $0xf8] sm:$0xff]
        %v5070 = vld [vmem:[%s1058 + $0x108] sm:$0xff]
        %v5071 = vld [vmem:[%s1058 + $0x110] sm:$0xff]
        %v5072 = vld [vmem:[%s1058 + $0x120] sm:$0xff]
        %v5073 = vld [vmem:[%s1058 + $0x128] sm:$0xff]
        %v5074 = vld [vmem:[%s1058 + $0x138] sm:$0xff]
        %v5075 = vld [vmem:[%s1058 + $0x140] sm:$0xff]
        %v5076 = vld [vmem:[%s1058 + $0x150] sm:$0xff]
        %v5077 = vld [vmem:[%s1058 + $0x158] sm:$0xff]
        %v5078 = vld [vmem:[%s1058 + $0x168] sm:$0xff]
        %v5079 = vld [vmem:[%s1058 + $0x170] sm:$0xff]
        %v5080 = vld [vmem:[%s1058 + $0x1] sm:$0xff]
        %v5081 = vld [vmem:[%s1058 + $0x9] sm:$0xff]
        %v5082 = vld [vmem:[%s1058 + $0x19] sm:$0xff]
        %v5083 = vld [vmem:[%s1058 + $0x21] sm:$0xff]
        %v5084 = vld [vmem:[%s1058 + $0x31] sm:$0xff]
        %v5085 = vld [vmem:[%s1058 + $0x39] sm:$0xff]
        %v5086 = vld [vmem:[%s1058 + $0x49] sm:$0xff]
        %v5087 = vld [vmem:[%s1058 + $0x51] sm:$0xff]
        %v5088 = vld [vmem:[%s1058 + $0x61] sm:$0xff]
        %v5089 = vld [vmem:[%s1058 + $0x69] sm:$0xff]
        %v5090 = vld [vmem:[%s1058 + $0x79] sm:$0xff]
        %v5091 = vld [vmem:[%s1058 + $0x81] sm:$0xff]
        %v5092 = vld [vmem:[%s1058 + $0x91] sm:$0xff]
        %v5093 = vld [vmem:[%s1058 + $0x99] sm:$0xff]
        %v5094 = vld [vmem:[%s1058 + $0xa9] sm:$0xff]
        %v5095 = vld [vmem:[%s1058 + $0xb1] sm:$0xff]
        %v5096 = vld [vmem:[%s1058 + $0xc1] sm:$0xff]
        %v5097 = vld [vmem:[%s1058 + $0xc9] sm:$0xff]
        %v5098 = vld [vmem:[%s1058 + $0xd9] sm:$0xff]
        %v5099 = vld [vmem:[%s1058 + $0xe1] sm:$0xff]
        %v5100 = vld [vmem:[%s1058 + $0xf1] sm:$0xff]
        %v5101 = vld [vmem:[%s1058 + $0xf9] sm:$0xff]
        %v5102 = vld [vmem:[%s1058 + $0x109] sm:$0xff]
        %v5103 = vld [vmem:[%s1058 + $0x111] sm:$0xff]
        %v5104 = vld [vmem:[%s1058 + $0x121] sm:$0xff]
        %v5105 = vld [vmem:[%s1058 + $0x129] sm:$0xff]
        %v5106 = vld [vmem:[%s1058 + $0x139] sm:$0xff]
        %v5107 = vld [vmem:[%s1058 + $0x141] sm:$0xff]
        %v5108 = vld [vmem:[%s1058 + $0x151] sm:$0xff]
        %v5109 = vld [vmem:[%s1058 + $0x159] sm:$0xff]
        %v5110 = vld [vmem:[%s1058 + $0x169] sm:$0xff]
        %v5111 = vld [vmem:[%s1058 + $0x171] sm:$0xff]
        %v5112 = vld [vmem:[%s1058 + $0x2] sm:$0xff]
        %v5113 = vld [vmem:[%s1058 + $0xa] sm:$0xff]
        %v5114 = vld [vmem:[%s1058 + $0x1a] sm:$0xff]
        %v5115 = vld [vmem:[%s1058 + $0x22] sm:$0xff]
        %v5116 = vld [vmem:[%s1058 + $0x32] sm:$0xff]
        %v5117 = vld [vmem:[%s1058 + $0x3a] sm:$0xff]
        %v5118 = vld [vmem:[%s1058 + $0x4a] sm:$0xff]
        %v5119 = vld [vmem:[%s1058 + $0x52] sm:$0xff]
        %v5120 = vld [vmem:[%s1058 + $0x62] sm:$0xff]
        %v5121 = vld [vmem:[%s1058 + $0x6a] sm:$0xff]
        %v5122 = vld [vmem:[%s1058 + $0x7a] sm:$0xff]
        %v5123 = vld [vmem:[%s1058 + $0x82] sm:$0xff]
        %v5124 = vld [vmem:[%s1058 + $0x92] sm:$0xff]
        %v5125 = vld [vmem:[%s1058 + $0x9a] sm:$0xff]
        %v5126 = vld [vmem:[%s1058 + $0xaa] sm:$0xff]
        %v5127 = vld [vmem:[%s1058 + $0xb2] sm:$0xff]
        %v5128 = vld [vmem:[%s1058 + $0xc2] sm:$0xff]
        %v5129 = vld [vmem:[%s1058 + $0xca] sm:$0xff]
        %v5130 = vld [vmem:[%s1058 + $0xda] sm:$0xff]
        %v5131 = vld [vmem:[%s1058 + $0xe2] sm:$0xff]
        %v5132 = vld [vmem:[%s1058 + $0xf2] sm:$0xff]
        %v5133 = vld [vmem:[%s1058 + $0xfa] sm:$0xff]
        %v5134 = vld [vmem:[%s1058 + $0x10a] sm:$0xff]
        %v5135 = vld [vmem:[%s1058 + $0x112] sm:$0xff]
        %v5136 = vld [vmem:[%s1058 + $0x122] sm:$0xff]
        %v5137 = vld [vmem:[%s1058 + $0x12a] sm:$0xff]
        %v5138 = vld [vmem:[%s1058 + $0x13a] sm:$0xff]
        %v5139 = vld [vmem:[%s1058 + $0x142] sm:$0xff]
        %v5140 = vld [vmem:[%s1058 + $0x152] sm:$0xff]
        %v5141 = vld [vmem:[%s1058 + $0x15a] sm:$0xff]
        %v5142 = vld [vmem:[%s1058 + $0x16a] sm:$0xff]
        %v5143 = vld [vmem:[%s1058 + $0x172] sm:$0xff]
        %v5144 = vld [vmem:[%s1283] sm:$0xff]
        %v5145 = vld [vmem:[%s1283 + $0x8] sm:$0xff]
        %v5146 = vld [vmem:[%s1283 + $0x18] sm:$0xff]
        %v5147 = vld [vmem:[%s1283 + $0x20] sm:$0xff]
        %v5148 = vld [vmem:[%s1283 + $0x30] sm:$0xff]
        %v5149 = vld [vmem:[%s1283 + $0x38] sm:$0xff]
        %v5150 = vld [vmem:[%s1283 + $0x48] sm:$0xff]
        %v5151 = vld [vmem:[%s1283 + $0x50] sm:$0xff]
        %v5152 = vld [vmem:[%s1283 + $0x60] sm:$0xff]
        %v5153 = vld [vmem:[%s1283 + $0x68] sm:$0xff]
        %v5154 = vld [vmem:[%s1283 + $0x78] sm:$0xff]
        %v5155 = vld [vmem:[%s1283 + $0x80] sm:$0xff]
        %v5156 = vld [vmem:[%s1283 + $0x90] sm:$0xff]
        %v5157 = vld [vmem:[%s1283 + $0x98] sm:$0xff]
        %v5158 = vld [vmem:[%s1283 + $0xa8] sm:$0xff]
        %v5159 = vld [vmem:[%s1283 + $0xb0] sm:$0xff]
        %v5160 = vld [vmem:[%s1283 + $0xc0] sm:$0xff]
        %v5161 = vld [vmem:[%s1283 + $0xc8] sm:$0xff]
        %v5162 = vld [vmem:[%s1283 + $0xd8] sm:$0xff]
        %v5163 = vld [vmem:[%s1283 + $0xe0] sm:$0xff]
        %v5164 = vld [vmem:[%s1283 + $0xf0] sm:$0xff]
        %v5165 = vld [vmem:[%s1283 + $0xf8] sm:$0xff]
        %v5166 = vld [vmem:[%s1283 + $0x108] sm:$0xff]
        %v5167 = vld [vmem:[%s1283 + $0x110] sm:$0xff]
        %v5168 = vld [vmem:[%s1283 + $0x120] sm:$0xff]
        %v5169 = vld [vmem:[%s1283 + $0x128] sm:$0xff]
        %v5170 = vld [vmem:[%s1283 + $0x138] sm:$0xff]
        %v5171 = vld [vmem:[%s1283 + $0x140] sm:$0xff]
        %v5172 = vld [vmem:[%s1283 + $0x150] sm:$0xff]
        %v5173 = vld [vmem:[%s1283 + $0x158] sm:$0xff]
        %v5174 = vld [vmem:[%s1283 + $0x168] sm:$0xff]
        %v5175 = vld [vmem:[%s1283 + $0x170] sm:$0xff]
        %v5176 = vld [vmem:[%s1283 + $0x1] sm:$0xff]
        %v5177 = vld [vmem:[%s1283 + $0x9] sm:$0xff]
        %v5178 = vld [vmem:[%s1283 + $0x19] sm:$0xff]
        %v5179 = vld [vmem:[%s1283 + $0x21] sm:$0xff]
        %v5180 = vld [vmem:[%s1283 + $0x31] sm:$0xff]
        %v5181 = vld [vmem:[%s1283 + $0x39] sm:$0xff]
        %v5182 = vld [vmem:[%s1283 + $0x49] sm:$0xff]
        %v5183 = vld [vmem:[%s1283 + $0x51] sm:$0xff]
        %v5184 = vld [vmem:[%s1283 + $0x61] sm:$0xff]
        %v5185 = vld [vmem:[%s1283 + $0x69] sm:$0xff]
        %v5186 = vld [vmem:[%s1283 + $0x79] sm:$0xff]
        %v5187 = vld [vmem:[%s1283 + $0x81] sm:$0xff]
        %v5188 = vld [vmem:[%s1283 + $0x91] sm:$0xff]
        %v5189 = vld [vmem:[%s1283 + $0x99] sm:$0xff]
        %v5190 = vld [vmem:[%s1283 + $0xa9] sm:$0xff]
        %v5191 = vld [vmem:[%s1283 + $0xb1] sm:$0xff]
        %v5192 = vld [vmem:[%s1283 + $0xc1] sm:$0xff]
        %v5193 = vld [vmem:[%s1283 + $0xc9] sm:$0xff]
        %v5194 = vld [vmem:[%s1283 + $0xd9] sm:$0xff]
        %v5195 = vld [vmem:[%s1283 + $0xe1] sm:$0xff]
        %v5196 = vld [vmem:[%s1283 + $0xf1] sm:$0xff]
        %v5197 = vld [vmem:[%s1283 + $0xf9] sm:$0xff]
        %v5198 = vld [vmem:[%s1283 + $0x109] sm:$0xff]
        %v5199 = vld [vmem:[%s1283 + $0x111] sm:$0xff]
        %v5200 = vld [vmem:[%s1283 + $0x121] sm:$0xff]
        %v5201 = vld [vmem:[%s1283 + $0x129] sm:$0xff]
        %v5202 = vld [vmem:[%s1283 + $0x139] sm:$0xff]
        %v5203 = vld [vmem:[%s1283 + $0x141] sm:$0xff]
        %v5204 = vld [vmem:[%s1283 + $0x151] sm:$0xff]
        %v5205 = vld [vmem:[%s1283 + $0x159] sm:$0xff]
        %v5206 = vld [vmem:[%s1283 + $0x169] sm:$0xff]
        %v5207 = vld [vmem:[%s1283 + $0x171] sm:$0xff]
        %v5208 = vld [vmem:[%s1283 + $0x2] sm:$0xff]
        %v5209 = vld [vmem:[%s1283 + $0xa] sm:$0xff]
        %v5210 = vld [vmem:[%s1283 + $0x1a] sm:$0xff]
        %v5211 = vld [vmem:[%s1283 + $0x22] sm:$0xff]
        %v5212 = vld [vmem:[%s1283 + $0x32] sm:$0xff]
        %v5213 = vld [vmem:[%s1283 + $0x3a] sm:$0xff]
        %v5214 = vld [vmem:[%s1283 + $0x4a] sm:$0xff]
        %v5215 = vld [vmem:[%s1283 + $0x52] sm:$0xff]
        %v5216 = vld [vmem:[%s1283 + $0x62] sm:$0xff]
        %v5217 = vld [vmem:[%s1283 + $0x6a] sm:$0xff]
        %v5218 = vld [vmem:[%s1283 + $0x7a] sm:$0xff]
        %v5219 = vld [vmem:[%s1283 + $0x82] sm:$0xff]
        %v5220 = vld [vmem:[%s1283 + $0x92] sm:$0xff]
        %v5221 = vld [vmem:[%s1283 + $0x9a] sm:$0xff]
        %v5222 = vld [vmem:[%s1283 + $0xaa] sm:$0xff]
        %v5223 = vld [vmem:[%s1283 + $0xb2] sm:$0xff]
        %v5224 = vld [vmem:[%s1283 + $0xc2] sm:$0xff]
        %v5225 = vld [vmem:[%s1283 + $0xca] sm:$0xff]
        %v5226 = vld [vmem:[%s1283 + $0xda] sm:$0xff]
        %v5227 = vld [vmem:[%s1283 + $0xe2] sm:$0xff]
        %v5228 = vld [vmem:[%s1283 + $0xf2] sm:$0xff]
        %v5229 = vld [vmem:[%s1283 + $0xfa] sm:$0xff]
        %v5230 = vld [vmem:[%s1283 + $0x10a] sm:$0xff]
        %v5231 = vld [vmem:[%s1283 + $0x112] sm:$0xff]
        %v5232 = vld [vmem:[%s1283 + $0x122] sm:$0xff]
        %v5233 = vld [vmem:[%s1283 + $0x12a] sm:$0xff]
        %v5234 = vld [vmem:[%s1283 + $0x13a] sm:$0xff]
        %v5235 = vld [vmem:[%s1283 + $0x142] sm:$0xff]
        %v5236 = vld [vmem:[%s1283 + $0x152] sm:$0xff]
        %v5237 = vld [vmem:[%s1283 + $0x15a] sm:$0xff]
        %v5238 = vld [vmem:[%s1283 + $0x16a] sm:$0xff]
        %v5239 = vld [vmem:[%s1283 + $0x172] sm:$0xff]
        %5272 = vrot.lane.b32.xlu0 %v4984, 32
        %v5273 = vpop.permute.xlu0 %5272
        %5274 = vrot.lane.b32.xlu0 %v4985, 32
        %v5275 = vpop.permute.xlu0 %5274
        %5276 = vrot.lane.b32.xlu0 %v4986, 32
        %v5277 = vpop.permute.xlu0 %5276
        %5278 = vrot.lane.b32.xlu0 %v4987, 32
        %v5279 = vpop.permute.xlu0 %5278
        %5280 = vrot.lane.b32.xlu0 %v4988, 32
        %v5281 = vpop.permute.xlu0 %5280
        %5282 = vrot.lane.b32.xlu0 %v4989, 32
        %v5283 = vpop.permute.xlu0 %5282
        %5284 = vrot.lane.b32.xlu0 %v4990, 32
        %v5285 = vpop.permute.xlu0 %5284
        %5286 = vrot.lane.b32.xlu0 %v4991, 32
        %v5287 = vpop.permute.xlu0 %5286
        %5288 = vrot.lane.b32.xlu0 %v4992, 32
        %v5289 = vpop.permute.xlu0 %5288
        %5290 = vrot.lane.b32.xlu0 %v4993, 32
        %v5291 = vpop.permute.xlu0 %5290
        %5292 = vrot.lane.b32.xlu0 %v4994, 32
        %v5293 = vpop.permute.xlu0 %5292
        %5294 = vrot.lane.b32.xlu0 %v4995, 32
        %v5295 = vpop.permute.xlu0 %5294
        %5296 = vrot.lane.b32.xlu0 %v4996, 32
        %v5297 = vpop.permute.xlu0 %5296
        %5298 = vrot.lane.b32.xlu0 %v4997, 32
        %v5299 = vpop.permute.xlu0 %5298
        %5300 = vrot.lane.b32.xlu0 %v4998, 32
        %v5301 = vpop.permute.xlu0 %5300
        %5302 = vrot.lane.b32.xlu0 %v4999, 32
        %v5303 = vpop.permute.xlu0 %5302
        %5304 = vrot.lane.b32.xlu0 %v5000, 32
        %v5305 = vpop.permute.xlu0 %5304
        %5306 = vrot.lane.b32.xlu0 %v5001, 32
        %v5307 = vpop.permute.xlu0 %5306
        %5308 = vrot.lane.b32.xlu0 %v5002, 32
        %v5309 = vpop.permute.xlu0 %5308
        %5310 = vrot.lane.b32.xlu0 %v5003, 32
        %v5311 = vpop.permute.xlu0 %5310
        %5312 = vrot.lane.b32.xlu0 %v5004, 32
        %v5313 = vpop.permute.xlu0 %5312
        %5314 = vrot.lane.b32.xlu0 %v5005, 32
        %v5315 = vpop.permute.xlu0 %5314
        %5316 = vrot.lane.b32.xlu0 %v5006, 32
        %v5317 = vpop.permute.xlu0 %5316
        %5318 = vrot.lane.b32.xlu0 %v5007, 32
        %v5319 = vpop.permute.xlu0 %5318
        %5320 = vrot.lane.b32.xlu0 %v5008, 32
        %v5321 = vpop.permute.xlu0 %5320
        %5322 = vrot.lane.b32.xlu0 %v5009, 32
        %v5323 = vpop.permute.xlu0 %5322
        %5324 = vrot.lane.b32.xlu0 %v5010, 32
        %v5325 = vpop.permute.xlu0 %5324
        %5326 = vrot.lane.b32.xlu0 %v5011, 32
        %v5327 = vpop.permute.xlu0 %5326
        %5328 = vrot.lane.b32.xlu0 %v5012, 32
        %v5329 = vpop.permute.xlu0 %5328
        %5330 = vrot.lane.b32.xlu0 %v5013, 32
        %v5331 = vpop.permute.xlu0 %5330
        %5332 = vrot.lane.b32.xlu0 %v5014, 32
        %v5333 = vpop.permute.xlu0 %5332
        %5334 = vrot.lane.b32.xlu0 %v5015, 32
        %v5335 = vpop.permute.xlu0 %5334
        %5400 = vrot.lane.b32.xlu0 %v5016, 64
        %v5401 = vpop.permute.xlu0 %5400
        %5402 = vrot.lane.b32.xlu0 %v5017, 64
        %v5403 = vpop.permute.xlu0 %5402
        %5404 = vrot.lane.b32.xlu0 %v5018, 64
        %v5405 = vpop.permute.xlu0 %5404
        %5406 = vrot.lane.b32.xlu0 %v5019, 64
        %v5407 = vpop.permute.xlu0 %5406
        %5408 = vrot.lane.b32.xlu0 %v5020, 64
        %v5409 = vpop.permute.xlu0 %5408
        %5410 = vrot.lane.b32.xlu0 %v5021, 64
        %v5411 = vpop.permute.xlu0 %5410
        %5412 = vrot.lane.b32.xlu0 %v5022, 64
        %v5413 = vpop.permute.xlu0 %5412
        %5414 = vrot.lane.b32.xlu0 %v5023, 64
        %v5415 = vpop.permute.xlu0 %5414
        %5416 = vrot.lane.b32.xlu0 %v5024, 64
        %v5417 = vpop.permute.xlu0 %5416
        %5418 = vrot.lane.b32.xlu0 %v5025, 64
        %v5419 = vpop.permute.xlu0 %5418
        %5420 = vrot.lane.b32.xlu0 %v5026, 64
        %v5421 = vpop.permute.xlu0 %5420
        %5422 = vrot.lane.b32.xlu0 %v5027, 64
        %v5423 = vpop.permute.xlu0 %5422
        %5424 = vrot.lane.b32.xlu0 %v5028, 64
        %v5425 = vpop.permute.xlu0 %5424
        %5426 = vrot.lane.b32.xlu0 %v5029, 64
        %v5427 = vpop.permute.xlu0 %5426
        %5428 = vrot.lane.b32.xlu0 %v5030, 64
        %v5429 = vpop.permute.xlu0 %5428
        %5430 = vrot.lane.b32.xlu0 %v5031, 64
        %v5431 = vpop.permute.xlu0 %5430
        %5432 = vrot.lane.b32.xlu0 %v5032, 64
        %v5433 = vpop.permute.xlu0 %5432
        %5434 = vrot.lane.b32.xlu0 %v5033, 64
        %v5435 = vpop.permute.xlu0 %5434
        %5436 = vrot.lane.b32.xlu0 %v5034, 64
        %v5437 = vpop.permute.xlu0 %5436
        %5438 = vrot.lane.b32.xlu0 %v5035, 64
        %v5439 = vpop.permute.xlu0 %5438
        %5440 = vrot.lane.b32.xlu0 %v5036, 64
        %v5441 = vpop.permute.xlu0 %5440
        %5442 = vrot.lane.b32.xlu0 %v5037, 64
        %v5443 = vpop.permute.xlu0 %5442
        %5444 = vrot.lane.b32.xlu0 %v5038, 64
        %v5445 = vpop.permute.xlu0 %5444
        %5446 = vrot.lane.b32.xlu0 %v5039, 64
        %v5447 = vpop.permute.xlu0 %5446
        %5448 = vrot.lane.b32.xlu0 %v5040, 64
        %v5449 = vpop.permute.xlu0 %5448
        %5450 = vrot.lane.b32.xlu0 %v5041, 64
        %v5451 = vpop.permute.xlu0 %5450
        %5452 = vrot.lane.b32.xlu0 %v5042, 64
        %v5453 = vpop.permute.xlu0 %5452
        %5454 = vrot.lane.b32.xlu0 %v5043, 64
        %v5455 = vpop.permute.xlu0 %5454
        %5456 = vrot.lane.b32.xlu0 %v5044, 64
        %v5457 = vpop.permute.xlu0 %5456
        %5458 = vrot.lane.b32.xlu0 %v5045, 64
        %v5459 = vpop.permute.xlu0 %5458
        %5460 = vrot.lane.b32.xlu0 %v5046, 64
        %v5461 = vpop.permute.xlu0 %5460
        %5462 = vrot.lane.b32.xlu0 %v5047, 64
        %v5463 = vpop.permute.xlu0 %5462
        %5528 = vrot.lane.b32.xlu0 %v5048, 96
        %v5529 = vpop.permute.xlu0 %5528
        %5530 = vrot.lane.b32.xlu0 %v5049, 96
        %v5531 = vpop.permute.xlu0 %5530
        %5532 = vrot.lane.b32.xlu0 %v5050, 96
        %v5533 = vpop.permute.xlu0 %5532
        %5534 = vrot.lane.b32.xlu0 %v5051, 96
        %v5535 = vpop.permute.xlu0 %5534
        %5536 = vrot.lane.b32.xlu0 %v5052, 96
        %v5537 = vpop.permute.xlu0 %5536
        %5538 = vrot.lane.b32.xlu0 %v5053, 96
        %v5539 = vpop.permute.xlu0 %5538
        %5540 = vrot.lane.b32.xlu0 %v5054, 96
        %v5541 = vpop.permute.xlu0 %5540
        %5542 = vrot.lane.b32.xlu0 %v5055, 96
        %v5543 = vpop.permute.xlu0 %5542
        %5544 = vrot.lane.b32.xlu0 %v5056, 96
        %v5545 = vpop.permute.xlu0 %5544
        %5546 = vrot.lane.b32.xlu0 %v5057, 96
        %v5547 = vpop.permute.xlu0 %5546
        %5548 = vrot.lane.b32.xlu0 %v5058, 96
        %v5549 = vpop.permute.xlu0 %5548
        %5550 = vrot.lane.b32.xlu0 %v5059, 96
        %v5551 = vpop.permute.xlu0 %5550
        %5552 = vrot.lane.b32.xlu0 %v5060, 96
        %v5553 = vpop.permute.xlu0 %5552
        %5554 = vrot.lane.b32.xlu0 %v5061, 96
        %v5555 = vpop.permute.xlu0 %5554
        %5556 = vrot.lane.b32.xlu0 %v5062, 96
        %v5557 = vpop.permute.xlu0 %5556
        %5558 = vrot.lane.b32.xlu0 %v5063, 96
        %v5559 = vpop.permute.xlu0 %5558
        %5560 = vrot.lane.b32.xlu0 %v5064, 96
        %v5561 = vpop.permute.xlu0 %5560
        %5562 = vrot.lane.b32.xlu0 %v5065, 96
        %v5563 = vpop.permute.xlu0 %5562
        %5564 = vrot.lane.b32.xlu0 %v5066, 96
        %v5565 = vpop.permute.xlu0 %5564
        %5566 = vrot.lane.b32.xlu0 %v5067, 96
        %v5567 = vpop.permute.xlu0 %5566
        %5568 = vrot.lane.b32.xlu0 %v5068, 96
        %v5569 = vpop.permute.xlu0 %5568
        %5570 = vrot.lane.b32.xlu0 %v5069, 96
        %v5571 = vpop.permute.xlu0 %5570
        %5572 = vrot.lane.b32.xlu0 %v5070, 96
        %v5573 = vpop.permute.xlu0 %5572
        %5574 = vrot.lane.b32.xlu0 %v5071, 96
        %v5575 = vpop.permute.xlu0 %5574
        %5576 = vrot.lane.b32.xlu0 %v5072, 96
        %v5577 = vpop.permute.xlu0 %5576
        %5578 = vrot.lane.b32.xlu0 %v5073, 96
        %v5579 = vpop.permute.xlu0 %5578
        %5580 = vrot.lane.b32.xlu0 %v5074, 96
        %v5581 = vpop.permute.xlu0 %5580
        %5582 = vrot.lane.b32.xlu0 %v5075, 96
        %v5583 = vpop.permute.xlu0 %5582
        %5584 = vrot.lane.b32.xlu0 %v5076, 96
        %v5585 = vpop.permute.xlu0 %5584
        %5586 = vrot.lane.b32.xlu0 %v5077, 96
        %v5587 = vpop.permute.xlu0 %5586
        %5588 = vrot.lane.b32.xlu0 %v5078, 96
        %v5589 = vpop.permute.xlu0 %5588
        %5590 = vrot.lane.b32.xlu0 %v5079, 96
        %v5591 = vpop.permute.xlu0 %5590
        %5656 = vrot.lane.b32.xlu0 %v5112, 32
        %v5657 = vpop.permute.xlu0 %5656
        %5658 = vrot.lane.b32.xlu0 %v5113, 32
        %v5659 = vpop.permute.xlu0 %5658
        %5660 = vrot.lane.b32.xlu0 %v5114, 32
        %v5661 = vpop.permute.xlu0 %5660
        %5662 = vrot.lane.b32.xlu0 %v5115, 32
        %v5663 = vpop.permute.xlu0 %5662
        %5664 = vrot.lane.b32.xlu0 %v5116, 32
        %v5665 = vpop.permute.xlu0 %5664
        %5666 = vrot.lane.b32.xlu0 %v5117, 32
        %v5667 = vpop.permute.xlu0 %5666
        %5668 = vrot.lane.b32.xlu0 %v5118, 32
        %v5669 = vpop.permute.xlu0 %5668
        %5670 = vrot.lane.b32.xlu0 %v5119, 32
        %v5671 = vpop.permute.xlu0 %5670
        %5672 = vrot.lane.b32.xlu0 %v5120, 32
        %v5673 = vpop.permute.xlu0 %5672
        %5674 = vrot.lane.b32.xlu0 %v5121, 32
        %v5675 = vpop.permute.xlu0 %5674
        %5676 = vrot.lane.b32.xlu0 %v5122, 32
        %v5677 = vpop.permute.xlu0 %5676
        %5678 = vrot.lane.b32.xlu0 %v5123, 32
        %v5679 = vpop.permute.xlu0 %5678
        %5680 = vrot.lane.b32.xlu0 %v5124, 32
        %v5681 = vpop.permute.xlu0 %5680
        %5682 = vrot.lane.b32.xlu0 %v5125, 32
        %v5683 = vpop.permute.xlu0 %5682
        %5684 = vrot.lane.b32.xlu0 %v5126, 32
        %v5685 = vpop.permute.xlu0 %5684
        %5686 = vrot.lane.b32.xlu0 %v5127, 32
        %v5687 = vpop.permute.xlu0 %5686
        %5688 = vrot.lane.b32.xlu0 %v5128, 32
        %v5689 = vpop.permute.xlu0 %5688
        %5690 = vrot.lane.b32.xlu0 %v5129, 32
        %v5691 = vpop.permute.xlu0 %5690
        %5692 = vrot.lane.b32.xlu0 %v5130, 32
        %v5693 = vpop.permute.xlu0 %5692
        %5694 = vrot.lane.b32.xlu0 %v5131, 32
        %v5695 = vpop.permute.xlu0 %5694
        %5696 = vrot.lane.b32.xlu0 %v5132, 32
        %v5697 = vpop.permute.xlu0 %5696
        %5698 = vrot.lane.b32.xlu0 %v5133, 32
        %v5699 = vpop.permute.xlu0 %5698
        %5700 = vrot.lane.b32.xlu0 %v5134, 32
        %v5701 = vpop.permute.xlu0 %5700
        %5702 = vrot.lane.b32.xlu0 %v5135, 32
        %v5703 = vpop.permute.xlu0 %5702
        %5704 = vrot.lane.b32.xlu0 %v5136, 32
        %v5705 = vpop.permute.xlu0 %5704
        %5706 = vrot.lane.b32.xlu0 %v5137, 32
        %v5707 = vpop.permute.xlu0 %5706
        %5708 = vrot.lane.b32.xlu0 %v5138, 32
        %v5709 = vpop.permute.xlu0 %5708
        %5710 = vrot.lane.b32.xlu0 %v5139, 32
        %v5711 = vpop.permute.xlu0 %5710
        %5712 = vrot.lane.b32.xlu0 %v5140, 32
        %v5713 = vpop.permute.xlu0 %5712
        %5714 = vrot.lane.b32.xlu0 %v5141, 32
        %v5715 = vpop.permute.xlu0 %5714
        %5716 = vrot.lane.b32.xlu0 %v5142, 32
        %v5717 = vpop.permute.xlu0 %5716
        %5718 = vrot.lane.b32.xlu0 %v5143, 32
        %v5719 = vpop.permute.xlu0 %5718
        %5784 = vrot.lane.b32.xlu0 %v5144, 64
        %v5785 = vpop.permute.xlu0 %5784
        %5786 = vrot.lane.b32.xlu0 %v5145, 64
        %v5787 = vpop.permute.xlu0 %5786
        %5788 = vrot.lane.b32.xlu0 %v5146, 64
        %v5789 = vpop.permute.xlu0 %5788
        %5790 = vrot.lane.b32.xlu0 %v5147, 64
        %v5791 = vpop.permute.xlu0 %5790
        %5792 = vrot.lane.b32.xlu0 %v5148, 64
        %v5793 = vpop.permute.xlu0 %5792
        %5794 = vrot.lane.b32.xlu0 %v5149, 64
        %v5795 = vpop.permute.xlu0 %5794
        %5796 = vrot.lane.b32.xlu0 %v5150, 64
        %v5797 = vpop.permute.xlu0 %5796
        %5798 = vrot.lane.b32.xlu0 %v5151, 64
        %v5799 = vpop.permute.xlu0 %5798
        %5800 = vrot.lane.b32.xlu0 %v5152, 64
        %v5801 = vpop.permute.xlu0 %5800
        %5802 = vrot.lane.b32.xlu0 %v5153, 64
        %v5803 = vpop.permute.xlu0 %5802
        %5804 = vrot.lane.b32.xlu0 %v5154, 64
        %v5805 = vpop.permute.xlu0 %5804
        %5806 = vrot.lane.b32.xlu0 %v5155, 64
        %v5807 = vpop.permute.xlu0 %5806
        %5808 = vrot.lane.b32.xlu0 %v5156, 64
        %v5809 = vpop.permute.xlu0 %5808
        %5810 = vrot.lane.b32.xlu0 %v5157, 64
        %v5811 = vpop.permute.xlu0 %5810
        %5812 = vrot.lane.b32.xlu0 %v5158, 64
        %v5813 = vpop.permute.xlu0 %5812
        %5814 = vrot.lane.b32.xlu0 %v5159, 64
        %v5815 = vpop.permute.xlu0 %5814
        %5816 = vrot.lane.b32.xlu0 %v5160, 64
        %v5817 = vpop.permute.xlu0 %5816
        %5818 = vrot.lane.b32.xlu0 %v5161, 64
        %v5819 = vpop.permute.xlu0 %5818
        %5820 = vrot.lane.b32.xlu0 %v5162, 64
        %v5821 = vpop.permute.xlu0 %5820
        %5822 = vrot.lane.b32.xlu0 %v5163, 64
        %v5823 = vpop.permute.xlu0 %5822
        %5824 = vrot.lane.b32.xlu0 %v5164, 64
        %v5825 = vpop.permute.xlu0 %5824
        %5826 = vrot.lane.b32.xlu0 %v5165, 64
        %v5827 = vpop.permute.xlu0 %5826
        %5828 = vrot.lane.b32.xlu0 %v5166, 64
        %v5829 = vpop.permute.xlu0 %5828
        %5830 = vrot.lane.b32.xlu0 %v5167, 64
        %v5831 = vpop.permute.xlu0 %5830
        %5832 = vrot.lane.b32.xlu0 %v5168, 64
        %v5833 = vpop.permute.xlu0 %5832
        %5834 = vrot.lane.b32.xlu0 %v5169, 64
        %v5835 = vpop.permute.xlu0 %5834
        %5836 = vrot.lane.b32.xlu0 %v5170, 64
        %v5837 = vpop.permute.xlu0 %5836
        %5838 = vrot.lane.b32.xlu0 %v5171, 64
        %v5839 = vpop.permute.xlu0 %5838
        %5840 = vrot.lane.b32.xlu0 %v5172, 64
        %v5841 = vpop.permute.xlu0 %5840
        %5842 = vrot.lane.b32.xlu0 %v5173, 64
        %v5843 = vpop.permute.xlu0 %5842
        %5844 = vrot.lane.b32.xlu0 %v5174, 64
        %v5845 = vpop.permute.xlu0 %5844
        %5846 = vrot.lane.b32.xlu0 %v5175, 64
        %v5847 = vpop.permute.xlu0 %5846
        %5912 = vrot.lane.b32.xlu0 %v5176, 96
        %v5913 = vpop.permute.xlu0 %5912
        %5914 = vrot.lane.b32.xlu0 %v5177, 96
        %v5915 = vpop.permute.xlu0 %5914
        %5916 = vrot.lane.b32.xlu0 %v5178, 96
        %v5917 = vpop.permute.xlu0 %5916
        %5918 = vrot.lane.b32.xlu0 %v5179, 96
        %v5919 = vpop.permute.xlu0 %5918
        %5920 = vrot.lane.b32.xlu0 %v5180, 96
        %v5921 = vpop.permute.xlu0 %5920
        %5922 = vrot.lane.b32.xlu0 %v5181, 96
        %v5923 = vpop.permute.xlu0 %5922
        %5924 = vrot.lane.b32.xlu0 %v5182, 96
        %v5925 = vpop.permute.xlu0 %5924
        %5926 = vrot.lane.b32.xlu0 %v5183, 96
        %v5927 = vpop.permute.xlu0 %5926
        %5928 = vrot.lane.b32.xlu0 %v5184, 96
        %v5929 = vpop.permute.xlu0 %5928
        %5930 = vrot.lane.b32.xlu0 %v5185, 96
        %v5931 = vpop.permute.xlu0 %5930
        %5932 = vrot.lane.b32.xlu0 %v5186, 96
        %v5933 = vpop.permute.xlu0 %5932
        %5934 = vrot.lane.b32.xlu0 %v5187, 96
        %v5935 = vpop.permute.xlu0 %5934
        %5936 = vrot.lane.b32.xlu0 %v5188, 96
        %v5937 = vpop.permute.xlu0 %5936
        %5938 = vrot.lane.b32.xlu0 %v5189, 96
        %v5939 = vpop.permute.xlu0 %5938
        %5940 = vrot.lane.b32.xlu0 %v5190, 96
        %v5941 = vpop.permute.xlu0 %5940
        %5942 = vrot.lane.b32.xlu0 %v5191, 96
        %v5943 = vpop.permute.xlu0 %5942
        %5944 = vrot.lane.b32.xlu0 %v5192, 96
        %v5945 = vpop.permute.xlu0 %5944
        %5946 = vrot.lane.b32.xlu0 %v5193, 96
        %v5947 = vpop.permute.xlu0 %5946
        %5948 = vrot.lane.b32.xlu0 %v5194, 96
        %v5949 = vpop.permute.xlu0 %5948
        %5950 = vrot.lane.b32.xlu0 %v5195, 96
        %v5951 = vpop.permute.xlu0 %5950
        %5952 = vrot.lane.b32.xlu0 %v5196, 96
        %v5953 = vpop.permute.xlu0 %5952
        %5954 = vrot.lane.b32.xlu0 %v5197, 96
        %v5955 = vpop.permute.xlu0 %5954
        %5956 = vrot.lane.b32.xlu0 %v5198, 96
        %v5957 = vpop.permute.xlu0 %5956
        %5958 = vrot.lane.b32.xlu0 %v5199, 96
        %v5959 = vpop.permute.xlu0 %5958
        %5960 = vrot.lane.b32.xlu0 %v5200, 96
        %v5961 = vpop.permute.xlu0 %5960
        %5962 = vrot.lane.b32.xlu0 %v5201, 96
        %v5963 = vpop.permute.xlu0 %5962
        %5964 = vrot.lane.b32.xlu0 %v5202, 96
        %v5965 = vpop.permute.xlu0 %5964
        %5966 = vrot.lane.b32.xlu0 %v5203, 96
        %v5967 = vpop.permute.xlu0 %5966
        %5968 = vrot.lane.b32.xlu0 %v5204, 96
        %v5969 = vpop.permute.xlu0 %5968
        %5970 = vrot.lane.b32.xlu0 %v5205, 96
        %v5971 = vpop.permute.xlu0 %5970
        %5972 = vrot.lane.b32.xlu0 %v5206, 96
        %v5973 = vpop.permute.xlu0 %5972
        %5974 = vrot.lane.b32.xlu0 %v5207, 96
        %v5975 = vpop.permute.xlu0 %5974
        %v6008 = vsel %vm450, %v4952, %v5273
        %v6009 = vsel %vm450, %v4953, %v5275
        %v6010 = vsel %vm450, %v4954, %v5277
        %v6011 = vsel %vm450, %v4955, %v5279
        %v6012 = vsel %vm450, %v4956, %v5281
        %v6013 = vsel %vm450, %v4957, %v5283
        %v6014 = vsel %vm450, %v4958, %v5285
        %v6015 = vsel %vm450, %v4959, %v5287
        %v6016 = vsel %vm450, %v4960, %v5289
        %v6017 = vsel %vm450, %v4961, %v5291
        %v6018 = vsel %vm450, %v4962, %v5293
        %v6019 = vsel %vm450, %v4963, %v5295
        %v6020 = vsel %vm450, %v4964, %v5297
        %v6021 = vsel %vm450, %v4965, %v5299
        %v6022 = vsel %vm450, %v4966, %v5301
        %v6023 = vsel %vm450, %v4967, %v5303
        %v6024 = vsel %vm450, %v4968, %v5305
        %v6025 = vsel %vm450, %v4969, %v5307
        %v6026 = vsel %vm450, %v4970, %v5309
        %v6027 = vsel %vm450, %v4971, %v5311
        %v6028 = vsel %vm450, %v4972, %v5313
        %v6029 = vsel %vm450, %v4973, %v5315
        %v6030 = vsel %vm450, %v4974, %v5317
        %v6031 = vsel %vm450, %v4975, %v5319
        %v6032 = vsel %vm450, %v4976, %v5321
        %v6033 = vsel %vm450, %v4977, %v5323
        %v6034 = vsel %vm450, %v4978, %v5325
        %v6035 = vsel %vm450, %v4979, %v5327
        %v6036 = vsel %vm450, %v4980, %v5329
        %v6037 = vsel %vm450, %v4981, %v5331
        %v6038 = vsel %vm450, %v4982, %v5333
        %v6039 = vsel %vm450, %v4983, %v5335
        %v6040 = vsel %vm2180, %v6008, %v5401
        %v6041 = vsel %vm2180, %v6009, %v5403
        %v6042 = vsel %vm2180, %v6010, %v5405
        %v6043 = vsel %vm2180, %v6011, %v5407
        %v6044 = vsel %vm2180, %v6012, %v5409
        %v6045 = vsel %vm2180, %v6013, %v5411
        %v6046 = vsel %vm2180, %v6014, %v5413
        %v6047 = vsel %vm2180, %v6015, %v5415
        %v6048 = vsel %vm2180, %v6016, %v5417
        %v6049 = vsel %vm2180, %v6017, %v5419
        %v6050 = vsel %vm2180, %v6018, %v5421
        %v6051 = vsel %vm2180, %v6019, %v5423
        %v6052 = vsel %vm2180, %v6020, %v5425
        %v6053 = vsel %vm2180, %v6021, %v5427
        %v6054 = vsel %vm2180, %v6022, %v5429
        %v6055 = vsel %vm2180, %v6023, %v5431
        %v6056 = vsel %vm2180, %v6024, %v5433
        %v6057 = vsel %vm2180, %v6025, %v5435
        %v6058 = vsel %vm2180, %v6026, %v5437
        %v6059 = vsel %vm2180, %v6027, %v5439
        %v6060 = vsel %vm2180, %v6028, %v5441
        %v6061 = vsel %vm2180, %v6029, %v5443
        %v6062 = vsel %vm2180, %v6030, %v5445
        %v6063 = vsel %vm2180, %v6031, %v5447
        %v6064 = vsel %vm2180, %v6032, %v5449
        %v6065 = vsel %vm2180, %v6033, %v5451
        %v6066 = vsel %vm2180, %v6034, %v5453
        %v6067 = vsel %vm2180, %v6035, %v5455
        %v6068 = vsel %vm2180, %v6036, %v5457
        %v6069 = vsel %vm2180, %v6037, %v5459
        %v6070 = vsel %vm2180, %v6038, %v5461
        %v6071 = vsel %vm2180, %v6039, %v5463
        %v6072 = vsel %vm2213, %v6040, %v5529
        %v6073 = vsel %vm2213, %v6041, %v5531
        %v6074 = vsel %vm2213, %v6042, %v5533
        %v6075 = vsel %vm2213, %v6043, %v5535
        %v6076 = vsel %vm2213, %v6044, %v5537
        %v6077 = vsel %vm2213, %v6045, %v5539
        %v6078 = vsel %vm2213, %v6046, %v5541
        %v6079 = vsel %vm2213, %v6047, %v5543
        %v6080 = vsel %vm2213, %v6048, %v5545
        %v6081 = vsel %vm2213, %v6049, %v5547
        %v6082 = vsel %vm2213, %v6050, %v5549
        %v6083 = vsel %vm2213, %v6051, %v5551
        %v6084 = vsel %vm2213, %v6052, %v5553
        %v6085 = vsel %vm2213, %v6053, %v5555
        %v6086 = vsel %vm2213, %v6054, %v5557
        %v6087 = vsel %vm2213, %v6055, %v5559
        %v6088 = vsel %vm2213, %v6056, %v5561
        %v6089 = vsel %vm2213, %v6057, %v5563
        %v6090 = vsel %vm2213, %v6058, %v5565
        %v6091 = vsel %vm2213, %v6059, %v5567
        %v6092 = vsel %vm2213, %v6060, %v5569
        %v6093 = vsel %vm2213, %v6061, %v5571
        %v6094 = vsel %vm2213, %v6062, %v5573
        %v6095 = vsel %vm2213, %v6063, %v5575
        %v6096 = vsel %vm2213, %v6064, %v5577
        %v6097 = vsel %vm2213, %v6065, %v5579
        %v6098 = vsel %vm2213, %v6066, %v5581
        %v6099 = vsel %vm2213, %v6067, %v5583
        %v6100 = vsel %vm2213, %v6068, %v5585
        %v6101 = vsel %vm2213, %v6069, %v5587
        %v6102 = vsel %vm2213, %v6070, %v5589
        %v6103 = vsel %vm2213, %v6071, %v5591
        %v6104 = vsel %vm450, %v5080, %v5657
        %v6105 = vsel %vm450, %v5081, %v5659
        %v6106 = vsel %vm450, %v5082, %v5661
        %v6107 = vsel %vm450, %v5083, %v5663
        %v6108 = vsel %vm450, %v5084, %v5665
        %v6109 = vsel %vm450, %v5085, %v5667
        %v6110 = vsel %vm450, %v5086, %v5669
        %v6111 = vsel %vm450, %v5087, %v5671
        %v6112 = vsel %vm450, %v5088, %v5673
        %v6113 = vsel %vm450, %v5089, %v5675
        %v6114 = vsel %vm450, %v5090, %v5677
        %v6115 = vsel %vm450, %v5091, %v5679
        %v6116 = vsel %vm450, %v5092, %v5681
        %v6117 = vsel %vm450, %v5093, %v5683
        %v6118 = vsel %vm450, %v5094, %v5685
        %v6119 = vsel %vm450, %v5095, %v5687
        %v6120 = vsel %vm450, %v5096, %v5689
        %v6121 = vsel %vm450, %v5097, %v5691
        %v6122 = vsel %vm450, %v5098, %v5693
        %v6123 = vsel %vm450, %v5099, %v5695
        %v6124 = vsel %vm450, %v5100, %v5697
        %v6125 = vsel %vm450, %v5101, %v5699
        %v6126 = vsel %vm450, %v5102, %v5701
        %v6127 = vsel %vm450, %v5103, %v5703
        %v6128 = vsel %vm450, %v5104, %v5705
        %v6129 = vsel %vm450, %v5105, %v5707
        %v6130 = vsel %vm450, %v5106, %v5709
        %v6131 = vsel %vm450, %v5107, %v5711
        %v6132 = vsel %vm450, %v5108, %v5713
        %v6133 = vsel %vm450, %v5109, %v5715
        %v6134 = vsel %vm450, %v5110, %v5717
        %v6135 = vsel %vm450, %v5111, %v5719
        %v6136 = vsel %vm2180, %v6104, %v5785
        %v6137 = vsel %vm2180, %v6105, %v5787
        %v6138 = vsel %vm2180, %v6106, %v5789
        %v6139 = vsel %vm2180, %v6107, %v5791
        %v6140 = vsel %vm2180, %v6108, %v5793
        %v6141 = vsel %vm2180, %v6109, %v5795
        %v6142 = vsel %vm2180, %v6110, %v5797
        %v6143 = vsel %vm2180, %v6111, %v5799
        %v6144 = vsel %vm2180, %v6112, %v5801
        %v6145 = vsel %vm2180, %v6113, %v5803
        %v6146 = vsel %vm2180, %v6114, %v5805
        %v6147 = vsel %vm2180, %v6115, %v5807
        %v6148 = vsel %vm2180, %v6116, %v5809
        %v6149 = vsel %vm2180, %v6117, %v5811
        %v6150 = vsel %vm2180, %v6118, %v5813
        %v6151 = vsel %vm2180, %v6119, %v5815
        %v6152 = vsel %vm2180, %v6120, %v5817
        %v6153 = vsel %vm2180, %v6121, %v5819
        %v6154 = vsel %vm2180, %v6122, %v5821
        %v6155 = vsel %vm2180, %v6123, %v5823
        %v6156 = vsel %vm2180, %v6124, %v5825
        %v6157 = vsel %vm2180, %v6125, %v5827
        %v6158 = vsel %vm2180, %v6126, %v5829
        %v6159 = vsel %vm2180, %v6127, %v5831
        %v6160 = vsel %vm2180, %v6128, %v5833
        %v6161 = vsel %vm2180, %v6129, %v5835
        %v6162 = vsel %vm2180, %v6130, %v5837
        %v6163 = vsel %vm2180, %v6131, %v5839
        %v6164 = vsel %vm2180, %v6132, %v5841
        %v6165 = vsel %vm2180, %v6133, %v5843
        %v6166 = vsel %vm2180, %v6134, %v5845
        %v6167 = vsel %vm2180, %v6135, %v5847
        %v6168 = vsel %vm2213, %v6136, %v5913
        %v6169 = vsel %vm2213, %v6137, %v5915
        %v6170 = vsel %vm2213, %v6138, %v5917
        %v6171 = vsel %vm2213, %v6139, %v5919
        %v6172 = vsel %vm2213, %v6140, %v5921
        %v6173 = vsel %vm2213, %v6141, %v5923
        %v6174 = vsel %vm2213, %v6142, %v5925
        %v6175 = vsel %vm2213, %v6143, %v5927
        %v6176 = vsel %vm2213, %v6144, %v5929
        %v6177 = vsel %vm2213, %v6145, %v5931
        %v6178 = vsel %vm2213, %v6146, %v5933
        %v6179 = vsel %vm2213, %v6147, %v5935
        %v6180 = vsel %vm2213, %v6148, %v5937
        %v6181 = vsel %vm2213, %v6149, %v5939
        %v6182 = vsel %vm2213, %v6150, %v5941
        %v6183 = vsel %vm2213, %v6151, %v5943
        %v6184 = vsel %vm2213, %v6152, %v5945
        %v6185 = vsel %vm2213, %v6153, %v5947
        %v6186 = vsel %vm2213, %v6154, %v5949
        %v6187 = vsel %vm2213, %v6155, %v5951
        %v6188 = vsel %vm2213, %v6156, %v5953
        %v6189 = vsel %vm2213, %v6157, %v5955
        %v6190 = vsel %vm2213, %v6158, %v5957
        %v6191 = vsel %vm2213, %v6159, %v5959
        %v6192 = vsel %vm2213, %v6160, %v5961
        %v6193 = vsel %vm2213, %v6161, %v5963
        %v6194 = vsel %vm2213, %v6162, %v5965
        %v6195 = vsel %vm2213, %v6163, %v5967
        %v6196 = vsel %vm2213, %v6164, %v5969
        %v6197 = vsel %vm2213, %v6165, %v5971
        %v6198 = vsel %vm2213, %v6166, %v5973
        %v6199 = vsel %vm2213, %v6167, %v5975
        %v6200 = vpack.c.bf16 %v6073, %v6072
        %v6201 = vpack.c.bf16 %v6169, %v6168
        %v6202 = vpack.c.bf16 %v5209, %v5208
        %v6203 = vpack.c.bf16 %v6075, %v6074
        %v6204 = vpack.c.bf16 %v6171, %v6170
        %v6205 = vpack.c.bf16 %v5211, %v5210
        %v6206 = vpack.c.bf16 %v6077, %v6076
        %v6207 = vpack.c.bf16 %v6173, %v6172
        %v6208 = vpack.c.bf16 %v5213, %v5212
        %v6209 = vpack.c.bf16 %v6079, %v6078
        %v6210 = vpack.c.bf16 %v6175, %v6174
        %v6211 = vpack.c.bf16 %v5215, %v5214
        %v6212 = vpack.c.bf16 %v6081, %v6080
        %v6213 = vpack.c.bf16 %v6177, %v6176
        %v6214 = vpack.c.bf16 %v5217, %v5216
        %v6215 = vpack.c.bf16 %v6083, %v6082
        %v6216 = vpack.c.bf16 %v6179, %v6178
        %v6217 = vpack.c.bf16 %v5219, %v5218
        %v6218 = vpack.c.bf16 %v6085, %v6084
        %v6219 = vpack.c.bf16 %v6181, %v6180
        %v6220 = vpack.c.bf16 %v5221, %v5220
        %v6221 = vpack.c.bf16 %v6087, %v6086
        %v6222 = vpack.c.bf16 %v6183, %v6182
        %v6223 = vpack.c.bf16 %v5223, %v5222
        %v6224 = vpack.c.bf16 %v6089, %v6088
        %v6225 = vpack.c.bf16 %v6185, %v6184
        %v6226 = vpack.c.bf16 %v5225, %v5224
        %v6227 = vpack.c.bf16 %v6091, %v6090
        %v6228 = vpack.c.bf16 %v6187, %v6186
        %v6229 = vpack.c.bf16 %v5227, %v5226
        %v6230 = vpack.c.bf16 %v6093, %v6092
        %v6231 = vpack.c.bf16 %v6189, %v6188
        %v6232 = vpack.c.bf16 %v5229, %v5228
        %v6233 = vpack.c.bf16 %v6095, %v6094
        %v6234 = vpack.c.bf16 %v6191, %v6190
        %v6235 = vpack.c.bf16 %v5231, %v5230
        %v6236 = vpack.c.bf16 %v6097, %v6096
        %v6237 = vpack.c.bf16 %v6193, %v6192
        %v6238 = vpack.c.bf16 %v5233, %v5232
        %v6239 = vpack.c.bf16 %v6099, %v6098
        %v6240 = vpack.c.bf16 %v6195, %v6194
        %v6241 = vpack.c.bf16 %v5235, %v5234
        %v6242 = vpack.c.bf16 %v6101, %v6100
        %v6243 = vpack.c.bf16 %v6197, %v6196
        %v6244 = vpack.c.bf16 %v5237, %v5236
        %v6245 = vpack.c.bf16 %v6103, %v6102
        %v6246 = vpack.c.bf16 %v6199, %v6198
        %v6247 = vpack.c.bf16 %v5239, %v5238
        %v6248 = vld [vmem:[#allocation9] sm:$0xf]
        %v6249 = vld [vmem:[#allocation9 + $0x4] sm:$0xf]
        %v6250 = vld [vmem:[#allocation9 + $0x8] sm:$0xf]
        %v6251 = vld [vmem:[#allocation9 + $0xc] sm:$0xf]
        %v6252 = vld [vmem:[#allocation9 + $0x10] sm:$0xf]
        %v6253 = vld [vmem:[#allocation9 + $0x14] sm:$0xf]
        %v6254 = vld [vmem:[#allocation9 + $0x18] sm:$0xf]
        %v6255 = vld [vmem:[#allocation9 + $0x1c] sm:$0xf]
        %v6256 = vld [vmem:[#allocation9 + $0x20] sm:$0xf]
        %v6257 = vld [vmem:[#allocation9 + $0x24] sm:$0xf]
        %v6258 = vld [vmem:[#allocation9 + $0x28] sm:$0xf]
        %v6259 = vld [vmem:[#allocation9 + $0x2c] sm:$0xf]
        %v6260 = vld [vmem:[#allocation9 + $0x30] sm:$0xf]
        %v6261 = vld [vmem:[#allocation9 + $0x34] sm:$0xf]
        %v6262 = vld [vmem:[#allocation9 + $0x38] sm:$0xf]
        %v6263 = vld [vmem:[#allocation9 + $0x3c] sm:$0xf]
        %v6264 = vld [vmem:[#allocation9 + $0x40] sm:$0xf]
        %v6265 = vld [vmem:[#allocation9 + $0x44] sm:$0xf]
        %v6266 = vld [vmem:[#allocation9 + $0x48] sm:$0xf]
        %v6267 = vld [vmem:[#allocation9 + $0x4c] sm:$0xf]
        %v6268 = vld [vmem:[#allocation9 + $0x50] sm:$0xf]
        %v6269 = vld [vmem:[#allocation9 + $0x54] sm:$0xf]
        %v6270 = vld [vmem:[#allocation9 + $0x58] sm:$0xf]
        %v6271 = vld [vmem:[#allocation9 + $0x5c] sm:$0xf]
        %v6272 = vld [vmem:[#allocation9 + $0x60] sm:$0xf]
        %v6273 = vld [vmem:[#allocation9 + $0x64] sm:$0xf]
        %v6274 = vld [vmem:[#allocation9 + $0x68] sm:$0xf]
        %v6275 = vld [vmem:[#allocation9 + $0x6c] sm:$0xf]
        %v6276 = vld [vmem:[#allocation9 + $0x70] sm:$0xf]
        %v6277 = vld [vmem:[#allocation9 + $0x74] sm:$0xf]
        %v6278 = vld [vmem:[#allocation9 + $0x78] sm:$0xf]
        %v6279 = vld [vmem:[#allocation9 + $0x7c] sm:$0xf]
        %v6280 = vld [vmem:[#allocation9 + $0x80] sm:$0xf]
        %v6281 = vld [vmem:[#allocation9 + $0x84] sm:$0xf]
        %v6282 = vld [vmem:[#allocation9 + $0x88] sm:$0xf]
        %v6283 = vld [vmem:[#allocation9 + $0x8c] sm:$0xf]
        %v6284 = vld [vmem:[%s8] sm:$0x1]
        %v6286 = vlaneseq
        %v6287 = vshrl.u32 %v6286, 7
        %v6288 = vsub.s32 0, %v6287
        %v6289 = vrot.slane %v6284, %v6288
        %v6327 = vunpack.c.l.b16 %v6248
        %v6328 = vunpack.c.l.b16 %v6249
        %v6329 = vunpack.c.l.b16 %v6250
        %v6330 = vunpack.c.l.b16 %v6251
        %v6331 = vunpack.c.l.b16 %v6252
        %v6332 = vunpack.c.l.b16 %v6253
        %v6333 = vunpack.c.l.b16 %v6254
        %v6334 = vunpack.c.l.b16 %v6255
        %v6335 = vunpack.c.l.b16 %v6256
        %v6336 = vunpack.c.l.b16 %v6257
        %v6337 = vunpack.c.l.b16 %v6258
        %v6338 = vunpack.c.l.b16 %v6259
        %v6339 = vunpack.c.l.b16 %v6260
        %v6340 = vunpack.c.l.b16 %v6261
        %v6341 = vunpack.c.l.b16 %v6262
        %v6342 = vunpack.c.l.b16 %v6263
        %v6343 = vunpack.c.l.b16 %v6264
        %v6344 = vunpack.c.l.b16 %v6265
        %v6345 = vunpack.c.l.b16 %v6266
        %v6346 = vunpack.c.l.b16 %v6267
        %v6347 = vunpack.c.l.b16 %v6268
        %v6348 = vunpack.c.l.b16 %v6269
        %v6349 = vunpack.c.l.b16 %v6270
        %v6350 = vunpack.c.l.b16 %v6271
        %v6351 = vunpack.c.l.b16 %v6272
        %v6352 = vunpack.c.l.b16 %v6273
        %v6353 = vunpack.c.l.b16 %v6274
        %v6354 = vunpack.c.l.b16 %v6275
        %v6355 = vunpack.c.l.b16 %v6276
        %v6356 = vunpack.c.l.b16 %v6277
        %v6357 = vunpack.c.l.b16 %v6278
        %v6358 = vunpack.c.l.b16 %v6279
        %v6359 = vunpack.c.l.b16 %v6280
        %v6360 = vunpack.c.l.b16 %v6281
        %v6361 = vunpack.c.l.b16 %v6282
        %v6362 = vunpack.c.l.b16 %v6283
        %v6363 = vpack.c.b16 %v6328, %v6327
        %v6364 = vpack.c.b16 %v6330, %v6329
        %v6365 = vpack.c.b16 %v6332, %v6331
        %v6366 = vpack.c.b16 %v6334, %v6333
        %v6367 = vpack.c.b16 %v6336, %v6335
        %v6368 = vpack.c.b16 %v6338, %v6337
        %v6369 = vpack.c.b16 %v6340, %v6339
        %v6370 = vpack.c.b16 %v6342, %v6341
        %v6371 = vpack.c.b16 %v6344, %v6343
        %v6372 = vpack.c.b16 %v6346, %v6345
        %v6373 = vpack.c.b16 %v6348, %v6347
        %v6374 = vpack.c.b16 %v6350, %v6349
        %v6375 = vpack.c.b16 %v6352, %v6351
        %v6376 = vpack.c.b16 %v6354, %v6353
        %v6377 = vpack.c.b16 %v6356, %v6355
        %v6378 = vpack.c.b16 %v6358, %v6357
        %v6379 = vpack.c.b16 %v6360, %v6359
        %v6380 = vpack.c.b16 %v6362, %v6361
        %v6400 = vsel %vm450, %v6202, 0
        %v6403 = vsel %vm450, %v6205, 0
        %v6406 = vsel %vm450, %v6208, 0
        %v6409 = vsel %vm450, %v6211, 0
        %v6412 = vsel %vm450, %v6214, 0
        %v6415 = vsel %vm450, %v6217, 0
        %v6418 = vsel %vm450, %v6220, 0
        %v6421 = vsel %vm450, %v6223, 0
        %v6424 = vsel %vm450, %v6226, 0
        %v6427 = vsel %vm450, %v6229, 0
        %v6430 = vsel %vm450, %v6232, 0
        %v6433 = vsel %vm450, %v6235, 0
        %v6436 = vsel %vm450, %v6238, 0
        %v6439 = vsel %vm450, %v6241, 0
        %v6442 = vsel %vm450, %v6244, 0
        %v6445 = vsel %vm450, %v6247, 0
        %6447 = vmatprep.subr.bf16.mxu0 0
        %6448 = vmatpush1.bf16.msra.mxu0 %v6363
        %6449 = vmatprep.subr.bf16.mxu0 0
        %6450 = vmatpush1.bf16.msra.mxu0 %v6364
        %6451 = vmatprep.subr.bf16.mxu0 0
        %6452 = vmatpush1.bf16.msra.mxu0 %v6365
        %6453 = vmatprep.subr.bf16.mxu0 0
        %6454 = vmatpush1.bf16.msra.mxu0 %v6366
        %6455 = vmatprep.subr.bf16.mxu0 0
        %6456 = vmatpush1.bf16.msra.mxu0 %v6367
        %6457 = vmatprep.subr.bf16.mxu0 0
        %6458 = vmatpush1.bf16.msra.mxu0 %v6368
        %6459 = vmatprep.subr.bf16.mxu0 0
        %6460 = vmatpush1.bf16.msra.mxu0 %v6369
        %6461 = vmatprep.subr.bf16.mxu0 0
        %6462 = vmatpush1.bf16.msra.mxu0 %v6370
        %6463 = vmatprep.subr.bf16.mxu0 0
        %6464 = vmatpush1.bf16.msra.mxu0 %v6371
        %6465 = vmatprep.subr.bf16.mxu0 0
        %6466 = vmatpush1.bf16.msra.mxu0 %v6372
        %6467 = vmatprep.subr.bf16.mxu0 0
        %6468 = vmatpush1.bf16.msra.mxu0 %v6373
        %6469 = vmatprep.subr.bf16.mxu0 0
        %6470 = vmatpush1.bf16.msra.mxu0 %v6374
        %6471 = vmatprep.subr.bf16.mxu0 0
        %6472 = vmatpush1.bf16.msra.mxu0 %v6375
        %6473 = vmatprep.subr.bf16.mxu0 0
        %6474 = vmatpush1.bf16.msra.mxu0 %v6376
        %6475 = vmatprep.subr.bf16.mxu0 0
        %6476 = vmatpush1.bf16.msra.mxu0 %v6377
        %6477 = vmatprep.subr.bf16.mxu0 0
        %6478 = vmatpush1.bf16.msra.mxu0 %v6378
        %6479 = vmatprep.mubr.bf16.mxu0 %v6201
        %6480 = vmatmul.mubr.bf16.gmra.mrb[0].mxu0 %v6200
        %v6481 = vpop.f32.mrb[0].mxu0
        %v6482 = vadd.f32 %v6289, %v6481
        %v6483 = vpop.f32.mrb[0].mxu0
        %v6484 = vpop.f32.mrb[0].mxu0
        %v6485 = vadd.f32 %v6289, %v6484
        %v6486 = vpop.f32.mrb[0].mxu0
        %6487 = vmatprep.mubr.bf16.mxu0 %v6204
        %6488 = vmatmul.mubr.bf16.gmra.mrb[0].mxu0 %v6203
        %v6489 = vpop.f32.mrb[0].mxu0
        %v6490 = vadd.f32 %v6289, %v6489
        %v6491 = vpop.f32.mrb[0].mxu0
        %v6492 = vpop.f32.mrb[0].mxu0
        %v6493 = vadd.f32 %v6289, %v6492
        %v6494 = vpop.f32.mrb[0].mxu0
        %6495 = vmatprep.mubr.bf16.mxu0 %v6207
        %6496 = vmatmul.mubr.bf16.gmra.mrb[0].mxu0 %v6206
        %v6497 = vpop.f32.mrb[0].mxu0
        %v6498 = vadd.f32 %v6289, %v6497
        %v6499 = vpop.f32.mrb[0].mxu0
        %v6500 = vpop.f32.mrb[0].mxu0
        %v6501 = vadd.f32 %v6289, %v6500
        %v6502 = vpop.f32.mrb[0].mxu0
        %6503 = vmatprep.mubr.bf16.mxu0 %v6210
        %6504 = vmatmul.mubr.bf16.gmra.mrb[0].mxu0 %v6209
        %v6505 = vpop.f32.mrb[0].mxu0
        %v6506 = vadd.f32 %v6289, %v6505
        %v6507 = vpop.f32.mrb[0].mxu0
        %v6508 = vpop.f32.mrb[0].mxu0
        %v6509 = vadd.f32 %v6289, %v6508
        %v6510 = vpop.f32.mrb[0].mxu0
        %6511 = vmatprep.mubr.bf16.mxu0 %v6213
        %6512 = vmatmul.mubr.bf16.gmra.mrb[0].mxu0 %v6212
        %v6513 = vpop.f32.mrb[0].mxu0
        %v6514 = vadd.f32 %v6289, %v6513
        %v6515 = vpop.f32.mrb[0].mxu0
        %v6516 = vpop.f32.mrb[0].mxu0
        %v6517 = vadd.f32 %v6289, %v6516
        %v6518 = vpop.f32.mrb[0].mxu0
        %6519 = vmatprep.mubr.bf16.mxu0 %v6216
        %6520 = vmatmul.mubr.bf16.gmra.mrb[0].mxu0 %v6215
        %v6521 = vpop.f32.mrb[0].mxu0
        %v6522 = vadd.f32 %v6289, %v6521
        %v6523 = vpop.f32.mrb[0].mxu0
        %v6524 = vpop.f32.mrb[0].mxu0
        %v6525 = vadd.f32 %v6289, %v6524
        %v6526 = vpop.f32.mrb[0].mxu0
        %6527 = vmatprep.mubr.bf16.mxu0 %v6219
        %6528 = vmatmul.mubr.bf16.gmra.mrb[0].mxu0 %v6218
        %v6529 = vpop.f32.mrb[0].mxu0
        %v6530 = vadd.f32 %v6289, %v6529
        %v6531 = vpop.f32.mrb[0].mxu0
        %v6532 = vpop.f32.mrb[0].mxu0
        %v6533 = vadd.f32 %v6289, %v6532
        %v6534 = vpop.f32.mrb[0].mxu0
        %6535 = vmatprep.mubr.bf16.mxu0 %v6222
        %6536 = vmatmul.mubr.bf16.gmra.mrb[0].mxu0 %v6221
        %v6537 = vpop.f32.mrb[0].mxu0
        %v6538 = vadd.f32 %v6289, %v6537
        %v6539 = vpop.f32.mrb[0].mxu0
        %v6540 = vpop.f32.mrb[0].mxu0
        %v6541 = vadd.f32 %v6289, %v6540
        %v6542 = vpop.f32.mrb[0].mxu0
        %6543 = vmatprep.mubr.bf16.mxu0 %v6225
        %6544 = vmatmul.mubr.bf16.gmra.mrb[0].mxu0 %v6224
        %v6545 = vpop.f32.mrb[0].mxu0
        %v6546 = vadd.f32 %v6289, %v6545
        %v6547 = vpop.f32.mrb[0].mxu0
        %v6548 = vpop.f32.mrb[0].mxu0
        %v6549 = vadd.f32 %v6289, %v6548
        %v6550 = vpop.f32.mrb[0].mxu0
        %6551 = vmatprep.mubr.bf16.mxu0 %v6228
        %6552 = vmatmul.mubr.bf16.gmra.mrb[0].mxu0 %v6227
        %v6553 = vpop.f32.mrb[0].mxu0
        %v6554 = vadd.f32 %v6289, %v6553
        %v6555 = vpop.f32.mrb[0].mxu0
        %v6556 = vpop.f32.mrb[0].mxu0
        %v6557 = vadd.f32 %v6289, %v6556
        %v6558 = vpop.f32.mrb[0].mxu0
        %6559 = vmatprep.mubr.bf16.mxu0 %v6231
        %6560 = vmatmul.mubr.bf16.gmra.mrb[0].mxu0 %v6230
        %v6561 = vpop.f32.mrb[0].mxu0
        %v6562 = vadd.f32 %v6289, %v6561
        %v6563 = vpop.f32.mrb[0].mxu0
        %v6564 = vpop.f32.mrb[0].mxu0
        %v6565 = vadd.f32 %v6289, %v6564
        %v6566 = vpop.f32.mrb[0].mxu0
        %6567 = vmatprep.mubr.bf16.mxu0 %v6234
        %6568 = vmatmul.mubr.bf16.gmra.mrb[0].mxu0 %v6233
        %v6569 = vpop.f32.mrb[0].mxu0
        %v6570 = vadd.f32 %v6289, %v6569
        %v6571 = vpop.f32.mrb[0].mxu0
        %v6572 = vpop.f32.mrb[0].mxu0
        %v6573 = vadd.f32 %v6289, %v6572
        %v6574 = vpop.f32.mrb[0].mxu0
        %6575 = vmatprep.mubr.bf16.mxu0 %v6237
        %6576 = vmatmul.mubr.bf16.gmra.mrb[0].mxu0 %v6236
        %v6577 = vpop.f32.mrb[0].mxu0
        %v6578 = vadd.f32 %v6289, %v6577
        %v6579 = vpop.f32.mrb[0].mxu0
        %v6580 = vpop.f32.mrb[0].mxu0
        %v6581 = vadd.f32 %v6289, %v6580
        %v6582 = vpop.f32.mrb[0].mxu0
        %6583 = vmatprep.mubr.bf16.mxu0 %v6240
        %6584 = vmatmul.mubr.bf16.gmra.mrb[0].mxu0 %v6239
        %v6585 = vpop.f32.mrb[0].mxu0
        %v6586 = vadd.f32 %v6289, %v6585
        %v6587 = vpop.f32.mrb[0].mxu0
        %v6588 = vpop.f32.mrb[0].mxu0
        %v6589 = vadd.f32 %v6289, %v6588
        %v6590 = vpop.f32.mrb[0].mxu0
        %6591 = vmatprep.mubr.bf16.mxu0 %v6243
        %6592 = vmatmul.mubr.bf16.gmra.mrb[0].mxu0 %v6242
        %v6593 = vpop.f32.mrb[0].mxu0
        %v6594 = vadd.f32 %v6289, %v6593
        %v6595 = vpop.f32.mrb[0].mxu0
        %v6596 = vpop.f32.mrb[0].mxu0
        %v6597 = vadd.f32 %v6289, %v6596
        %v6598 = vpop.f32.mrb[0].mxu0
        %6599 = vmatprep.mubr.bf16.mxu0 %v6246
        %6600 = vmatmul.mubr.bf16.gmra.mrb[0].mxu0 %v6245
        %v6601 = vpop.f32.mrb[0].mxu0
        %v6602 = vadd.f32 %v6289, %v6601
        %v6603 = vpop.f32.mrb[0].mxu0
        %v6604 = vpop.f32.mrb[0].mxu0
        %v6605 = vadd.f32 %v6289, %v6604
        %v6606 = vpop.f32.mrb[0].mxu0
        %6607 = vdwg.mxu0
        %6608 = vmatprep.subr.bf16.mxu0 0
        %6609 = vmatpush1.bf16.msra.mxu0 %v6379
        %6610 = vmatprep.subr.bf16.mxu0 0
        %6611 = vmatpush1.bf16.msra.mxu0 %v6380
        %6612 = vmatprep.subr.bf16.mxu0 0
        %6613 = vmatpush1.bf16.msra.mxu0 0
        %6614 = vmatprep.subr.bf16.mxu0 0
        %6615 = vmatpush1.bf16.msra.mxu0 0
        %6616 = vmatprep.subr.bf16.mxu0 0
        %6617 = vmatpush1.bf16.msra.mxu0 0
        %6618 = vmatprep.subr.bf16.mxu0 0
        %6619 = vmatpush1.bf16.msra.mxu0 0
        %6620 = vmatprep.subr.bf16.mxu0 0
        %6621 = vmatpush1.bf16.msra.mxu0 0
        %6622 = vmatprep.subr.bf16.mxu0 0
        %6623 = vmatpush1.bf16.msra.mxu0 0
        %6624 = vmatprep.subr.bf16.mxu0 0
        %6625 = vmatpush1.bf16.msra.mxu0 0
        %6626 = vmatprep.subr.bf16.mxu0 0
        %6627 = vmatpush1.bf16.msra.mxu0 0
        %6628 = vmatprep.subr.bf16.mxu0 0
        %6629 = vmatpush1.bf16.msra.mxu0 0
        %6630 = vmatprep.subr.bf16.mxu0 0
        %6631 = vmatpush1.bf16.msra.mxu0 0
        %6632 = vmatprep.subr.bf16.mxu0 0
        %6633 = vmatpush1.bf16.msra.mxu0 0
        %6634 = vmatprep.subr.bf16.mxu0 0
        %6635 = vmatpush1.bf16.msra.mxu0 0
        %6636 = vmatprep.subr.bf16.mxu0 0
        %6637 = vmatpush1.bf16.msra.mxu0 0
        %6638 = vmatprep.subr.bf16.mxu0 0
        %6639 = vmatpush1.bf16.msra.mxu0 0
        %6640 = vmatprep.mubr.bf16.mxu0 0
        %6641 = vmatmul.mubr.bf16.gmra.mrb[0].mxu0 %v6400
        %v6642 = vpop.f32.mrb[0].mxu0
        %v6643 = vadd.f32 %v6482, %v6642
        %v6644 = vpop.f32.mrb[0].mxu0
        %v6645 = vpop.f32.mrb[0].mxu0
        %v6646 = vadd.f32 %v6485, %v6645
        %v6647 = vpop.f32.mrb[0].mxu0
        %6648 = vmatprep.mubr.bf16.mxu0 0
        %6649 = vmatmul.mubr.bf16.gmra.mrb[0].mxu0 %v6403
        %v6650 = vpop.f32.mrb[0].mxu0
        %v6651 = vadd.f32 %v6490, %v6650
        %v6652 = vpop.f32.mrb[0].mxu0
        %v6653 = vpop.f32.mrb[0].mxu0
        %v6654 = vadd.f32 %v6493, %v6653
        %v6655 = vpop.f32.mrb[0].mxu0
        %6656 = vmatprep.mubr.bf16.mxu0 0
        %6657 = vmatmul.mubr.bf16.gmra.mrb[0].mxu0 %v6406
        %v6658 = vpop.f32.mrb[0].mxu0
        %v6659 = vadd.f32 %v6498, %v6658
        %v6660 = vpop.f32.mrb[0].mxu0
        %v6661 = vpop.f32.mrb[0].mxu0
        %v6662 = vadd.f32 %v6501, %v6661
        %v6663 = vpop.f32.mrb[0].mxu0
        %6664 = vmatprep.mubr.bf16.mxu0 0
        %6665 = vmatmul.mubr.bf16.gmra.mrb[0].mxu0 %v6409
        %v6666 = vpop.f32.mrb[0].mxu0
        %v6667 = vadd.f32 %v6506, %v6666
        %v6668 = vpop.f32.mrb[0].mxu0
        %v6669 = vpop.f32.mrb[0].mxu0
        %v6670 = vadd.f32 %v6509, %v6669
        %v6671 = vpop.f32.mrb[0].mxu0
        %6672 = vmatprep.mubr.bf16.mxu0 0
        %6673 = vmatmul.mubr.bf16.gmra.mrb[0].mxu0 %v6412
        %v6674 = vpop.f32.mrb[0].mxu0
        %v6675 = vadd.f32 %v6514, %v6674
        %v6676 = vpop.f32.mrb[0].mxu0
        %v6677 = vpop.f32.mrb[0].mxu0
        %v6678 = vadd.f32 %v6517, %v6677
        %v6679 = vpop.f32.mrb[0].mxu0
        %6680 = vmatprep.mubr.bf16.mxu0 0
        %6681 = vmatmul.mubr.bf16.gmra.mrb[0].mxu0 %v6415
        %v6682 = vpop.f32.mrb[0].mxu0
        %v6683 = vadd.f32 %v6522, %v6682
        %v6684 = vpop.f32.mrb[0].mxu0
        %v6685 = vpop.f32.mrb[0].mxu0
        %v6686 = vadd.f32 %v6525, %v6685
        %v6687 = vpop.f32.mrb[0].mxu0
        %6688 = vmatprep.mubr.bf16.mxu0 0
        %6689 = vmatmul.mubr.bf16.gmra.mrb[0].mxu0 %v6418
        %v6690 = vpop.f32.mrb[0].mxu0
        %v6691 = vadd.f32 %v6530, %v6690
        %v6692 = vpop.f32.mrb[0].mxu0
        %v6693 = vpop.f32.mrb[0].mxu0
        %v6694 = vadd.f32 %v6533, %v6693
        %v6695 = vpop.f32.mrb[0].mxu0
        %6696 = vmatprep.mubr.bf16.mxu0 0
        %6697 = vmatmul.mubr.bf16.gmra.mrb[0].mxu0 %v6421
        %v6698 = vpop.f32.mrb[0].mxu0
        %v6699 = vadd.f32 %v6538, %v6698
        %v6700 = vpop.f32.mrb[0].mxu0
        %v6701 = vpop.f32.mrb[0].mxu0
        %v6702 = vadd.f32 %v6541, %v6701
        %v6703 = vpop.f32.mrb[0].mxu0
        %6704 = vmatprep.mubr.bf16.mxu0 0
        %6705 = vmatmul.mubr.bf16.gmra.mrb[0].mxu0 %v6424
        %v6706 = vpop.f32.mrb[0].mxu0
        %v6707 = vadd.f32 %v6546, %v6706
        %v6708 = vpop.f32.mrb[0].mxu0
        %v6709 = vpop.f32.mrb[0].mxu0
        %v6710 = vadd.f32 %v6549, %v6709
        %v6711 = vpop.f32.mrb[0].mxu0
        %6712 = vmatprep.mubr.bf16.mxu0 0
        %6713 = vmatmul.mubr.bf16.gmra.mrb[0].mxu0 %v6427
        %v6714 = vpop.f32.mrb[0].mxu0
        %v6715 = vadd.f32 %v6554, %v6714
        %v6716 = vpop.f32.mrb[0].mxu0
        %v6717 = vpop.f32.mrb[0].mxu0
        %v6718 = vadd.f32 %v6557, %v6717
        %v6719 = vpop.f32.mrb[0].mxu0
        %6720 = vmatprep.mubr.bf16.mxu0 0
        %6721 = vmatmul.mubr.bf16.gmra.mrb[0].mxu0 %v6430
        %v6722 = vpop.f32.mrb[0].mxu0
        %v6723 = vadd.f32 %v6562, %v6722
        %v6724 = vpop.f32.mrb[0].mxu0
        %v6725 = vpop.f32.mrb[0].mxu0
        %v6726 = vadd.f32 %v6565, %v6725
        %v6727 = vpop.f32.mrb[0].mxu0
        %6728 = vmatprep.mubr.bf16.mxu0 0
        %6729 = vmatmul.mubr.bf16.gmra.mrb[0].mxu0 %v6433
        %v6730 = vpop.f32.mrb[0].mxu0
        %v6731 = vadd.f32 %v6570, %v6730
        %v6732 = vpop.f32.mrb[0].mxu0
        %v6733 = vpop.f32.mrb[0].mxu0
        %v6734 = vadd.f32 %v6573, %v6733
        %v6735 = vpop.f32.mrb[0].mxu0
        %6736 = vmatprep.mubr.bf16.mxu0 0
        %6737 = vmatmul.mubr.bf16.gmra.mrb[0].mxu0 %v6436
        %v6738 = vpop.f32.mrb[0].mxu0
        %v6739 = vadd.f32 %v6578, %v6738
        %v6740 = vpop.f32.mrb[0].mxu0
        %v6741 = vpop.f32.mrb[0].mxu0
        %v6742 = vadd.f32 %v6581, %v6741
        %v6743 = vpop.f32.mrb[0].mxu0
        %6744 = vmatprep.mubr.bf16.mxu0 0
        %6745 = vmatmul.mubr.bf16.gmra.mrb[0].mxu0 %v6439
        %v6746 = vpop.f32.mrb[0].mxu0
        %v6747 = vadd.f32 %v6586, %v6746
        %v6748 = vpop.f32.mrb[0].mxu0
        %v6749 = vpop.f32.mrb[0].mxu0
        %v6750 = vadd.f32 %v6589, %v6749
        %v6751 = vpop.f32.mrb[0].mxu0
        %6752 = vmatprep.mubr.bf16.mxu0 0
        %6753 = vmatmul.mubr.bf16.gmra.mrb[0].mxu0 %v6442
        %v6754 = vpop.f32.mrb[0].mxu0
        %v6755 = vadd.f32 %v6594, %v6754
        %v6756 = vpop.f32.mrb[0].mxu0
        %v6757 = vpop.f32.mrb[0].mxu0
        %v6758 = vadd.f32 %v6597, %v6757
        %v6759 = vpop.f32.mrb[0].mxu0
        %6760 = vmatprep.mubr.bf16.mxu0 0
        %6761 = vmatmul.mubr.bf16.gmra.mrb[0].mxu0 %v6445
        %v6762 = vpop.f32.mrb[0].mxu0
        %v6763 = vadd.f32 %v6602, %v6762
        %v6764 = vpop.f32.mrb[0].mxu0
        %v6765 = vpop.f32.mrb[0].mxu0
        %v6766 = vadd.f32 %v6605, %v6765
        %v6767 = vpop.f32.mrb[0].mxu0
        %6768 = vdwg.mxu0
        %v6769 = vmax.f32 %v6643, 0.0
        %v6770 = vmax.f32 %v6646, 0.0
        %v6771 = vmax.f32 %v6651, 0.0
        %v6772 = vmax.f32 %v6654, 0.0
        %v6773 = vmax.f32 %v6659, 0.0
        %v6774 = vmax.f32 %v6662, 0.0
        %v6775 = vmax.f32 %v6667, 0.0
        %v6776 = vmax.f32 %v6670, 0.0
        %v6777 = vmax.f32 %v6675, 0.0
        %v6778 = vmax.f32 %v6678, 0.0
        %v6779 = vmax.f32 %v6683, 0.0
        %v6780 = vmax.f32 %v6686, 0.0
        %v6781 = vmax.f32 %v6691, 0.0
        %v6782 = vmax.f32 %v6694, 0.0
        %v6783 = vmax.f32 %v6699, 0.0
        %v6784 = vmax.f32 %v6702, 0.0
        %v6785 = vmax.f32 %v6707, 0.0
        %v6786 = vmax.f32 %v6710, 0.0
        %v6787 = vmax.f32 %v6715, 0.0
        %v6788 = vmax.f32 %v6718, 0.0
        %v6789 = vmax.f32 %v6723, 0.0
        %v6790 = vmax.f32 %v6726, 0.0
        %v6791 = vmax.f32 %v6731, 0.0
        %v6792 = vmax.f32 %v6734, 0.0
        %v6793 = vmax.f32 %v6739, 0.0
        %v6794 = vmax.f32 %v6742, 0.0
        %v6795 = vmax.f32 %v6747, 0.0
        %v6796 = vmax.f32 %v6750, 0.0
        %v6797 = vmax.f32 %v6755, 0.0
        %v6798 = vmax.f32 %v6758, 0.0
        %v6799 = vmax.f32 %v6763, 0.0
        %v6800 = vmax.f32 %v6766, 0.0
        %6833 = vrot.lane.b32.xlu0 %v2911, 32
        %v6834 = vpop.permute.xlu0 %6833
        %6835 = vrot.lane.b32.xlu0 %v2912, 32
        %v6836 = vpop.permute.xlu0 %6835
        %6837 = vrot.lane.b32.xlu0 %v2913, 32
        %v6838 = vpop.permute.xlu0 %6837
        %6839 = vrot.lane.b32.xlu0 %v2914, 32
        %v6840 = vpop.permute.xlu0 %6839
        %6841 = vrot.lane.b32.xlu0 %v2915, 32
        %v6842 = vpop.permute.xlu0 %6841
        %6843 = vrot.lane.b32.xlu0 %v2916, 32
        %v6844 = vpop.permute.xlu0 %6843
        %6845 = vrot.lane.b32.xlu0 %v2917, 32
        %v6846 = vpop.permute.xlu0 %6845
        %6847 = vrot.lane.b32.xlu0 %v2918, 32
        %v6848 = vpop.permute.xlu0 %6847
        %6849 = vrot.lane.b32.xlu0 %v2919, 32
        %v6850 = vpop.permute.xlu0 %6849
        %6851 = vrot.lane.b32.xlu0 %v2920, 32
        %v6852 = vpop.permute.xlu0 %6851
        %6853 = vrot.lane.b32.xlu0 %v2921, 32
        %v6854 = vpop.permute.xlu0 %6853
        %6855 = vrot.lane.b32.xlu0 %v2922, 32
        %v6856 = vpop.permute.xlu0 %6855
        %6857 = vrot.lane.b32.xlu0 %v2923, 32
        %v6858 = vpop.permute.xlu0 %6857
        %6859 = vrot.lane.b32.xlu0 %v2924, 32
        %v6860 = vpop.permute.xlu0 %6859
        %6861 = vrot.lane.b32.xlu0 %v2925, 32
        %v6862 = vpop.permute.xlu0 %6861
        %6863 = vrot.lane.b32.xlu0 %v2926, 32
        %v6864 = vpop.permute.xlu0 %6863
        %6865 = vrot.lane.b32.xlu0 %v2927, 32
        %v6866 = vpop.permute.xlu0 %6865
        %6867 = vrot.lane.b32.xlu0 %v2928, 32
        %v6868 = vpop.permute.xlu0 %6867
        %6869 = vrot.lane.b32.xlu0 %v2929, 32
        %v6870 = vpop.permute.xlu0 %6869
        %6871 = vrot.lane.b32.xlu0 %v2930, 32
        %v6872 = vpop.permute.xlu0 %6871
        %6873 = vrot.lane.b32.xlu0 %v2931, 32
        %v6874 = vpop.permute.xlu0 %6873
        %6875 = vrot.lane.b32.xlu0 %v2932, 32
        %v6876 = vpop.permute.xlu0 %6875
        %6877 = vrot.lane.b32.xlu0 %v2933, 32
        %v6878 = vpop.permute.xlu0 %6877
        %6879 = vrot.lane.b32.xlu0 %v2934, 32
        %v6880 = vpop.permute.xlu0 %6879
        %6881 = vrot.lane.b32.xlu0 %v2935, 32
        %v6882 = vpop.permute.xlu0 %6881
        %6883 = vrot.lane.b32.xlu0 %v2936, 32
        %v6884 = vpop.permute.xlu0 %6883
        %6885 = vrot.lane.b32.xlu0 %v2937, 32
        %v6886 = vpop.permute.xlu0 %6885
        %6887 = vrot.lane.b32.xlu0 %v2938, 32
        %v6888 = vpop.permute.xlu0 %6887
        %6889 = vrot.lane.b32.xlu0 %v2939, 32
        %v6890 = vpop.permute.xlu0 %6889
        %6891 = vrot.lane.b32.xlu0 %v2940, 32
        %v6892 = vpop.permute.xlu0 %6891
        %6893 = vrot.lane.b32.xlu0 %v2941, 32
        %v6894 = vpop.permute.xlu0 %6893
        %6895 = vrot.lane.b32.xlu0 %v2942, 32
        %v6896 = vpop.permute.xlu0 %6895
        %6961 = vrot.lane.b32.xlu0 %v6769, 64
        %v6962 = vpop.permute.xlu0 %6961
        %6963 = vrot.lane.b32.xlu0 %v6770, 64
        %v6964 = vpop.permute.xlu0 %6963
        %6965 = vrot.lane.b32.xlu0 %v6771, 64
        %v6966 = vpop.permute.xlu0 %6965
        %6967 = vrot.lane.b32.xlu0 %v6772, 64
        %v6968 = vpop.permute.xlu0 %6967
        %6969 = vrot.lane.b32.xlu0 %v6773, 64
        %v6970 = vpop.permute.xlu0 %6969
        %6971 = vrot.lane.b32.xlu0 %v6774, 64
        %v6972 = vpop.permute.xlu0 %6971
        %6973 = vrot.lane.b32.xlu0 %v6775, 64
        %v6974 = vpop.permute.xlu0 %6973
        %6975 = vrot.lane.b32.xlu0 %v6776, 64
        %v6976 = vpop.permute.xlu0 %6975
        %6977 = vrot.lane.b32.xlu0 %v6777, 64
        %v6978 = vpop.permute.xlu0 %6977
        %6979 = vrot.lane.b32.xlu0 %v6778, 64
        %v6980 = vpop.permute.xlu0 %6979
        %6981 = vrot.lane.b32.xlu0 %v6779, 64
        %v6982 = vpop.permute.xlu0 %6981
        %6983 = vrot.lane.b32.xlu0 %v6780, 64
        %v6984 = vpop.permute.xlu0 %6983
        %6985 = vrot.lane.b32.xlu0 %v6781, 64
        %v6986 = vpop.permute.xlu0 %6985
        %6987 = vrot.lane.b32.xlu0 %v6782, 64
        %v6988 = vpop.permute.xlu0 %6987
        %6989 = vrot.lane.b32.xlu0 %v6783, 64
        %v6990 = vpop.permute.xlu0 %6989
        %6991 = vrot.lane.b32.xlu0 %v6784, 64
        %v6992 = vpop.permute.xlu0 %6991
        %6993 = vrot.lane.b32.xlu0 %v6785, 64
        %v6994 = vpop.permute.xlu0 %6993
        %6995 = vrot.lane.b32.xlu0 %v6786, 64
        %v6996 = vpop.permute.xlu0 %6995
        %6997 = vrot.lane.b32.xlu0 %v6787, 64
        %v6998 = vpop.permute.xlu0 %6997
        %6999 = vrot.lane.b32.xlu0 %v6788, 64
        %v7000 = vpop.permute.xlu0 %6999
        %7001 = vrot.lane.b32.xlu0 %v6789, 64
        %v7002 = vpop.permute.xlu0 %7001
        %7003 = vrot.lane.b32.xlu0 %v6790, 64
        %v7004 = vpop.permute.xlu0 %7003
        %7005 = vrot.lane.b32.xlu0 %v6791, 64
        %v7006 = vpop.permute.xlu0 %7005
        %7007 = vrot.lane.b32.xlu0 %v6792, 64
        %v7008 = vpop.permute.xlu0 %7007
        %7009 = vrot.lane.b32.xlu0 %v6793, 64
        %v7010 = vpop.permute.xlu0 %7009
        %7011 = vrot.lane.b32.xlu0 %v6794, 64
        %v7012 = vpop.permute.xlu0 %7011
        %7013 = vrot.lane.b32.xlu0 %v6795, 64
        %v7014 = vpop.permute.xlu0 %7013
        %7015 = vrot.lane.b32.xlu0 %v6796, 64
        %v7016 = vpop.permute.xlu0 %7015
        %7017 = vrot.lane.b32.xlu0 %v6797, 64
        %v7018 = vpop.permute.xlu0 %7017
        %7019 = vrot.lane.b32.xlu0 %v6798, 64
        %v7020 = vpop.permute.xlu0 %7019
        %7021 = vrot.lane.b32.xlu0 %v6799, 64
        %v7022 = vpop.permute.xlu0 %7021
        %7023 = vrot.lane.b32.xlu0 %v6800, 64
        %v7024 = vpop.permute.xlu0 %7023
        %v7057 = vsel %vm450, %v898, %v6834
        %v7058 = vsel %vm450, %v899, %v6836
        %v7059 = vsel %vm450, %v900, %v6838
        %v7060 = vsel %vm450, %v901, %v6840
        %v7061 = vsel %vm450, %v902, %v6842
        %v7062 = vsel %vm450, %v903, %v6844
        %v7063 = vsel %vm450, %v904, %v6846
        %v7064 = vsel %vm450, %v905, %v6848
        %v7065 = vsel %vm450, %v906, %v6850
        %v7066 = vsel %vm450, %v907, %v6852
        %v7067 = vsel %vm450, %v908, %v6854
        %v7068 = vsel %vm450, %v909, %v6856
        %v7069 = vsel %vm450, %v910, %v6858
        %v7070 = vsel %vm450, %v911, %v6860
        %v7071 = vsel %vm450, %v912, %v6862
        %v7072 = vsel %vm450, %v913, %v6864
        %v7073 = vsel %vm450, %v914, %v6866
        %v7074 = vsel %vm450, %v915, %v6868
        %v7075 = vsel %vm450, %v916, %v6870
        %v7076 = vsel %vm450, %v917, %v6872
        %v7077 = vsel %vm450, %v918, %v6874
        %v7078 = vsel %vm450, %v919, %v6876
        %v7079 = vsel %vm450, %v920, %v6878
        %v7080 = vsel %vm450, %v921, %v6880
        %v7081 = vsel %vm450, %v922, %v6882
        %v7082 = vsel %vm450, %v923, %v6884
        %v7083 = vsel %vm450, %v924, %v6886
        %v7084 = vsel %vm450, %v925, %v6888
        %v7085 = vsel %vm450, %v926, %v6890
        %v7086 = vsel %vm450, %v927, %v6892
        %v7087 = vsel %vm450, %v928, %v6894
        %v7088 = vsel %vm450, %v929, %v6896
        %v7089 = vsel %vm2180, %v7057, %v6962
        %v7090 = vsel %vm2180, %v7058, %v6964
        %v7091 = vsel %vm2180, %v7059, %v6966
        %v7092 = vsel %vm2180, %v7060, %v6968
        %v7093 = vsel %vm2180, %v7061, %v6970
        %v7094 = vsel %vm2180, %v7062, %v6972
        %v7095 = vsel %vm2180, %v7063, %v6974
        %v7096 = vsel %vm2180, %v7064, %v6976
        %v7097 = vsel %vm2180, %v7065, %v6978
        %v7098 = vsel %vm2180, %v7066, %v6980
        %v7099 = vsel %vm2180, %v7067, %v6982
        %v7100 = vsel %vm2180, %v7068, %v6984
        %v7101 = vsel %vm2180, %v7069, %v6986
        %v7102 = vsel %vm2180, %v7070, %v6988
        %v7103 = vsel %vm2180, %v7071, %v6990
        %v7104 = vsel %vm2180, %v7072, %v6992
        %v7105 = vsel %vm2180, %v7073, %v6994
        %v7106 = vsel %vm2180, %v7074, %v6996
        %v7107 = vsel %vm2180, %v7075, %v6998
        %v7108 = vsel %vm2180, %v7076, %v7000
        %v7109 = vsel %vm2180, %v7077, %v7002
        %v7110 = vsel %vm2180, %v7078, %v7004
        %v7111 = vsel %vm2180, %v7079, %v7006
        %v7112 = vsel %vm2180, %v7080, %v7008
        %v7113 = vsel %vm2180, %v7081, %v7010
        %v7114 = vsel %vm2180, %v7082, %v7012
        %v7115 = vsel %vm2180, %v7083, %v7014
        %v7116 = vsel %vm2180, %v7084, %v7016
        %v7117 = vsel %vm2180, %v7085, %v7018
        %v7118 = vsel %vm2180, %v7086, %v7020
        %v7119 = vsel %vm2180, %v7087, %v7022
        %v7120 = vsel %vm2180, %v7088, %v7024
        %v7121 = vpack.c.bf16 %v7090, %v7089
        %v7122 = vpack.c.bf16 %v7092, %v7091
        %v7123 = vpack.c.bf16 %v7094, %v7093
        %v7124 = vpack.c.bf16 %v7096, %v7095
        %v7125 = vpack.c.bf16 %v7098, %v7097
        %v7126 = vpack.c.bf16 %v7100, %v7099
        %v7127 = vpack.c.bf16 %v7102, %v7101
        %v7128 = vpack.c.bf16 %v7104, %v7103
        %v7129 = vpack.c.bf16 %v7106, %v7105
        %v7130 = vpack.c.bf16 %v7108, %v7107
        %v7131 = vpack.c.bf16 %v7110, %v7109
        %v7132 = vpack.c.bf16 %v7112, %v7111
        %v7133 = vpack.c.bf16 %v7114, %v7113
        %v7134 = vpack.c.bf16 %v7116, %v7115
        %v7135 = vpack.c.bf16 %v7118, %v7117
        %v7136 = vpack.c.bf16 %v7120, %v7119
        %v7137 = vld [vmem:[%s9] sm:$0xff]
        %v7138 = vld [vmem:[%s9 + $0x8] sm:$0xff]
        %v7139 = vld [vmem:[%s9 + $0x10] sm:$0xff]
        %v7140 = vld [vmem:[%s9 + $0x18] sm:$0xff]
        %v7141 = vld [vmem:[%s9 + $0x20] sm:$0xff]
        %v7142 = vld [vmem:[%s9 + $0x28] sm:$0xff]
        %v7143 = vld [vmem:[%s9 + $0x30] sm:$0xff]
        %v7144 = vld [vmem:[%s9 + $0x38] sm:$0xff]
        %v7145 = vld [vmem:[%s9 + $0x40] sm:$0xff]
        %v7146 = vld [vmem:[%s9 + $0x48] sm:$0xff]
        %v7147 = vld [vmem:[%s9 + $0x50] sm:$0xff]
        %v7148 = vld [vmem:[%s9 + $0x58] sm:$0xff]
        %v7149 = vld [vmem:[%s10] sm:$0x3]
        %v7151 = vlaneseq
        %v7152 = vshrl.u32 %v7151, 7
        %v7153 = vsub.s32 0, %v7152
        %v7154 = vrot.slane %v7149, %v7153
        %v7155 = vlaneseq
        %v7156 = vshrl.u32 %v7155, 7
        %v7157 = vsub.s32 1, %v7156
        %v7158 = vrot.slane %v7149, %v7157
        %v7173 = vunpack.c.l.b16 %v7137
        %v7174 = vunpack.c.h.b16 %v7137
        %v7175 = vunpack.c.l.b16 %v7138
        %v7176 = vunpack.c.h.b16 %v7138
        %v7177 = vunpack.c.l.b16 %v7139
        %v7178 = vunpack.c.h.b16 %v7139
        %v7179 = vunpack.c.l.b16 %v7140
        %v7180 = vunpack.c.h.b16 %v7140
        %v7181 = vunpack.c.l.b16 %v7141
        %v7182 = vunpack.c.h.b16 %v7141
        %v7183 = vunpack.c.l.b16 %v7142
        %v7184 = vunpack.c.h.b16 %v7142
        %v7185 = vunpack.c.l.b16 %v7143
        %v7186 = vunpack.c.h.b16 %v7143
        %v7187 = vunpack.c.l.b16 %v7144
        %v7188 = vunpack.c.h.b16 %v7144
        %v7189 = vunpack.c.l.b16 %v7145
        %v7190 = vunpack.c.h.b16 %v7145
        %v7191 = vunpack.c.l.b16 %v7146
        %v7192 = vunpack.c.h.b16 %v7146
        %v7193 = vunpack.c.l.b16 %v7147
        %v7194 = vunpack.c.h.b16 %v7147
        %v7195 = vunpack.c.l.b16 %v7148
        %v7196 = vunpack.c.h.b16 %v7148
        %v7197 = vpack.c.b16 %v7175, %v7173
        %v7198 = vpack.c.b16 %v7176, %v7174
        %v7199 = vpack.c.b16 %v7179, %v7177
        %v7200 = vpack.c.b16 %v7180, %v7178
        %v7201 = vpack.c.b16 %v7183, %v7181
        %v7202 = vpack.c.b16 %v7184, %v7182
        %v7203 = vpack.c.b16 %v7187, %v7185
        %v7204 = vpack.c.b16 %v7188, %v7186
        %v7205 = vpack.c.b16 %v7191, %v7189
        %v7206 = vpack.c.b16 %v7192, %v7190
        %v7207 = vpack.c.b16 %v7195, %v7193
        %v7208 = vpack.c.b16 %v7196, %v7194
        %v7222 = vsel %vm2213, %v7121, 0
        %v7225 = vsel %vm2213, %v7122, 0
        %v7228 = vsel %vm2213, %v7123, 0
        %v7231 = vsel %vm2213, %v7124, 0
        %v7234 = vsel %vm2213, %v7125, 0
        %v7237 = vsel %vm2213, %v7126, 0
        %v7240 = vsel %vm2213, %v7127, 0
        %v7243 = vsel %vm2213, %v7128, 0
        %v7246 = vsel %vm2213, %v7129, 0
        %v7249 = vsel %vm2213, %v7130, 0
        %v7252 = vsel %vm2213, %v7131, 0
        %v7255 = vsel %vm2213, %v7132, 0
        %v7258 = vsel %vm2213, %v7133, 0
        %v7261 = vsel %vm2213, %v7134, 0
        %v7264 = vsel %vm2213, %v7135, 0
        %v7267 = vsel %vm2213, %v7136, 0
        %7269 = vmatprep.subr.bf16.mxu0 %v7198
        %7270 = vmatpush1.bf16.msra.mxu0 %v7197
        %7271 = vmatprep.subr.bf16.mxu0 %v7200
        %7272 = vmatpush1.bf16.msra.mxu0 %v7199
        %7273 = vmatprep.subr.bf16.mxu0 %v7202
        %7274 = vmatpush1.bf16.msra.mxu0 %v7201
        %7275 = vmatprep.subr.bf16.mxu0 %v7204
        %7276 = vmatpush1.bf16.msra.mxu0 %v7203
        %7277 = vmatprep.subr.bf16.mxu0 %v7206
        %7278 = vmatpush1.bf16.msra.mxu0 %v7205
        %7279 = vmatprep.subr.bf16.mxu0 %v7208
        %7280 = vmatpush1.bf16.msra.mxu0 %v7207
        %7281 = vmatprep.subr.bf16.mxu0 0
        %7282 = vmatpush1.bf16.msra.mxu0 0
        %7283 = vmatprep.subr.bf16.mxu0 0
        %7284 = vmatpush1.bf16.msra.mxu0 0
        %7285 = vmatprep.subr.bf16.mxu0 0
        %7286 = vmatpush1.bf16.msra.mxu0 0
        %7287 = vmatprep.subr.bf16.mxu0 0
        %7288 = vmatpush1.bf16.msra.mxu0 0
        %7289 = vmatprep.subr.bf16.mxu0 0
        %7290 = vmatpush1.bf16.msra.mxu0 0
        %7291 = vmatprep.subr.bf16.mxu0 0
        %7292 = vmatpush1.bf16.msra.mxu0 0
        %7293 = vmatprep.subr.bf16.mxu0 0
        %7294 = vmatpush1.bf16.msra.mxu0 0
        %7295 = vmatprep.subr.bf16.mxu0 0
        %7296 = vmatpush1.bf16.msra.mxu0 0
        %7297 = vmatprep.subr.bf16.mxu0 0
        %7298 = vmatpush1.bf16.msra.mxu0 0
        %7299 = vmatprep.subr.bf16.mxu0 0
        %7300 = vmatpush1.bf16.msra.mxu0 0
        %7301 = vmatprep.mubr.bf16.mxu0 0
        %7302 = vmatmul.mubr.bf16.gmra.mrb[0].mxu0 %v7222
        %v7303 = vpop.f32.mrb[0].mxu0
        %v7304 = vadd.f32 %v7154, %v7303
        %v7305 = vpop.f32.mrb[0].mxu0
        %v7306 = vadd.f32 %v7158, %v7305
        %v7307 = vpop.f32.mrb[0].mxu0
        %v7308 = vadd.f32 %v7154, %v7307
        %v7309 = vpop.f32.mrb[0].mxu0
        %v7310 = vadd.f32 %v7158, %v7309
        %7311 = vmatprep.mubr.bf16.mxu0 0
        %7312 = vmatmul.mubr.bf16.gmra.mrb[0].mxu0 %v7225
        %v7313 = vpop.f32.mrb[0].mxu0
        %v7314 = vadd.f32 %v7154, %v7313
        %v7315 = vpop.f32.mrb[0].mxu0
        %v7316 = vadd.f32 %v7158, %v7315
        %v7317 = vpop.f32.mrb[0].mxu0
        %v7318 = vadd.f32 %v7154, %v7317
        %v7319 = vpop.f32.mrb[0].mxu0
        %v7320 = vadd.f32 %v7158, %v7319
        %7321 = vmatprep.mubr.bf16.mxu0 0
        %7322 = vmatmul.mubr.bf16.gmra.mrb[0].mxu0 %v7228
        %v7323 = vpop.f32.mrb[0].mxu0
        %v7324 = vadd.f32 %v7154, %v7323
        %v7325 = vpop.f32.mrb[0].mxu0
        %v7326 = vadd.f32 %v7158, %v7325
        %v7327 = vpop.f32.mrb[0].mxu0
        %v7328 = vadd.f32 %v7154, %v7327
        %v7329 = vpop.f32.mrb[0].mxu0
        %v7330 = vadd.f32 %v7158, %v7329
        %7331 = vmatprep.mubr.bf16.mxu0 0
        %7332 = vmatmul.mubr.bf16.gmra.mrb[0].mxu0 %v7231
        %v7333 = vpop.f32.mrb[0].mxu0
        %v7334 = vadd.f32 %v7154, %v7333
        %v7335 = vpop.f32.mrb[0].mxu0
        %v7336 = vadd.f32 %v7158, %v7335
        %v7337 = vpop.f32.mrb[0].mxu0
        %v7338 = vadd.f32 %v7154, %v7337
        %v7339 = vpop.f32.mrb[0].mxu0
        %v7340 = vadd.f32 %v7158, %v7339
        %7341 = vmatprep.mubr.bf16.mxu0 0
        %7342 = vmatmul.mubr.bf16.gmra.mrb[0].mxu0 %v7234
        %v7343 = vpop.f32.mrb[0].mxu0
        %v7344 = vadd.f32 %v7154, %v7343
        %v7345 = vpop.f32.mrb[0].mxu0
        %v7346 = vadd.f32 %v7158, %v7345
        %v7347 = vpop.f32.mrb[0].mxu0
        %v7348 = vadd.f32 %v7154, %v7347
        %v7349 = vpop.f32.mrb[0].mxu0
        %v7350 = vadd.f32 %v7158, %v7349
        %7351 = vmatprep.mubr.bf16.mxu0 0
        %7352 = vmatmul.mubr.bf16.gmra.mrb[0].mxu0 %v7237
        %v7353 = vpop.f32.mrb[0].mxu0
        %v7354 = vadd.f32 %v7154, %v7353
        %v7355 = vpop.f32.mrb[0].mxu0
        %v7356 = vadd.f32 %v7158, %v7355
        %v7357 = vpop.f32.mrb[0].mxu0
        %v7358 = vadd.f32 %v7154, %v7357
        %v7359 = vpop.f32.mrb[0].mxu0
        %v7360 = vadd.f32 %v7158, %v7359
        %7361 = vmatprep.mubr.bf16.mxu0 0
        %7362 = vmatmul.mubr.bf16.gmra.mrb[0].mxu0 %v7240
        %v7363 = vpop.f32.mrb[0].mxu0
        %v7364 = vadd.f32 %v7154, %v7363
        %v7365 = vpop.f32.mrb[0].mxu0
        %v7366 = vadd.f32 %v7158, %v7365
        %v7367 = vpop.f32.mrb[0].mxu0
        %v7368 = vadd.f32 %v7154, %v7367
        %v7369 = vpop.f32.mrb[0].mxu0
        %v7370 = vadd.f32 %v7158, %v7369
        %7371 = vmatprep.mubr.bf16.mxu0 0
        %7372 = vmatmul.mubr.bf16.gmra.mrb[0].mxu0 %v7243
        %v7373 = vpop.f32.mrb[0].mxu0
        %v7374 = vadd.f32 %v7154, %v7373
        %v7375 = vpop.f32.mrb[0].mxu0
        %v7376 = vadd.f32 %v7158, %v7375
        %v7377 = vpop.f32.mrb[0].mxu0
        %v7378 = vadd.f32 %v7154, %v7377
        %v7379 = vpop.f32.mrb[0].mxu0
        %v7380 = vadd.f32 %v7158, %v7379
        %7381 = vmatprep.mubr.bf16.mxu0 0
        %7382 = vmatmul.mubr.bf16.gmra.mrb[0].mxu0 %v7246
        %v7383 = vpop.f32.mrb[0].mxu0
        %v7384 = vadd.f32 %v7154, %v7383
        %v7385 = vpop.f32.mrb[0].mxu0
        %v7386 = vadd.f32 %v7158, %v7385
        %v7387 = vpop.f32.mrb[0].mxu0
        %v7388 = vadd.f32 %v7154, %v7387
        %v7389 = vpop.f32.mrb[0].mxu0
        %v7390 = vadd.f32 %v7158, %v7389
        %7391 = vmatprep.mubr.bf16.mxu0 0
        %7392 = vmatmul.mubr.bf16.gmra.mrb[0].mxu0 %v7249
        %v7393 = vpop.f32.mrb[0].mxu0
        %v7394 = vadd.f32 %v7154, %v7393
        %v7395 = vpop.f32.mrb[0].mxu0
        %v7396 = vadd.f32 %v7158, %v7395
        %v7397 = vpop.f32.mrb[0].mxu0
        %v7398 = vadd.f32 %v7154, %v7397
        %v7399 = vpop.f32.mrb[0].mxu0
        %v7400 = vadd.f32 %v7158, %v7399
        %7401 = vmatprep.mubr.bf16.mxu0 0
        %7402 = vmatmul.mubr.bf16.gmra.mrb[0].mxu0 %v7252
        %v7403 = vpop.f32.mrb[0].mxu0
        %v7404 = vadd.f32 %v7154, %v7403
        %v7405 = vpop.f32.mrb[0].mxu0
        %v7406 = vadd.f32 %v7158, %v7405
        %v7407 = vpop.f32.mrb[0].mxu0
        %v7408 = vadd.f32 %v7154, %v7407
        %v7409 = vpop.f32.mrb[0].mxu0
        %v7410 = vadd.f32 %v7158, %v7409
        %7411 = vmatprep.mubr.bf16.mxu0 0
        %7412 = vmatmul.mubr.bf16.gmra.mrb[0].mxu0 %v7255
        %v7413 = vpop.f32.mrb[0].mxu0
        %v7414 = vadd.f32 %v7154, %v7413
        %v7415 = vpop.f32.mrb[0].mxu0
        %v7416 = vadd.f32 %v7158, %v7415
        %v7417 = vpop.f32.mrb[0].mxu0
        %v7418 = vadd.f32 %v7154, %v7417
        %v7419 = vpop.f32.mrb[0].mxu0
        %v7420 = vadd.f32 %v7158, %v7419
        %7421 = vmatprep.mubr.bf16.mxu0 0
        %7422 = vmatmul.mubr.bf16.gmra.mrb[0].mxu0 %v7258
        %v7423 = vpop.f32.mrb[0].mxu0
        %v7424 = vadd.f32 %v7154, %v7423
        %v7425 = vpop.f32.mrb[0].mxu0
        %v7426 = vadd.f32 %v7158, %v7425
        %v7427 = vpop.f32.mrb[0].mxu0
        %v7428 = vadd.f32 %v7154, %v7427
        %v7429 = vpop.f32.mrb[0].mxu0
        %v7430 = vadd.f32 %v7158, %v7429
        %7431 = vmatprep.mubr.bf16.mxu0 0
        %7432 = vmatmul.mubr.bf16.gmra.mrb[0].mxu0 %v7261
        %v7433 = vpop.f32.mrb[0].mxu0
        %v7434 = vadd.f32 %v7154, %v7433
        %v7435 = vpop.f32.mrb[0].mxu0
        %v7436 = vadd.f32 %v7158, %v7435
        %v7437 = vpop.f32.mrb[0].mxu0
        %v7438 = vadd.f32 %v7154, %v7437
        %v7439 = vpop.f32.mrb[0].mxu0
        %v7440 = vadd.f32 %v7158, %v7439
        %7441 = vmatprep.mubr.bf16.mxu0 0
        %7442 = vmatmul.mubr.bf16.gmra.mrb[0].mxu0 %v7264
        %v7443 = vpop.f32.mrb[0].mxu0
        %v7444 = vadd.f32 %v7154, %v7443
        %v7445 = vpop.f32.mrb[0].mxu0
        %v7446 = vadd.f32 %v7158, %v7445
        %v7447 = vpop.f32.mrb[0].mxu0
        %v7448 = vadd.f32 %v7154, %v7447
        %v7449 = vpop.f32.mrb[0].mxu0
        %v7450 = vadd.f32 %v7158, %v7449
        %7451 = vmatprep.mubr.bf16.mxu0 0
        %7452 = vmatmul.mubr.bf16.gmra.mrb[0].mxu0 %v7267
        %v7453 = vpop.f32.mrb[0].mxu0
        %v7454 = vadd.f32 %v7154, %v7453
        %v7455 = vpop.f32.mrb[0].mxu0
        %v7456 = vadd.f32 %v7158, %v7455
        %v7457 = vpop.f32.mrb[0].mxu0
        %v7458 = vadd.f32 %v7154, %v7457
        %v7459 = vpop.f32.mrb[0].mxu0
        %v7460 = vadd.f32 %v7158, %v7459
        %7461 = vdwg.mxu0
        %v7462 = vmul.f32 %v7304, 0.17
        %v7463 = vmul.f32 %v7306, 0.17
        %v7464 = vmul.f32 %v7308, 0.17
        %v7465 = vmul.f32 %v7310, 0.17
        %v7466 = vmul.f32 %v7314, 0.17
        %v7467 = vmul.f32 %v7316, 0.17
        %v7468 = vmul.f32 %v7318, 0.17
        %v7469 = vmul.f32 %v7320, 0.17
        %v7470 = vmul.f32 %v7324, 0.17
        %v7471 = vmul.f32 %v7326, 0.17
        %v7472 = vmul.f32 %v7328, 0.17
        %v7473 = vmul.f32 %v7330, 0.17
        %v7474 = vmul.f32 %v7334, 0.17
        %v7475 = vmul.f32 %v7336, 0.17
        %v7476 = vmul.f32 %v7338, 0.17
        %v7477 = vmul.f32 %v7340, 0.17
        %v7478 = vmul.f32 %v7344, 0.17
        %v7479 = vmul.f32 %v7346, 0.17
        %v7480 = vmul.f32 %v7348, 0.17
        %v7481 = vmul.f32 %v7350, 0.17
        %v7482 = vmul.f32 %v7354, 0.17
        %v7483 = vmul.f32 %v7356, 0.17
        %v7484 = vmul.f32 %v7358, 0.17
        %v7485 = vmul.f32 %v7360, 0.17
        %v7486 = vmul.f32 %v7364, 0.17
        %v7487 = vmul.f32 %v7366, 0.17
        %v7488 = vmul.f32 %v7368, 0.17
        %v7489 = vmul.f32 %v7370, 0.17
        %v7490 = vmul.f32 %v7374, 0.17
        %v7491 = vmul.f32 %v7376, 0.17
        %v7492 = vmul.f32 %v7378, 0.17
        %v7493 = vmul.f32 %v7380, 0.17
        %v7494 = vmul.f32 %v7384, 0.17
        %v7495 = vmul.f32 %v7386, 0.17
        %v7496 = vmul.f32 %v7388, 0.17
        %v7497 = vmul.f32 %v7390, 0.17
        %v7498 = vmul.f32 %v7394, 0.17
        %v7499 = vmul.f32 %v7396, 0.17
        %v7500 = vmul.f32 %v7398, 0.17
        %v7501 = vmul.f32 %v7400, 0.17
        %v7502 = vmul.f32 %v7404, 0.17
        %v7503 = vmul.f32 %v7406, 0.17
        %v7504 = vmul.f32 %v7408, 0.17
        %v7505 = vmul.f32 %v7410, 0.17
        %v7506 = vmul.f32 %v7414, 0.17
        %v7507 = vmul.f32 %v7416, 0.17
        %v7508 = vmul.f32 %v7418, 0.17
        %v7509 = vmul.f32 %v7420, 0.17
        %v7510 = vmul.f32 %v7424, 0.17
        %v7511 = vmul.f32 %v7426, 0.17
        %v7512 = vmul.f32 %v7428, 0.17
        %v7513 = vmul.f32 %v7430, 0.17
        %v7514 = vmul.f32 %v7434, 0.17
        %v7515 = vmul.f32 %v7436, 0.17
        %v7516 = vmul.f32 %v7438, 0.17
        %v7517 = vmul.f32 %v7440, 0.17
        %v7518 = vmul.f32 %v7444, 0.17
        %v7519 = vmul.f32 %v7446, 0.17
        %v7520 = vmul.f32 %v7448, 0.17
        %v7521 = vmul.f32 %v7450, 0.17
        %v7522 = vmul.f32 %v7454, 0.17
        %v7523 = vmul.f32 %v7456, 0.17
        %v7524 = vmul.f32 %v7458, 0.17
        %v7525 = vmul.f32 %v7460, 0.17
        %v7526 = vadd.f32 %v7462, %v506
        %v7527 = vadd.f32 %v7463, %v507
        %v7528 = vadd.f32 %v7464, %v508
        %v7529 = vadd.f32 %v7465, %v509
        %v7530 = vadd.f32 %v7466, %v510
        %v7531 = vadd.f32 %v7467, %v511
        %v7532 = vadd.f32 %v7468, %v512
        %v7533 = vadd.f32 %v7469, %v513
        %v7534 = vadd.f32 %v7470, %v514
        %v7535 = vadd.f32 %v7471, %v515
        %v7536 = vadd.f32 %v7472, %v516
        %v7537 = vadd.f32 %v7473, %v517
        %v7538 = vadd.f32 %v7474, %v518
        %v7539 = vadd.f32 %v7475, %v519
        %v7540 = vadd.f32 %v7476, %v520
        %v7541 = vadd.f32 %v7477, %v521
        %v7542 = vadd.f32 %v7478, %v522
        %v7543 = vadd.f32 %v7479, %v523
        %v7544 = vadd.f32 %v7480, %v524
        %v7545 = vadd.f32 %v7481, %v525
        %v7546 = vadd.f32 %v7482, %v526
        %v7547 = vadd.f32 %v7483, %v527
        %v7548 = vadd.f32 %v7484, %v528
        %v7549 = vadd.f32 %v7485, %v529
        %v7550 = vadd.f32 %v7486, %v530
        %v7551 = vadd.f32 %v7487, %v531
        %v7552 = vadd.f32 %v7488, %v532
        %v7553 = vadd.f32 %v7489, %v533
        %v7554 = vadd.f32 %v7490, %v534
        %v7555 = vadd.f32 %v7491, %v535
        %v7556 = vadd.f32 %v7492, %v536
        %v7557 = vadd.f32 %v7493, %v537
        %v7558 = vadd.f32 %v7494, %v538
        %v7559 = vadd.f32 %v7495, %v539
        %v7560 = vadd.f32 %v7496, %v540
        %v7561 = vadd.f32 %v7497, %v541
        %v7562 = vadd.f32 %v7498, %v542
        %v7563 = vadd.f32 %v7499, %v543
        %v7564 = vadd.f32 %v7500, %v544
        %v7565 = vadd.f32 %v7501, %v545
        %v7566 = vadd.f32 %v7502, %v546
        %v7567 = vadd.f32 %v7503, %v547
        %v7568 = vadd.f32 %v7504, %v548
        %v7569 = vadd.f32 %v7505, %v549
        %v7570 = vadd.f32 %v7506, %v550
        %v7571 = vadd.f32 %v7507, %v551
        %v7572 = vadd.f32 %v7508, %v552
        %v7573 = vadd.f32 %v7509, %v553
        %v7574 = vadd.f32 %v7510, %v554
        %v7575 = vadd.f32 %v7511, %v555
        %v7576 = vadd.f32 %v7512, %v556
        %v7577 = vadd.f32 %v7513, %v557
        %v7578 = vadd.f32 %v7514, %v558
        %v7579 = vadd.f32 %v7515, %v559
        %v7580 = vadd.f32 %v7516, %v560
        %v7581 = vadd.f32 %v7517, %v561
        %v7582 = vadd.f32 %v7518, %v562
        %v7583 = vadd.f32 %v7519, %v563
        %v7584 = vadd.f32 %v7520, %v564
        %v7585 = vadd.f32 %v7521, %v565
        %v7586 = vadd.f32 %v7522, %v566
        %v7587 = vadd.f32 %v7523, %v567
        %v7588 = vadd.f32 %v7524, %v568
        %v7589 = vadd.f32 %v7525, %v569
        %v7590 = vmax.f32 %v7526, 0.0
        %v7591 = vmax.f32 %v7527, 0.0
        %v7592 = vmax.f32 %v7528, 0.0
        %v7593 = vmax.f32 %v7529, 0.0
        %v7594 = vmax.f32 %v7530, 0.0
        %v7595 = vmax.f32 %v7531, 0.0
        %v7596 = vmax.f32 %v7532, 0.0
        %v7597 = vmax.f32 %v7533, 0.0
        %v7598 = vmax.f32 %v7534, 0.0
        %v7599 = vmax.f32 %v7535, 0.0
        %v7600 = vmax.f32 %v7536, 0.0
        %v7601 = vmax.f32 %v7537, 0.0
        %v7602 = vmax.f32 %v7538, 0.0
        %v7603 = vmax.f32 %v7539, 0.0
        %v7604 = vmax.f32 %v7540, 0.0
        %v7605 = vmax.f32 %v7541, 0.0
        %v7606 = vmax.f32 %v7542, 0.0
        %v7607 = vmax.f32 %v7543, 0.0
        %v7608 = vmax.f32 %v7544, 0.0
        %v7609 = vmax.f32 %v7545, 0.0
        %v7610 = vmax.f32 %v7546, 0.0
        %v7611 = vmax.f32 %v7547, 0.0
        %v7612 = vmax.f32 %v7548, 0.0
        %v7613 = vmax.f32 %v7549, 0.0
        %v7614 = vmax.f32 %v7550, 0.0
        %v7615 = vmax.f32 %v7551, 0.0
        %v7616 = vmax.f32 %v7552, 0.0
        %v7617 = vmax.f32 %v7553, 0.0
        %v7618 = vmax.f32 %v7554, 0.0
        %v7619 = vmax.f32 %v7555, 0.0
        %v7620 = vmax.f32 %v7556, 0.0
        %v7621 = vmax.f32 %v7557, 0.0
        %v7622 = vmax.f32 %v7558, 0.0
        %v7623 = vmax.f32 %v7559, 0.0
        %v7624 = vmax.f32 %v7560, 0.0
        %v7625 = vmax.f32 %v7561, 0.0
        %v7626 = vmax.f32 %v7562, 0.0
        %v7627 = vmax.f32 %v7563, 0.0
        %v7628 = vmax.f32 %v7564, 0.0
        %v7629 = vmax.f32 %v7565, 0.0
        %v7630 = vmax.f32 %v7566, 0.0
        %v7631 = vmax.f32 %v7567, 0.0
        %v7632 = vmax.f32 %v7568, 0.0
        %v7633 = vmax.f32 %v7569, 0.0
        %v7634 = vmax.f32 %v7570, 0.0
        %v7635 = vmax.f32 %v7571, 0.0
        %v7636 = vmax.f32 %v7572, 0.0
        %v7637 = vmax.f32 %v7573, 0.0
        %v7638 = vmax.f32 %v7574, 0.0
        %v7639 = vmax.f32 %v7575, 0.0
        %v7640 = vmax.f32 %v7576, 0.0
        %v7641 = vmax.f32 %v7577, 0.0
        %v7642 = vmax.f32 %v7578, 0.0
        %v7643 = vmax.f32 %v7579, 0.0
        %v7644 = vmax.f32 %v7580, 0.0
        %v7645 = vmax.f32 %v7581, 0.0
        %v7646 = vmax.f32 %v7582, 0.0
        %v7647 = vmax.f32 %v7583, 0.0
        %v7648 = vmax.f32 %v7584, 0.0
        %v7649 = vmax.f32 %v7585, 0.0
        %v7650 = vmax.f32 %v7586, 0.0
        %v7651 = vmax.f32 %v7587, 0.0
        %v7652 = vmax.f32 %v7588, 0.0
        %v7653 = vmax.f32 %v7589, 0.0
        %7654 = vst [vmem:[%s448] sm:$0xff] %v7590
        %7655 = vst [vmem:[%s448 + $0x8] sm:$0xff] %v7591
        %7656 = vst [vmem:[%s448 + $0x10] sm:$0xff] %v7592
        %7657 = vst [vmem:[%s448 + $0x18] sm:$0xff] %v7593
        %7658 = vst [vmem:[%s448 + $0x20] sm:$0xff] %v7594
        %7659 = vst [vmem:[%s448 + $0x28] sm:$0xff] %v7595
        %7660 = vst [vmem:[%s448 + $0x30] sm:$0xff] %v7596
        %7661 = vst [vmem:[%s448 + $0x38] sm:$0xff] %v7597
        %7662 = vst [vmem:[%s448 + $0x40] sm:$0xff] %v7598
        %7663 = vst [vmem:[%s448 + $0x48] sm:$0xff] %v7599
        %7664 = vst [vmem:[%s448 + $0x50] sm:$0xff] %v7600
        %7665 = vst [vmem:[%s448 + $0x58] sm:$0xff] %v7601
        %7666 = vst [vmem:[%s448 + $0x60] sm:$0xff] %v7602
        %7667 = vst [vmem:[%s448 + $0x68] sm:$0xff] %v7603
        %7668 = vst [vmem:[%s448 + $0x70] sm:$0xff] %v7604
        %7669 = vst [vmem:[%s448 + $0x78] sm:$0xff] %v7605
        %7670 = vst [vmem:[%s448 + $0x80] sm:$0xff] %v7606
        %7671 = vst [vmem:[%s448 + $0x88] sm:$0xff] %v7607
        %7672 = vst [vmem:[%s448 + $0x90] sm:$0xff] %v7608
        %7673 = vst [vmem:[%s448 + $0x98] sm:$0xff] %v7609
        %7674 = vst [vmem:[%s448 + $0xa0] sm:$0xff] %v7610
        %7675 = vst [vmem:[%s448 + $0xa8] sm:$0xff] %v7611
        %7676 = vst [vmem:[%s448 + $0xb0] sm:$0xff] %v7612
        %7677 = vst [vmem:[%s448 + $0xb8] sm:$0xff] %v7613
        %7678 = vst [vmem:[%s448 + $0xc0] sm:$0xff] %v7614
        %7679 = vst [vmem:[%s448 + $0xc8] sm:$0xff] %v7615
        %7680 = vst [vmem:[%s448 + $0xd0] sm:$0xff] %v7616
        %7681 = vst [vmem:[%s448 + $0xd8] sm:$0xff] %v7617
        %7682 = vst [vmem:[%s448 + $0xe0] sm:$0xff] %v7618
        %7683 = vst [vmem:[%s448 + $0xe8] sm:$0xff] %v7619
        %7684 = vst [vmem:[%s448 + $0xf0] sm:$0xff] %v7620
        %7685 = vst [vmem:[%s448 + $0xf8] sm:$0xff] %v7621
        %7686 = vst [vmem:[%s448 + $0x100] sm:$0xff] %v7622
        %7687 = vst [vmem:[%s448 + $0x108] sm:$0xff] %v7623
        %7688 = vst [vmem:[%s448 + $0x110] sm:$0xff] %v7624
        %7689 = vst [vmem:[%s448 + $0x118] sm:$0xff] %v7625
        %7690 = vst [vmem:[%s448 + $0x120] sm:$0xff] %v7626
        %7691 = vst [vmem:[%s448 + $0x128] sm:$0xff] %v7627
        %7692 = vst [vmem:[%s448 + $0x130] sm:$0xff] %v7628
        %7693 = vst [vmem:[%s448 + $0x138] sm:$0xff] %v7629
        %7694 = vst [vmem:[%s448 + $0x140] sm:$0xff] %v7630
        %7695 = vst [vmem:[%s448 + $0x148] sm:$0xff] %v7631
        %7696 = vst [vmem:[%s448 + $0x150] sm:$0xff] %v7632
        %7697 = vst [vmem:[%s448 + $0x158] sm:$0xff] %v7633
        %7698 = vst [vmem:[%s448 + $0x160] sm:$0xff] %v7634
        %7699 = vst [vmem:[%s448 + $0x168] sm:$0xff] %v7635
        %7700 = vst [vmem:[%s448 + $0x170] sm:$0xff] %v7636
        %7701 = vst [vmem:[%s448 + $0x178] sm:$0xff] %v7637
        %7702 = vst [vmem:[%s448 + $0x180] sm:$0xff] %v7638
        %7703 = vst [vmem:[%s448 + $0x188] sm:$0xff] %v7639
        %7704 = vst [vmem:[%s448 + $0x190] sm:$0xff] %v7640
        %7705 = vst [vmem:[%s448 + $0x198] sm:$0xff] %v7641
        %7706 = vst [vmem:[%s448 + $0x1a0] sm:$0xff] %v7642
        %7707 = vst [vmem:[%s448 + $0x1a8] sm:$0xff] %v7643
        %7708 = vst [vmem:[%s448 + $0x1b0] sm:$0xff] %v7644
        %7709 = vst [vmem:[%s448 + $0x1b8] sm:$0xff] %v7645
        %7710 = vst [vmem:[%s448 + $0x1c0] sm:$0xff] %v7646
        %7711 = vst [vmem:[%s448 + $0x1c8] sm:$0xff] %v7647
        %7712 = vst [vmem:[%s448 + $0x1d0] sm:$0xff] %v7648
        %7713 = vst [vmem:[%s448 + $0x1d8] sm:$0xff] %v7649
        %7714 = vst [vmem:[%s448 + $0x1e0] sm:$0xff] %v7650
        %7715 = vst [vmem:[%s448 + $0x1e8] sm:$0xff] %v7651
        %7716 = vst [vmem:[%s448 + $0x1f0] sm:$0xff] %v7652
        %7717 = vst [vmem:[%s448 + $0x1f8] sm:$0xff] %v7653
        %s7718 = sand.u32 %s274, 1
        %s7719 = scalar_lea.sflag [#allocation5], %s7718
        %s7720 = sand.u32 %s274, 1
        %s7721 = smul.addr %s7720, 512
        %s7722 = scalar_lea.vmem [#allocation11], %s7721
        // Predicated region
        $region81: #{block35_pallas.1} parent=63 // pred_check
          %p7723 = pneg %p284
        $region82: #{block35_pallas.1} parent=63 // pred_check_branch
          %7725 = sbr.rel (%p7723) target = $region84
        $region83: #{block35_pallas.1} parent=63 // pred_region
          %s7727 = ssub.s32 8192, 8192
          %7728 = vsyncadd %s7719, %s7727
          %s7729 = smul.addr %s30, 64
          %s7730 = smul.addr %s7729, 128
          %s7731 = scalar_lea.hbm %s11, %s7730
          %s7732 = sshll.u32 %s7722, 4
          %s7733 = int_to_ptr.vmem [resolvable:$true] %s7732
          %7738 = dma.vmem_to_hbm [thread:$0]  %s7733, 8192, %s7731, %s7719, 256, 256, 16
        $region84: #{block35_pallas.1} parent=63 // pred_fallthru
          _
      $region64: #{block35_pallas.1} parent=5 // pred_fallthru
        _
      %p7739 = scmp.le.s32.totalorder 2, %s25
      // Predicated region
      $region85: #{block35_pallas.1} parent=5 // pred_check
        %p7740 = pneg %p7739
      $region86: #{block35_pallas.1} parent=5 // pred_check_branch
        %7742 = sbr.rel (%p7740) target = $region88
      $region87: #{block35_pallas.1} parent=5 // pred_region
        %s7743 = ssub.s32 %s25, 2
        // Predicated region
        $region89: #{block35_pallas.1} parent=87 // pred_check
          %p7744 = pneg %p290
        $region90: #{block35_pallas.1} parent=87 // pred_check_branch
          %7746 = sbr.rel (%p7744) target = $region92
        $region91: #{block35_pallas.1} parent=87 // pred_region
          %s7747 = sand.u32 %s275, 1
          %s7748 = scalar_lea.sflag [#allocation5], %s7747
          %s7749 = sand.u32 %s275, 1
          %s7750 = smul.addr %s7749, 512
          %s7751 = scalar_lea.vmem [#allocation11], %s7750
          %7752 = dma.done %s7748, 8192
        $region92: #{block35_pallas.1} parent=87 // pred_fallthru
          _
      $region88: #{block35_pallas.1} parent=5 // pred_fallthru
        _
    $region6: #{block35_pallas.1} parent=1 // loop_footer
      %s29 = sadd.s32 1, %s25
    $region7: #{block35_pallas.1} parent=1 // loop_footer_branch
      %24 = sbr.rel target = $region3
    $region8: #{block35_pallas.1} parent=1 // loop_exit
      _
    %7753 = vsyncpa [#allocation4], 1
    %s7754 = scalar_lea.sflag [#allocation4], 1
    %7755 = vsyncpa %s7754, 1
    %7756 = vsyncpa [#allocation7], 1
    %7757 = vsyncpa [#allocation10], 1
    %7758 = vsyncpa [#allocation5], 1
    %s7759 = scalar_lea.sflag [#allocation5], 1
    %7760 = vsyncpa %s7759, 1

</llo_original>
